<compile_context>
chip_gen: v6e
topology: v6e:2x2x1
jax: 0.10.0
libtpu: 0.0.40
codegen_flags: <defaults>
</compile_context>

<pallas_src>
import functools

import jax
import jax.numpy as jnp
from jax.experimental import pallas as pl
from jax.experimental.pallas import tpu as pltpu


def _round_up(x, m):
    return (x + m - 1) // m * m


@functools.lru_cache(maxsize=1)
def _vmem_limit_bytes():
    """Generation-aware VMEM cap: ~100 MiB on v5e/v6e (128 MiB VMEM), ~51 MiB on v7x."""
    cap = 64 * 1024 * 1024
    try:
        info_fn = getattr(pltpu, "get_tpu_info", None)
        if info_fn is not None:
            cap = int(info_fn().vmem_capacity_bytes)
    except Exception:
        pass
    return min(int(cap * 0.80), 100 * 1024 * 1024)


# ----------------------------------------------------------------------------------
# Pallas kernels
# ----------------------------------------------------------------------------------
def _matmul_bias_kernel(x_ref, w_ref, b_ref, o_ref):
    # Operands arrive pre-cast to bf16 from the wrapper; astype is a no-op then.
    acc = jnp.dot(x_ref[...].astype(jnp.bfloat16), w_ref[...].astype(jnp.bfloat16),
                  preferred_element_type=jnp.float32)
    o_ref[...] = (acc + b_ref[...]).astype(o_ref.dtype)


def matmul_bias(x, w, b, out_dtype=jnp.float32, tm_max=512):
    """(M, K) @ (K, N) + (N,), tiled over M rows; K/N arrive 128-padded, operands bf16.

    tm is chosen so there are >=2 row tiles whenever M allows (keeps the second
    TensorCore busy on v7x); weights stay resident via the constant index_map.
    TODO(synk): add a K grid axis with a VMEM f32 accumulator if K ever grows
    beyond a few thousand (here K <= 640)."""
    M, K = x.shape
    K2, N = w.shape
    assert K == K2
    tm = min(tm_max, max(8, _round_up(pl.cdiv(M, 2), 8)))
    tm = min(tm, _round_up(M, 8))
    Mp = _round_up(M, tm)
    if Mp != M:
        x = jnp.pad(x, ((0, Mp - M), (0, 0)))
    out = pl.pallas_call(
        _matmul_bias_kernel,
        grid=(Mp // tm,),
        in_specs=[
            pl.BlockSpec((tm, K), lambda i: (i, 0)),
            pl.BlockSpec((K, N), lambda i: (0, 0)),   # weights resident across row tiles
            pl.BlockSpec((1, N), lambda i: (0, 0)),
        ],
        out_specs=pl.BlockSpec((tm, N), lambda i: (i, 0)),
        out_shape=jax.ShapeDtypeStruct((Mp, N), out_dtype),
        compiler_params=pltpu.CompilerParams(
            dimension_semantics=("parallel",), vmem_limit_bytes=_vmem_limit_bytes()),
    )(x, w, b.reshape(1, N))
    return out[:M] if Mp != M else out


def _content_stats_kernel(c_ref, mean_ref, isig_ref):
    # Per-batch, per-channel mean and 1/sigma of content tokens (nor_mean_std pre-pass).
    x = c_ref[0].astype(jnp.float32)                       # (N, Cp)
    n = x.shape[0]
    mu = jnp.mean(x, axis=0, keepdims=True)
    var = jnp.sum((x - mu) ** 2, axis=0, keepdims=True) * (1.0 / (n - 1))  # unbiased (torch.var)
    mean_ref[0] = mu
    isig_ref[0] = jax.lax.rsqrt(var + 1e-5)                # calc_mean_std eps


def content_stats(c_flat):
    B, N, Cp = c_flat.shape
    return pl.pallas_call(
        _content_stats_kernel,
        grid=(B,),
        in_specs=[pl.BlockSpec((1, N, Cp), lambda b: (b, 0, 0))],
        out_specs=[pl.BlockSpec((1, 1, Cp), lambda b: (b, 0, 0)),
                   pl.BlockSpec((1, 1, Cp), lambda b: (b, 0, 0))],
        out_shape=(jax.ShapeDtypeStruct((B, 1, Cp), jnp.float32),
                   jax.ShapeDtypeStruct((B, 1, Cp), jnp.float32)),
        compiler_params=pltpu.CompilerParams(
            dimension_semantics=("parallel",), vmem_limit_bytes=_vmem_limit_bytes()),
    )(c_flat)


def _attn_adain_kernel(fq_ref, kt_ref, sf_ref, c_ref, cm_ref, cis_ref,
                       o_ref, s_ref, sfsq_ref):
    # fq: (tq, Ckp) bf16 queries; kt: (Ckp, Nk) bf16 keys (pre-transposed, resident);
    # sf: (Nk, cp) bf16 style tokens (resident); c: (tq, cp) f32 content tokens.
    # style^2 built once per batch in VMEM (keys/style resident across the q axis).
    @pl.when(pl.program_id(1) == 0)
    def _():
        sq = sf_ref[0].astype(jnp.float32)
        sfsq_ref[...] = (sq * sq).astype(jnp.bfloat16)

    scores = jnp.dot(fq_ref[0], kt_ref[0], preferred_element_type=jnp.float32)  # (tq, Nk)
    m = jnp.max(scores, axis=-1, keepdims=True)
    p = jnp.exp(scores - m)
    s = p / jnp.sum(p, axis=-1, keepdims=True)             # exact softmax (S is an output)
    s_ref[0] = s.astype(s_ref.dtype)

    s16 = s.astype(jnp.bfloat16)
    mean = jnp.dot(s16, sf_ref[0], preferred_element_type=jnp.float32)          # (tq, cp)
    ex2 = jnp.dot(s16, sfsq_ref[...], preferred_element_type=jnp.float32)       # (tq, cp)
    std = jnp.sqrt(jnp.maximum(ex2 - mean * mean, 0.0))    # torch.relu clamp
    nor = (c_ref[0].astype(jnp.float32) - cm_ref[0]) * cis_ref[0]               # nor_mean_std(content)
    o_ref[0] = (std * nor + mean).astype(o_ref.dtype)


def _pick_tq(nq, nk, ckp, cp, budget):
    """Largest query tile that divides Nq and fits (resident keys/style + tiles) in VMEM."""
    cands = [t for t in (1024, 512, 256, 128, 64, 32, 16, 8) if nq % t == 0]
    if not cands:
        return nq
    resident = 2 * (2 * nk * ckp) + 2 * (2 * nk * cp) + 2 * nk * cp  # kt + sf (dbl-buf) + sf^2 scratch
    for t in cands:
        per_tile = 2 * (2 * t * ckp + 4 * t * cp + 4 * t * cp + 2 * t * nk)     # fq, c, out, S (dbl-buf)
        if resident + per_tile <= budget:
            return t
    return cands[-1]


def attn_adain(fq, kt, sf, c_flat, c_mean, c_isig):
    """Fused softmax(F G^T) attention stats + AdaIN apply, tiled over query tokens."""
    B, Nq, Ckp = fq.shape
    _, _, Nk = kt.shape
    cp = sf.shape[2]
    tq = _pick_tq(Nq, Nk, Ckp, cp, _vmem_limit_bytes())
    # TODO(synk): for very large style images (Nk ~ 256*256) tile Nk flash-style;
    # here the attention map S is a module output so the full row is materialized.
    out, S = pl.pallas_call(
        _attn_adain_kernel,
        grid=(B, Nq // tq),
        in_specs=[
            pl.BlockSpec((1, tq, Ckp), lambda b, q: (b, q, 0)),
            pl.BlockSpec((1, Ckp, Nk), lambda b, q: (b, 0, 0)),   # keys resident
            pl.BlockSpec((1, Nk, cp), lambda b, q: (b, 0, 0)),    # style tokens resident
            pl.BlockSpec((1, tq, cp), lambda b, q: (b, q, 0)),
            pl.BlockSpec((1, 1, cp), lambda b, q: (b, 0, 0)),
            pl.BlockSpec((1, 1, cp), lambda b, q: (b, 0, 0)),
        ],
        out_specs=[
            pl.BlockSpec((1, tq, cp), lambda b, q: (b, q, 0)),
            pl.BlockSpec((1, tq, Nk), lambda b, q: (b, q, 0)),
        ],
        out_shape=(
            jax.ShapeDtypeStruct((B, Nq, cp), jnp.float32),
            jax.ShapeDtypeStruct((B, Nq, Nk), jnp.bfloat16),      # bf16 S halves writeback
        ),
        scratch_shapes=[pltpu.VMEM((Nk, cp), jnp.bfloat16)],      # style^2, built at q == 0
        compiler_params=pltpu.CompilerParams(
            dimension_semantics=("parallel", "arbitrary"),
            vmem_limit_bytes=_vmem_limit_bytes()),
    )(fq, kt, sf, c_flat, c_mean, c_isig)
    return out, S


# ----------------------------------------------------------------------------------
# Glue (layout / padding done once at the boundary, NHWC end-to-end inside)
# ----------------------------------------------------------------------------------
def to_nhwc_pad(x, cp, dtype=jnp.float32):
    B, C, H, W = x.shape
    x = jnp.transpose(x, (0, 2, 3, 1)).astype(dtype)
    if cp != C:
        x = jnp.pad(x, ((0, 0), (0, 0), (0, 0), (0, cp - C)))
    return x


def from_nhwc_unpad(x, c):
    return jnp.transpose(x[..., :c], (0, 3, 1, 2))


def conv1x1_nhwc(x, w, b, out_dtype=jnp.float32):
    B, H, W, Cin = x.shape
    Cout = w.shape[1]
    y = matmul_bias(x.reshape(B * H * W, Cin), w, b, out_dtype=out_dtype)
    return y.reshape(B, H, W, Cout)


def nearest_resize_nhwc(x, out_h, out_w):
    # PyTorch F.interpolate(mode='nearest'): src = floor(dst * in / out)
    B, H, W, C = x.shape
    yi = (jnp.arange(out_h) * H) // out_h
    xi = (jnp.arange(out_w) * W) // out_w
    return x[:, yi[:, None], xi[None, :], :]


def merge_conv3x3(x, w_im2col, bias):
    """ReflectionPad2d(1) + 3x3 conv folded into ONE matmul: the 9 taps become the K
    dimension (im2col over the real channel count), so the MXU does a single dense
    (B*H*W, Kp) @ (Kp, Cop) pass instead of nine mostly-zero K=128 taps with
    per-tap window copies.  TODO(synk): for real channel counts >=128 switch to a
    halo-tiled tap-loop kernel instead of materializing the 9x patch tensor."""
    B, H, W, C = x.shape
    Kp, Cop = w_im2col.shape
    xp = jnp.pad(x, ((0, 0), (1, 1), (1, 1), (0, 0)), mode="reflect")
    pat = jnp.concatenate(
        [xp[:, ky:ky + H, kx:kx + W, :] for ky in range(3) for kx in range(3)], axis=-1)
    pat = pat.reshape(B * H * W, 9 * C).astype(jnp.bfloat16)
    if Kp != 9 * C:
        pat = jnp.pad(pat, ((0, 0), (0, Kp - 9 * C)))
    y = matmul_bias(pat, w_im2col, bias, out_dtype=jnp.float32)
    return y.reshape(B, H, W, Cop)


def adaattn_v2_nhwc(p, content, style, content_key, style_key):
    """AdaptiveMultiAdaAttN_v2.forward (NHWC, channel-padded).

    TODO(synk): random subsampling branch (h_g*w_g > max_sample) not implemented;
    demo sizes stay below max_sample = 256*256."""
    Fq = conv1x1_nhwc(content_key, p["f_w"], p["f_b"], jnp.bfloat16)   # (B, h, w, Ckp)
    G = conv1x1_nhwc(style_key, p["g_w"], p["g_b"], jnp.bfloat16)      # (B, hg, wg, Ckp)
    Hh = conv1x1_nhwc(style, p["h_w"], p["h_b"], jnp.bfloat16)         # (B, sh, sw, cp)
    B, h, w, ckp = Fq.shape
    _, hg, wg, cp = Hh.shape
    # Bicubic interpolate of H to (hg, wg) is the identity when style and style_key
    # share spatial dims (true for the shapes constructed here).
    # TODO(synk): general bicubic resize (sh != hg) is not implemented.
    assert Hh.shape[1] == G.shape[1] and Hh.shape[2] == G.shape[2]

    Nq, Nk = h * w, hg * wg
    fq = Fq.reshape(B, Nq, ckp)
    kt = jnp.transpose(G.reshape(B, Nk, ckp), (0, 2, 1))   # one-time layout: (B, Ckp, Nk)
    sf = Hh.reshape(B, Nk, cp)

    c_flat = content.reshape(B, Nq, cp)                    # requires ch*cw == h*w (as in reference)
    c_mean, c_isig = content_stats(c_flat)
    out_flat, S = attn_adain(fq, kt, sf, c_flat, c_mean, c_isig)
    return out_flat.reshape(B, h, w, cp), S


def transformer_forward(params, c41, s41, c51, s51, c41k, s41k, c51k, s51k, *, out_c):
    p41, p51 = params["attn_4_1"], params["attn_5_1"]
    cp = p41["h_w"].shape[1]
    qp = p41["f_w"].shape[0]
    kp4 = p41["g_w"].shape[0]
    kp5 = p51["g_w"].shape[0]

    # Single NCHW -> NHWC transpose + zero channel pad per input.  Attention / conv
    # operands stream as bf16; content stays f32 (feeds mean/var stats + AdaIN apply).
    c41n = to_nhwc_pad(c41, cp, jnp.float32)
    c51n = to_nhwc_pad(c51, cp, jnp.float32)
    s41n = to_nhwc_pad(s41, cp, jnp.bfloat16)
    s51n = to_nhwc_pad(s51, cp, jnp.bfloat16)
    c41kn = to_nhwc_pad(c41k, qp, jnp.bfloat16)
    s41kn = to_nhwc_pad(s41k, kp4, jnp.bfloat16)
    c51kn = to_nhwc_pad(c51k, qp, jnp.bfloat16)
    s51kn = to_nhwc_pad(s51k, kp5, jnp.bfloat16)

    f41n, a41 = adaattn_v2_nhwc(p41, c41n, s41n, c41kn, s41kn)
    f51n, a51 = adaattn_v2_nhwc(p51, c51n, s51n, c51kn, s51kn)

    up = nearest_resize_nhwc(f51n, f41n.shape[1], f41n.shape[2])
    merged = (f41n + up)[..., :out_c]                      # real channels only for im2col
    sty = merge_conv3x3(merged, params["merge_w"], params["merge_b"])

    return (from_nhwc_unpad(sty, out_c), from_nhwc_unpad(f41n, out_c),
            from_nhwc_unpad(f51n, out_c), a41, a51)


# ----------------------------------------------------------------------------------
# Parameter preparation: PyTorch conv layouts -> lane-dense bf16 matmul operands.
# ----------------------------------------------------------------------------------
def prep_conv1x1(w, b, cin_p, cout_p):
    cout, cin = w.shape[0], w.shape[1]
    wm = w.reshape(cout, cin).T
    wm = jnp.pad(wm, ((0, cin_p - cin), (0, cout_p - cout))).astype(jnp.bfloat16)
    return wm, jnp.pad(b, (0, cout_p - cout))              # bias stays f32


def prep_conv3x3_im2col(w, b, cout_p):
    cout, cin = w.shape[0], w.shape[1]
    # (cout, cin, 3, 3) -> row index (ky*3 + kx)*cin + ci, matching the patch concat order.
    wm = jnp.transpose(w, (2, 3, 1, 0)).reshape(9 * cin, cout)
    kp = _round_up(9 * cin, 128)
    wm = jnp.pad(wm, ((0, kp - 9 * cin), (0, cout_p - cout))).astype(jnp.bfloat16)
    return wm, jnp.pad(b, (0, cout_p - cout))


def prepare_params(raw, cp, qp, kp4, kp5):
    def prep_attn(p, kp):
        fw, fb = prep_conv1x1(p["f_w"], p["f_b"], qp, kp)
        gw, gb = prep_conv1x1(p["g_w"], p["g_b"], kp, kp)
        hw, hb = prep_conv1x1(p["h_w"], p["h_b"], cp, cp)
        # out_conv exists in the torch module but is never used in forward().
        return {"f_w": fw, "f_b": fb, "g_w": gw, "g_b": gb, "h_w": hw, "h_b": hb}

    mw, mb = prep_conv3x3_im2col(raw["merge_w"], raw["merge_b"], cp)
    return {"attn_4_1": prep_attn(raw["attn_4_1"], kp4),
            "attn_5_1": prep_attn(raw["attn_5_1"], kp5),
            "merge_w": mw, "merge_b": mb}


# ----------------------------------------------------------------------------------
if __name__ == "__main__":
    B = 2
    C = 16        # in_planes == out_planes (required for std*nor(content)+mean broadcast)
    Q = 16        # query_planes
    KP = 16       # key_planes (5_1 branch key/query conv uses KP + 512)
    H4, W4 = 16, 16
    H5, W5 = 8, 8

    pkey = jax.random.PRNGKey(42)
    keys = jax.random.split(pkey, 14)

    def init(k, shape, scale=0.05):
        return jax.random.normal(k, shape, jnp.float32) * scale

    raw_params = {
        "attn_4_1": {
            "f_w": init(keys[0], (KP, Q, 1, 1)), "f_b": init(keys[1], (KP,)),
            "g_w": init(keys[2], (KP, KP, 1, 1)), "g_b": init(keys[3], (KP,)),
            "h_w": init(keys[4], (C, C, 1, 1)), "h_b": init(keys[5], (C,)),
        },
        "attn_5_1": {
            "f_w": init(keys[6], (KP + 512, Q, 1, 1)), "f_b": init(keys[7], (KP + 512,)),
            "g_w": init(keys[8], (KP + 512, KP + 512, 1, 1)), "g_b": init(keys[9], (KP + 512,)),
            "h_w": init(keys[10], (C, C, 1, 1)), "h_b": init(keys[11], (C,)),
        },
        "merge_w": init(keys[12], (C, C, 3, 3)),
        "merge_b": init(keys[13], (C,)),
    }

    CP = _round_up(C, 128)
    QP = _round_up(Q, 128)
    KP4 = _round_up(KP, 128)
    KP5 = _round_up(KP + 512, 128)
    params = prepare_params(raw_params, CP, QP, KP4, KP5)

    ikey = jax.random.PRNGKey(0)
    ik = jax.random.split(ikey, 8)
    content4_1 = jax.random.normal(ik[0], (B, C, H4, W4), jnp.float32)
    style4_1 = jax.random.normal(ik[1], (B, C, H4, W4), jnp.float32)
    content5_1 = jax.random.normal(ik[2], (B, C, H5, W5), jnp.float32)
    style5_1 = jax.random.normal(ik[3], (B, C, H5, W5), jnp.float32)
    content4_1_key = jax.random.normal(ik[4], (B, Q, H4, W4), jnp.float32)
    style4_1_key = jax.random.normal(ik[5], (B, KP, H4, W4), jnp.float32)
    content5_1_key = jax.random.normal(ik[6], (B, Q, H5, W5), jnp.float32)
    style5_1_key = jax.random.normal(ik[7], (B, KP + 512, H5, W5), jnp.float32)

    fwd = jax.jit(functools.partial(transformer_forward, out_c=C))
    outs = fwd(params, content4_1, style4_1, content5_1, style5_1,
               content4_1_key, style4_1_key, content5_1_key, style5_1_key)
    jax.block_until_ready(outs)

    stylized, f41, f51, a41, a51 = outs
    assert stylized.shape == (B, C, H4, W4)
    assert f41.shape == (B, C, H4, W4)
    assert f51.shape == (B, C, H5, W5)
    assert a41.shape == (B, H4 * W4, H4 * W4)
    assert a51.shape == (B, H5 * W5, H5 * W5)
    assert all(bool(jnp.all(jnp.isfinite(x.astype(jnp.float32))))
               for x in (stylized, f41, f51, a41, a51))
    print("KERNEL_OK")
</pallas_src>

<mosaic_0001>
module attributes {stable_mosaic.version = 11 : i64} {
  func.func @_matmul_bias_kernel(%arg0: i32, %arg1: memref<64x128xbf16, #tpu.memory_space<vmem>>, %arg2: memref<128x128xbf16, #tpu.memory_space<vmem>>, %arg3: memref<1x128xf32, #tpu.memory_space<vmem>>, %arg4: memref<64x128xbf16, #tpu.memory_space<vmem>>) attributes {dimension_semantics = [#tpu.dimension_semantics<parallel>], iteration_bounds = array<i64: 2>, scalar_prefetch = 0 : i64, scratch_operands = 0 : i64, tpu.core_type = #tpu.core_type<tc>, window_params = [{transform_indices = @transform_0, window_bounds = array<i64: 64, 128>}, {pipeline_mode = #tpu.pipeline_mode<synchronous>, transform_indices = @transform_1, window_bounds = array<i64: 128, 128>}, {pipeline_mode = #tpu.pipeline_mode<synchronous>, transform_indices = @transform_2, window_bounds = array<i64: 1, 128>}, {transform_indices = @transform_3, window_bounds = array<i64: 64, 128>}]} {
    %c0 = arith.constant 0 : index
    %c0_0 = arith.constant 0 : index
    %0 = vector.load %arg1[%c0, %c0_0] : memref<64x128xbf16, #tpu.memory_space<vmem>>, vector<64x128xbf16>
    %c0_1 = arith.constant 0 : index
    %c0_2 = arith.constant 0 : index
    %1 = vector.load %arg2[%c0_1, %c0_2] : memref<128x128xbf16, #tpu.memory_space<vmem>>, vector<128x128xbf16>
    %cst = arith.constant dense<0.000000e+00> : vector<64x128xf32>
    %2 = tpu.matmul %0, %1, %cst {dimension_numbers = #tpu.dot_dimension_numbers<[1], [0], [0], [1], [0, 0, 1, 1], [], []>} : vector<64x128xbf16>, vector<128x128xbf16>, vector<64x128xf32> -> vector<64x128xf32>
    %c0_3 = arith.constant 0 : index
    %c0_4 = arith.constant 0 : index
    %3 = vector.load %arg3[%c0_3, %c0_4] : memref<1x128xf32, #tpu.memory_space<vmem>>, vector<1x128xf32>
    %4 = vector.broadcast %3 : vector<1x128xf32> to vector<64x128xf32>
    %5 = arith.addf %2, %4 : vector<64x128xf32>
    %6 = arith.truncf %5 : vector<64x128xf32> to vector<64x128xbf16>
    %c0_5 = arith.constant 0 : index
    %c0_6 = arith.constant 0 : index
    %7 = vector.load %arg4[%c0_5, %c0_6] : memref<64x128xbf16, #tpu.memory_space<vmem>>, vector<64x128xbf16>
    tpu.vector_store %arg4[%c0_5, %c0_6], %6 {strides = array<i32>} : memref<64x128xbf16, #tpu.memory_space<vmem>>, vector<64x128xbf16>,
    return
  }
  func.func @transform_0(%arg0: i32) -> (i32, i32) {
    %c0_i32 = arith.constant 0 : i32
    %c0_i32_0 = arith.constant 0 : i32
    return %arg0, %c0_i32 : i32, i32
  }
  func.func @transform_1(%arg0: i32) -> (i32, i32) {
    %c0_i32 = arith.constant 0 : i32
    %c0_i32_0 = arith.constant 0 : i32
    %c0_i32_1 = arith.constant 0 : i32
    return %c0_i32, %c0_i32_0 : i32, i32
  }
  func.func @transform_2(%arg0: i32) -> (i32, i32) {
    %c0_i32 = arith.constant 0 : i32
    %c0_i32_0 = arith.constant 0 : i32
    %c0_i32_1 = arith.constant 0 : i32
    return %c0_i32, %c0_i32_0 : i32, i32
  }
  func.func @transform_3(%arg0: i32) -> (i32, i32) {
    %c0_i32 = arith.constant 0 : i32
    %c0_i32_0 = arith.constant 0 : i32
    return %arg0, %c0_i32 : i32, i32
  }
}

module attributes {stable_mosaic.version = 11 : i64} {
  func.func @_content_stats_kernel(%arg0: i32, %arg1: memref<1x64x128xf32, #tpu.memory_space<vmem>>, %arg2: memref<1x1x128xf32, #tpu.memory_space<vmem>>, %arg3: memref<1x1x128xf32, #tpu.memory_space<vmem>>) attributes {dimension_semantics = [#tpu.dimension_semantics<parallel>], iteration_bounds = array<i64: 2>, scalar_prefetch = 0 : i64, scratch_operands = 0 : i64, tpu.core_type = #tpu.core_type<tc>, window_params = [{transform_indices = @transform_0, window_bounds = array<i64: 1, 64, 128>}, {transform_indices = @transform_1, window_bounds = array<i64: 1, 1, 128>}, {transform_indices = @transform_2, window_bounds = array<i64: 1, 1, 128>}]} {
    %c0 = arith.constant 0 : index
    %c0_0 = arith.constant 0 : index
    %c0_1 = arith.constant 0 : index
    %0 = vector.load %arg1[%c0, %c0_0, %c0_1] : memref<1x64x128xf32, #tpu.memory_space<vmem>>, vector<1x64x128xf32>
    %1 = vector.shape_cast %0 : vector<1x64x128xf32> to vector<64x128xf32>
    %cst = arith.constant dense<0.000000e+00> : vector<128xf32>
    %2 = vector.multi_reduction <add>, %1, %cst [0] : vector<64x128xf32> to vector<128xf32>
    %3 = vector.shape_cast %2 : vector<128xf32> to vector<1x128xf32>
    %cst_2 = arith.constant 6.400000e+01 : f32
    %4 = vector.broadcast %cst_2 : f32 to vector<1x128xf32>
    %5 = arith.divf %3, %4 : vector<1x128xf32>
    %6 = vector.broadcast %5 : vector<1x128xf32> to vector<64x128xf32>
    %7 = arith.subf %1, %6 : vector<64x128xf32>
    %8 = arith.mulf %7, %7 : vector<64x128xf32>
    %cst_3 = arith.constant dense<0.000000e+00> : vector<128xf32>
    %9 = vector.multi_reduction <add>, %8, %cst_3 [0] : vector<64x128xf32> to vector<128xf32>
    %10 = vector.shape_cast %9 : vector<128xf32> to vector<1x128xf32>
    %cst_4 = arith.constant 0.0158730168 : f32
    %11 = vector.broadcast %cst_4 : f32 to vector<1x128xf32>
    %12 = arith.mulf %10, %11 : vector<1x128xf32>
    %c0_5 = arith.constant 0 : index
    %c0_6 = arith.constant 0 : index
    %c0_7 = arith.constant 0 : index
    %13 = vector.load %arg2[%c0_5, %c0_6, %c0_7] : memref<1x1x128xf32, #tpu.memory_space<vmem>>, vector<1x1x128xf32>
    %14 = vector.shape_cast %13 : vector<1x1x128xf32> to vector<1x128xf32>
    %15 = vector.shape_cast %5 : vector<1x128xf32> to vector<1x1x128xf32>
    tpu.vector_store %arg2[%c0_5, %c0_6, %c0_7], %15 {strides = array<i32>} : memref<1x1x128xf32, #tpu.memory_space<vmem>>, vector<1x1x128xf32>,
    %cst_8 = arith.constant 9.99999974E-6 : f32
    %16 = vector.broadcast %cst_8 : f32 to vector<1x128xf32>
    %17 = arith.addf %12, %16 : vector<1x128xf32>
    %18 = math.rsqrt %17 : vector<1x128xf32>
    %c0_9 = arith.constant 0 : index
    %c0_10 = arith.constant 0 : index
    %c0_11 = arith.constant 0 : index
    %19 = vector.load %arg3[%c0_9, %c0_10, %c0_11] : memref<1x1x128xf32, #tpu.memory_space<vmem>>, vector<1x1x128xf32>
    %20 = vector.shape_cast %19 : vector<1x1x128xf32> to vector<1x128xf32>
    %21 = vector.shape_cast %18 : vector<1x128xf32> to vector<1x1x128xf32>
    tpu.vector_store %arg3[%c0_9, %c0_10, %c0_11], %21 {strides = array<i32>} : memref<1x1x128xf32, #tpu.memory_space<vmem>>, vector<1x1x128xf32>,
    return
  }
  func.func @transform_0(%arg0: i32) -> (i32, i32, i32) {
    %c0_i32 = arith.constant 0 : i32
    %c0_i32_0 = arith.constant 0 : i32
    %c0_i32_1 = arith.constant 0 : i32
    return %arg0, %c0_i32, %c0_i32_0 : i32, i32, i32
  }
  func.func @transform_1(%arg0: i32) -> (i32, i32, i32) {
    %c0_i32 = arith.constant 0 : i32
    %c0_i32_0 = arith.constant 0 : i32
    %c0_i32_1 = arith.constant 0 : i32
    return %arg0, %c0_i32, %c0_i32_0 : i32, i32, i32
  }
  func.func @transform_2(%arg0: i32) -> (i32, i32, i32) {
    %c0_i32 = arith.constant 0 : i32
    %c0_i32_0 = arith.constant 0 : i32
    %c0_i32_1 = arith.constant 0 : i32
    return %arg0, %c0_i32, %c0_i32_0 : i32, i32, i32
  }
}

module attributes {stable_mosaic.version = 11 : i64} {
  func.func @_matmul_bias_kernel(%arg0: i32, %arg1: memref<64x128xbf16, #tpu.memory_space<vmem>>, %arg2: memref<128x640xbf16, #tpu.memory_space<vmem>>, %arg3: memref<1x640xf32, #tpu.memory_space<vmem>>, %arg4: memref<64x640xbf16, #tpu.memory_space<vmem>>) attributes {dimension_semantics = [#tpu.dimension_semantics<parallel>], iteration_bounds = array<i64: 2>, scalar_prefetch = 0 : i64, scratch_operands = 0 : i64, tpu.core_type = #tpu.core_type<tc>, window_params = [{transform_indices = @transform_0, window_bounds = array<i64: 64, 128>}, {pipeline_mode = #tpu.pipeline_mode<synchronous>, transform_indices = @transform_1, window_bounds = array<i64: 128, 640>}, {pipeline_mode = #tpu.pipeline_mode<synchronous>, transform_indices = @transform_2, window_bounds = array<i64: 1, 640>}, {transform_indices = @transform_3, window_bounds = array<i64: 64, 640>}]} {
    %c0 = arith.constant 0 : index
    %c0_0 = arith.constant 0 : index
    %0 = vector.load %arg1[%c0, %c0_0] : memref<64x128xbf16, #tpu.memory_space<vmem>>, vector<64x128xbf16>
    %c0_1 = arith.constant 0 : index
    %c0_2 = arith.constant 0 : index
    %1 = vector.load %arg2[%c0_1, %c0_2] : memref<128x640xbf16, #tpu.memory_space<vmem>>, vector<128x640xbf16>
    %cst = arith.constant dense<0.000000e+00> : vector<64x640xf32>
    %2 = tpu.matmul %0, %1, %cst {dimension_numbers = #tpu.dot_dimension_numbers<[1], [0], [0], [1], [0, 0, 1, 1], [], []>} : vector<64x128xbf16>, vector<128x640xbf16>, vector<64x640xf32> -> vector<64x640xf32>
    %c0_3 = arith.constant 0 : index
    %c0_4 = arith.constant 0 : index
    %3 = vector.load %arg3[%c0_3, %c0_4] : memref<1x640xf32, #tpu.memory_space<vmem>>, vector<1x640xf32>
    %4 = vector.broadcast %3 : vector<1x640xf32> to vector<64x640xf32>
    %5 = arith.addf %2, %4 : vector<64x640xf32>
    %6 = arith.truncf %5 : vector<64x640xf32> to vector<64x640xbf16>
    %c0_5 = arith.constant 0 : index
    %c0_6 = arith.constant 0 : index
    %7 = vector.load %arg4[%c0_5, %c0_6] : memref<64x640xbf16, #tpu.memory_space<vmem>>, vector<64x640xbf16>
    tpu.vector_store %arg4[%c0_5, %c0_6], %6 {strides = array<i32>} : memref<64x640xbf16, #tpu.memory_space<vmem>>, vector<64x640xbf16>,
    return
  }
  func.func @transform_0(%arg0: i32) -> (i32, i32) {
    %c0_i32 = arith.constant 0 : i32
    %c0_i32_0 = arith.constant 0 : i32
    return %arg0, %c0_i32 : i32, i32
  }
  func.func @transform_1(%arg0: i32) -> (i32, i32) {
    %c0_i32 = arith.constant 0 : i32
    %c0_i32_0 = arith.constant 0 : i32
    %c0_i32_1 = arith.constant 0 : i32
    return %c0_i32, %c0_i32_0 : i32, i32
  }
  func.func @transform_2(%arg0: i32) -> (i32, i32) {
    %c0_i32 = arith.constant 0 : i32
    %c0_i32_0 = arith.constant 0 : i32
    %c0_i32_1 = arith.constant 0 : i32
    return %c0_i32, %c0_i32_0 : i32, i32
  }
  func.func @transform_3(%arg0: i32) -> (i32, i32) {
    %c0_i32 = arith.constant 0 : i32
    %c0_i32_0 = arith.constant 0 : i32
    return %arg0, %c0_i32 : i32, i32
  }
}

module attributes {stable_mosaic.version = 11 : i64} {
  func.func @_matmul_bias_kernel(%arg0: i32, %arg1: memref<256x128xbf16, #tpu.memory_space<vmem>>, %arg2: memref<128x128xbf16, #tpu.memory_space<vmem>>, %arg3: memref<1x128xf32, #tpu.memory_space<vmem>>, %arg4: memref<256x128xbf16, #tpu.memory_space<vmem>>) attributes {dimension_semantics = [#tpu.dimension_semantics<parallel>], iteration_bounds = array<i64: 2>, scalar_prefetch = 0 : i64, scratch_operands = 0 : i64, tpu.core_type = #tpu.core_type<tc>, window_params = [{transform_indices = @transform_0, window_bounds = array<i64: 256, 128>}, {pipeline_mode = #tpu.pipeline_mode<synchronous>, transform_indices = @transform_1, window_bounds = array<i64: 128, 128>}, {pipeline_mode = #tpu.pipeline_mode<synchronous>, transform_indices = @transform_2, window_bounds = array<i64: 1, 128>}, {transform_indices = @transform_3, window_bounds = array<i64: 256, 128>}]} {
    %c0 = arith.constant 0 : index
    %c0_0 = arith.constant 0 : index
    %0 = vector.load %arg1[%c0, %c0_0] : memref<256x128xbf16, #tpu.memory_space<vmem>>, vector<256x128xbf16>
    %c0_1 = arith.constant 0 : index
    %c0_2 = arith.constant 0 : index
    %1 = vector.load %arg2[%c0_1, %c0_2] : memref<128x128xbf16, #tpu.memory_space<vmem>>, vector<128x128xbf16>
    %cst = arith.constant dense<0.000000e+00> : vector<256x128xf32>
    %2 = tpu.matmul %0, %1, %cst {dimension_numbers = #tpu.dot_dimension_numbers<[1], [0], [0], [1], [0, 0, 1, 1], [], []>} : vector<256x128xbf16>, vector<128x128xbf16>, vector<256x128xf32> -> vector<256x128xf32>
    %c0_3 = arith.constant 0 : index
    %c0_4 = arith.constant 0 : index
    %3 = vector.load %arg3[%c0_3, %c0_4] : memref<1x128xf32, #tpu.memory_space<vmem>>, vector<1x128xf32>
    %4 = vector.broadcast %3 : vector<1x128xf32> to vector<256x128xf32>
    %5 = arith.addf %2, %4 : vector<256x128xf32>
    %6 = arith.truncf %5 : vector<256x128xf32> to vector<256x128xbf16>
    %c0_5 = arith.constant 0 : index
    %c0_6 = arith.constant 0 : index
    %7 = vector.load %arg4[%c0_5, %c0_6] : memref<256x128xbf16, #tpu.memory_space<vmem>>, vector<256x128xbf16>
    tpu.vector_store %arg4[%c0_5, %c0_6], %6 {strides = array<i32>} : memref<256x128xbf16, #tpu.memory_space<vmem>>, vector<256x128xbf16>,
    return
  }
  func.func @transform_0(%arg0: i32) -> (i32, i32) {
    %c0_i32 = arith.constant 0 : i32
    %c0_i32_0 = arith.constant 0 : i32
    return %arg0, %c0_i32 : i32, i32
  }
  func.func @transform_1(%arg0: i32) -> (i32, i32) {
    %c0_i32 = arith.constant 0 : i32
    %c0_i32_0 = arith.constant 0 : i32
    %c0_i32_1 = arith.constant 0 : i32
    return %c0_i32, %c0_i32_0 : i32, i32
  }
  func.func @transform_2(%arg0: i32) -> (i32, i32) {
    %c0_i32 = arith.constant 0 : i32
    %c0_i32_0 = arith.constant 0 : i32
    %c0_i32_1 = arith.constant 0 : i32
    return %c0_i32, %c0_i32_0 : i32, i32
  }
  func.func @transform_3(%arg0: i32) -> (i32, i32) {
    %c0_i32 = arith.constant 0 : i32
    %c0_i32_0 = arith.constant 0 : i32
    return %arg0, %c0_i32 : i32, i32
  }
}

module attributes {stable_mosaic.version = 11 : i64} {
  func.func @_matmul_bias_kernel(%arg0: i32, %arg1: memref<64x640xbf16, #tpu.memory_space<vmem>>, %arg2: memref<640x640xbf16, #tpu.memory_space<vmem>>, %arg3: memref<1x640xf32, #tpu.memory_space<vmem>>, %arg4: memref<64x640xbf16, #tpu.memory_space<vmem>>) attributes {dimension_semantics = [#tpu.dimension_semantics<parallel>], iteration_bounds = array<i64: 2>, scalar_prefetch = 0 : i64, scratch_operands = 0 : i64, tpu.core_type = #tpu.core_type<tc>, window_params = [{transform_indices = @transform_0, window_bounds = array<i64: 64, 640>}, {pipeline_mode = #tpu.pipeline_mode<synchronous>, transform_indices = @transform_1, window_bounds = array<i64: 640, 640>}, {pipeline_mode = #tpu.pipeline_mode<synchronous>, transform_indices = @transform_2, window_bounds = array<i64: 1, 640>}, {transform_indices = @transform_3, window_bounds = array<i64: 64, 640>}]} {
    %c0 = arith.constant 0 : index
    %c0_0 = arith.constant 0 : index
    %0 = vector.load %arg1[%c0, %c0_0] : memref<64x640xbf16, #tpu.memory_space<vmem>>, vector<64x640xbf16>
    %c0_1 = arith.constant 0 : index
    %c0_2 = arith.constant 0 : index
    %1 = vector.load %arg2[%c0_1, %c0_2] : memref<640x640xbf16, #tpu.memory_space<vmem>>, vector<640x640xbf16>
    %cst = arith.constant dense<0.000000e+00> : vector<64x640xf32>
    %2 = tpu.matmul %0, %1, %cst {dimension_numbers = #tpu.dot_dimension_numbers<[1], [0], [0], [1], [0, 0, 1, 1], [], []>} : vector<64x640xbf16>, vector<640x640xbf16>, vector<64x640xf32> -> vector<64x640xf32>
    %c0_3 = arith.constant 0 : index
    %c0_4 = arith.constant 0 : index
    %3 = vector.load %arg3[%c0_3, %c0_4] : memref<1x640xf32, #tpu.memory_space<vmem>>, vector<1x640xf32>
    %4 = vector.broadcast %3 : vector<1x640xf32> to vector<64x640xf32>
    %5 = arith.addf %2, %4 : vector<64x640xf32>
    %6 = arith.truncf %5 : vector<64x640xf32> to vector<64x640xbf16>
    %c0_5 = arith.constant 0 : index
    %c0_6 = arith.constant 0 : index
    %7 = vector.load %arg4[%c0_5, %c0_6] : memref<64x640xbf16, #tpu.memory_space<vmem>>, vector<64x640xbf16>
    tpu.vector_store %arg4[%c0_5, %c0_6], %6 {strides = array<i32>} : memref<64x640xbf16, #tpu.memory_space<vmem>>, vector<64x640xbf16>,
    return
  }
  func.func @transform_0(%arg0: i32) -> (i32, i32) {
    %c0_i32 = arith.constant 0 : i32
    %c0_i32_0 = arith.constant 0 : i32
    return %arg0, %c0_i32 : i32, i32
  }
  func.func @transform_1(%arg0: i32) -> (i32, i32) {
    %c0_i32 = arith.constant 0 : i32
    %c0_i32_0 = arith.constant 0 : i32
    %c0_i32_1 = arith.constant 0 : i32
    return %c0_i32, %c0_i32_0 : i32, i32
  }
  func.func @transform_2(%arg0: i32) -> (i32, i32) {
    %c0_i32 = arith.constant 0 : i32
    %c0_i32_0 = arith.constant 0 : i32
    %c0_i32_1 = arith.constant 0 : i32
    return %c0_i32, %c0_i32_0 : i32, i32
  }
  func.func @transform_3(%arg0: i32) -> (i32, i32) {
    %c0_i32 = arith.constant 0 : i32
    %c0_i32_0 = arith.constant 0 : i32
    return %arg0, %c0_i32 : i32, i32
  }
}

module attributes {stable_mosaic.version = 11 : i64} {
  func.func @_attn_adain_kernel(%arg0: i32, %arg1: i32, %arg2: memref<1x64x640xbf16, #tpu.memory_space<vmem>>, %arg3: memref<1x640x64xbf16, #tpu.memory_space<vmem>>, %arg4: memref<1x64x128xbf16, #tpu.memory_space<vmem>>, %arg5: memref<1x64x128xf32, #tpu.memory_space<vmem>>, %arg6: memref<1x1x128xf32, #tpu.memory_space<vmem>>, %arg7: memref<1x1x128xf32, #tpu.memory_space<vmem>>, %arg8: memref<1x64x128xf32, #tpu.memory_space<vmem>>, %arg9: memref<1x64x64xbf16, #tpu.memory_space<vmem>>, %arg10: memref<64x128xbf16, #tpu.memory_space<vmem>>) attributes {dimension_semantics = [#tpu.dimension_semantics<parallel>, #tpu.dimension_semantics<arbitrary>], iteration_bounds = array<i64: 2, 1>, scalar_prefetch = 0 : i64, scratch_operands = 1 : i64, tpu.core_type = #tpu.core_type<tc>, window_params = [{transform_indices = @transform_0, window_bounds = array<i64: 1, 64, 640>}, {transform_indices = @transform_1, window_bounds = array<i64: 1, 640, 64>}, {transform_indices = @transform_2, window_bounds = array<i64: 1, 64, 128>}, {transform_indices = @transform_3, window_bounds = array<i64: 1, 64, 128>}, {transform_indices = @transform_4, window_bounds = array<i64: 1, 1, 128>}, {transform_indices = @transform_5, window_bounds = array<i64: 1, 1, 128>}, {transform_indices = @transform_6, window_bounds = array<i64: 1, 64, 128>}, {transform_indices = @transform_7, window_bounds = array<i64: 1, 64, 64>}]} {
    %c0_i32 = arith.constant 0 : i32
    %0 = arith.cmpi eq, %arg1, %c0_i32 : i32
    %1 = arith.extui %0 : i1 to i32
    %c0_i32_0 = arith.constant 0 : i32
    %2 = arith.cmpi ne, %1, %c0_i32_0 : i32
    scf.if %2 {
      %c0_31 = arith.constant 0 : index
      %c0_32 = arith.constant 0 : index
      %c0_33 = arith.constant 0 : index
      %47 = vector.load %arg4[%c0_31, %c0_32, %c0_33] : memref<1x64x128xbf16, #tpu.memory_space<vmem>>, vector<1x64x128xbf16>
      %48 = vector.shape_cast %47 : vector<1x64x128xbf16> to vector<64x128xbf16>
      %49 = arith.extf %48 : vector<64x128xbf16> to vector<64x128xf32>
      %50 = arith.mulf %49, %49 : vector<64x128xf32>
      %51 = arith.truncf %50 : vector<64x128xf32> to vector<64x128xbf16>
      %c0_34 = arith.constant 0 : index
      %c0_35 = arith.constant 0 : index
      %52 = vector.load %arg10[%c0_34, %c0_35] : memref<64x128xbf16, #tpu.memory_space<vmem>>, vector<64x128xbf16>
      tpu.vector_store %arg10[%c0_34, %c0_35], %51 {strides = array<i32>} : memref<64x128xbf16, #tpu.memory_space<vmem>>, vector<64x128xbf16>,
    } else {
    }
    %c0 = arith.constant 0 : index
    %c0_1 = arith.constant 0 : index
    %c0_2 = arith.constant 0 : index
    %3 = vector.load %arg2[%c0, %c0_1, %c0_2] : memref<1x64x640xbf16, #tpu.memory_space<vmem>>, vector<1x64x640xbf16>
    %4 = vector.shape_cast %3 : vector<1x64x640xbf16> to vector<64x640xbf16>
    %c0_3 = arith.constant 0 : index
    %c0_4 = arith.constant 0 : index
    %c0_5 = arith.constant 0 : index
    %5 = vector.load %arg3[%c0_3, %c0_4, %c0_5] : memref<1x640x64xbf16, #tpu.memory_space<vmem>>, vector<1x640x64xbf16>
    %6 = vector.shape_cast %5 : vector<1x640x64xbf16> to vector<640x64xbf16>
    %cst = arith.constant dense<0.000000e+00> : vector<64x64xf32>
    %7 = tpu.matmul %4, %6, %cst {dimension_numbers = #tpu.dot_dimension_numbers<[1], [0], [0], [1], [0, 0, 1, 1], [], []>} : vector<64x640xbf16>, vector<640x64xbf16>, vector<64x64xf32> -> vector<64x64xf32>
    %cst_6 = arith.constant dense<0xFF800000> : vector<64xf32>
    %8 = vector.multi_reduction <maximumf>, %7, %cst_6 [1] : vector<64x64xf32> to vector<64xf32>
    %9 = vector.shape_cast %8 : vector<64xf32> to vector<64x1xf32>
    %10 = vector.broadcast %9 : vector<64x1xf32> to vector<64x64xf32>
    %11 = arith.subf %7, %10 : vector<64x64xf32>
    %12 = math.exp %11 : vector<64x64xf32>
    %cst_7 = arith.constant dense<0.000000e+00> : vector<64xf32>
    %13 = vector.multi_reduction <add>, %12, %cst_7 [1] : vector<64x64xf32> to vector<64xf32>
    %14 = vector.shape_cast %13 : vector<64xf32> to vector<64x1xf32>
    %15 = vector.broadcast %14 : vector<64x1xf32> to vector<64x64xf32>
    %16 = arith.divf %12, %15 : vector<64x64xf32>
    %17 = arith.truncf %16 : vector<64x64xf32> to vector<64x64xbf16>
    %c0_8 = arith.constant 0 : index
    %c0_9 = arith.constant 0 : index
    %c0_10 = arith.constant 0 : index
    %18 = vector.load %arg9[%c0_8, %c0_9, %c0_10] : memref<1x64x64xbf16, #tpu.memory_space<vmem>>, vector<1x64x64xbf16>
    %19 = vector.shape_cast %18 : vector<1x64x64xbf16> to vector<64x64xbf16>
    %20 = vector.shape_cast %17 : vector<64x64xbf16> to vector<1x64x64xbf16>
    tpu.vector_store %arg9[%c0_8, %c0_9, %c0_10], %20 {strides = array<i32>} : memref<1x64x64xbf16, #tpu.memory_space<vmem>>, vector<1x64x64xbf16>,
    %21 = arith.truncf %16 : vector<64x64xf32> to vector<64x64xbf16>
    %c0_11 = arith.constant 0 : index
    %c0_12 = arith.constant 0 : index
    %c0_13 = arith.constant 0 : index
    %22 = vector.load %arg4[%c0_11, %c0_12, %c0_13] : memref<1x64x128xbf16, #tpu.memory_space<vmem>>, vector<1x64x128xbf16>
    %23 = vector.shape_cast %22 : vector<1x64x128xbf16> to vector<64x128xbf16>
    %cst_14 = arith.constant dense<0.000000e+00> : vector<64x128xf32>
    %24 = tpu.matmul %21, %23, %cst_14 {dimension_numbers = #tpu.dot_dimension_numbers<[1], [0], [0], [1], [0, 0, 1, 1], [], []>} : vector<64x64xbf16>, vector<64x128xbf16>, vector<64x128xf32> -> vector<64x128xf32>
    %c0_15 = arith.constant 0 : index
    %c0_16 = arith.constant 0 : index
    %25 = vector.load %arg10[%c0_15, %c0_16] : memref<64x128xbf16, #tpu.memory_space<vmem>>, vector<64x128xbf16>
    %cst_17 = arith.constant dense<0.000000e+00> : vector<64x128xf32>
    %26 = tpu.matmul %21, %25, %cst_17 {dimension_numbers = #tpu.dot_dimension_numbers<[1], [0], [0], [1], [0, 0, 1, 1], [], []>} : vector<64x64xbf16>, vector<64x128xbf16>, vector<64x128xf32> -> vector<64x128xf32>
    %27 = arith.mulf %24, %24 : vector<64x128xf32>
    %28 = arith.subf %26, %27 : vector<64x128xf32>
    %cst_18 = arith.constant 0.000000e+00 : f32
    %29 = vector.broadcast %cst_18 : f32 to vector<64x128xf32>
    %30 = arith.maximumf %28, %29 : vector<64x128xf32>
    %31 = math.sqrt %30 : vector<64x128xf32>
    %c0_19 = arith.constant 0 : index
    %c0_20 = arith.constant 0 : index
    %c0_21 = arith.constant 0 : index
    %32 = vector.load %arg5[%c0_19, %c0_20, %c0_21] : memref<1x64x128xf32, #tpu.memory_space<vmem>>, vector<1x64x128xf32>
    %33 = vector.shape_cast %32 : vector<1x64x128xf32> to vector<64x128xf32>
    %c0_22 = arith.constant 0 : index
    %c0_23 = arith.constant 0 : index
    %c0_24 = arith.constant 0 : index
    %34 = vector.load %arg6[%c0_22, %c0_23, %c0_24] : memref<1x1x128xf32, #tpu.memory_space<vmem>>, vector<1x1x128xf32>
    %35 = vector.shape_cast %34 : vector<1x1x128xf32> to vector<1x128xf32>
    %36 = vector.broadcast %35 : vector<1x128xf32> to vector<64x128xf32>
    %37 = arith.subf %33, %36 : vector<64x128xf32>
    %c0_25 = arith.constant 0 : index
    %c0_26 = arith.constant 0 : index
    %c0_27 = arith.constant 0 : index
    %38 = vector.load %arg7[%c0_25, %c0_26, %c0_27] : memref<1x1x128xf32, #tpu.memory_space<vmem>>, vector<1x1x128xf32>
    %39 = vector.shape_cast %38 : vector<1x1x128xf32> to vector<1x128xf32>
    %40 = vector.broadcast %39 : vector<1x128xf32> to vector<64x128xf32>
    %41 = arith.mulf %37, %40 : vector<64x128xf32>
    %42 = arith.mulf %31, %41 : vector<64x128xf32>
    %43 = arith.addf %42, %24 : vector<64x128xf32>
    %c0_28 = arith.constant 0 : index
    %c0_29 = arith.constant 0 : index
    %c0_30 = arith.constant 0 : index
    %44 = vector.load %arg8[%c0_28, %c0_29, %c0_30] : memref<1x64x128xf32, #tpu.memory_space<vmem>>, vector<1x64x128xf32>
    %45 = vector.shape_cast %44 : vector<1x64x128xf32> to vector<64x128xf32>
    %46 = vector.shape_cast %43 : vector<64x128xf32> to vector<1x64x128xf32>
    tpu.vector_store %arg8[%c0_28, %c0_29, %c0_30], %46 {strides = array<i32>} : memref<1x64x128xf32, #tpu.memory_space<vmem>>, vector<1x64x128xf32>,
    return
  }
  func.func @transform_0(%arg0: i32, %arg1: i32) -> (i32, i32, i32) {
    %c0_i32 = arith.constant 0 : i32
    %c0_i32_0 = arith.constant 0 : i32
    return %arg0, %arg1, %c0_i32 : i32, i32, i32
  }
  func.func @transform_1(%arg0: i32, %arg1: i32) -> (i32, i32, i32) {
    %c0_i32 = arith.constant 0 : i32
    %c0_i32_0 = arith.constant 0 : i32
    %c0_i32_1 = arith.constant 0 : i32
    return %arg0, %c0_i32, %c0_i32_0 : i32, i32, i32
  }
  func.func @transform_2(%arg0: i32, %arg1: i32) -> (i32, i32, i32) {
    %c0_i32 = arith.constant 0 : i32
    %c0_i32_0 = arith.constant 0 : i32
    %c0_i32_1 = arith.constant 0 : i32
    return %arg0, %c0_i32, %c0_i32_0 : i32, i32, i32
  }
  func.func @transform_3(%arg0: i32, %arg1: i32) -> (i32, i32, i32) {
    %c0_i32 = arith.constant 0 : i32
    %c0_i32_0 = arith.constant 0 : i32
    return %arg0, %arg1, %c0_i32 : i32, i32, i32
  }
  func.func @transform_4(%arg0: i32, %arg1: i32) -> (i32, i32, i32) {
    %c0_i32 = arith.constant 0 : i32
    %c0_i32_0 = arith.constant 0 : i32
    %c0_i32_1 = arith.constant 0 : i32
    return %arg0, %c0_i32, %c0_i32_0 : i32, i32, i32
  }
  func.func @transform_5(%arg0: i32, %arg1: i32) -> (i32, i32, i32) {
    %c0_i32 = arith.constant 0 : i32
    %c0_i32_0 = arith.constant 0 : i32
    %c0_i32_1 = arith.constant 0 : i32
    return %arg0, %c0_i32, %c0_i32_0 : i32, i32, i32
  }
  func.func @transform_6(%arg0: i32, %arg1: i32) -> (i32, i32, i32) {
    %c0_i32 = arith.constant 0 : i32
    %c0_i32_0 = arith.constant 0 : i32
    return %arg0, %arg1, %c0_i32 : i32, i32, i32
  }
  func.func @transform_7(%arg0: i32, %arg1: i32) -> (i32, i32, i32) {
    %c0_i32 = arith.constant 0 : i32
    %c0_i32_0 = arith.constant 0 : i32
    return %arg0, %arg1, %c0_i32 : i32, i32, i32
  }
}

module attributes {stable_mosaic.version = 11 : i64} {
  func.func @_attn_adain_kernel(%arg0: i32, %arg1: i32, %arg2: memref<1x256x128xbf16, #tpu.memory_space<vmem>>, %arg3: memref<1x128x256xbf16, #tpu.memory_space<vmem>>, %arg4: memref<1x256x128xbf16, #tpu.memory_space<vmem>>, %arg5: memref<1x256x128xf32, #tpu.memory_space<vmem>>, %arg6: memref<1x1x128xf32, #tpu.memory_space<vmem>>, %arg7: memref<1x1x128xf32, #tpu.memory_space<vmem>>, %arg8: memref<1x256x128xf32, #tpu.memory_space<vmem>>, %arg9: memref<1x256x256xbf16, #tpu.memory_space<vmem>>, %arg10: memref<256x128xbf16, #tpu.memory_space<vmem>>) attributes {dimension_semantics = [#tpu.dimension_semantics<parallel>, #tpu.dimension_semantics<arbitrary>], iteration_bounds = array<i64: 2, 1>, scalar_prefetch = 0 : i64, scratch_operands = 1 : i64, tpu.core_type = #tpu.core_type<tc>, window_params = [{transform_indices = @transform_0, window_bounds = array<i64: 1, 256, 128>}, {transform_indices = @transform_1, window_bounds = array<i64: 1, 128, 256>}, {transform_indices = @transform_2, window_bounds = array<i64: 1, 256, 128>}, {transform_indices = @transform_3, window_bounds = array<i64: 1, 256, 128>}, {transform_indices = @transform_4, window_bounds = array<i64: 1, 1, 128>}, {transform_indices = @transform_5, window_bounds = array<i64: 1, 1, 128>}, {transform_indices = @transform_6, window_bounds = array<i64: 1, 256, 128>}, {transform_indices = @transform_7, window_bounds = array<i64: 1, 256, 256>}]} {
    %c0_i32 = arith.constant 0 : i32
    %0 = arith.cmpi eq, %arg1, %c0_i32 : i32
    %1 = arith.extui %0 : i1 to i32
    %c0_i32_0 = arith.constant 0 : i32
    %2 = arith.cmpi ne, %1, %c0_i32_0 : i32
    scf.if %2 {
      %c0_31 = arith.constant 0 : index
      %c0_32 = arith.constant 0 : index
      %c0_33 = arith.constant 0 : index
      %47 = vector.load %arg4[%c0_31, %c0_32, %c0_33] : memref<1x256x128xbf16, #tpu.memory_space<vmem>>, vector<1x256x128xbf16>
      %48 = vector.shape_cast %47 : vector<1x256x128xbf16> to vector<256x128xbf16>
      %49 = arith.extf %48 : vector<256x128xbf16> to vector<256x128xf32>
      %50 = arith.mulf %49, %49 : vector<256x128xf32>
      %51 = arith.truncf %50 : vector<256x128xf32> to vector<256x128xbf16>
      %c0_34 = arith.constant 0 : index
      %c0_35 = arith.constant 0 : index
      %52 = vector.load %arg10[%c0_34, %c0_35] : memref<256x128xbf16, #tpu.memory_space<vmem>>, vector<256x128xbf16>
      tpu.vector_store %arg10[%c0_34, %c0_35], %51 {strides = array<i32>} : memref<256x128xbf16, #tpu.memory_space<vmem>>, vector<256x128xbf16>,
    } else {
    }
    %c0 = arith.constant 0 : index
    %c0_1 = arith.constant 0 : index
    %c0_2 = arith.constant 0 : index
    %3 = vector.load %arg2[%c0, %c0_1, %c0_2] : memref<1x256x128xbf16, #tpu.memory_space<vmem>>, vector<1x256x128xbf16>
    %4 = vector.shape_cast %3 : vector<1x256x128xbf16> to vector<256x128xbf16>
    %c0_3 = arith.constant 0 : index
    %c0_4 = arith.constant 0 : index
    %c0_5 = arith.constant 0 : index
    %5 = vector.load %arg3[%c0_3, %c0_4, %c0_5] : memref<1x128x256xbf16, #tpu.memory_space<vmem>>, vector<1x128x256xbf16>
    %6 = vector.shape_cast %5 : vector<1x128x256xbf16> to vector<128x256xbf16>
    %cst = arith.constant dense<0.000000e+00> : vector<256x256xf32>
    %7 = tpu.matmul %4, %6, %cst {dimension_numbers = #tpu.dot_dimension_numbers<[1], [0], [0], [1], [0, 0, 1, 1], [], []>} : vector<256x128xbf16>, vector<128x256xbf16>, vector<256x256xf32> -> vector<256x256xf32>
    %cst_6 = arith.constant dense<0xFF800000> : vector<256xf32>
    %8 = vector.multi_reduction <maximumf>, %7, %cst_6 [1] : vector<256x256xf32> to vector<256xf32>
    %9 = vector.shape_cast %8 : vector<256xf32> to vector<256x1xf32>
    %10 = vector.broadcast %9 : vector<256x1xf32> to vector<256x256xf32>
    %11 = arith.subf %7, %10 : vector<256x256xf32>
    %12 = math.exp %11 : vector<256x256xf32>
    %cst_7 = arith.constant dense<0.000000e+00> : vector<256xf32>
    %13 = vector.multi_reduction <add>, %12, %cst_7 [1] : vector<256x256xf32> to vector<256xf32>
    %14 = vector.shape_cast %13 : vector<256xf32> to vector<256x1xf32>
    %15 = vector.broadcast %14 : vector<256x1xf32> to vector<256x256xf32>
    %16 = arith.divf %12, %15 : vector<256x256xf32>
    %17 = arith.truncf %16 : vector<256x256xf32> to vector<256x256xbf16>
    %c0_8 = arith.constant 0 : index
    %c0_9 = arith.constant 0 : index
    %c0_10 = arith.constant 0 : index
    %18 = vector.load %arg9[%c0_8, %c0_9, %c0_10] : memref<1x256x256xbf16, #tpu.memory_space<vmem>>, vector<1x256x256xbf16>
    %19 = vector.shape_cast %18 : vector<1x256x256xbf16> to vector<256x256xbf16>
    %20 = vector.shape_cast %17 : vector<256x256xbf16> to vector<1x256x256xbf16>
    tpu.vector_store %arg9[%c0_8, %c0_9, %c0_10], %20 {strides = array<i32>} : memref<1x256x256xbf16, #tpu.memory_space<vmem>>, vector<1x256x256xbf16>,
    %21 = arith.truncf %16 : vector<256x256xf32> to vector<256x256xbf16>
    %c0_11 = arith.constant 0 : index
    %c0_12 = arith.constant 0 : index
    %c0_13 = arith.constant 0 : index
    %22 = vector.load %arg4[%c0_11, %c0_12, %c0_13] : memref<1x256x128xbf16, #tpu.memory_space<vmem>>, vector<1x256x128xbf16>
    %23 = vector.shape_cast %22 : vector<1x256x128xbf16> to vector<256x128xbf16>
    %cst_14 = arith.constant dense<0.000000e+00> : vector<256x128xf32>
    %24 = tpu.matmul %21, %23, %cst_14 {dimension_numbers = #tpu.dot_dimension_numbers<[1], [0], [0], [1], [0, 0, 1, 1], [], []>} : vector<256x256xbf16>, vector<256x128xbf16>, vector<256x128xf32> -> vector<256x128xf32>
    %c0_15 = arith.constant 0 : index
    %c0_16 = arith.constant 0 : index
    %25 = vector.load %arg10[%c0_15, %c0_16] : memref<256x128xbf16, #tpu.memory_space<vmem>>, vector<256x128xbf16>
    %cst_17 = arith.constant dense<0.000000e+00> : vector<256x128xf32>
    %26 = tpu.matmul %21, %25, %cst_17 {dimension_numbers = #tpu.dot_dimension_numbers<[1], [0], [0], [1], [0, 0, 1, 1], [], []>} : vector<256x256xbf16>, vector<256x128xbf16>, vector<256x128xf32> -> vector<256x128xf32>
    %27 = arith.mulf %24, %24 : vector<256x128xf32>
    %28 = arith.subf %26, %27 : vector<256x128xf32>
    %cst_18 = arith.constant 0.000000e+00 : f32
    %29 = vector.broadcast %cst_18 : f32 to vector<256x128xf32>
    %30 = arith.maximumf %28, %29 : vector<256x128xf32>
    %31 = math.sqrt %30 : vector<256x128xf32>
    %c0_19 = arith.constant 0 : index
    %c0_20 = arith.constant 0 : index
    %c0_21 = arith.constant 0 : index
    %32 = vector.load %arg5[%c0_19, %c0_20, %c0_21] : memref<1x256x128xf32, #tpu.memory_space<vmem>>, vector<1x256x128xf32>
    %33 = vector.shape_cast %32 : vector<1x256x128xf32> to vector<256x128xf32>
    %c0_22 = arith.constant 0 : index
    %c0_23 = arith.constant 0 : index
    %c0_24 = arith.constant 0 : index
    %34 = vector.load %arg6[%c0_22, %c0_23, %c0_24] : memref<1x1x128xf32, #tpu.memory_space<vmem>>, vector<1x1x128xf32>
    %35 = vector.shape_cast %34 : vector<1x1x128xf32> to vector<1x128xf32>
    %36 = vector.broadcast %35 : vector<1x128xf32> to vector<256x128xf32>
    %37 = arith.subf %33, %36 : vector<256x128xf32>
    %c0_25 = arith.constant 0 : index
    %c0_26 = arith.constant 0 : index
    %c0_27 = arith.constant 0 : index
    %38 = vector.load %arg7[%c0_25, %c0_26, %c0_27] : memref<1x1x128xf32, #tpu.memory_space<vmem>>, vector<1x1x128xf32>
    %39 = vector.shape_cast %38 : vector<1x1x128xf32> to vector<1x128xf32>
    %40 = vector.broadcast %39 : vector<1x128xf32> to vector<256x128xf32>
    %41 = arith.mulf %37, %40 : vector<256x128xf32>
    %42 = arith.mulf %31, %41 : vector<256x128xf32>
    %43 = arith.addf %42, %24 : vector<256x128xf32>
    %c0_28 = arith.constant 0 : index
    %c0_29 = arith.constant 0 : index
    %c0_30 = arith.constant 0 : index
    %44 = vector.load %arg8[%c0_28, %c0_29, %c0_30] : memref<1x256x128xf32, #tpu.memory_space<vmem>>, vector<1x256x128xf32>
    %45 = vector.shape_cast %44 : vector<1x256x128xf32> to vector<256x128xf32>
    %46 = vector.shape_cast %43 : vector<256x128xf32> to vector<1x256x128xf32>
    tpu.vector_store %arg8[%c0_28, %c0_29, %c0_30], %46 {strides = array<i32>} : memref<1x256x128xf32, #tpu.memory_space<vmem>>, vector<1x256x128xf32>,
    return
  }
  func.func @transform_0(%arg0: i32, %arg1: i32) -> (i32, i32, i32) {
    %c0_i32 = arith.constant 0 : i32
    %c0_i32_0 = arith.constant 0 : i32
    return %arg0, %arg1, %c0_i32 : i32, i32, i32
  }
  func.func @transform_1(%arg0: i32, %arg1: i32) -> (i32, i32, i32) {
    %c0_i32 = arith.constant 0 : i32
    %c0_i32_0 = arith.constant 0 : i32
    %c0_i32_1 = arith.constant 0 : i32
    return %arg0, %c0_i32, %c0_i32_0 : i32, i32, i32
  }
  func.func @transform_2(%arg0: i32, %arg1: i32) -> (i32, i32, i32) {
    %c0_i32 = arith.constant 0 : i32
    %c0_i32_0 = arith.constant 0 : i32
    %c0_i32_1 = arith.constant 0 : i32
    return %arg0, %c0_i32, %c0_i32_0 : i32, i32, i32
  }
  func.func @transform_3(%arg0: i32, %arg1: i32) -> (i32, i32, i32) {
    %c0_i32 = arith.constant 0 : i32
    %c0_i32_0 = arith.constant 0 : i32
    return %arg0, %arg1, %c0_i32 : i32, i32, i32
  }
  func.func @transform_4(%arg0: i32, %arg1: i32) -> (i32, i32, i32) {
    %c0_i32 = arith.constant 0 : i32
    %c0_i32_0 = arith.constant 0 : i32
    %c0_i32_1 = arith.constant 0 : i32
    return %arg0, %c0_i32, %c0_i32_0 : i32, i32, i32
  }
  func.func @transform_5(%arg0: i32, %arg1: i32) -> (i32, i32, i32) {
    %c0_i32 = arith.constant 0 : i32
    %c0_i32_0 = arith.constant 0 : i32
    %c0_i32_1 = arith.constant 0 : i32
    return %arg0, %c0_i32, %c0_i32_0 : i32, i32, i32
  }
  func.func @transform_6(%arg0: i32, %arg1: i32) -> (i32, i32, i32) {
    %c0_i32 = arith.constant 0 : i32
    %c0_i32_0 = arith.constant 0 : i32
    return %arg0, %arg1, %c0_i32 : i32, i32, i32
  }
  func.func @transform_7(%arg0: i32, %arg1: i32) -> (i32, i32, i32) {
    %c0_i32 = arith.constant 0 : i32
    %c0_i32_0 = arith.constant 0 : i32
    return %arg0, %arg1, %c0_i32 : i32, i32, i32
  }
}

module attributes {stable_mosaic.version = 11 : i64} {
  func.func @_content_stats_kernel(%arg0: i32, %arg1: memref<1x256x128xf32, #tpu.memory_space<vmem>>, %arg2: memref<1x1x128xf32, #tpu.memory_space<vmem>>, %arg3: memref<1x1x128xf32, #tpu.memory_space<vmem>>) attributes {dimension_semantics = [#tpu.dimension_semantics<parallel>], iteration_bounds = array<i64: 2>, scalar_prefetch = 0 : i64, scratch_operands = 0 : i64, tpu.core_type = #tpu.core_type<tc>, window_params = [{transform_indices = @transform_0, window_bounds = array<i64: 1, 256, 128>}, {transform_indices = @transform_1, window_bounds = array<i64: 1, 1, 128>}, {transform_indices = @transform_2, window_bounds = array<i64: 1, 1, 128>}]} {
    %c0 = arith.constant 0 : index
    %c0_0 = arith.constant 0 : index
    %c0_1 = arith.constant 0 : index
    %0 = vector.load %arg1[%c0, %c0_0, %c0_1] : memref<1x256x128xf32, #tpu.memory_space<vmem>>, vector<1x256x128xf32>
    %1 = vector.shape_cast %0 : vector<1x256x128xf32> to vector<256x128xf32>
    %cst = arith.constant dense<0.000000e+00> : vector<128xf32>
    %2 = vector.multi_reduction <add>, %1, %cst [0] : vector<256x128xf32> to vector<128xf32>
    %3 = vector.shape_cast %2 : vector<128xf32> to vector<1x128xf32>
    %cst_2 = arith.constant 2.560000e+02 : f32
    %4 = vector.broadcast %cst_2 : f32 to vector<1x128xf32>
    %5 = arith.divf %3, %4 : vector<1x128xf32>
    %6 = vector.broadcast %5 : vector<1x128xf32> to vector<256x128xf32>
    %7 = arith.subf %1, %6 : vector<256x128xf32>
    %8 = arith.mulf %7, %7 : vector<256x128xf32>
    %cst_3 = arith.constant dense<0.000000e+00> : vector<128xf32>
    %9 = vector.multi_reduction <add>, %8, %cst_3 [0] : vector<256x128xf32> to vector<128xf32>
    %10 = vector.shape_cast %9 : vector<128xf32> to vector<1x128xf32>
    %cst_4 = arith.constant 0.00392156886 : f32
    %11 = vector.broadcast %cst_4 : f32 to vector<1x128xf32>
    %12 = arith.mulf %10, %11 : vector<1x128xf32>
    %c0_5 = arith.constant 0 : index
    %c0_6 = arith.constant 0 : index
    %c0_7 = arith.constant 0 : index
    %13 = vector.load %arg2[%c0_5, %c0_6, %c0_7] : memref<1x1x128xf32, #tpu.memory_space<vmem>>, vector<1x1x128xf32>
    %14 = vector.shape_cast %13 : vector<1x1x128xf32> to vector<1x128xf32>
    %15 = vector.shape_cast %5 : vector<1x128xf32> to vector<1x1x128xf32>
    tpu.vector_store %arg2[%c0_5, %c0_6, %c0_7], %15 {strides = array<i32>} : memref<1x1x128xf32, #tpu.memory_space<vmem>>, vector<1x1x128xf32>,
    %cst_8 = arith.constant 9.99999974E-6 : f32
    %16 = vector.broadcast %cst_8 : f32 to vector<1x128xf32>
    %17 = arith.addf %12, %16 : vector<1x128xf32>
    %18 = math.rsqrt %17 : vector<1x128xf32>
    %c0_9 = arith.constant 0 : index
    %c0_10 = arith.constant 0 : index
    %c0_11 = arith.constant 0 : index
    %19 = vector.load %arg3[%c0_9, %c0_10, %c0_11] : memref<1x1x128xf32, #tpu.memory_space<vmem>>, vector<1x1x128xf32>
    %20 = vector.shape_cast %19 : vector<1x1x128xf32> to vector<1x128xf32>
    %21 = vector.shape_cast %18 : vector<1x128xf32> to vector<1x1x128xf32>
    tpu.vector_store %arg3[%c0_9, %c0_10, %c0_11], %21 {strides = array<i32>} : memref<1x1x128xf32, #tpu.memory_space<vmem>>, vector<1x1x128xf32>,
    return
  }
  func.func @transform_0(%arg0: i32) -> (i32, i32, i32) {
    %c0_i32 = arith.constant 0 : i32
    %c0_i32_0 = arith.constant 0 : i32
    %c0_i32_1 = arith.constant 0 : i32
    return %arg0, %c0_i32, %c0_i32_0 : i32, i32, i32
  }
  func.func @transform_1(%arg0: i32) -> (i32, i32, i32) {
    %c0_i32 = arith.constant 0 : i32
    %c0_i32_0 = arith.constant 0 : i32
    %c0_i32_1 = arith.constant 0 : i32
    return %arg0, %c0_i32, %c0_i32_0 : i32, i32, i32
  }
  func.func @transform_2(%arg0: i32) -> (i32, i32, i32) {
    %c0_i32 = arith.constant 0 : i32
    %c0_i32_0 = arith.constant 0 : i32
    %c0_i32_1 = arith.constant 0 : i32
    return %arg0, %c0_i32, %c0_i32_0 : i32, i32, i32
  }
}

module attributes {stable_mosaic.version = 11 : i64} {
  func.func @_matmul_bias_kernel(%arg0: i32, %arg1: memref<256x256xbf16, #tpu.memory_space<vmem>>, %arg2: memref<256x128xbf16, #tpu.memory_space<vmem>>, %arg3: memref<1x128xf32, #tpu.memory_space<vmem>>, %arg4: memref<256x128xf32, #tpu.memory_space<vmem>>) attributes {dimension_semantics = [#tpu.dimension_semantics<parallel>], iteration_bounds = array<i64: 2>, scalar_prefetch = 0 : i64, scratch_operands = 0 : i64, tpu.core_type = #tpu.core_type<tc>, window_params = [{transform_indices = @transform_0, window_bounds = array<i64: 256, 256>}, {pipeline_mode = #tpu.pipeline_mode<synchronous>, transform_indices = @transform_1, window_bounds = array<i64: 256, 128>}, {pipeline_mode = #tpu.pipeline_mode<synchronous>, transform_indices = @transform_2, window_bounds = array<i64: 1, 128>}, {transform_indices = @transform_3, window_bounds = array<i64: 256, 128>}]} {
    %c0 = arith.constant 0 : index
    %c0_0 = arith.constant 0 : index
    %0 = vector.load %arg1[%c0, %c0_0] : memref<256x256xbf16, #tpu.memory_space<vmem>>, vector<256x256xbf16>
    %c0_1 = arith.constant 0 : index
    %c0_2 = arith.constant 0 : index
    %1 = vector.load %arg2[%c0_1, %c0_2] : memref<256x128xbf16, #tpu.memory_space<vmem>>, vector<256x128xbf16>
    %cst = arith.constant dense<0.000000e+00> : vector<256x128xf32>
    %2 = tpu.matmul %0, %1, %cst {dimension_numbers = #tpu.dot_dimension_numbers<[1], [0], [0], [1], [0, 0, 1, 1], [], []>} : vector<256x256xbf16>, vector<256x128xbf16>, vector<256x128xf32> -> vector<256x128xf32>
    %c0_3 = arith.constant 0 : index
    %c0_4 = arith.constant 0 : index
    %3 = vector.load %arg3[%c0_3, %c0_4] : memref<1x128xf32, #tpu.memory_space<vmem>>, vector<1x128xf32>
    %4 = vector.broadcast %3 : vector<1x128xf32> to vector<256x128xf32>
    %5 = arith.addf %2, %4 : vector<256x128xf32>
    %c0_5 = arith.constant 0 : index
    %c0_6 = arith.constant 0 : index
    %6 = vector.load %arg4[%c0_5, %c0_6] : memref<256x128xf32, #tpu.memory_space<vmem>>, vector<256x128xf32>
    tpu.vector_store %arg4[%c0_5, %c0_6], %5 {strides = array<i32>} : memref<256x128xf32, #tpu.memory_space<vmem>>, vector<256x128xf32>,
    return
  }
  func.func @transform_0(%arg0: i32) -> (i32, i32) {
    %c0_i32 = arith.constant 0 : i32
    %c0_i32_0 = arith.constant 0 : i32
    return %arg0, %c0_i32 : i32, i32
  }
  func.func @transform_1(%arg0: i32) -> (i32, i32) {
    %c0_i32 = arith.constant 0 : i32
    %c0_i32_0 = arith.constant 0 : i32
    %c0_i32_1 = arith.constant 0 : i32
    return %c0_i32, %c0_i32_0 : i32, i32
  }
  func.func @transform_2(%arg0: i32) -> (i32, i32) {
    %c0_i32 = arith.constant 0 : i32
    %c0_i32_0 = arith.constant 0 : i32
    %c0_i32_1 = arith.constant 0 : i32
    return %c0_i32, %c0_i32_0 : i32, i32
  }
  func.func @transform_3(%arg0: i32) -> (i32, i32) {
    %c0_i32 = arith.constant 0 : i32
    %c0_i32_0 = arith.constant 0 : i32
    return %arg0, %c0_i32 : i32, i32
  }
}

</mosaic_0001>

<llo_original>
// kernel: transformer_forward.19
$region0: #{transformer_forward.19}
  #allocation0 [shape = 'u32[]', space=smem, size = 0x4, offset = 0x4, fixed_abs, tag = 'smem constant byte address 0x4 - core index']
  #allocation1 [shape = 'u32[144,128]{1,0:T(1,128)}', space=vmem, size = 0x12000, scoped, tag = 'internal scratch']
  %s0 = inlined_call_operand.vmem [shape: f32[2,64,128], index: 0, kind: input, shape index: {}]
  %s1 = inlined_call_operand.vmem [shape: f32[2,1,128], index: 1, kind: output, shape index: {0}]
  %s2 = inlined_call_operand.vmem [shape: f32[2,1,128], index: 2, kind: output, shape index: {1}]
  %3 = xla_tuple %s1, %s2
  %s4 = sld [smem:[#allocation0]]
  $region45: #{transformer_forward.19} parent=0
    _
  %s6 = ssub.s32 1, %s4
  %s7 = scalar_select 0, %s6, %s4
  loop: start=0, step=1, limit=4
  $region2: #{transformer_forward.19} parent=0 // loop_pre_header
    _
  $region3: #{transformer_forward.19} parent=0 // loop_header
    %s9 = sphi 0, %s13
    %p10 = scmp.ge.s32.totalorder %s9, 4
    %s19 = sphi 0, %s21
    %s22 = sphi 0, %s19
    %s23 = sphi 0, %s22
    %s39 = sphi 0, %s23
    %s45 = sphi 0, %s47
    %s48 = sphi 0, %s45
    %s49 = sphi 0, %s48
    %s65 = sphi 0, %s49
    %s71 = sphi 0, %s73
    %s74 = sphi 0, %s71
    %s75 = sphi 0, %s74
    %s91 = sphi 0, %s75
  $region4: #{transformer_forward.19} parent=0 // loop_header_branch
    %12 = sbr.rel (%p10) target = $region8
  $region5: #{transformer_forward.19} parent=0 // loop_body
    %s14 = ssub.s32 %s9, 1
    %s15 = ssub.s32 %s9, 2
    %s16 = sadd.s32 %s9, 1
    %s17 = ssub.s32 %s9, %s16
    %p18 = scmp.eq.s32.totalorder %s17, 0
    %s20 = sadd.s32 %s19, 1
    %s21 = scalar_select %p18, %s19, %s20
    %p24 = pneg %p18
    %p25 = scmp.eq.s32.totalorder %s9, 1
    %p26 = por %p24, %p25
    %p27 = scmp.ne.s32.totalorder %s19, %s22
    %p28 = scmp.eq.s32.totalorder %s9, 0
    %p29 = por %p27, %p28
    %p30 = scmp.ne.s32.totalorder %s19, %s22
    %p31 = scmp.eq.s32.totalorder %s14, 1
    %p32 = por %p30, %p31
    %p33 = scmp.ne.s32.totalorder %s22, %s23
    %p34 = scmp.eq.s32.totalorder %s14, 0
    %p35 = por %p33, %p34
    %p36 = scmp.ne.s32.totalorder %s22, %s23
    %p37 = scmp.eq.s32.totalorder %s15, 1
    %p38 = por %p36, %p37
    %p40 = scmp.ne.s32.totalorder %s23, %s39
    %p41 = scmp.eq.s32.totalorder %s15, 0
    %p42 = por %p40, %p41
    %s43 = ssub.s32 %s9, %s16
    %p44 = scmp.eq.s32.totalorder %s43, 0
    %s46 = sadd.s32 %s45, 1
    %s47 = scalar_select %p44, %s45, %s46
    %p50 = pneg %p44
    %p51 = scmp.eq.s32.totalorder %s9, 1
    %p52 = por %p50, %p51
    %p53 = scmp.ne.s32.totalorder %s45, %s48
    %p54 = scmp.eq.s32.totalorder %s9, 0
    %p55 = por %p53, %p54
    %p56 = scmp.ne.s32.totalorder %s45, %s48
    %p57 = scmp.eq.s32.totalorder %s14, 1
    %p58 = por %p56, %p57
    %p59 = scmp.ne.s32.totalorder %s48, %s49
    %p60 = scmp.eq.s32.totalorder %s14, 0
    %p61 = por %p59, %p60
    %p62 = scmp.ne.s32.totalorder %s48, %s49
    %p63 = scmp.eq.s32.totalorder %s15, 1
    %p64 = por %p62, %p63
    %p66 = scmp.ne.s32.totalorder %s49, %s65
    %p67 = scmp.eq.s32.totalorder %s15, 0
    %p68 = por %p66, %p67
    %s69 = ssub.s32 %s9, %s16
    %p70 = scmp.eq.s32.totalorder %s69, 0
    %s72 = sadd.s32 %s71, 1
    %s73 = scalar_select %p70, %s71, %s72
    %p76 = pneg %p70
    %p77 = scmp.eq.s32.totalorder %s9, 1
    %p78 = por %p76, %p77
    %p79 = scmp.ne.s32.totalorder %s71, %s74
    %p80 = scmp.eq.s32.totalorder %s9, 0
    %p81 = por %p79, %p80
    %p82 = scmp.ne.s32.totalorder %s71, %s74
    %p83 = scmp.eq.s32.totalorder %s14, 1
    %p84 = por %p82, %p83
    %p85 = scmp.ne.s32.totalorder %s74, %s75
    %p86 = scmp.eq.s32.totalorder %s14, 0
    %p87 = por %p85, %p86
    %p88 = scmp.ne.s32.totalorder %s74, %s75
    %p89 = scmp.eq.s32.totalorder %s15, 1
    %p90 = por %p88, %p89
    %p92 = scmp.ne.s32.totalorder %s75, %s91
    %p93 = scmp.eq.s32.totalorder %s15, 0
    %p94 = por %p92, %p93
    %p95 = scmp.le.s32.totalorder 1, %s9
    %p96 = scmp.lt.s32.totalorder %s9, 3
    %p97 = pnand %p95, %p96
    %p98 = pneg %p97
    // Predicated region
    $region9: #{transformer_forward.19} parent=5 // pred_check
      _
    $region10: #{transformer_forward.19} parent=5 // pred_check_branch
      %100 = sbr.rel (%p97) target = $region12
    $region11: #{transformer_forward.19} parent=5 // pred_region
      %s101 = ssub.s32 %s9, 1
    $region12: #{transformer_forward.19} parent=5 // pred_fallthru
      _
    %p102 = scmp.lt.s32.totalorder %s9, 2
    // Predicated region
    $region13: #{transformer_forward.19} parent=5 // pred_check
      %p103 = pneg %p102
    $region14: #{transformer_forward.19} parent=5 // pred_check_branch
      %105 = sbr.rel (%p103) target = $region16
    $region15: #{transformer_forward.19} parent=5 // pred_region
      // Predicated region
      $region17: #{transformer_forward.19} parent=15 // pred_check
        %p106 = pneg %p29
      $region18: #{transformer_forward.19} parent=15 // pred_check_branch
        %108 = sbr.rel (%p106) target = $region20
      $region19: #{transformer_forward.19} parent=15 // pred_region
        %p109 = scmp.lt.s32.totalorder %s9, 1
        %s110 = scalar_select %p109, %s9, 1
        %s111 = smul.addr %s110, 8
        %s112 = smul.addr %s111, 8
        %s113 = scalar_lea.vmem %s0, %s112
      $region20: #{transformer_forward.19} parent=15 // pred_fallthru
        _
    $region16: #{transformer_forward.19} parent=5 // pred_fallthru
      _
    %p114 = scmp.le.s32.totalorder 1, %s9
    %p115 = scmp.lt.s32.totalorder %s9, 3
    %p116 = pnand %p114, %p115
    %p117 = pneg %p116
    // Predicated region
    $region21: #{transformer_forward.19} parent=5 // pred_check
      _
    $region22: #{transformer_forward.19} parent=5 // pred_check_branch
      %119 = sbr.rel (%p116) target = $region24
    $region23: #{transformer_forward.19} parent=5 // pred_region
      %s120 = ssub.s32 %s9, 1
      %p121 = scmp.lt.s32.totalorder %s14, 1
      %s122 = scalar_select %p121, %s14, 1
      %s123 = smul.addr %s122, 8
      %s124 = smul.addr %s123, 8
      %s125 = scalar_lea.vmem %s0, %s124
      %p126 = pneg %p35
      %p127 = pneg %p32
      %p128 = pneg %p61
      %p129 = pneg %p58
      %p130 = scmp.lt.s32.totalorder %s14, 1
      %s131 = scalar_select %p130, %s14, 1
      %s132 = scalar_lea.vmem %s1, %s131
      %p133 = pneg %p87
      %p134 = pneg %p84
      %p135 = scmp.lt.s32.totalorder %s14, 1
      %s136 = scalar_select %p135, %s14, 1
      %s137 = scalar_lea.vmem %s2, %s136
      %p138 = scmp.lt.s32.totalorder %s14, 1
      %s139 = scalar_select %p138, %s14, 1
      %s140 = smul.addr %s139, 8
      %s141 = smul.addr %s140, 8
      %s142 = scalar_lea.vmem %s0, %s141
      %p143 = scmp.lt.s32.totalorder %s14, 1
      %s144 = scalar_select %p143, %s14, 1
      %s145 = scalar_lea.vmem %s1, %s144
      %p146 = scmp.lt.s32.totalorder %s14, 1
      %s147 = scalar_select %p146, %s14, 1
      %s148 = scalar_lea.vmem %s2, %s147
      %v149 = vld [vmem:[%s142] sm:$0xff]
      %v150 = vld [vmem:[%s142 + $0x8] sm:$0xff]
      %v151 = vld [vmem:[%s142 + $0x10] sm:$0xff]
      %v152 = vld [vmem:[%s142 + $0x18] sm:$0xff]
      %v153 = vld [vmem:[%s142 + $0x20] sm:$0xff]
      %v154 = vld [vmem:[%s142 + $0x28] sm:$0xff]
      %v155 = vld [vmem:[%s142 + $0x30] sm:$0xff]
      %v156 = vld [vmem:[%s142 + $0x38] sm:$0xff]
      %v157 = vadd.f32 %v149, %v150
      %v158 = vadd.f32 %v157, %v151
      %v159 = vadd.f32 %v158, %v152
      %v160 = vadd.f32 %v159, %v153
      %v161 = vadd.f32 %v160, %v154
      %v162 = vadd.f32 %v161, %v155
      %v163 = vadd.f32 %v162, %v156
      %v164 = vrot.slane %v163, 4
      %v165 = vadd.f32 %v163, %v164
      %v166 = vrot.slane %v165, 2
      %v167 = vadd.f32 %v165, %v166
      %v168 = vrot.slane %v167, 1
      %v169 = vadd.f32 %v167, %v168
      %v170 = vrcp.pop 64.0
      %v171 = vmul.f32 %v169, %v170
      %v172 = vsub.f32 %v149, %v171
      %v173 = vsub.f32 %v150, %v171
      %v174 = vsub.f32 %v151, %v171
      %v175 = vsub.f32 %v152, %v171
      %v176 = vsub.f32 %v153, %v171
      %v177 = vsub.f32 %v154, %v171
      %v178 = vsub.f32 %v155, %v171
      %v179 = vsub.f32 %v156, %v171
      %v180 = vmul.f32 %v172, %v172
      %v181 = vmul.f32 %v173, %v173
      %v182 = vmul.f32 %v174, %v174
      %v183 = vmul.f32 %v175, %v175
      %v184 = vmul.f32 %v176, %v176
      %v185 = vmul.f32 %v177, %v177
      %v186 = vmul.f32 %v178, %v178
      %v187 = vmul.f32 %v179, %v179
      %v188 = vadd.f32 %v180, %v181
      %v189 = vadd.f32 %v188, %v182
      %v190 = vadd.f32 %v189, %v183
      %v191 = vadd.f32 %v190, %v184
      %v192 = vadd.f32 %v191, %v185
      %v193 = vadd.f32 %v192, %v186
      %v194 = vadd.f32 %v193, %v187
      %v195 = vrot.slane %v194, 4
      %v196 = vadd.f32 %v194, %v195
      %v197 = vrot.slane %v196, 2
      %v198 = vadd.f32 %v196, %v197
      %v199 = vrot.slane %v198, 1
      %v200 = vadd.f32 %v198, %v199
      %v201 = vmul.f32 %v200, 0.015873017
      %202 = vst [vmem:[%s145] sm:$0x1] %v171
      %v203 = vadd.f32 %v201, 1e-05
      %v204 = vrsqrt.pop %v203
      %205 = vst [vmem:[%s148] sm:$0x1] %v204
      %p206 = scmp.lt.s32.totalorder %s14, 1
      %s207 = scalar_select %p206, %s14, 1
      %s208 = scalar_lea.vmem %s1, %s207
      %p209 = scmp.lt.s32.totalorder %s14, 1
      %s210 = scalar_select %p209, %s14, 1
      %s211 = scalar_lea.vmem %s2, %s210
      // Predicated region
      $region25: #{transformer_forward.19} parent=23 // pred_check
        %p212 = pneg %p58
      $region26: #{transformer_forward.19} parent=23 // pred_check_branch
        %214 = sbr.rel (%p212) target = $region28
      $region27: #{transformer_forward.19} parent=23 // pred_region
        _
      $region28: #{transformer_forward.19} parent=23 // pred_fallthru
        _
      // Predicated region
      $region29: #{transformer_forward.19} parent=23 // pred_check
        %p215 = pneg %p84
      $region30: #{transformer_forward.19} parent=23 // pred_check_branch
        %217 = sbr.rel (%p215) target = $region32
      $region31: #{transformer_forward.19} parent=23 // pred_region
        _
      $region32: #{transformer_forward.19} parent=23 // pred_fallthru
        _
    $region24: #{transformer_forward.19} parent=5 // pred_fallthru
      _
    %p218 = scmp.le.s32.totalorder 2, %s9
    // Predicated region
    $region33: #{transformer_forward.19} parent=5 // pred_check
      %p219 = pneg %p218
    $region34: #{transformer_forward.19} parent=5 // pred_check_branch
      %221 = sbr.rel (%p219) target = $region36
    $region35: #{transformer_forward.19} parent=5 // pred_region
      %s222 = ssub.s32 %s9, 2
      // Predicated region
      $region37: #{transformer_forward.19} parent=35 // pred_check
        %p223 = pneg %p64
      $region38: #{transformer_forward.19} parent=35 // pred_check_branch
        %225 = sbr.rel (%p223) target = $region40
      $region39: #{transformer_forward.19} parent=35 // pred_region
        %p226 = scmp.lt.s32.totalorder %s15, 1
        %s227 = scalar_select %p226, %s15, 1
        %s228 = scalar_lea.vmem %s1, %s227
      $region40: #{transformer_forward.19} parent=35 // pred_fallthru
        _
      // Predicated region
      $region41: #{transformer_forward.19} parent=35 // pred_check
        %p229 = pneg %p90
      $region42: #{transformer_forward.19} parent=35 // pred_check_branch
        %231 = sbr.rel (%p229) target = $region44
      $region43: #{transformer_forward.19} parent=35 // pred_region
        %p232 = scmp.lt.s32.totalorder %s15, 1
        %s233 = scalar_select %p232, %s15, 1
        %s234 = scalar_lea.vmem %s2, %s233
      $region44: #{transformer_forward.19} parent=35 // pred_fallthru
        _
    $region36: #{transformer_forward.19} parent=5 // pred_fallthru
      _
  $region6: #{transformer_forward.19} parent=0 // loop_footer
    %s13 = sadd.s32 1, %s9
  $region7: #{transformer_forward.19} parent=0 // loop_footer_branch
    %8 = sbr.rel target = $region3
  $region8: #{transformer_forward.19} parent=0 // loop_exit
    _

// kernel: transformer_forward.18
$region0: #{transformer_forward.18}
  #allocation0 [shape = 'u32[]', space=smem, size = 0x4, offset = 0x4, fixed_abs, tag = 'smem constant byte address 0x4 - core index']
  #allocation1 [shape = 'u32[144,128]{1,0:T(1,128)}', space=vmem, size = 0x12000, scoped, tag = 'internal scratch']
  %s0 = inlined_call_operand.vmem [shape: bf16[128,128], index: 0, kind: input, shape index: {}]
  %s1 = inlined_call_operand.vmem [shape: bf16[128,128], index: 1, kind: input, shape index: {}]
  %s2 = inlined_call_operand.vmem [shape: f32[1,128], index: 2, kind: input, shape index: {}]
  %s3 = inlined_call_operand.vmem [shape: bf16[128,128], index: 3, kind: output, shape index: {}]
  %s4 = sld [smem:[#allocation0]]
  $region45: #{transformer_forward.18} parent=0
    _
  %s6 = ssub.s32 1, %s4
  %s7 = scalar_select 0, %s6, %s4
  loop: start=0, step=1, limit=4
  $region2: #{transformer_forward.18} parent=0 // loop_pre_header
    _
  $region3: #{transformer_forward.18} parent=0 // loop_header
    %s9 = sphi 0, %s13
    %p10 = scmp.ge.s32.totalorder %s9, 4
    %s19 = sphi 0, %s21
    %s22 = sphi 0, %s19
    %s23 = sphi 0, %s22
    %s39 = sphi 0, %s23
    %s43 = sphi 0, %s43
    %s45 = sphi 0, %s43
    %s46 = sphi 0, %s45
    %s60 = sphi 0, %s46
    %s64 = sphi 0, %s64
    %s66 = sphi 0, %s64
    %s67 = sphi 0, %s66
    %s81 = sphi 0, %s67
    %s87 = sphi 0, %s89
    %s90 = sphi 0, %s87
    %s91 = sphi 0, %s90
    %s107 = sphi 0, %s91
  $region4: #{transformer_forward.18} parent=0 // loop_header_branch
    %12 = sbr.rel (%p10) target = $region8
  $region5: #{transformer_forward.18} parent=0 // loop_body
    %s14 = ssub.s32 %s9, 1
    %s15 = ssub.s32 %s9, 2
    %s16 = sadd.s32 %s9, 1
    %s17 = ssub.s32 %s9, %s16
    %p18 = scmp.eq.s32.totalorder %s17, 0
    %s20 = sadd.s32 %s19, 1
    %s21 = scalar_select %p18, %s19, %s20
    %p24 = pneg %p18
    %p25 = scmp.eq.s32.totalorder %s9, 1
    %p26 = por %p24, %p25
    %p27 = scmp.ne.s32.totalorder %s19, %s22
    %p28 = scmp.eq.s32.totalorder %s9, 0
    %p29 = por %p27, %p28
    %p30 = scmp.ne.s32.totalorder %s19, %s22
    %p31 = scmp.eq.s32.totalorder %s14, 1
    %p32 = por %p30, %p31
    %p33 = scmp.ne.s32.totalorder %s22, %s23
    %p34 = scmp.eq.s32.totalorder %s14, 0
    %p35 = por %p33, %p34
    %p36 = scmp.ne.s32.totalorder %s22, %s23
    %p37 = scmp.eq.s32.totalorder %s15, 1
    %p38 = por %p36, %p37
    %p40 = scmp.ne.s32.totalorder %s23, %s39
    %p41 = scmp.eq.s32.totalorder %s15, 0
    %p42 = por %p40, %p41
    %s44 = sadd.s32 %s43, 1
    %p47 = scmp.eq.s32.totalorder %s9, 1
    %p48 = scmp.ne.s32.totalorder %s43, %s45
    %p49 = scmp.eq.s32.totalorder %s9, 0
    %p50 = por %p48, %p49
    %p51 = scmp.ne.s32.totalorder %s43, %s45
    %p52 = scmp.eq.s32.totalorder %s14, 1
    %p53 = por %p51, %p52
    %p54 = scmp.ne.s32.totalorder %s45, %s46
    %p55 = scmp.eq.s32.totalorder %s14, 0
    %p56 = por %p54, %p55
    %p57 = scmp.ne.s32.totalorder %s45, %s46
    %p58 = scmp.eq.s32.totalorder %s15, 1
    %p59 = por %p57, %p58
    %p61 = scmp.ne.s32.totalorder %s46, %s60
    %p62 = scmp.eq.s32.totalorder %s15, 0
    %p63 = por %p61, %p62
    %s65 = sadd.s32 %s64, 1
    %p68 = scmp.eq.s32.totalorder %s9, 1
    %p69 = scmp.ne.s32.totalorder %s64, %s66
    %p70 = scmp.eq.s32.totalorder %s9, 0
    %p71 = por %p69, %p70
    %p72 = scmp.ne.s32.totalorder %s64, %s66
    %p73 = scmp.eq.s32.totalorder %s14, 1
    %p74 = por %p72, %p73
    %p75 = scmp.ne.s32.totalorder %s66, %s67
    %p76 = scmp.eq.s32.totalorder %s14, 0
    %p77 = por %p75, %p76
    %p78 = scmp.ne.s32.totalorder %s66, %s67
    %p79 = scmp.eq.s32.totalorder %s15, 1
    %p80 = por %p78, %p79
    %p82 = scmp.ne.s32.totalorder %s67, %s81
    %p83 = scmp.eq.s32.totalorder %s15, 0
    %p84 = por %p82, %p83
    %s85 = ssub.s32 %s9, %s16
    %p86 = scmp.eq.s32.totalorder %s85, 0
    %s88 = sadd.s32 %s87, 1
    %s89 = scalar_select %p86, %s87, %s88
    %p92 = pneg %p86
    %p93 = scmp.eq.s32.totalorder %s9, 1
    %p94 = por %p92, %p93
    %p95 = scmp.ne.s32.totalorder %s87, %s90
    %p96 = scmp.eq.s32.totalorder %s9, 0
    %p97 = por %p95, %p96
    %p98 = scmp.ne.s32.totalorder %s87, %s90
    %p99 = scmp.eq.s32.totalorder %s14, 1
    %p100 = por %p98, %p99
    %p101 = scmp.ne.s32.totalorder %s90, %s91
    %p102 = scmp.eq.s32.totalorder %s14, 0
    %p103 = por %p101, %p102
    %p104 = scmp.ne.s32.totalorder %s90, %s91
    %p105 = scmp.eq.s32.totalorder %s15, 1
    %p106 = por %p104, %p105
    %p108 = scmp.ne.s32.totalorder %s91, %s107
    %p109 = scmp.eq.s32.totalorder %s15, 0
    %p110 = por %p108, %p109
    %p111 = scmp.le.s32.totalorder 1, %s9
    %p112 = scmp.lt.s32.totalorder %s9, 3
    %p113 = pnand %p111, %p112
    %p114 = pneg %p113
    // Predicated region
    $region9: #{transformer_forward.18} parent=5 // pred_check
      _
    $region10: #{transformer_forward.18} parent=5 // pred_check_branch
      %116 = sbr.rel (%p113) target = $region12
    $region11: #{transformer_forward.18} parent=5 // pred_region
      %s117 = ssub.s32 %s9, 1
      // Predicated region
      $region13: #{transformer_forward.18} parent=11 // pred_check
        %p118 = pneg %p56
      $region14: #{transformer_forward.18} parent=11 // pred_check_branch
        %120 = sbr.rel (%p118) target = $region16
      $region15: #{transformer_forward.18} parent=11 // pred_region
        _
      $region16: #{transformer_forward.18} parent=11 // pred_fallthru
        _
      // Predicated region
      $region17: #{transformer_forward.18} parent=11 // pred_check
        %p121 = pneg %p77
      $region18: #{transformer_forward.18} parent=11 // pred_check_branch
        %123 = sbr.rel (%p121) target = $region20
      $region19: #{transformer_forward.18} parent=11 // pred_region
        _
      $region20: #{transformer_forward.18} parent=11 // pred_fallthru
        _
    $region12: #{transformer_forward.18} parent=5 // pred_fallthru
      _
    %p124 = scmp.lt.s32.totalorder %s9, 2
    // Predicated region
    $region21: #{transformer_forward.18} parent=5 // pred_check
      %p125 = pneg %p124
    $region22: #{transformer_forward.18} parent=5 // pred_check_branch
      %127 = sbr.rel (%p125) target = $region24
    $region23: #{transformer_forward.18} parent=5 // pred_region
      // Predicated region
      $region25: #{transformer_forward.18} parent=23 // pred_check
        %p128 = pneg %p29
      $region26: #{transformer_forward.18} parent=23 // pred_check_branch
        %130 = sbr.rel (%p128) target = $region28
      $region27: #{transformer_forward.18} parent=23 // pred_region
        %s131 = smul.u32 8, %s9
        %p132 = scmp.lt.s32.totalorder %s131, 15
        %s133 = scalar_select %p132, %s131, 15
        %s134 = smul.addr %s133, 4
        %s135 = scalar_lea.vmem %s0, %s134
        %s136 = smul.u32 8, %s9
      $region28: #{transformer_forward.18} parent=23 // pred_fallthru
        _
    $region24: #{transformer_forward.18} parent=5 // pred_fallthru
      _
    %p137 = scmp.le.s32.totalorder 1, %s9
    %p138 = scmp.lt.s32.totalorder %s9, 3
    %p139 = pnand %p137, %p138
    %p140 = pneg %p139
    // Predicated region
    $region29: #{transformer_forward.18} parent=5 // pred_check
      _
    $region30: #{transformer_forward.18} parent=5 // pred_check_branch
      %142 = sbr.rel (%p139) target = $region32
    $region31: #{transformer_forward.18} parent=5 // pred_region
      %s143 = ssub.s32 %s9, 1
      %s144 = smul.u32 8, %s14
      %p145 = scmp.lt.s32.totalorder %s144, 15
      %s146 = scalar_select %p145, %s144, 15
      %s147 = smul.addr %s146, 4
      %s148 = scalar_lea.vmem %s0, %s147
      %p149 = pneg %p35
      %p150 = pneg %p32
      %p151 = pneg %p56
      %p152 = pneg %p53
      %p153 = pneg %p77
      %p154 = pneg %p74
      %p155 = pneg %p103
      %p156 = pneg %p100
      %s157 = smul.u32 8, %s14
      %p158 = scmp.lt.s32.totalorder %s157, 15
      %s159 = scalar_select %p158, %s157, 15
      %s160 = smul.addr %s159, 4
      %s161 = scalar_lea.vmem %s3, %s160
      %s162 = smul.u32 8, %s14
      %p163 = scmp.lt.s32.totalorder %s162, 15
      %s164 = scalar_select %p163, %s162, 15
      %s165 = smul.addr %s164, 4
      %s166 = scalar_lea.vmem %s0, %s165
      %s167 = smul.u32 8, %s14
      %s168 = smul.u32 8, %s14
      %p169 = scmp.lt.s32.totalorder %s168, 15
      %s170 = scalar_select %p169, %s168, 15
      %s171 = smul.addr %s170, 4
      %s172 = scalar_lea.vmem %s3, %s171
      %s173 = smul.u32 8, %s14
      %v175 = vld [vmem:[%s166] sm:$0xf]
      %v176 = vld [vmem:[%s166 + $0x4] sm:$0xf]
      %v177 = vld [vmem:[%s166 + $0x8] sm:$0xf]
      %v178 = vld [vmem:[%s166 + $0xc] sm:$0xf]
      %v179 = vld [vmem:[%s166 + $0x10] sm:$0xf]
      %v180 = vld [vmem:[%s166 + $0x14] sm:$0xf]
      %v181 = vld [vmem:[%s166 + $0x18] sm:$0xf]
      %v182 = vld [vmem:[%s166 + $0x1c] sm:$0xf]
      %v183 = vld [vmem:[%s1] sm:$0xf]
      %v184 = vld [vmem:[%s1 + $0x4] sm:$0xf]
      %v185 = vld [vmem:[%s1 + $0x8] sm:$0xf]
      %v186 = vld [vmem:[%s1 + $0xc] sm:$0xf]
      %v187 = vld [vmem:[%s1 + $0x10] sm:$0xf]
      %v188 = vld [vmem:[%s1 + $0x14] sm:$0xf]
      %v189 = vld [vmem:[%s1 + $0x18] sm:$0xf]
      %v190 = vld [vmem:[%s1 + $0x1c] sm:$0xf]
      %v191 = vld [vmem:[%s1 + $0x20] sm:$0xf]
      %v192 = vld [vmem:[%s1 + $0x24] sm:$0xf]
      %v193 = vld [vmem:[%s1 + $0x28] sm:$0xf]
      %v194 = vld [vmem:[%s1 + $0x2c] sm:$0xf]
      %v195 = vld [vmem:[%s1 + $0x30] sm:$0xf]
      %v196 = vld [vmem:[%s1 + $0x34] sm:$0xf]
      %v197 = vld [vmem:[%s1 + $0x38] sm:$0xf]
      %v198 = vld [vmem:[%s1 + $0x3c] sm:$0xf]
      %v199 = vld [vmem:[%s2] sm:$0x1]
      %v201 = vlaneseq
      %v202 = vshrl.u32 %v201, 7
      %v203 = vsub.s32 0, %v202
      %v204 = vrot.slane %v199, %v203
      %v214 = vunpack.c.l.b16 %v175
      %v215 = vunpack.c.l.b16 %v176
      %v216 = vunpack.c.l.b16 %v177
      %v217 = vunpack.c.l.b16 %v178
      %v218 = vunpack.c.l.b16 %v179
      %v219 = vunpack.c.l.b16 %v180
      %v220 = vunpack.c.l.b16 %v181
      %v221 = vunpack.c.l.b16 %v182
      %v222 = vpack.c.b16 %v215, %v214
      %v223 = vpack.c.b16 %v217, %v216
      %v224 = vpack.c.b16 %v219, %v218
      %v225 = vpack.c.b16 %v221, %v220
      %v246 = vunpack.c.l.b16 %v183
      %v247 = vunpack.c.l.b16 %v184
      %v248 = vunpack.c.l.b16 %v185
      %v249 = vunpack.c.l.b16 %v186
      %v250 = vunpack.c.l.b16 %v187
      %v251 = vunpack.c.l.b16 %v188
      %v252 = vunpack.c.l.b16 %v189
      %v253 = vunpack.c.l.b16 %v190
      %v254 = vunpack.c.l.b16 %v191
      %v255 = vunpack.c.l.b16 %v192
      %v256 = vunpack.c.l.b16 %v193
      %v257 = vunpack.c.l.b16 %v194
      %v258 = vunpack.c.l.b16 %v195
      %v259 = vunpack.c.l.b16 %v196
      %v260 = vunpack.c.l.b16 %v197
      %v261 = vunpack.c.l.b16 %v198
      %v262 = vpack.c.b16 %v247, %v246
      %v263 = vpack.c.b16 %v249, %v248
      %v264 = vpack.c.b16 %v251, %v250
      %v265 = vpack.c.b16 %v253, %v252
      %v266 = vpack.c.b16 %v255, %v254
      %v267 = vpack.c.b16 %v257, %v256
      %v268 = vpack.c.b16 %v259, %v258
      %v269 = vpack.c.b16 %v261, %v260
      %278 = vmatprep.subr.bf16.mxu0 0
      %279 = vmatpush1.bf16.msra.mxu0 %v269
      %280 = vmatprep.subr.bf16.mxu0 0
      %281 = vmatpush1.bf16.msra.mxu0 %v268
      %282 = vmatprep.subr.bf16.mxu0 0
      %283 = vmatpush1.bf16.msra.mxu0 %v267
      %284 = vmatprep.subr.bf16.mxu0 0
      %285 = vmatpush1.bf16.msra.mxu0 %v266
      %286 = vmatprep.subr.bf16.mxu0 0
      %287 = vmatpush1.bf16.msra.mxu0 %v265
      %288 = vmatprep.subr.bf16.mxu0 0
      %289 = vmatpush1.bf16.msra.mxu0 %v264
      %290 = vmatprep.subr.bf16.mxu0 0
      %291 = vmatpush1.bf16.msra.mxu0 %v263
      %292 = vmatprep.subr.bf16.mxu0 0
      %293 = vmatpush1.bf16.msra.mxu0 %v262
      %294 = vmatprep.subr.bf16.mxu0 0
      %295 = vmatpush2.bf16.msra.mxu0 0
      %296 = vmatprep.subr.bf16.mxu0 0
      %297 = vmatpush2.bf16.msra.mxu0 0
      %298 = vmatprep.subr.bf16.mxu0 0
      %299 = vmatpush2.bf16.msra.mxu0 0
      %300 = vmatprep.subr.bf16.mxu0 0
      %301 = vmatpush2.bf16.msra.mxu0 0
      %302 = vmatprep.subr.bf16.mxu0 0
      %303 = vmatpush2.bf16.msra.mxu0 0
      %304 = vmatprep.subr.bf16.mxu0 0
      %305 = vmatpush2.bf16.msra.mxu0 0
      %306 = vmatprep.subr.bf16.mxu0 0
      %307 = vmatpush2.bf16.msra.mxu0 0
      %308 = vmatprep.subr.bf16.mxu0 0
      %309 = vmatpush2.bf16.msra.mxu0 0
      %310 = vmatprep.mubr.bf16.mxu0 0
      %311 = vmatmul.mubr.bf16.gmra.mxu0 %v222
      %v312 = vpop.f32.mrf.mxu0
      %v313 = vadd.f32 %v204, %v312
      %v314 = vpop.f32.mrf.mxu0
      %v315 = vpop.f32.mrf.mxu0
      %v316 = vadd.f32 %v204, %v315
      %v317 = vpop.f32.mrf.mxu0
      %318 = vmatprep.mubr.bf16.mxu0 0
      %319 = vmatmul.mubr.bf16.gmra.mxu0 %v223
      %v320 = vpop.f32.mrf.mxu0
      %v321 = vadd.f32 %v204, %v320
      %v322 = vpop.f32.mrf.mxu0
      %v323 = vpop.f32.mrf.mxu0
      %v324 = vadd.f32 %v204, %v323
      %v325 = vpop.f32.mrf.mxu0
      %326 = vmatprep.mubr.bf16.mxu0 0
      %327 = vmatmul.mubr.bf16.gmra.mxu0 %v224
      %v328 = vpop.f32.mrf.mxu0
      %v329 = vadd.f32 %v204, %v328
      %v330 = vpop.f32.mrf.mxu0
      %v331 = vpop.f32.mrf.mxu0
      %v332 = vadd.f32 %v204, %v331
      %v333 = vpop.f32.mrf.mxu0
      %334 = vmatprep.mubr.bf16.mxu0 0
      %335 = vmatmul.mubr.bf16.gmra.mxu0 %v225
      %v336 = vpop.f32.mrf.mxu0
      %v337 = vadd.f32 %v204, %v336
      %v338 = vpop.f32.mrf.mxu0
      %v339 = vpop.f32.mrf.mxu0
      %v340 = vadd.f32 %v204, %v339
      %v341 = vpop.f32.mrf.mxu0
      %342 = vdwg.mxu0
      %v343 = vpack.c.bf16 %v316, %v313
      %v344 = vpack.c.bf16 %v324, %v321
      %v345 = vpack.c.bf16 %v332, %v329
      %v346 = vpack.c.bf16 %v340, %v337
      %v351 = vunpack.c.l.b16 %v343
      %v352 = vunpack.c.h.b16 %v343
      %v353 = vunpack.c.l.b16 %v344
      %v354 = vunpack.c.h.b16 %v344
      %v355 = vunpack.c.l.b16 %v345
      %v356 = vunpack.c.h.b16 %v345
      %v357 = vunpack.c.l.b16 %v346
      %v358 = vunpack.c.h.b16 %v346
      %v359 = vpack.c.b16 %v351, %v351
      %v360 = vpack.c.b16 %v352, %v352
      %v361 = vpack.c.b16 %v353, %v353
      %v362 = vpack.c.b16 %v354, %v354
      %v363 = vpack.c.b16 %v355, %v355
      %v364 = vpack.c.b16 %v356, %v356
      %v365 = vpack.c.b16 %v357, %v357
      %v366 = vpack.c.b16 %v358, %v358
      %375 = vst [vmem:[%s172] sm:$0xf] %v359
      %376 = vst [vmem:[%s172 + $0x4] sm:$0xf] %v360
      %377 = vst [vmem:[%s172 + $0x8] sm:$0xf] %v361
      %378 = vst [vmem:[%s172 + $0xc] sm:$0xf] %v362
      %379 = vst [vmem:[%s172 + $0x10] sm:$0xf] %v363
      %380 = vst [vmem:[%s172 + $0x14] sm:$0xf] %v364
      %381 = vst [vmem:[%s172 + $0x18] sm:$0xf] %v365
      %382 = vst [vmem:[%s172 + $0x1c] sm:$0xf] %v366
      %s383 = smul.u32 8, %s14
      %p384 = scmp.lt.s32.totalorder %s383, 15
      %s385 = scalar_select %p384, %s383, 15
      %s386 = smul.addr %s385, 4
      %s387 = scalar_lea.vmem %s3, %s386
      // Predicated region
      $region33: #{transformer_forward.18} parent=31 // pred_check
        %p388 = pneg %p100
      $region34: #{transformer_forward.18} parent=31 // pred_check_branch
        %390 = sbr.rel (%p388) target = $region36
      $region35: #{transformer_forward.18} parent=31 // pred_region
        %s391 = smul.u32 8, %s14
      $region36: #{transformer_forward.18} parent=31 // pred_fallthru
        _
    $region32: #{transformer_forward.18} parent=5 // pred_fallthru
      _
    %p392 = scmp.le.s32.totalorder 2, %s9
    // Predicated region
    $region37: #{transformer_forward.18} parent=5 // pred_check
      %p393 = pneg %p392
    $region38: #{transformer_forward.18} parent=5 // pred_check_branch
      %395 = sbr.rel (%p393) target = $region40
    $region39: #{transformer_forward.18} parent=5 // pred_region
      %s396 = ssub.s32 %s9, 2
      // Predicated region
      $region41: #{transformer_forward.18} parent=39 // pred_check
        %p397 = pneg %p106
      $region42: #{transformer_forward.18} parent=39 // pred_check_branch
        %399 = sbr.rel (%p397) target = $region44
      $region43: #{transformer_forward.18} parent=39 // pred_region
        %s400 = smul.u32 8, %s15
        %p401 = scmp.lt.s32.totalorder %s400, 15
        %s402 = scalar_select %p401, %s400, 15
        %s403 = smul.addr %s402, 4
        %s404 = scalar_lea.vmem %s3, %s403
      $region44: #{transformer_forward.18} parent=39 // pred_fallthru
        _
    $region40: #{transformer_forward.18} parent=5 // pred_fallthru
      _
  $region6: #{transformer_forward.18} parent=0 // loop_footer
    %s13 = sadd.s32 1, %s9
  $region7: #{transformer_forward.18} parent=0 // loop_footer_branch
    %8 = sbr.rel target = $region3
  $region8: #{transformer_forward.18} parent=0 // loop_exit
    _

// kernel: transformer_forward.16
$region0: #{transformer_forward.16}
  #allocation0 [shape = 'u32[]', space=smem, size = 0x4, offset = 0x4, fixed_abs, tag = 'smem constant byte address 0x4 - core index']
  #allocation1 [shape = 'u32[144,128]{1,0:T(1,128)}', space=vmem, size = 0x12000, scoped, tag = 'internal scratch']
  %s0 = inlined_call_operand.vmem [shape: bf16[128,128], index: 0, kind: input, shape index: {}]
  %s1 = inlined_call_operand.vmem [shape: bf16[128,640], index: 1, kind: input, shape index: {}]
  %s2 = inlined_call_operand.vmem [shape: f32[1,640], index: 2, kind: input, shape index: {}]
  %s3 = inlined_call_operand.vmem [shape: bf16[128,640], index: 3, kind: output, shape index: {}]
  %s4 = sld [smem:[#allocation0]]
  $region45: #{transformer_forward.16} parent=0
    _
  %s6 = ssub.s32 1, %s4
  %s7 = scalar_select 0, %s6, %s4
  loop: start=0, step=1, limit=4
  $region2: #{transformer_forward.16} parent=0 // loop_pre_header
    _
  $region3: #{transformer_forward.16} parent=0 // loop_header
    %s9 = sphi 0, %s13
    %p10 = scmp.ge.s32.totalorder %s9, 4
    %s19 = sphi 0, %s21
    %s22 = sphi 0, %s19
    %s23 = sphi 0, %s22
    %s39 = sphi 0, %s23
    %s43 = sphi 0, %s43
    %s45 = sphi 0, %s43
    %s46 = sphi 0, %s45
    %s60 = sphi 0, %s46
    %s64 = sphi 0, %s64
    %s66 = sphi 0, %s64
    %s67 = sphi 0, %s66
    %s81 = sphi 0, %s67
    %s87 = sphi 0, %s89
    %s90 = sphi 0, %s87
    %s91 = sphi 0, %s90
    %s107 = sphi 0, %s91
  $region4: #{transformer_forward.16} parent=0 // loop_header_branch
    %12 = sbr.rel (%p10) target = $region8
  $region5: #{transformer_forward.16} parent=0 // loop_body
    %s14 = ssub.s32 %s9, 1
    %s15 = ssub.s32 %s9, 2
    %s16 = sadd.s32 %s9, 1
    %s17 = ssub.s32 %s9, %s16
    %p18 = scmp.eq.s32.totalorder %s17, 0
    %s20 = sadd.s32 %s19, 1
    %s21 = scalar_select %p18, %s19, %s20
    %p24 = pneg %p18
    %p25 = scmp.eq.s32.totalorder %s9, 1
    %p26 = por %p24, %p25
    %p27 = scmp.ne.s32.totalorder %s19, %s22
    %p28 = scmp.eq.s32.totalorder %s9, 0
    %p29 = por %p27, %p28
    %p30 = scmp.ne.s32.totalorder %s19, %s22
    %p31 = scmp.eq.s32.totalorder %s14, 1
    %p32 = por %p30, %p31
    %p33 = scmp.ne.s32.totalorder %s22, %s23
    %p34 = scmp.eq.s32.totalorder %s14, 0
    %p35 = por %p33, %p34
    %p36 = scmp.ne.s32.totalorder %s22, %s23
    %p37 = scmp.eq.s32.totalorder %s15, 1
    %p38 = por %p36, %p37
    %p40 = scmp.ne.s32.totalorder %s23, %s39
    %p41 = scmp.eq.s32.totalorder %s15, 0
    %p42 = por %p40, %p41
    %s44 = sadd.s32 %s43, 1
    %p47 = scmp.eq.s32.totalorder %s9, 1
    %p48 = scmp.ne.s32.totalorder %s43, %s45
    %p49 = scmp.eq.s32.totalorder %s9, 0
    %p50 = por %p48, %p49
    %p51 = scmp.ne.s32.totalorder %s43, %s45
    %p52 = scmp.eq.s32.totalorder %s14, 1
    %p53 = por %p51, %p52
    %p54 = scmp.ne.s32.totalorder %s45, %s46
    %p55 = scmp.eq.s32.totalorder %s14, 0
    %p56 = por %p54, %p55
    %p57 = scmp.ne.s32.totalorder %s45, %s46
    %p58 = scmp.eq.s32.totalorder %s15, 1
    %p59 = por %p57, %p58
    %p61 = scmp.ne.s32.totalorder %s46, %s60
    %p62 = scmp.eq.s32.totalorder %s15, 0
    %p63 = por %p61, %p62
    %s65 = sadd.s32 %s64, 1
    %p68 = scmp.eq.s32.totalorder %s9, 1
    %p69 = scmp.ne.s32.totalorder %s64, %s66
    %p70 = scmp.eq.s32.totalorder %s9, 0
    %p71 = por %p69, %p70
    %p72 = scmp.ne.s32.totalorder %s64, %s66
    %p73 = scmp.eq.s32.totalorder %s14, 1
    %p74 = por %p72, %p73
    %p75 = scmp.ne.s32.totalorder %s66, %s67
    %p76 = scmp.eq.s32.totalorder %s14, 0
    %p77 = por %p75, %p76
    %p78 = scmp.ne.s32.totalorder %s66, %s67
    %p79 = scmp.eq.s32.totalorder %s15, 1
    %p80 = por %p78, %p79
    %p82 = scmp.ne.s32.totalorder %s67, %s81
    %p83 = scmp.eq.s32.totalorder %s15, 0
    %p84 = por %p82, %p83
    %s85 = ssub.s32 %s9, %s16
    %p86 = scmp.eq.s32.totalorder %s85, 0
    %s88 = sadd.s32 %s87, 1
    %s89 = scalar_select %p86, %s87, %s88
    %p92 = pneg %p86
    %p93 = scmp.eq.s32.totalorder %s9, 1
    %p94 = por %p92, %p93
    %p95 = scmp.ne.s32.totalorder %s87, %s90
    %p96 = scmp.eq.s32.totalorder %s9, 0
    %p97 = por %p95, %p96
    %p98 = scmp.ne.s32.totalorder %s87, %s90
    %p99 = scmp.eq.s32.totalorder %s14, 1
    %p100 = por %p98, %p99
    %p101 = scmp.ne.s32.totalorder %s90, %s91
    %p102 = scmp.eq.s32.totalorder %s14, 0
    %p103 = por %p101, %p102
    %p104 = scmp.ne.s32.totalorder %s90, %s91
    %p105 = scmp.eq.s32.totalorder %s15, 1
    %p106 = por %p104, %p105
    %p108 = scmp.ne.s32.totalorder %s91, %s107
    %p109 = scmp.eq.s32.totalorder %s15, 0
    %p110 = por %p108, %p109
    %p111 = scmp.le.s32.totalorder 1, %s9
    %p112 = scmp.lt.s32.totalorder %s9, 3
    %p113 = pnand %p111, %p112
    %p114 = pneg %p113
    // Predicated region
    $region9: #{transformer_forward.16} parent=5 // pred_check
      _
    $region10: #{transformer_forward.16} parent=5 // pred_check_branch
      %116 = sbr.rel (%p113) target = $region12
    $region11: #{transformer_forward.16} parent=5 // pred_region
      %s117 = ssub.s32 %s9, 1
      // Predicated region
      $region13: #{transformer_forward.16} parent=11 // pred_check
        %p118 = pneg %p56
      $region14: #{transformer_forward.16} parent=11 // pred_check_branch
        %120 = sbr.rel (%p118) target = $region16
      $region15: #{transformer_forward.16} parent=11 // pred_region
        _
      $region16: #{transformer_forward.16} parent=11 // pred_fallthru
        _
      // Predicated region
      $region17: #{transformer_forward.16} parent=11 // pred_check
        %p121 = pneg %p77
      $region18: #{transformer_forward.16} parent=11 // pred_check_branch
        %123 = sbr.rel (%p121) target = $region20
      $region19: #{transformer_forward.16} parent=11 // pred_region
        _
      $region20: #{transformer_forward.16} parent=11 // pred_fallthru
        _
    $region12: #{transformer_forward.16} parent=5 // pred_fallthru
      _
    %p124 = scmp.lt.s32.totalorder %s9, 2
    // Predicated region
    $region21: #{transformer_forward.16} parent=5 // pred_check
      %p125 = pneg %p124
    $region22: #{transformer_forward.16} parent=5 // pred_check_branch
      %127 = sbr.rel (%p125) target = $region24
    $region23: #{transformer_forward.16} parent=5 // pred_region
      // Predicated region
      $region25: #{transformer_forward.16} parent=23 // pred_check
        %p128 = pneg %p29
      $region26: #{transformer_forward.16} parent=23 // pred_check_branch
        %130 = sbr.rel (%p128) target = $region28
      $region27: #{transformer_forward.16} parent=23 // pred_region
        %s131 = smul.u32 8, %s9
        %p132 = scmp.lt.s32.totalorder %s131, 15
        %s133 = scalar_select %p132, %s131, 15
        %s134 = smul.addr %s133, 4
        %s135 = scalar_lea.vmem %s0, %s134
        %s136 = smul.u32 8, %s9
      $region28: #{transformer_forward.16} parent=23 // pred_fallthru
        _
    $region24: #{transformer_forward.16} parent=5 // pred_fallthru
      _
    %p137 = scmp.le.s32.totalorder 1, %s9
    %p138 = scmp.lt.s32.totalorder %s9, 3
    %p139 = pnand %p137, %p138
    %p140 = pneg %p139
    // Predicated region
    $region29: #{transformer_forward.16} parent=5 // pred_check
      _
    $region30: #{transformer_forward.16} parent=5 // pred_check_branch
      %142 = sbr.rel (%p139) target = $region32
    $region31: #{transformer_forward.16} parent=5 // pred_region
      %s143 = ssub.s32 %s9, 1
      %s144 = smul.u32 8, %s14
      %p145 = scmp.lt.s32.totalorder %s144, 15
      %s146 = scalar_select %p145, %s144, 15
      %s147 = smul.addr %s146, 4
      %s148 = scalar_lea.vmem %s0, %s147
      %p149 = pneg %p35
      %p150 = pneg %p32
      %p151 = pneg %p56
      %p152 = pneg %p53
      %p153 = pneg %p77
      %p154 = pneg %p74
      %p155 = pneg %p103
      %p156 = pneg %p100
      %s157 = smul.u32 8, %s14
      %p158 = scmp.lt.s32.totalorder %s157, 15
      %s159 = scalar_select %p158, %s157, 15
      %s160 = smul.addr %s159, 5
      %s161 = smul.addr %s160, 4
      %s162 = scalar_lea.vmem %s3, %s161
      %s163 = smul.u32 8, %s14
      %p164 = scmp.lt.s32.totalorder %s163, 15
      %s165 = scalar_select %p164, %s163, 15
      %s166 = smul.addr %s165, 4
      %s167 = scalar_lea.vmem %s0, %s166
      %s168 = smul.u32 8, %s14
      %s169 = smul.u32 8, %s14
      %p170 = scmp.lt.s32.totalorder %s169, 15
      %s171 = scalar_select %p170, %s169, 15
      %s172 = smul.addr %s171, 5
      %s173 = smul.addr %s172, 4
      %s174 = scalar_lea.vmem %s3, %s173
      %s175 = smul.u32 8, %s14
      %v177 = vld [vmem:[%s167] sm:$0xf]
      %v178 = vld [vmem:[%s167 + $0x4] sm:$0xf]
      %v179 = vld [vmem:[%s167 + $0x8] sm:$0xf]
      %v180 = vld [vmem:[%s167 + $0xc] sm:$0xf]
      %v181 = vld [vmem:[%s167 + $0x10] sm:$0xf]
      %v182 = vld [vmem:[%s167 + $0x14] sm:$0xf]
      %v183 = vld [vmem:[%s167 + $0x18] sm:$0xf]
      %v184 = vld [vmem:[%s167 + $0x1c] sm:$0xf]
      %v185 = vld [vmem:[%s1] sm:$0xff]
      %v186 = vld [vmem:[%s1 + $0x8] sm:$0xff]
      %v187 = vld [vmem:[%s1 + $0x10] sm:$0xf]
      %v188 = vld [vmem:[%s1 + $0x14] sm:$0xff]
      %v189 = vld [vmem:[%s1 + $0x1c] sm:$0xff]
      %v190 = vld [vmem:[%s1 + $0x24] sm:$0xf]
      %v191 = vld [vmem:[%s1 + $0x28] sm:$0xff]
      %v192 = vld [vmem:[%s1 + $0x30] sm:$0xff]
      %v193 = vld [vmem:[%s1 + $0x38] sm:$0xf]
      %v194 = vld [vmem:[%s1 + $0x3c] sm:$0xff]
      %v195 = vld [vmem:[%s1 + $0x44] sm:$0xff]
      %v196 = vld [vmem:[%s1 + $0x4c] sm:$0xf]
      %v197 = vld [vmem:[%s1 + $0x50] sm:$0xff]
      %v198 = vld [vmem:[%s1 + $0x58] sm:$0xff]
      %v199 = vld [vmem:[%s1 + $0x60] sm:$0xf]
      %v200 = vld [vmem:[%s1 + $0x64] sm:$0xff]
      %v201 = vld [vmem:[%s1 + $0x6c] sm:$0xff]
      %v202 = vld [vmem:[%s1 + $0x74] sm:$0xf]
      %v203 = vld [vmem:[%s1 + $0x78] sm:$0xff]
      %v204 = vld [vmem:[%s1 + $0x80] sm:$0xff]
      %v205 = vld [vmem:[%s1 + $0x88] sm:$0xf]
      %v206 = vld [vmem:[%s1 + $0x8c] sm:$0xff]
      %v207 = vld [vmem:[%s1 + $0x94] sm:$0xff]
      %v208 = vld [vmem:[%s1 + $0x9c] sm:$0xf]
      %v209 = vld [vmem:[%s1 + $0xa0] sm:$0xff]
      %v210 = vld [vmem:[%s1 + $0xa8] sm:$0xff]
      %v211 = vld [vmem:[%s1 + $0xb0] sm:$0xf]
      %v212 = vld [vmem:[%s1 + $0xb4] sm:$0xff]
      %v213 = vld [vmem:[%s1 + $0xbc] sm:$0xff]
      %v214 = vld [vmem:[%s1 + $0xc4] sm:$0xf]
      %v215 = vld [vmem:[%s1 + $0xc8] sm:$0xff]
      %v216 = vld [vmem:[%s1 + $0xd0] sm:$0xff]
      %v217 = vld [vmem:[%s1 + $0xd8] sm:$0xf]
      %v218 = vld [vmem:[%s1 + $0xdc] sm:$0xff]
      %v219 = vld [vmem:[%s1 + $0xe4] sm:$0xff]
      %v220 = vld [vmem:[%s1 + $0xec] sm:$0xf]
      %v221 = vld [vmem:[%s1 + $0xf0] sm:$0xff]
      %v222 = vld [vmem:[%s1 + $0xf8] sm:$0xff]
      %v223 = vld [vmem:[%s1 + $0x100] sm:$0xf]
      %v224 = vld [vmem:[%s1 + $0x104] sm:$0xff]
      %v225 = vld [vmem:[%s1 + $0x10c] sm:$0xff]
      %v226 = vld [vmem:[%s1 + $0x114] sm:$0xf]
      %v227 = vld [vmem:[%s1 + $0x118] sm:$0xff]
      %v228 = vld [vmem:[%s1 + $0x120] sm:$0xff]
      %v229 = vld [vmem:[%s1 + $0x128] sm:$0xf]
      %v230 = vld [vmem:[%s1 + $0x12c] sm:$0xff]
      %v231 = vld [vmem:[%s1 + $0x134] sm:$0xff]
      %v232 = vld [vmem:[%s1 + $0x13c] sm:$0xf]
      %v233 = vld [vmem:[%s2] sm:$0x1f]
      %v235 = vlaneseq
      %v236 = vshrl.u32 %v235, 7
      %v237 = vsub.s32 0, %v236
      %v238 = vrot.slane %v233, %v237
      %v239 = vlaneseq
      %v240 = vshrl.u32 %v239, 7
      %v241 = vsub.s32 1, %v240
      %v242 = vrot.slane %v233, %v241
      %v243 = vlaneseq
      %v244 = vshrl.u32 %v243, 7
      %v245 = vsub.s32 2, %v244
      %v246 = vrot.slane %v233, %v245
      %v247 = vlaneseq
      %v248 = vshrl.u32 %v247, 7
      %v249 = vsub.s32 3, %v248
      %v250 = vrot.slane %v233, %v249
      %v251 = vlaneseq
      %v252 = vshrl.u32 %v251, 7
      %v253 = vsub.s32 4, %v252
      %v254 = vrot.slane %v233, %v253
      %v268 = vunpack.c.l.b16 %v177
      %v269 = vunpack.c.l.b16 %v178
      %v270 = vunpack.c.l.b16 %v179
      %v271 = vunpack.c.l.b16 %v180
      %v272 = vunpack.c.l.b16 %v181
      %v273 = vunpack.c.l.b16 %v182
      %v274 = vunpack.c.l.b16 %v183
      %v275 = vunpack.c.l.b16 %v184
      %v276 = vpack.c.b16 %v269, %v268
      %v277 = vpack.c.b16 %v271, %v270
      %v278 = vpack.c.b16 %v273, %v272
      %v279 = vpack.c.b16 %v275, %v274
      %v332 = vunpack.c.l.b16 %v185
      %v333 = vunpack.c.h.b16 %v185
      %v334 = vunpack.c.l.b16 %v186
      %v335 = vunpack.c.h.b16 %v186
      %v336 = vunpack.c.l.b16 %v187
      %v337 = vunpack.c.l.b16 %v188
      %v338 = vunpack.c.h.b16 %v188
      %v339 = vunpack.c.l.b16 %v189
      %v340 = vunpack.c.h.b16 %v189
      %v341 = vunpack.c.l.b16 %v190
      %v342 = vunpack.c.l.b16 %v191
      %v343 = vunpack.c.h.b16 %v191
      %v344 = vunpack.c.l.b16 %v192
      %v345 = vunpack.c.h.b16 %v192
      %v346 = vunpack.c.l.b16 %v193
      %v347 = vunpack.c.l.b16 %v194
      %v348 = vunpack.c.h.b16 %v194
      %v349 = vunpack.c.l.b16 %v195
      %v350 = vunpack.c.h.b16 %v195
      %v351 = vunpack.c.l.b16 %v196
      %v352 = vunpack.c.l.b16 %v197
      %v353 = vunpack.c.h.b16 %v197
      %v354 = vunpack.c.l.b16 %v198
      %v355 = vunpack.c.h.b16 %v198
      %v356 = vunpack.c.l.b16 %v199
      %v357 = vunpack.c.l.b16 %v200
      %v358 = vunpack.c.h.b16 %v200
      %v359 = vunpack.c.l.b16 %v201
      %v360 = vunpack.c.h.b16 %v201
      %v361 = vunpack.c.l.b16 %v202
      %v362 = vunpack.c.l.b16 %v203
      %v363 = vunpack.c.h.b16 %v203
      %v364 = vunpack.c.l.b16 %v204
      %v365 = vunpack.c.h.b16 %v204
      %v366 = vunpack.c.l.b16 %v205
      %v367 = vunpack.c.l.b16 %v206
      %v368 = vunpack.c.h.b16 %v206
      %v369 = vunpack.c.l.b16 %v207
      %v370 = vunpack.c.h.b16 %v207
      %v371 = vunpack.c.l.b16 %v208
      %v372 = vunpack.c.l.b16 %v209
      %v373 = vunpack.c.h.b16 %v209
      %v374 = vunpack.c.l.b16 %v210
      %v375 = vunpack.c.h.b16 %v210
      %v376 = vunpack.c.l.b16 %v211
      %v377 = vunpack.c.l.b16 %v212
      %v378 = vunpack.c.h.b16 %v212
      %v379 = vunpack.c.l.b16 %v213
      %v380 = vunpack.c.h.b16 %v213
      %v381 = vunpack.c.l.b16 %v214
      %v382 = vunpack.c.l.b16 %v215
      %v383 = vunpack.c.h.b16 %v215
      %v384 = vunpack.c.l.b16 %v216
      %v385 = vunpack.c.h.b16 %v216
      %v386 = vunpack.c.l.b16 %v217
      %v387 = vunpack.c.l.b16 %v218
      %v388 = vunpack.c.h.b16 %v218
      %v389 = vunpack.c.l.b16 %v219
      %v390 = vunpack.c.h.b16 %v219
      %v391 = vunpack.c.l.b16 %v220
      %v392 = vunpack.c.l.b16 %v221
      %v393 = vunpack.c.h.b16 %v221
      %v394 = vunpack.c.l.b16 %v222
      %v395 = vunpack.c.h.b16 %v222
      %v396 = vunpack.c.l.b16 %v223
      %v397 = vunpack.c.l.b16 %v224
      %v398 = vunpack.c.h.b16 %v224
      %v399 = vunpack.c.l.b16 %v225
      %v400 = vunpack.c.h.b16 %v225
      %v401 = vunpack.c.l.b16 %v226
      %v402 = vunpack.c.l.b16 %v227
      %v403 = vunpack.c.h.b16 %v227
      %v404 = vunpack.c.l.b16 %v228
      %v405 = vunpack.c.h.b16 %v228
      %v406 = vunpack.c.l.b16 %v229
      %v407 = vunpack.c.l.b16 %v230
      %v408 = vunpack.c.h.b16 %v230
      %v409 = vunpack.c.l.b16 %v231
      %v410 = vunpack.c.h.b16 %v231
      %v411 = vunpack.c.l.b16 %v232
      %v412 = vpack.c.b16 %v337, %v332
      %v413 = vpack.c.b16 %v338, %v333
      %v414 = vpack.c.b16 %v339, %v334
      %v415 = vpack.c.b16 %v340, %v335
      %v416 = vpack.c.b16 %v341, %v336
      %v417 = vpack.c.b16 %v347, %v342
      %v418 = vpack.c.b16 %v348, %v343
      %v419 = vpack.c.b16 %v349, %v344
      %v420 = vpack.c.b16 %v350, %v345
      %v421 = vpack.c.b16 %v351, %v346
      %v422 = vpack.c.b16 %v357, %v352
      %v423 = vpack.c.b16 %v358, %v353
      %v424 = vpack.c.b16 %v359, %v354
      %v425 = vpack.c.b16 %v360, %v355
      %v426 = vpack.c.b16 %v361, %v356
      %v427 = vpack.c.b16 %v367, %v362
      %v428 = vpack.c.b16 %v368, %v363
      %v429 = vpack.c.b16 %v369, %v364
      %v430 = vpack.c.b16 %v370, %v365
      %v431 = vpack.c.b16 %v371, %v366
      %v432 = vpack.c.b16 %v377, %v372
      %v433 = vpack.c.b16 %v378, %v373
      %v434 = vpack.c.b16 %v379, %v374
      %v435 = vpack.c.b16 %v380, %v375
      %v436 = vpack.c.b16 %v381, %v376
      %v437 = vpack.c.b16 %v387, %v382
      %v438 = vpack.c.b16 %v388, %v383
      %v439 = vpack.c.b16 %v389, %v384
      %v440 = vpack.c.b16 %v390, %v385
      %v441 = vpack.c.b16 %v391, %v386
      %v442 = vpack.c.b16 %v397, %v392
      %v443 = vpack.c.b16 %v398, %v393
      %v444 = vpack.c.b16 %v399, %v394
      %v445 = vpack.c.b16 %v400, %v395
      %v446 = vpack.c.b16 %v401, %v396
      %v447 = vpack.c.b16 %v407, %v402
      %v448 = vpack.c.b16 %v408, %v403
      %v449 = vpack.c.b16 %v409, %v404
      %v450 = vpack.c.b16 %v410, %v405
      %v451 = vpack.c.b16 %v411, %v406
      %492 = vmatprep.subr.bf16.mxu0 %v448
      %493 = vmatpush1.bf16.msra.mxu0 %v447
      %494 = vmatprep.subr.bf16.mxu0 %v443
      %495 = vmatpush1.bf16.msra.mxu0 %v442
      %496 = vmatprep.subr.bf16.mxu0 %v438
      %497 = vmatpush1.bf16.msra.mxu0 %v437
      %498 = vmatprep.subr.bf16.mxu0 %v433
      %499 = vmatpush1.bf16.msra.mxu0 %v432
      %500 = vmatprep.subr.bf16.mxu0 %v428
      %501 = vmatpush1.bf16.msra.mxu0 %v427
      %502 = vmatprep.subr.bf16.mxu0 %v423
      %503 = vmatpush1.bf16.msra.mxu0 %v422
      %504 = vmatprep.subr.bf16.mxu0 %v418
      %505 = vmatpush1.bf16.msra.mxu0 %v417
      %506 = vmatprep.subr.bf16.mxu0 %v413
      %507 = vmatpush1.bf16.msra.mxu0 %v412
      %508 = vmatprep.subr.bf16.mxu0 0
      %509 = vmatpush2.bf16.msra.mxu0 0
      %510 = vmatprep.subr.bf16.mxu0 0
      %511 = vmatpush2.bf16.msra.mxu0 0
      %512 = vmatprep.subr.bf16.mxu0 0
      %513 = vmatpush2.bf16.msra.mxu0 0
      %514 = vmatprep.subr.bf16.mxu0 0
      %515 = vmatpush2.bf16.msra.mxu0 0
      %516 = vmatprep.subr.bf16.mxu0 0
      %517 = vmatpush2.bf16.msra.mxu0 0
      %518 = vmatprep.subr.bf16.mxu0 0
      %519 = vmatpush2.bf16.msra.mxu0 0
      %520 = vmatprep.subr.bf16.mxu0 0
      %521 = vmatpush2.bf16.msra.mxu0 0
      %522 = vmatprep.subr.bf16.mxu0 0
      %523 = vmatpush2.bf16.msra.mxu0 0
      %524 = vmatprep.mubr.bf16.mxu0 0
      %525 = vmatmul.mubr.bf16.gmra.mxu0 %v276
      %v526 = vpop.f32.mrf.mxu0
      %v527 = vadd.f32 %v238, %v526
      %v528 = vpop.f32.mrf.mxu0
      %v529 = vadd.f32 %v242, %v528
      %v530 = vpop.f32.mrf.mxu0
      %v531 = vadd.f32 %v238, %v530
      %v532 = vpop.f32.mrf.mxu0
      %v533 = vadd.f32 %v242, %v532
      %534 = vmatprep.mubr.bf16.mxu0 0
      %535 = vmatmul.mubr.bf16.gmra.mxu0 %v277
      %v536 = vpop.f32.mrf.mxu0
      %v537 = vadd.f32 %v238, %v536
      %v538 = vpop.f32.mrf.mxu0
      %v539 = vadd.f32 %v242, %v538
      %v540 = vpop.f32.mrf.mxu0
      %v541 = vadd.f32 %v238, %v540
      %v542 = vpop.f32.mrf.mxu0
      %v543 = vadd.f32 %v242, %v542
      %544 = vmatprep.mubr.bf16.mxu0 0
      %545 = vmatmul.mubr.bf16.gmra.mxu0 %v278
      %v546 = vpop.f32.mrf.mxu0
      %v547 = vadd.f32 %v238, %v546
      %v548 = vpop.f32.mrf.mxu0
      %v549 = vadd.f32 %v242, %v548
      %v550 = vpop.f32.mrf.mxu0
      %v551 = vadd.f32 %v238, %v550
      %v552 = vpop.f32.mrf.mxu0
      %v553 = vadd.f32 %v242, %v552
      %554 = vmatprep.mubr.bf16.mxu0 0
      %555 = vmatmul.mubr.bf16.gmra.mxu0 %v279
      %v556 = vpop.f32.mrf.mxu0
      %v557 = vadd.f32 %v238, %v556
      %v558 = vpop.f32.mrf.mxu0
      %v559 = vadd.f32 %v242, %v558
      %v560 = vpop.f32.mrf.mxu0
      %v561 = vadd.f32 %v238, %v560
      %v562 = vpop.f32.mrf.mxu0
      %v563 = vadd.f32 %v242, %v562
      %564 = vdwg.mxu0
      %565 = vmatprep.subr.bf16.mxu0 %v450
      %566 = vmatpush1.bf16.msra.mxu0 %v449
      %567 = vmatprep.subr.bf16.mxu0 %v445
      %568 = vmatpush1.bf16.msra.mxu0 %v444
      %569 = vmatprep.subr.bf16.mxu0 %v440
      %570 = vmatpush1.bf16.msra.mxu0 %v439
      %571 = vmatprep.subr.bf16.mxu0 %v435
      %572 = vmatpush1.bf16.msra.mxu0 %v434
      %573 = vmatprep.subr.bf16.mxu0 %v430
      %574 = vmatpush1.bf16.msra.mxu0 %v429
      %575 = vmatprep.subr.bf16.mxu0 %v425
      %576 = vmatpush1.bf16.msra.mxu0 %v424
      %577 = vmatprep.subr.bf16.mxu0 %v420
      %578 = vmatpush1.bf16.msra.mxu0 %v419
      %579 = vmatprep.subr.bf16.mxu0 %v415
      %580 = vmatpush1.bf16.msra.mxu0 %v414
      %581 = vmatprep.subr.bf16.mxu0 0
      %582 = vmatpush2.bf16.msra.mxu0 0
      %583 = vmatprep.subr.bf16.mxu0 0
      %584 = vmatpush2.bf16.msra.mxu0 0
      %585 = vmatprep.subr.bf16.mxu0 0
      %586 = vmatpush2.bf16.msra.mxu0 0
      %587 = vmatprep.subr.bf16.mxu0 0
      %588 = vmatpush2.bf16.msra.mxu0 0
      %589 = vmatprep.subr.bf16.mxu0 0
      %590 = vmatpush2.bf16.msra.mxu0 0
      %591 = vmatprep.subr.bf16.mxu0 0
      %592 = vmatpush2.bf16.msra.mxu0 0
      %593 = vmatprep.subr.bf16.mxu0 0
      %594 = vmatpush2.bf16.msra.mxu0 0
      %595 = vmatprep.subr.bf16.mxu0 0
      %596 = vmatpush2.bf16.msra.mxu0 0
      %597 = vmatprep.mubr.bf16.mxu0 0
      %598 = vmatmul.mubr.bf16.gmra.mxu0 %v276
      %v599 = vpop.f32.mrf.mxu0
      %v600 = vadd.f32 %v246, %v599
      %v601 = vpop.f32.mrf.mxu0
      %v602 = vadd.f32 %v250, %v601
      %v603 = vpop.f32.mrf.mxu0
      %v604 = vadd.f32 %v246, %v603
      %v605 = vpop.f32.mrf.mxu0
      %v606 = vadd.f32 %v250, %v605
      %607 = vmatprep.mubr.bf16.mxu0 0
      %608 = vmatmul.mubr.bf16.gmra.mxu0 %v277
      %v609 = vpop.f32.mrf.mxu0
      %v610 = vadd.f32 %v246, %v609
      %v611 = vpop.f32.mrf.mxu0
      %v612 = vadd.f32 %v250, %v611
      %v613 = vpop.f32.mrf.mxu0
      %v614 = vadd.f32 %v246, %v613
      %v615 = vpop.f32.mrf.mxu0
      %v616 = vadd.f32 %v250, %v615
      %617 = vmatprep.mubr.bf16.mxu0 0
      %618 = vmatmul.mubr.bf16.gmra.mxu0 %v278
      %v619 = vpop.f32.mrf.mxu0
      %v620 = vadd.f32 %v246, %v619
      %v621 = vpop.f32.mrf.mxu0
      %v622 = vadd.f32 %v250, %v621
      %v623 = vpop.f32.mrf.mxu0
      %v624 = vadd.f32 %v246, %v623
      %v625 = vpop.f32.mrf.mxu0
      %v626 = vadd.f32 %v250, %v625
      %627 = vmatprep.mubr.bf16.mxu0 0
      %628 = vmatmul.mubr.bf16.gmra.mxu0 %v279
      %v629 = vpop.f32.mrf.mxu0
      %v630 = vadd.f32 %v246, %v629
      %v631 = vpop.f32.mrf.mxu0
      %v632 = vadd.f32 %v250, %v631
      %v633 = vpop.f32.mrf.mxu0
      %v634 = vadd.f32 %v246, %v633
      %v635 = vpop.f32.mrf.mxu0
      %v636 = vadd.f32 %v250, %v635
      %637 = vdwg.mxu0
      %638 = vmatprep.subr.bf16.mxu0 0
      %639 = vmatpush1.bf16.msra.mxu0 %v451
      %640 = vmatprep.subr.bf16.mxu0 0
      %641 = vmatpush1.bf16.msra.mxu0 %v446
      %642 = vmatprep.subr.bf16.mxu0 0
      %643 = vmatpush1.bf16.msra.mxu0 %v441
      %644 = vmatprep.subr.bf16.mxu0 0
      %645 = vmatpush1.bf16.msra.mxu0 %v436
      %646 = vmatprep.subr.bf16.mxu0 0
      %647 = vmatpush1.bf16.msra.mxu0 %v431
      %648 = vmatprep.subr.bf16.mxu0 0
      %649 = vmatpush1.bf16.msra.mxu0 %v426
      %650 = vmatprep.subr.bf16.mxu0 0
      %651 = vmatpush1.bf16.msra.mxu0 %v421
      %652 = vmatprep.subr.bf16.mxu0 0
      %653 = vmatpush1.bf16.msra.mxu0 %v416
      %654 = vmatprep.subr.bf16.mxu0 0
      %655 = vmatpush2.bf16.msra.mxu0 0
      %656 = vmatprep.subr.bf16.mxu0 0
      %657 = vmatpush2.bf16.msra.mxu0 0
      %658 = vmatprep.subr.bf16.mxu0 0
      %659 = vmatpush2.bf16.msra.mxu0 0
      %660 = vmatprep.subr.bf16.mxu0 0
      %661 = vmatpush2.bf16.msra.mxu0 0
      %662 = vmatprep.subr.bf16.mxu0 0
      %663 = vmatpush2.bf16.msra.mxu0 0
      %664 = vmatprep.subr.bf16.mxu0 0
      %665 = vmatpush2.bf16.msra.mxu0 0
      %666 = vmatprep.subr.bf16.mxu0 0
      %667 = vmatpush2.bf16.msra.mxu0 0
      %668 = vmatprep.subr.bf16.mxu0 0
      %669 = vmatpush2.bf16.msra.mxu0 0
      %670 = vmatprep.mubr.bf16.mxu0 0
      %671 = vmatmul.mubr.bf16.gmra.mxu0 %v276
      %v672 = vpop.f32.mrf.mxu0
      %v673 = vadd.f32 %v254, %v672
      %v674 = vpop.f32.mrf.mxu0
      %v675 = vpop.f32.mrf.mxu0
      %v676 = vadd.f32 %v254, %v675
      %v677 = vpop.f32.mrf.mxu0
      %678 = vmatprep.mubr.bf16.mxu0 0
      %679 = vmatmul.mubr.bf16.gmra.mxu0 %v277
      %v680 = vpop.f32.mrf.mxu0
      %v681 = vadd.f32 %v254, %v680
      %v682 = vpop.f32.mrf.mxu0
      %v683 = vpop.f32.mrf.mxu0
      %v684 = vadd.f32 %v254, %v683
      %v685 = vpop.f32.mrf.mxu0
      %686 = vmatprep.mubr.bf16.mxu0 0
      %687 = vmatmul.mubr.bf16.gmra.mxu0 %v278
      %v688 = vpop.f32.mrf.mxu0
      %v689 = vadd.f32 %v254, %v688
      %v690 = vpop.f32.mrf.mxu0
      %v691 = vpop.f32.mrf.mxu0
      %v692 = vadd.f32 %v254, %v691
      %v693 = vpop.f32.mrf.mxu0
      %694 = vmatprep.mubr.bf16.mxu0 0
      %695 = vmatmul.mubr.bf16.gmra.mxu0 %v279
      %v696 = vpop.f32.mrf.mxu0
      %v697 = vadd.f32 %v254, %v696
      %v698 = vpop.f32.mrf.mxu0
      %v699 = vpop.f32.mrf.mxu0
      %v700 = vadd.f32 %v254, %v699
      %v701 = vpop.f32.mrf.mxu0
      %702 = vdwg.mxu0
      %v703 = vpack.c.bf16 %v531, %v527
      %v704 = vpack.c.bf16 %v533, %v529
      %v705 = vpack.c.bf16 %v604, %v600
      %v706 = vpack.c.bf16 %v606, %v602
      %v707 = vpack.c.bf16 %v676, %v673
      %v708 = vpack.c.bf16 %v541, %v537
      %v709 = vpack.c.bf16 %v543, %v539
      %v710 = vpack.c.bf16 %v614, %v610
      %v711 = vpack.c.bf16 %v616, %v612
      %v712 = vpack.c.bf16 %v684, %v681
      %v713 = vpack.c.bf16 %v551, %v547
      %v714 = vpack.c.bf16 %v553, %v549
      %v715 = vpack.c.bf16 %v624, %v620
      %v716 = vpack.c.bf16 %v626, %v622
      %v717 = vpack.c.bf16 %v692, %v689
      %v718 = vpack.c.bf16 %v561, %v557
      %v719 = vpack.c.bf16 %v563, %v559
      %v720 = vpack.c.bf16 %v634, %v630
      %v721 = vpack.c.bf16 %v636, %v632
      %v722 = vpack.c.bf16 %v700, %v697
      %v743 = vunpack.c.l.b16 %v703
      %v744 = vunpack.c.l.b16 %v704
      %v745 = vunpack.c.l.b16 %v705
      %v746 = vunpack.c.l.b16 %v706
      %v747 = vunpack.c.l.b16 %v707
      %v748 = vunpack.c.h.b16 %v703
      %v749 = vunpack.c.h.b16 %v704
      %v750 = vunpack.c.h.b16 %v705
      %v751 = vunpack.c.h.b16 %v706
      %v752 = vunpack.c.h.b16 %v707
      %v753 = vunpack.c.l.b16 %v708
      %v754 = vunpack.c.l.b16 %v709
      %v755 = vunpack.c.l.b16 %v710
      %v756 = vunpack.c.l.b16 %v711
      %v757 = vunpack.c.l.b16 %v712
      %v758 = vunpack.c.h.b16 %v708
      %v759 = vunpack.c.h.b16 %v709
      %v760 = vunpack.c.h.b16 %v710
      %v761 = vunpack.c.h.b16 %v711
      %v762 = vunpack.c.h.b16 %v712
      %v763 = vunpack.c.l.b16 %v713
      %v764 = vunpack.c.l.b16 %v714
      %v765 = vunpack.c.l.b16 %v715
      %v766 = vunpack.c.l.b16 %v716
      %v767 = vunpack.c.l.b16 %v717
      %v768 = vunpack.c.h.b16 %v713
      %v769 = vunpack.c.h.b16 %v714
      %v770 = vunpack.c.h.b16 %v715
      %v771 = vunpack.c.h.b16 %v716
      %v772 = vunpack.c.h.b16 %v717
      %v773 = vunpack.c.l.b16 %v718
      %v774 = vunpack.c.l.b16 %v719
      %v775 = vunpack.c.l.b16 %v720
      %v776 = vunpack.c.l.b16 %v721
      %v777 = vunpack.c.l.b16 %v722
      %v778 = vunpack.c.h.b16 %v718
      %v779 = vunpack.c.h.b16 %v719
      %v780 = vunpack.c.h.b16 %v720
      %v781 = vunpack.c.h.b16 %v721
      %v782 = vunpack.c.h.b16 %v722
      %v783 = vpack.c.b16 %v744, %v743
      %v784 = vpack.c.b16 %v746, %v745
      %v785 = vpack.c.b16 %v747, %v747
      %v786 = vpack.c.b16 %v749, %v748
      %v787 = vpack.c.b16 %v751, %v750
      %v788 = vpack.c.b16 %v752, %v752
      %v789 = vpack.c.b16 %v754, %v753
      %v790 = vpack.c.b16 %v756, %v755
      %v791 = vpack.c.b16 %v757, %v757
      %v792 = vpack.c.b16 %v759, %v758
      %v793 = vpack.c.b16 %v761, %v760
      %v794 = vpack.c.b16 %v762, %v762
      %v795 = vpack.c.b16 %v764, %v763
      %v796 = vpack.c.b16 %v766, %v765
      %v797 = vpack.c.b16 %v767, %v767
      %v798 = vpack.c.b16 %v769, %v768
      %v799 = vpack.c.b16 %v771, %v770
      %v800 = vpack.c.b16 %v772, %v772
      %v801 = vpack.c.b16 %v774, %v773
      %v802 = vpack.c.b16 %v776, %v775
      %v803 = vpack.c.b16 %v777, %v777
      %v804 = vpack.c.b16 %v779, %v778
      %v805 = vpack.c.b16 %v781, %v780
      %v806 = vpack.c.b16 %v782, %v782
      %831 = vst [vmem:[%s174] sm:$0xff] %v783
      %832 = vst [vmem:[%s174 + $0x8] sm:$0xff] %v784
      %833 = vst [vmem:[%s174 + $0x10] sm:$0xf] %v785
      %834 = vst [vmem:[%s174 + $0x14] sm:$0xff] %v786
      %835 = vst [vmem:[%s174 + $0x1c] sm:$0xff] %v787
      %836 = vst [vmem:[%s174 + $0x24] sm:$0xf] %v788
      %837 = vst [vmem:[%s174 + $0x28] sm:$0xff] %v789
      %838 = vst [vmem:[%s174 + $0x30] sm:$0xff] %v790
      %839 = vst [vmem:[%s174 + $0x38] sm:$0xf] %v791
      %840 = vst [vmem:[%s174 + $0x3c] sm:$0xff] %v792
      %841 = vst [vmem:[%s174 + $0x44] sm:$0xff] %v793
      %842 = vst [vmem:[%s174 + $0x4c] sm:$0xf] %v794
      %843 = vst [vmem:[%s174 + $0x50] sm:$0xff] %v795
      %844 = vst [vmem:[%s174 + $0x58] sm:$0xff] %v796
      %845 = vst [vmem:[%s174 + $0x60] sm:$0xf] %v797
      %846 = vst [vmem:[%s174 + $0x64] sm:$0xff] %v798
      %847 = vst [vmem:[%s174 + $0x6c] sm:$0xff] %v799
      %848 = vst [vmem:[%s174 + $0x74] sm:$0xf] %v800
      %849 = vst [vmem:[%s174 + $0x78] sm:$0xff] %v801
      %850 = vst [vmem:[%s174 + $0x80] sm:$0xff] %v802
      %851 = vst [vmem:[%s174 + $0x88] sm:$0xf] %v803
      %852 = vst [vmem:[%s174 + $0x8c] sm:$0xff] %v804
      %853 = vst [vmem:[%s174 + $0x94] sm:$0xff] %v805
      %854 = vst [vmem:[%s174 + $0x9c] sm:$0xf] %v806
      %s855 = smul.u32 8, %s14
      %p856 = scmp.lt.s32.totalorder %s855, 15
      %s857 = scalar_select %p856, %s855, 15
      %s858 = smul.addr %s857, 5
      %s859 = smul.addr %s858, 4
      %s860 = scalar_lea.vmem %s3, %s859
      // Predicated region
      $region33: #{transformer_forward.16} parent=31 // pred_check
        %p861 = pneg %p100
      $region34: #{transformer_forward.16} parent=31 // pred_check_branch
        %863 = sbr.rel (%p861) target = $region36
      $region35: #{transformer_forward.16} parent=31 // pred_region
        %s864 = smul.u32 8, %s14
      $region36: #{transformer_forward.16} parent=31 // pred_fallthru
        _
    $region32: #{transformer_forward.16} parent=5 // pred_fallthru
      _
    %p865 = scmp.le.s32.totalorder 2, %s9
    // Predicated region
    $region37: #{transformer_forward.16} parent=5 // pred_check
      %p866 = pneg %p865
    $region38: #{transformer_forward.16} parent=5 // pred_check_branch
      %868 = sbr.rel (%p866) target = $region40
    $region39: #{transformer_forward.16} parent=5 // pred_region
      %s869 = ssub.s32 %s9, 2
      // Predicated region
      $region41: #{transformer_forward.16} parent=39 // pred_check
        %p870 = pneg %p106
      $region42: #{transformer_forward.16} parent=39 // pred_check_branch
        %872 = sbr.rel (%p870) target = $region44
      $region43: #{transformer_forward.16} parent=39 // pred_region
        %s873 = smul.u32 8, %s15
        %p874 = scmp.lt.s32.totalorder %s873, 15
        %s875 = scalar_select %p874, %s873, 15
        %s876 = smul.addr %s875, 5
        %s877 = smul.addr %s876, 4
        %s878 = scalar_lea.vmem %s3, %s877
      $region44: #{transformer_forward.16} parent=39 // pred_fallthru
        _
    $region40: #{transformer_forward.16} parent=5 // pred_fallthru
      _
  $region6: #{transformer_forward.16} parent=0 // loop_footer
    %s13 = sadd.s32 1, %s9
  $region7: #{transformer_forward.16} parent=0 // loop_footer_branch
    %8 = sbr.rel target = $region3
  $region8: #{transformer_forward.16} parent=0 // loop_exit
    _

// kernel: transformer_forward.13
$region0: #{transformer_forward.13}
  #allocation0 [shape = 'u32[]', space=smem, size = 0x4, offset = 0x4, fixed_abs, tag = 'smem constant byte address 0x4 - core index']
  #allocation1 [shape = 'u32[144,128]{1,0:T(1,128)}', space=vmem, size = 0x12000, scoped, tag = 'internal scratch']
  %s0 = inlined_call_operand.vmem [shape: bf16[512,128], index: 0, kind: input, shape index: {}]
  %s1 = inlined_call_operand.vmem [shape: bf16[128,128], index: 1, kind: input, shape index: {}]
  %s2 = inlined_call_operand.vmem [shape: f32[1,128], index: 2, kind: input, shape index: {}]
  %s3 = inlined_call_operand.vmem [shape: bf16[512,128], index: 3, kind: output, shape index: {}]
  %s4 = sld [smem:[#allocation0]]
  $region45: #{transformer_forward.13} parent=0
    _
  %s6 = ssub.s32 1, %s4
  %s7 = scalar_select 0, %s6, %s4
  loop: start=0, step=1, limit=4
  $region2: #{transformer_forward.13} parent=0 // loop_pre_header
    _
  $region3: #{transformer_forward.13} parent=0 // loop_header
    %s9 = sphi 0, %s13
    %p10 = scmp.ge.s32.totalorder %s9, 4
    %s19 = sphi 0, %s21
    %s22 = sphi 0, %s19
    %s23 = sphi 0, %s22
    %s39 = sphi 0, %s23
    %s43 = sphi 0, %s43
    %s45 = sphi 0, %s43
    %s46 = sphi 0, %s45
    %s60 = sphi 0, %s46
    %s64 = sphi 0, %s64
    %s66 = sphi 0, %s64
    %s67 = sphi 0, %s66
    %s81 = sphi 0, %s67
    %s87 = sphi 0, %s89
    %s90 = sphi 0, %s87
    %s91 = sphi 0, %s90
    %s107 = sphi 0, %s91
  $region4: #{transformer_forward.13} parent=0 // loop_header_branch
    %12 = sbr.rel (%p10) target = $region8
  $region5: #{transformer_forward.13} parent=0 // loop_body
    %s14 = ssub.s32 %s9, 1
    %s15 = ssub.s32 %s9, 2
    %s16 = sadd.s32 %s9, 1
    %s17 = ssub.s32 %s9, %s16
    %p18 = scmp.eq.s32.totalorder %s17, 0
    %s20 = sadd.s32 %s19, 1
    %s21 = scalar_select %p18, %s19, %s20
    %p24 = pneg %p18
    %p25 = scmp.eq.s32.totalorder %s9, 1
    %p26 = por %p24, %p25
    %p27 = scmp.ne.s32.totalorder %s19, %s22
    %p28 = scmp.eq.s32.totalorder %s9, 0
    %p29 = por %p27, %p28
    %p30 = scmp.ne.s32.totalorder %s19, %s22
    %p31 = scmp.eq.s32.totalorder %s14, 1
    %p32 = por %p30, %p31
    %p33 = scmp.ne.s32.totalorder %s22, %s23
    %p34 = scmp.eq.s32.totalorder %s14, 0
    %p35 = por %p33, %p34
    %p36 = scmp.ne.s32.totalorder %s22, %s23
    %p37 = scmp.eq.s32.totalorder %s15, 1
    %p38 = por %p36, %p37
    %p40 = scmp.ne.s32.totalorder %s23, %s39
    %p41 = scmp.eq.s32.totalorder %s15, 0
    %p42 = por %p40, %p41
    %s44 = sadd.s32 %s43, 1
    %p47 = scmp.eq.s32.totalorder %s9, 1
    %p48 = scmp.ne.s32.totalorder %s43, %s45
    %p49 = scmp.eq.s32.totalorder %s9, 0
    %p50 = por %p48, %p49
    %p51 = scmp.ne.s32.totalorder %s43, %s45
    %p52 = scmp.eq.s32.totalorder %s14, 1
    %p53 = por %p51, %p52
    %p54 = scmp.ne.s32.totalorder %s45, %s46
    %p55 = scmp.eq.s32.totalorder %s14, 0
    %p56 = por %p54, %p55
    %p57 = scmp.ne.s32.totalorder %s45, %s46
    %p58 = scmp.eq.s32.totalorder %s15, 1
    %p59 = por %p57, %p58
    %p61 = scmp.ne.s32.totalorder %s46, %s60
    %p62 = scmp.eq.s32.totalorder %s15, 0
    %p63 = por %p61, %p62
    %s65 = sadd.s32 %s64, 1
    %p68 = scmp.eq.s32.totalorder %s9, 1
    %p69 = scmp.ne.s32.totalorder %s64, %s66
    %p70 = scmp.eq.s32.totalorder %s9, 0
    %p71 = por %p69, %p70
    %p72 = scmp.ne.s32.totalorder %s64, %s66
    %p73 = scmp.eq.s32.totalorder %s14, 1
    %p74 = por %p72, %p73
    %p75 = scmp.ne.s32.totalorder %s66, %s67
    %p76 = scmp.eq.s32.totalorder %s14, 0
    %p77 = por %p75, %p76
    %p78 = scmp.ne.s32.totalorder %s66, %s67
    %p79 = scmp.eq.s32.totalorder %s15, 1
    %p80 = por %p78, %p79
    %p82 = scmp.ne.s32.totalorder %s67, %s81
    %p83 = scmp.eq.s32.totalorder %s15, 0
    %p84 = por %p82, %p83
    %s85 = ssub.s32 %s9, %s16
    %p86 = scmp.eq.s32.totalorder %s85, 0
    %s88 = sadd.s32 %s87, 1
    %s89 = scalar_select %p86, %s87, %s88
    %p92 = pneg %p86
    %p93 = scmp.eq.s32.totalorder %s9, 1
    %p94 = por %p92, %p93
    %p95 = scmp.ne.s32.totalorder %s87, %s90
    %p96 = scmp.eq.s32.totalorder %s9, 0
    %p97 = por %p95, %p96
    %p98 = scmp.ne.s32.totalorder %s87, %s90
    %p99 = scmp.eq.s32.totalorder %s14, 1
    %p100 = por %p98, %p99
    %p101 = scmp.ne.s32.totalorder %s90, %s91
    %p102 = scmp.eq.s32.totalorder %s14, 0
    %p103 = por %p101, %p102
    %p104 = scmp.ne.s32.totalorder %s90, %s91
    %p105 = scmp.eq.s32.totalorder %s15, 1
    %p106 = por %p104, %p105
    %p108 = scmp.ne.s32.totalorder %s91, %s107
    %p109 = scmp.eq.s32.totalorder %s15, 0
    %p110 = por %p108, %p109
    %p111 = scmp.le.s32.totalorder 1, %s9
    %p112 = scmp.lt.s32.totalorder %s9, 3
    %p113 = pnand %p111, %p112
    %p114 = pneg %p113
    // Predicated region
    $region9: #{transformer_forward.13} parent=5 // pred_check
      _
    $region10: #{transformer_forward.13} parent=5 // pred_check_branch
      %116 = sbr.rel (%p113) target = $region12
    $region11: #{transformer_forward.13} parent=5 // pred_region
      %s117 = ssub.s32 %s9, 1
      // Predicated region
      $region13: #{transformer_forward.13} parent=11 // pred_check
        %p118 = pneg %p56
      $region14: #{transformer_forward.13} parent=11 // pred_check_branch
        %120 = sbr.rel (%p118) target = $region16
      $region15: #{transformer_forward.13} parent=11 // pred_region
        _
      $region16: #{transformer_forward.13} parent=11 // pred_fallthru
        _
      // Predicated region
      $region17: #{transformer_forward.13} parent=11 // pred_check
        %p121 = pneg %p77
      $region18: #{transformer_forward.13} parent=11 // pred_check_branch
        %123 = sbr.rel (%p121) target = $region20
      $region19: #{transformer_forward.13} parent=11 // pred_region
        _
      $region20: #{transformer_forward.13} parent=11 // pred_fallthru
        _
    $region12: #{transformer_forward.13} parent=5 // pred_fallthru
      _
    %p124 = scmp.lt.s32.totalorder %s9, 2
    // Predicated region
    $region21: #{transformer_forward.13} parent=5 // pred_check
      %p125 = pneg %p124
    $region22: #{transformer_forward.13} parent=5 // pred_check_branch
      %127 = sbr.rel (%p125) target = $region24
    $region23: #{transformer_forward.13} parent=5 // pred_region
      // Predicated region
      $region25: #{transformer_forward.13} parent=23 // pred_check
        %p128 = pneg %p29
      $region26: #{transformer_forward.13} parent=23 // pred_check_branch
        %130 = sbr.rel (%p128) target = $region28
      $region27: #{transformer_forward.13} parent=23 // pred_region
        %s131 = smul.u32 32, %s9
        %p132 = scmp.lt.s32.totalorder %s131, 63
        %s133 = scalar_select %p132, %s131, 63
        %s134 = smul.addr %s133, 4
        %s135 = scalar_lea.vmem %s0, %s134
        %s136 = smul.u32 32, %s9
      $region28: #{transformer_forward.13} parent=23 // pred_fallthru
        _
    $region24: #{transformer_forward.13} parent=5 // pred_fallthru
      _
    %p137 = scmp.le.s32.totalorder 1, %s9
    %p138 = scmp.lt.s32.totalorder %s9, 3
    %p139 = pnand %p137, %p138
    %p140 = pneg %p139
    // Predicated region
    $region29: #{transformer_forward.13} parent=5 // pred_check
      _
    $region30: #{transformer_forward.13} parent=5 // pred_check_branch
      %142 = sbr.rel (%p139) target = $region32
    $region31: #{transformer_forward.13} parent=5 // pred_region
      %s143 = ssub.s32 %s9, 1
      %s144 = smul.u32 32, %s14
      %p145 = scmp.lt.s32.totalorder %s144, 63
      %s146 = scalar_select %p145, %s144, 63
      %s147 = smul.addr %s146, 4
      %s148 = scalar_lea.vmem %s0, %s147
      %p149 = pneg %p35
      %p150 = pneg %p32
      %p151 = pneg %p56
      %p152 = pneg %p53
      %p153 = pneg %p77
      %p154 = pneg %p74
      %p155 = pneg %p103
      %p156 = pneg %p100
      %s157 = smul.u32 32, %s14
      %p158 = scmp.lt.s32.totalorder %s157, 63
      %s159 = scalar_select %p158, %s157, 63
      %s160 = smul.addr %s159, 4
      %s161 = scalar_lea.vmem %s3, %s160
      %s162 = smul.u32 32, %s14
      %p163 = scmp.lt.s32.totalorder %s162, 63
      %s164 = scalar_select %p163, %s162, 63
      %s165 = smul.addr %s164, 4
      %s166 = scalar_lea.vmem %s0, %s165
      %s167 = smul.u32 32, %s14
      %s168 = smul.u32 32, %s14
      %p169 = scmp.lt.s32.totalorder %s168, 63
      %s170 = scalar_select %p169, %s168, 63
      %s171 = smul.addr %s170, 4
      %s172 = scalar_lea.vmem %s3, %s171
      %s173 = smul.u32 32, %s14
      %v175 = vld [vmem:[%s166] sm:$0xf]
      %v176 = vld [vmem:[%s166 + $0x4] sm:$0xf]
      %v177 = vld [vmem:[%s166 + $0x8] sm:$0xf]
      %v178 = vld [vmem:[%s166 + $0xc] sm:$0xf]
      %v179 = vld [vmem:[%s166 + $0x10] sm:$0xf]
      %v180 = vld [vmem:[%s166 + $0x14] sm:$0xf]
      %v181 = vld [vmem:[%s166 + $0x18] sm:$0xf]
      %v182 = vld [vmem:[%s166 + $0x1c] sm:$0xf]
      %v183 = vld [vmem:[%s166 + $0x20] sm:$0xf]
      %v184 = vld [vmem:[%s166 + $0x24] sm:$0xf]
      %v185 = vld [vmem:[%s166 + $0x28] sm:$0xf]
      %v186 = vld [vmem:[%s166 + $0x2c] sm:$0xf]
      %v187 = vld [vmem:[%s166 + $0x30] sm:$0xf]
      %v188 = vld [vmem:[%s166 + $0x34] sm:$0xf]
      %v189 = vld [vmem:[%s166 + $0x38] sm:$0xf]
      %v190 = vld [vmem:[%s166 + $0x3c] sm:$0xf]
      %v191 = vld [vmem:[%s166 + $0x40] sm:$0xf]
      %v192 = vld [vmem:[%s166 + $0x44] sm:$0xf]
      %v193 = vld [vmem:[%s166 + $0x48] sm:$0xf]
      %v194 = vld [vmem:[%s166 + $0x4c] sm:$0xf]
      %v195 = vld [vmem:[%s166 + $0x50] sm:$0xf]
      %v196 = vld [vmem:[%s166 + $0x54] sm:$0xf]
      %v197 = vld [vmem:[%s166 + $0x58] sm:$0xf]
      %v198 = vld [vmem:[%s166 + $0x5c] sm:$0xf]
      %v199 = vld [vmem:[%s166 + $0x60] sm:$0xf]
      %v200 = vld [vmem:[%s166 + $0x64] sm:$0xf]
      %v201 = vld [vmem:[%s166 + $0x68] sm:$0xf]
      %v202 = vld [vmem:[%s166 + $0x6c] sm:$0xf]
      %v203 = vld [vmem:[%s166 + $0x70] sm:$0xf]
      %v204 = vld [vmem:[%s166 + $0x74] sm:$0xf]
      %v205 = vld [vmem:[%s166 + $0x78] sm:$0xf]
      %v206 = vld [vmem:[%s166 + $0x7c] sm:$0xf]
      %v207 = vld [vmem:[%s1] sm:$0xf]
      %v208 = vld [vmem:[%s1 + $0x4] sm:$0xf]
      %v209 = vld [vmem:[%s1 + $0x8] sm:$0xf]
      %v210 = vld [vmem:[%s1 + $0xc] sm:$0xf]
      %v211 = vld [vmem:[%s1 + $0x10] sm:$0xf]
      %v212 = vld [vmem:[%s1 + $0x14] sm:$0xf]
      %v213 = vld [vmem:[%s1 + $0x18] sm:$0xf]
      %v214 = vld [vmem:[%s1 + $0x1c] sm:$0xf]
      %v215 = vld [vmem:[%s1 + $0x20] sm:$0xf]
      %v216 = vld [vmem:[%s1 + $0x24] sm:$0xf]
      %v217 = vld [vmem:[%s1 + $0x28] sm:$0xf]
      %v218 = vld [vmem:[%s1 + $0x2c] sm:$0xf]
      %v219 = vld [vmem:[%s1 + $0x30] sm:$0xf]
      %v220 = vld [vmem:[%s1 + $0x34] sm:$0xf]
      %v221 = vld [vmem:[%s1 + $0x38] sm:$0xf]
      %v222 = vld [vmem:[%s1 + $0x3c] sm:$0xf]
      %v223 = vld [vmem:[%s2] sm:$0x1]
      %v225 = vlaneseq
      %v226 = vshrl.u32 %v225, 7
      %v227 = vsub.s32 0, %v226
      %v228 = vrot.slane %v223, %v227
      %v262 = vunpack.c.l.b16 %v175
      %v263 = vunpack.c.l.b16 %v176
      %v264 = vunpack.c.l.b16 %v177
      %v265 = vunpack.c.l.b16 %v178
      %v266 = vunpack.c.l.b16 %v179
      %v267 = vunpack.c.l.b16 %v180
      %v268 = vunpack.c.l.b16 %v181
      %v269 = vunpack.c.l.b16 %v182
      %v270 = vunpack.c.l.b16 %v183
      %v271 = vunpack.c.l.b16 %v184
      %v272 = vunpack.c.l.b16 %v185
      %v273 = vunpack.c.l.b16 %v186
      %v274 = vunpack.c.l.b16 %v187
      %v275 = vunpack.c.l.b16 %v188
      %v276 = vunpack.c.l.b16 %v189
      %v277 = vunpack.c.l.b16 %v190
      %v278 = vunpack.c.l.b16 %v191
      %v279 = vunpack.c.l.b16 %v192
      %v280 = vunpack.c.l.b16 %v193
      %v281 = vunpack.c.l.b16 %v194
      %v282 = vunpack.c.l.b16 %v195
      %v283 = vunpack.c.l.b16 %v196
      %v284 = vunpack.c.l.b16 %v197
      %v285 = vunpack.c.l.b16 %v198
      %v286 = vunpack.c.l.b16 %v199
      %v287 = vunpack.c.l.b16 %v200
      %v288 = vunpack.c.l.b16 %v201
      %v289 = vunpack.c.l.b16 %v202
      %v290 = vunpack.c.l.b16 %v203
      %v291 = vunpack.c.l.b16 %v204
      %v292 = vunpack.c.l.b16 %v205
      %v293 = vunpack.c.l.b16 %v206
      %v294 = vpack.c.b16 %v263, %v262
      %v295 = vpack.c.b16 %v265, %v264
      %v296 = vpack.c.b16 %v267, %v266
      %v297 = vpack.c.b16 %v269, %v268
      %v298 = vpack.c.b16 %v271, %v270
      %v299 = vpack.c.b16 %v273, %v272
      %v300 = vpack.c.b16 %v275, %v274
      %v301 = vpack.c.b16 %v277, %v276
      %v302 = vpack.c.b16 %v279, %v278
      %v303 = vpack.c.b16 %v281, %v280
      %v304 = vpack.c.b16 %v283, %v282
      %v305 = vpack.c.b16 %v285, %v284
      %v306 = vpack.c.b16 %v287, %v286
      %v307 = vpack.c.b16 %v289, %v288
      %v308 = vpack.c.b16 %v291, %v290
      %v309 = vpack.c.b16 %v293, %v292
      %v342 = vunpack.c.l.b16 %v207
      %v343 = vunpack.c.l.b16 %v208
      %v344 = vunpack.c.l.b16 %v209
      %v345 = vunpack.c.l.b16 %v210
      %v346 = vunpack.c.l.b16 %v211
      %v347 = vunpack.c.l.b16 %v212
      %v348 = vunpack.c.l.b16 %v213
      %v349 = vunpack.c.l.b16 %v214
      %v350 = vunpack.c.l.b16 %v215
      %v351 = vunpack.c.l.b16 %v216
      %v352 = vunpack.c.l.b16 %v217
      %v353 = vunpack.c.l.b16 %v218
      %v354 = vunpack.c.l.b16 %v219
      %v355 = vunpack.c.l.b16 %v220
      %v356 = vunpack.c.l.b16 %v221
      %v357 = vunpack.c.l.b16 %v222
      %v358 = vpack.c.b16 %v343, %v342
      %v359 = vpack.c.b16 %v345, %v344
      %v360 = vpack.c.b16 %v347, %v346
      %v361 = vpack.c.b16 %v349, %v348
      %v362 = vpack.c.b16 %v351, %v350
      %v363 = vpack.c.b16 %v353, %v352
      %v364 = vpack.c.b16 %v355, %v354
      %v365 = vpack.c.b16 %v357, %v356
      %374 = vmatprep.subr.bf16.mxu0 0
      %375 = vmatpush1.bf16.msra.mxu0 %v365
      %376 = vmatprep.subr.bf16.mxu0 0
      %377 = vmatpush1.bf16.msra.mxu0 %v364
      %378 = vmatprep.subr.bf16.mxu0 0
      %379 = vmatpush1.bf16.msra.mxu0 %v363
      %380 = vmatprep.subr.bf16.mxu0 0
      %381 = vmatpush1.bf16.msra.mxu0 %v362
      %382 = vmatprep.subr.bf16.mxu0 0
      %383 = vmatpush1.bf16.msra.mxu0 %v361
      %384 = vmatprep.subr.bf16.mxu0 0
      %385 = vmatpush1.bf16.msra.mxu0 %v360
      %386 = vmatprep.subr.bf16.mxu0 0
      %387 = vmatpush1.bf16.msra.mxu0 %v359
      %388 = vmatprep.subr.bf16.mxu0 0
      %389 = vmatpush1.bf16.msra.mxu0 %v358
      %390 = vmatprep.subr.bf16.mxu0 0
      %391 = vmatpush2.bf16.msra.mxu0 0
      %392 = vmatprep.subr.bf16.mxu0 0
      %393 = vmatpush2.bf16.msra.mxu0 0
      %394 = vmatprep.subr.bf16.mxu0 0
      %395 = vmatpush2.bf16.msra.mxu0 0
      %396 = vmatprep.subr.bf16.mxu0 0
      %397 = vmatpush2.bf16.msra.mxu0 0
      %398 = vmatprep.subr.bf16.mxu0 0
      %399 = vmatpush2.bf16.msra.mxu0 0
      %400 = vmatprep.subr.bf16.mxu0 0
      %401 = vmatpush2.bf16.msra.mxu0 0
      %402 = vmatprep.subr.bf16.mxu0 0
      %403 = vmatpush2.bf16.msra.mxu0 0
      %404 = vmatprep.subr.bf16.mxu0 0
      %405 = vmatpush2.bf16.msra.mxu0 0
      %406 = vmatprep.mubr.bf16.mxu0 0
      %407 = vmatmul.mubr.bf16.gmra.mxu0 %v294
      %v408 = vpop.f32.mrf.mxu0
      %v409 = vadd.f32 %v228, %v408
      %v410 = vpop.f32.mrf.mxu0
      %v411 = vpop.f32.mrf.mxu0
      %v412 = vadd.f32 %v228, %v411
      %v413 = vpop.f32.mrf.mxu0
      %414 = vmatprep.mubr.bf16.mxu0 0
      %415 = vmatmul.mubr.bf16.gmra.mxu0 %v295
      %v416 = vpop.f32.mrf.mxu0
      %v417 = vadd.f32 %v228, %v416
      %v418 = vpop.f32.mrf.mxu0
      %v419 = vpop.f32.mrf.mxu0
      %v420 = vadd.f32 %v228, %v419
      %v421 = vpop.f32.mrf.mxu0
      %422 = vmatprep.mubr.bf16.mxu0 0
      %423 = vmatmul.mubr.bf16.gmra.mxu0 %v296
      %v424 = vpop.f32.mrf.mxu0
      %v425 = vadd.f32 %v228, %v424
      %v426 = vpop.f32.mrf.mxu0
      %v427 = vpop.f32.mrf.mxu0
      %v428 = vadd.f32 %v228, %v427
      %v429 = vpop.f32.mrf.mxu0
      %430 = vmatprep.mubr.bf16.mxu0 0
      %431 = vmatmul.mubr.bf16.gmra.mxu0 %v297
      %v432 = vpop.f32.mrf.mxu0
      %v433 = vadd.f32 %v228, %v432
      %v434 = vpop.f32.mrf.mxu0
      %v435 = vpop.f32.mrf.mxu0
      %v436 = vadd.f32 %v228, %v435
      %v437 = vpop.f32.mrf.mxu0
      %438 = vmatprep.mubr.bf16.mxu0 0
      %439 = vmatmul.mubr.bf16.gmra.mxu0 %v298
      %v440 = vpop.f32.mrf.mxu0
      %v441 = vadd.f32 %v228, %v440
      %v442 = vpop.f32.mrf.mxu0
      %v443 = vpop.f32.mrf.mxu0
      %v444 = vadd.f32 %v228, %v443
      %v445 = vpop.f32.mrf.mxu0
      %446 = vmatprep.mubr.bf16.mxu0 0
      %447 = vmatmul.mubr.bf16.gmra.mxu0 %v299
      %v448 = vpop.f32.mrf.mxu0
      %v449 = vadd.f32 %v228, %v448
      %v450 = vpop.f32.mrf.mxu0
      %v451 = vpop.f32.mrf.mxu0
      %v452 = vadd.f32 %v228, %v451
      %v453 = vpop.f32.mrf.mxu0
      %454 = vmatprep.mubr.bf16.mxu0 0
      %455 = vmatmul.mubr.bf16.gmra.mxu0 %v300
      %v456 = vpop.f32.mrf.mxu0
      %v457 = vadd.f32 %v228, %v456
      %v458 = vpop.f32.mrf.mxu0
      %v459 = vpop.f32.mrf.mxu0
      %v460 = vadd.f32 %v228, %v459
      %v461 = vpop.f32.mrf.mxu0
      %462 = vmatprep.mubr.bf16.mxu0 0
      %463 = vmatmul.mubr.bf16.gmra.mxu0 %v301
      %v464 = vpop.f32.mrf.mxu0
      %v465 = vadd.f32 %v228, %v464
      %v466 = vpop.f32.mrf.mxu0
      %v467 = vpop.f32.mrf.mxu0
      %v468 = vadd.f32 %v228, %v467
      %v469 = vpop.f32.mrf.mxu0
      %470 = vmatprep.mubr.bf16.mxu0 0
      %471 = vmatmul.mubr.bf16.gmra.mxu0 %v302
      %v472 = vpop.f32.mrf.mxu0
      %v473 = vadd.f32 %v228, %v472
      %v474 = vpop.f32.mrf.mxu0
      %v475 = vpop.f32.mrf.mxu0
      %v476 = vadd.f32 %v228, %v475
      %v477 = vpop.f32.mrf.mxu0
      %478 = vmatprep.mubr.bf16.mxu0 0
      %479 = vmatmul.mubr.bf16.gmra.mxu0 %v303
      %v480 = vpop.f32.mrf.mxu0
      %v481 = vadd.f32 %v228, %v480
      %v482 = vpop.f32.mrf.mxu0
      %v483 = vpop.f32.mrf.mxu0
      %v484 = vadd.f32 %v228, %v483
      %v485 = vpop.f32.mrf.mxu0
      %486 = vmatprep.mubr.bf16.mxu0 0
      %487 = vmatmul.mubr.bf16.gmra.mxu0 %v304
      %v488 = vpop.f32.mrf.mxu0
      %v489 = vadd.f32 %v228, %v488
      %v490 = vpop.f32.mrf.mxu0
      %v491 = vpop.f32.mrf.mxu0
      %v492 = vadd.f32 %v228, %v491
      %v493 = vpop.f32.mrf.mxu0
      %494 = vmatprep.mubr.bf16.mxu0 0
      %495 = vmatmul.mubr.bf16.gmra.mxu0 %v305
      %v496 = vpop.f32.mrf.mxu0
      %v497 = vadd.f32 %v228, %v496
      %v498 = vpop.f32.mrf.mxu0
      %v499 = vpop.f32.mrf.mxu0
      %v500 = vadd.f32 %v228, %v499
      %v501 = vpop.f32.mrf.mxu0
      %502 = vmatprep.mubr.bf16.mxu0 0
      %503 = vmatmul.mubr.bf16.gmra.mxu0 %v306
      %v504 = vpop.f32.mrf.mxu0
      %v505 = vadd.f32 %v228, %v504
      %v506 = vpop.f32.mrf.mxu0
      %v507 = vpop.f32.mrf.mxu0
      %v508 = vadd.f32 %v228, %v507
      %v509 = vpop.f32.mrf.mxu0
      %510 = vmatprep.mubr.bf16.mxu0 0
      %511 = vmatmul.mubr.bf16.gmra.mxu0 %v307
      %v512 = vpop.f32.mrf.mxu0
      %v513 = vadd.f32 %v228, %v512
      %v514 = vpop.f32.mrf.mxu0
      %v515 = vpop.f32.mrf.mxu0
      %v516 = vadd.f32 %v228, %v515
      %v517 = vpop.f32.mrf.mxu0
      %518 = vmatprep.mubr.bf16.mxu0 0
      %519 = vmatmul.mubr.bf16.gmra.mxu0 %v308
      %v520 = vpop.f32.mrf.mxu0
      %v521 = vadd.f32 %v228, %v520
      %v522 = vpop.f32.mrf.mxu0
      %v523 = vpop.f32.mrf.mxu0
      %v524 = vadd.f32 %v228, %v523
      %v525 = vpop.f32.mrf.mxu0
      %526 = vmatprep.mubr.bf16.mxu0 0
      %527 = vmatmul.mubr.bf16.gmra.mxu0 %v309
      %v528 = vpop.f32.mrf.mxu0
      %v529 = vadd.f32 %v228, %v528
      %v530 = vpop.f32.mrf.mxu0
      %v531 = vpop.f32.mrf.mxu0
      %v532 = vadd.f32 %v228, %v531
      %v533 = vpop.f32.mrf.mxu0
      %534 = vdwg.mxu0
      %v535 = vpack.c.bf16 %v412, %v409
      %v536 = vpack.c.bf16 %v420, %v417
      %v537 = vpack.c.bf16 %v428, %v425
      %v538 = vpack.c.bf16 %v436, %v433
      %v539 = vpack.c.bf16 %v444, %v441
      %v540 = vpack.c.bf16 %v452, %v449
      %v541 = vpack.c.bf16 %v460, %v457
      %v542 = vpack.c.bf16 %v468, %v465
      %v543 = vpack.c.bf16 %v476, %v473
      %v544 = vpack.c.bf16 %v484, %v481
      %v545 = vpack.c.bf16 %v492, %v489
      %v546 = vpack.c.bf16 %v500, %v497
      %v547 = vpack.c.bf16 %v508, %v505
      %v548 = vpack.c.bf16 %v516, %v513
      %v549 = vpack.c.bf16 %v524, %v521
      %v550 = vpack.c.bf16 %v532, %v529
      %v567 = vunpack.c.l.b16 %v535
      %v568 = vunpack.c.h.b16 %v535
      %v569 = vunpack.c.l.b16 %v536
      %v570 = vunpack.c.h.b16 %v536
      %v571 = vunpack.c.l.b16 %v537
      %v572 = vunpack.c.h.b16 %v537
      %v573 = vunpack.c.l.b16 %v538
      %v574 = vunpack.c.h.b16 %v538
      %v575 = vunpack.c.l.b16 %v539
      %v576 = vunpack.c.h.b16 %v539
      %v577 = vunpack.c.l.b16 %v540
      %v578 = vunpack.c.h.b16 %v540
      %v579 = vunpack.c.l.b16 %v541
      %v580 = vunpack.c.h.b16 %v541
      %v581 = vunpack.c.l.b16 %v542
      %v582 = vunpack.c.h.b16 %v542
      %v583 = vunpack.c.l.b16 %v543
      %v584 = vunpack.c.h.b16 %v543
      %v585 = vunpack.c.l.b16 %v544
      %v586 = vunpack.c.h.b16 %v544
      %v587 = vunpack.c.l.b16 %v545
      %v588 = vunpack.c.h.b16 %v545
      %v589 = vunpack.c.l.b16 %v546
      %v590 = vunpack.c.h.b16 %v546
      %v591 = vunpack.c.l.b16 %v547
      %v592 = vunpack.c.h.b16 %v547
      %v593 = vunpack.c.l.b16 %v548
      %v594 = vunpack.c.h.b16 %v548
      %v595 = vunpack.c.l.b16 %v549
      %v596 = vunpack.c.h.b16 %v549
      %v597 = vunpack.c.l.b16 %v550
      %v598 = vunpack.c.h.b16 %v550
      %v599 = vpack.c.b16 %v567, %v567
      %v600 = vpack.c.b16 %v568, %v568
      %v601 = vpack.c.b16 %v569, %v569
      %v602 = vpack.c.b16 %v570, %v570
      %v603 = vpack.c.b16 %v571, %v571
      %v604 = vpack.c.b16 %v572, %v572
      %v605 = vpack.c.b16 %v573, %v573
      %v606 = vpack.c.b16 %v574, %v574
      %v607 = vpack.c.b16 %v575, %v575
      %v608 = vpack.c.b16 %v576, %v576
      %v609 = vpack.c.b16 %v577, %v577
      %v610 = vpack.c.b16 %v578, %v578
      %v611 = vpack.c.b16 %v579, %v579
      %v612 = vpack.c.b16 %v580, %v580
      %v613 = vpack.c.b16 %v581, %v581
      %v614 = vpack.c.b16 %v582, %v582
      %v615 = vpack.c.b16 %v583, %v583
      %v616 = vpack.c.b16 %v584, %v584
      %v617 = vpack.c.b16 %v585, %v585
      %v618 = vpack.c.b16 %v586, %v586
      %v619 = vpack.c.b16 %v587, %v587
      %v620 = vpack.c.b16 %v588, %v588
      %v621 = vpack.c.b16 %v589, %v589
      %v622 = vpack.c.b16 %v590, %v590
      %v623 = vpack.c.b16 %v591, %v591
      %v624 = vpack.c.b16 %v592, %v592
      %v625 = vpack.c.b16 %v593, %v593
      %v626 = vpack.c.b16 %v594, %v594
      %v627 = vpack.c.b16 %v595, %v595
      %v628 = vpack.c.b16 %v596, %v596
      %v629 = vpack.c.b16 %v597, %v597
      %v630 = vpack.c.b16 %v598, %v598
      %663 = vst [vmem:[%s172] sm:$0xf] %v599
      %664 = vst [vmem:[%s172 + $0x4] sm:$0xf] %v600
      %665 = vst [vmem:[%s172 + $0x8] sm:$0xf] %v601
      %666 = vst [vmem:[%s172 + $0xc] sm:$0xf] %v602
      %667 = vst [vmem:[%s172 + $0x10] sm:$0xf] %v603
      %668 = vst [vmem:[%s172 + $0x14] sm:$0xf] %v604
      %669 = vst [vmem:[%s172 + $0x18] sm:$0xf] %v605
      %670 = vst [vmem:[%s172 + $0x1c] sm:$0xf] %v606
      %671 = vst [vmem:[%s172 + $0x20] sm:$0xf] %v607
      %672 = vst [vmem:[%s172 + $0x24] sm:$0xf] %v608
      %673 = vst [vmem:[%s172 + $0x28] sm:$0xf] %v609
      %674 = vst [vmem:[%s172 + $0x2c] sm:$0xf] %v610
      %675 = vst [vmem:[%s172 + $0x30] sm:$0xf] %v611
      %676 = vst [vmem:[%s172 + $0x34] sm:$0xf] %v612
      %677 = vst [vmem:[%s172 + $0x38] sm:$0xf] %v613
      %678 = vst [vmem:[%s172 + $0x3c] sm:$0xf] %v614
      %679 = vst [vmem:[%s172 + $0x40] sm:$0xf] %v615
      %680 = vst [vmem:[%s172 + $0x44] sm:$0xf] %v616
      %681 = vst [vmem:[%s172 + $0x48] sm:$0xf] %v617
      %682 = vst [vmem:[%s172 + $0x4c] sm:$0xf] %v618
      %683 = vst [vmem:[%s172 + $0x50] sm:$0xf] %v619
      %684 = vst [vmem:[%s172 + $0x54] sm:$0xf] %v620
      %685 = vst [vmem:[%s172 + $0x58] sm:$0xf] %v621
      %686 = vst [vmem:[%s172 + $0x5c] sm:$0xf] %v622
      %687 = vst [vmem:[%s172 + $0x60] sm:$0xf] %v623
      %688 = vst [vmem:[%s172 + $0x64] sm:$0xf] %v624
      %689 = vst [vmem:[%s172 + $0x68] sm:$0xf] %v625
      %690 = vst [vmem:[%s172 + $0x6c] sm:$0xf] %v626
      %691 = vst [vmem:[%s172 + $0x70] sm:$0xf] %v627
      %692 = vst [vmem:[%s172 + $0x74] sm:$0xf] %v628
      %693 = vst [vmem:[%s172 + $0x78] sm:$0xf] %v629
      %694 = vst [vmem:[%s172 + $0x7c] sm:$0xf] %v630
      %s695 = smul.u32 32, %s14
      %p696 = scmp.lt.s32.totalorder %s695, 63
      %s697 = scalar_select %p696, %s695, 63
      %s698 = smul.addr %s697, 4
      %s699 = scalar_lea.vmem %s3, %s698
      // Predicated region
      $region33: #{transformer_forward.13} parent=31 // pred_check
        %p700 = pneg %p100
      $region34: #{transformer_forward.13} parent=31 // pred_check_branch
        %702 = sbr.rel (%p700) target = $region36
      $region35: #{transformer_forward.13} parent=31 // pred_region
        %s703 = smul.u32 32, %s14
      $region36: #{transformer_forward.13} parent=31 // pred_fallthru
        _
    $region32: #{transformer_forward.13} parent=5 // pred_fallthru
      _
    %p704 = scmp.le.s32.totalorder 2, %s9
    // Predicated region
    $region37: #{transformer_forward.13} parent=5 // pred_check
      %p705 = pneg %p704
    $region38: #{transformer_forward.13} parent=5 // pred_check_branch
      %707 = sbr.rel (%p705) target = $region40
    $region39: #{transformer_forward.13} parent=5 // pred_region
      %s708 = ssub.s32 %s9, 2
      // Predicated region
      $region41: #{transformer_forward.13} parent=39 // pred_check
        %p709 = pneg %p106
      $region42: #{transformer_forward.13} parent=39 // pred_check_branch
        %711 = sbr.rel (%p709) target = $region44
      $region43: #{transformer_forward.13} parent=39 // pred_region
        %s712 = smul.u32 32, %s15
        %p713 = scmp.lt.s32.totalorder %s712, 63
        %s714 = scalar_select %p713, %s712, 63
        %s715 = smul.addr %s714, 4
        %s716 = scalar_lea.vmem %s3, %s715
      $region44: #{transformer_forward.13} parent=39 // pred_fallthru
        _
    $region40: #{transformer_forward.13} parent=5 // pred_fallthru
      _
  $region6: #{transformer_forward.13} parent=0 // loop_footer
    %s13 = sadd.s32 1, %s9
  $region7: #{transformer_forward.13} parent=0 // loop_footer_branch
    %8 = sbr.rel target = $region3
  $region8: #{transformer_forward.13} parent=0 // loop_exit
    _

// kernel: transformer_forward.20
$region0: #{transformer_forward.20}
  #allocation0 [shape = 'u32[]', space=smem, size = 0x4, offset = 0x4, fixed_abs, tag = 'smem constant byte address 0x4 - core index']
  #allocation1 [shape = 'u32[144,128]{1,0:T(1,128)}', space=vmem, size = 0x12000, scoped, tag = 'internal scratch']
  #allocation2 [shape = 'bf16[64,128]{1,0:T(8,128)(2,1)}', space=vmem, size = 0x4000, scoped, tag = 'scratch operand']
  %s0 = inlined_call_operand.vmem [shape: bf16[2,64,640], index: 0, kind: input, shape index: {}]
  %s1 = inlined_call_operand.vmem [shape: bf16[2,640,64], index: 1, kind: input, shape index: {}]
  %s2 = inlined_call_operand.vmem [shape: bf16[2,64,128], index: 2, kind: input, shape index: {}]
  %s3 = inlined_call_operand.vmem [shape: f32[2,64,128], index: 3, kind: input, shape index: {}]
  %s4 = inlined_call_operand.vmem [shape: f32[2,1,128], index: 4, kind: input, shape index: {}]
  %s5 = inlined_call_operand.vmem [shape: f32[2,1,128], index: 5, kind: input, shape index: {}]
  %s6 = inlined_call_operand.vmem [shape: f32[2,64,128], index: 6, kind: output, shape index: {0}]
  %s7 = inlined_call_operand.hbm [shape: bf16[2,64,64], index: 7, kind: output, shape index: {1}]
  %8 = xla_tuple %s6, %s7
  %s9 = sld [smem:[#allocation0]]
  $region69: #{transformer_forward.20} parent=0
    _
  %s11 = ssub.s32 1, %s9
  %s12 = scalar_select 0, %s11, %s9
  $region1: #{transformer_forward.20} parent=0
    #allocation3 [shape = 'u8[32768]{0}', space=vmem, size = 0x8000, scoped, tag = 'output window, operand 1']
    #allocation4 [shape = 's32[2]{0}', space=sflag, size = 0x8, scoped, tag = 'scoped memory for transformer_forward.20']
    %13 = vsyncpa [#allocation4], 0
    %s14 = scalar_lea.sflag [#allocation4], 1
    %15 = vsyncpa %s14, 0
    loop: start=0, step=1, limit=4
    $region2: #{transformer_forward.20} parent=1 // loop_pre_header
      _
    $region3: #{transformer_forward.20} parent=1 // loop_header
      %s17 = sphi 0, %s21
      %p18 = scmp.ge.s32.totalorder %s17, 4
      %s24 = sphi 0, %s36
      %s25 = sphi 0, %s32
      %s26 = sphi 0, %s24
      %s27 = sphi 0, %s25
      %s28 = sphi 0, %s26
      %s29 = sphi 0, %s27
      %s41 = sphi 0, %s43
      %s44 = sphi 0, %s41
      %s45 = sphi 0, %s44
      %s61 = sphi 0, %s45
      %s67 = sphi 0, %s69
      %s70 = sphi 0, %s67
      %s71 = sphi 0, %s70
      %s87 = sphi 0, %s71
      %s93 = sphi 0, %s95
      %s96 = sphi 0, %s93
      %s97 = sphi 0, %s96
      %s113 = sphi 0, %s97
      %s121 = sphi 0, %s123
      %s124 = sphi 0, %s121
      %s125 = sphi 0, %s124
      %s141 = sphi 0, %s125
      %s147 = sphi 0, %s149
      %s150 = sphi 0, %s147
      %s151 = sphi 0, %s150
      %s167 = sphi 0, %s151
      %s173 = sphi 0, %s175
      %s176 = sphi 0, %s173
      %s177 = sphi 0, %s176
      %s193 = sphi 0, %s177
      %s201 = sphi 0, %s203
      %s204 = sphi 0, %s201
      %s205 = sphi 0, %s204
      %s221 = sphi 0, %s205
      %s229 = sphi 0, %s231
      %s232 = sphi 0, %s229
      %s233 = sphi 0, %s232
      %s249 = sphi 0, %s233
    $region4: #{transformer_forward.20} parent=1 // loop_header_branch
      %20 = sbr.rel (%p18) target = $region8
    $region5: #{transformer_forward.20} parent=1 // loop_body
      %s22 = ssub.s32 %s17, 1
      %s23 = ssub.s32 %s17, 2
      %s30 = sadd.s32 1, %s25
      %p31 = scmp.ge.s32.totalorder %s30, 1
      %s32 = scalar_select %p31, 0, %s30
      %s33 = sadd.s32 1, %s24
      %s34 = scalar_select %p31, %s33, %s24
      %p35 = scmp.ge.s32.totalorder %s34, 2
      %s36 = scalar_select %p35, 0, %s34
      %s37 = ssub.s32 %s24, %s36
      %s38 = ssub.s32 %s25, %s32
      %s39 = sor.u32 %s37, %s38
      %p40 = scmp.eq.s32.totalorder %s39, 0
      %s42 = sadd.s32 %s41, 1
      %s43 = scalar_select %p40, %s41, %s42
      %p46 = pneg %p40
      %p47 = scmp.eq.s32.totalorder %s17, 1
      %p48 = por %p46, %p47
      %p49 = scmp.ne.s32.totalorder %s41, %s44
      %p50 = scmp.eq.s32.totalorder %s17, 0
      %p51 = por %p49, %p50
      %p52 = scmp.ne.s32.totalorder %s41, %s44
      %p53 = scmp.eq.s32.totalorder %s22, 1
      %p54 = por %p52, %p53
      %p55 = scmp.ne.s32.totalorder %s44, %s45
      %p56 = scmp.eq.s32.totalorder %s22, 0
      %p57 = por %p55, %p56
      %p58 = scmp.ne.s32.totalorder %s44, %s45
      %p59 = scmp.eq.s32.totalorder %s23, 1
      %p60 = por %p58, %p59
      %p62 = scmp.ne.s32.totalorder %s45, %s61
      %p63 = scmp.eq.s32.totalorder %s23, 0
      %p64 = por %p62, %p63
      %s65 = ssub.s32 %s24, %s36
      %p66 = scmp.eq.s32.totalorder %s65, 0
      %s68 = sadd.s32 %s67, 1
      %s69 = scalar_select %p66, %s67, %s68
      %p72 = pneg %p66
      %p73 = scmp.eq.s32.totalorder %s17, 1
      %p74 = por %p72, %p73
      %p75 = scmp.ne.s32.totalorder %s67, %s70
      %p76 = scmp.eq.s32.totalorder %s17, 0
      %p77 = por %p75, %p76
      %p78 = scmp.ne.s32.totalorder %s67, %s70
      %p79 = scmp.eq.s32.totalorder %s22, 1
      %p80 = por %p78, %p79
      %p81 = scmp.ne.s32.totalorder %s70, %s71
      %p82 = scmp.eq.s32.totalorder %s22, 0
      %p83 = por %p81, %p82
      %p84 = scmp.ne.s32.totalorder %s70, %s71
      %p85 = scmp.eq.s32.totalorder %s23, 1
      %p86 = por %p84, %p85
      %p88 = scmp.ne.s32.totalorder %s71, %s87
      %p89 = scmp.eq.s32.totalorder %s23, 0
      %p90 = por %p88, %p89
      %s91 = ssub.s32 %s24, %s36
      %p92 = scmp.eq.s32.totalorder %s91, 0
      %s94 = sadd.s32 %s93, 1
      %s95 = scalar_select %p92, %s93, %s94
      %p98 = pneg %p92
      %p99 = scmp.eq.s32.totalorder %s17, 1
      %p100 = por %p98, %p99
      %p101 = scmp.ne.s32.totalorder %s93, %s96
      %p102 = scmp.eq.s32.totalorder %s17, 0
      %p103 = por %p101, %p102
      %p104 = scmp.ne.s32.totalorder %s93, %s96
      %p105 = scmp.eq.s32.totalorder %s22, 1
      %p106 = por %p104, %p105
      %p107 = scmp.ne.s32.totalorder %s96, %s97
      %p108 = scmp.eq.s32.totalorder %s22, 0
      %p109 = por %p107, %p108
      %p110 = scmp.ne.s32.totalorder %s96, %s97
      %p111 = scmp.eq.s32.totalorder %s23, 1
      %p112 = por %p110, %p111
      %p114 = scmp.ne.s32.totalorder %s97, %s113
      %p115 = scmp.eq.s32.totalorder %s23, 0
      %p116 = por %p114, %p115
      %s117 = ssub.s32 %s24, %s36
      %s118 = ssub.s32 %s25, %s32
      %s119 = sor.u32 %s117, %s118
      %p120 = scmp.eq.s32.totalorder %s119, 0
      %s122 = sadd.s32 %s121, 1
      %s123 = scalar_select %p120, %s121, %s122
      %p126 = pneg %p120
      %p127 = scmp.eq.s32.totalorder %s17, 1
      %p128 = por %p126, %p127
      %p129 = scmp.ne.s32.totalorder %s121, %s124
      %p130 = scmp.eq.s32.totalorder %s17, 0
      %p131 = por %p129, %p130
      %p132 = scmp.ne.s32.totalorder %s121, %s124
      %p133 = scmp.eq.s32.totalorder %s22, 1
      %p134 = por %p132, %p133
      %p135 = scmp.ne.s32.totalorder %s124, %s125
      %p136 = scmp.eq.s32.totalorder %s22, 0
      %p137 = por %p135, %p136
      %p138 = scmp.ne.s32.totalorder %s124, %s125
      %p139 = scmp.eq.s32.totalorder %s23, 1
      %p140 = por %p138, %p139
      %p142 = scmp.ne.s32.totalorder %s125, %s141
      %p143 = scmp.eq.s32.totalorder %s23, 0
      %p144 = por %p142, %p143
      %s145 = ssub.s32 %s24, %s36
      %p146 = scmp.eq.s32.totalorder %s145, 0
      %s148 = sadd.s32 %s147, 1
      %s149 = scalar_select %p146, %s147, %s148
      %p152 = pneg %p146
      %p153 = scmp.eq.s32.totalorder %s17, 1
      %p154 = por %p152, %p153
      %p155 = scmp.ne.s32.totalorder %s147, %s150
      %p156 = scmp.eq.s32.totalorder %s17, 0
      %p157 = por %p155, %p156
      %p158 = scmp.ne.s32.totalorder %s147, %s150
      %p159 = scmp.eq.s32.totalorder %s22, 1
      %p160 = por %p158, %p159
      %p161 = scmp.ne.s32.totalorder %s150, %s151
      %p162 = scmp.eq.s32.totalorder %s22, 0
      %p163 = por %p161, %p162
      %p164 = scmp.ne.s32.totalorder %s150, %s151
      %p165 = scmp.eq.s32.totalorder %s23, 1
      %p166 = por %p164, %p165
      %p168 = scmp.ne.s32.totalorder %s151, %s167
      %p169 = scmp.eq.s32.totalorder %s23, 0
      %p170 = por %p168, %p169
      %s171 = ssub.s32 %s24, %s36
      %p172 = scmp.eq.s32.totalorder %s171, 0
      %s174 = sadd.s32 %s173, 1
      %s175 = scalar_select %p172, %s173, %s174
      %p178 = pneg %p172
      %p179 = scmp.eq.s32.totalorder %s17, 1
      %p180 = por %p178, %p179
      %p181 = scmp.ne.s32.totalorder %s173, %s176
      %p182 = scmp.eq.s32.totalorder %s17, 0
      %p183 = por %p181, %p182
      %p184 = scmp.ne.s32.totalorder %s173, %s176
      %p185 = scmp.eq.s32.totalorder %s22, 1
      %p186 = por %p184, %p185
      %p187 = scmp.ne.s32.totalorder %s176, %s177
      %p188 = scmp.eq.s32.totalorder %s22, 0
      %p189 = por %p187, %p188
      %p190 = scmp.ne.s32.totalorder %s176, %s177
      %p191 = scmp.eq.s32.totalorder %s23, 1
      %p192 = por %p190, %p191
      %p194 = scmp.ne.s32.totalorder %s177, %s193
      %p195 = scmp.eq.s32.totalorder %s23, 0
      %p196 = por %p194, %p195
      %s197 = ssub.s32 %s24, %s36
      %s198 = ssub.s32 %s25, %s32
      %s199 = sor.u32 %s197, %s198
      %p200 = scmp.eq.s32.totalorder %s199, 0
      %s202 = sadd.s32 %s201, 1
      %s203 = scalar_select %p200, %s201, %s202
      %p206 = pneg %p200
      %p207 = scmp.eq.s32.totalorder %s17, 1
      %p208 = por %p206, %p207
      %p209 = scmp.ne.s32.totalorder %s201, %s204
      %p210 = scmp.eq.s32.totalorder %s17, 0
      %p211 = por %p209, %p210
      %p212 = scmp.ne.s32.totalorder %s201, %s204
      %p213 = scmp.eq.s32.totalorder %s22, 1
      %p214 = por %p212, %p213
      %p215 = scmp.ne.s32.totalorder %s204, %s205
      %p216 = scmp.eq.s32.totalorder %s22, 0
      %p217 = por %p215, %p216
      %p218 = scmp.ne.s32.totalorder %s204, %s205
      %p219 = scmp.eq.s32.totalorder %s23, 1
      %p220 = por %p218, %p219
      %p222 = scmp.ne.s32.totalorder %s205, %s221
      %p223 = scmp.eq.s32.totalorder %s23, 0
      %p224 = por %p222, %p223
      %s225 = ssub.s32 %s24, %s36
      %s226 = ssub.s32 %s25, %s32
      %s227 = sor.u32 %s225, %s226
      %p228 = scmp.eq.s32.totalorder %s227, 0
      %s230 = sadd.s32 %s229, 1
      %s231 = scalar_select %p228, %s229, %s230
      %p234 = pneg %p228
      %p235 = scmp.eq.s32.totalorder %s17, 1
      %p236 = por %p234, %p235
      %p237 = scmp.ne.s32.totalorder %s229, %s232
      %p238 = scmp.eq.s32.totalorder %s17, 0
      %p239 = por %p237, %p238
      %p240 = scmp.ne.s32.totalorder %s229, %s232
      %p241 = scmp.eq.s32.totalorder %s22, 1
      %p242 = por %p240, %p241
      %p243 = scmp.ne.s32.totalorder %s232, %s233
      %p244 = scmp.eq.s32.totalorder %s22, 0
      %p245 = por %p243, %p244
      %p246 = scmp.ne.s32.totalorder %s232, %s233
      %p247 = scmp.eq.s32.totalorder %s23, 1
      %p248 = por %p246, %p247
      %p250 = scmp.ne.s32.totalorder %s233, %s249
      %p251 = scmp.eq.s32.totalorder %s23, 0
      %p252 = por %p250, %p251
      %p253 = scmp.le.s32.totalorder 1, %s17
      %p254 = scmp.lt.s32.totalorder %s17, 3
      %p255 = pnand %p253, %p254
      %p256 = pneg %p255
      // Predicated region
      $region9: #{transformer_forward.20} parent=5 // pred_check
        _
      $region10: #{transformer_forward.20} parent=5 // pred_check_branch
        %258 = sbr.rel (%p255) target = $region12
      $region11: #{transformer_forward.20} parent=5 // pred_region
        %s259 = ssub.s32 %s17, 1
      $region12: #{transformer_forward.20} parent=5 // pred_fallthru
        _
      %p260 = scmp.lt.s32.totalorder %s17, 2
      // Predicated region
      $region13: #{transformer_forward.20} parent=5 // pred_check
        %p261 = pneg %p260
      $region14: #{transformer_forward.20} parent=5 // pred_check_branch
        %263 = sbr.rel (%p261) target = $region16
      $region15: #{transformer_forward.20} parent=5 // pred_region
        // Predicated region
        $region17: #{transformer_forward.20} parent=15 // pred_check
          %p264 = pneg %p51
        $region18: #{transformer_forward.20} parent=15 // pred_check_branch
          %266 = sbr.rel (%p264) target = $region20
        $region19: #{transformer_forward.20} parent=15 // pred_region
          %s267 = smul.u32 8, %s25
          %p268 = scmp.lt.s32.totalorder %s24, 1
          %s269 = scalar_select %p268, %s24, 1
          %p270 = scmp.lt.s32.totalorder %s267, 7
          %s271 = scalar_select %p270, %s267, 7
          %s272 = smul.addr %s271, 5
          %s273 = smul.addr %s269, 40
          %s274 = sadd.s32 %s272, %s273
          %s275 = smul.addr %s274, 4
          %s276 = scalar_lea.vmem %s0, %s275
          %s277 = smul.u32 8, %s25
        $region20: #{transformer_forward.20} parent=15 // pred_fallthru
          _
        // Predicated region
        $region21: #{transformer_forward.20} parent=15 // pred_check
          %p278 = pneg %p77
        $region22: #{transformer_forward.20} parent=15 // pred_check_branch
          %280 = sbr.rel (%p278) target = $region24
        $region23: #{transformer_forward.20} parent=15 // pred_region
          %p281 = scmp.lt.s32.totalorder %s24, 1
          %s282 = scalar_select %p281, %s24, 1
          %s283 = smul.addr %s282, 80
          %s284 = smul.addr %s283, 4
          %s285 = scalar_lea.vmem %s1, %s284
        $region24: #{transformer_forward.20} parent=15 // pred_fallthru
          _
        // Predicated region
        $region25: #{transformer_forward.20} parent=15 // pred_check
          %p286 = pneg %p103
        $region26: #{transformer_forward.20} parent=15 // pred_check_branch
          %288 = sbr.rel (%p286) target = $region28
        $region27: #{transformer_forward.20} parent=15 // pred_region
          %p289 = scmp.lt.s32.totalorder %s24, 1
          %s290 = scalar_select %p289, %s24, 1
          %s291 = smul.addr %s290, 8
          %s292 = smul.addr %s291, 4
          %s293 = scalar_lea.vmem %s2, %s292
        $region28: #{transformer_forward.20} parent=15 // pred_fallthru
          _
        // Predicated region
        $region29: #{transformer_forward.20} parent=15 // pred_check
          %p294 = pneg %p131
        $region30: #{transformer_forward.20} parent=15 // pred_check_branch
          %296 = sbr.rel (%p294) target = $region32
        $region31: #{transformer_forward.20} parent=15 // pred_region
          %s297 = smul.u32 8, %s25
          %p298 = scmp.lt.s32.totalorder %s24, 1
          %s299 = scalar_select %p298, %s24, 1
          %p300 = scmp.lt.s32.totalorder %s297, 7
          %s301 = scalar_select %p300, %s297, 7
          %s302 = smul.addr %s299, 8
          %s303 = sadd.s32 %s301, %s302
          %s304 = smul.addr %s303, 8
          %s305 = scalar_lea.vmem %s3, %s304
          %s306 = smul.u32 8, %s25
        $region32: #{transformer_forward.20} parent=15 // pred_fallthru
          _
        // Predicated region
        $region33: #{transformer_forward.20} parent=15 // pred_check
          %p307 = pneg %p157
        $region34: #{transformer_forward.20} parent=15 // pred_check_branch
          %309 = sbr.rel (%p307) target = $region36
        $region35: #{transformer_forward.20} parent=15 // pred_region
          %p310 = scmp.lt.s32.totalorder %s24, 1
          %s311 = scalar_select %p310, %s24, 1
          %s312 = scalar_lea.vmem %s4, %s311
        $region36: #{transformer_forward.20} parent=15 // pred_fallthru
          _
        // Predicated region
        $region37: #{transformer_forward.20} parent=15 // pred_check
          %p313 = pneg %p183
        $region38: #{transformer_forward.20} parent=15 // pred_check_branch
          %315 = sbr.rel (%p313) target = $region40
        $region39: #{transformer_forward.20} parent=15 // pred_region
          %p316 = scmp.lt.s32.totalorder %s24, 1
          %s317 = scalar_select %p316, %s24, 1
          %s318 = scalar_lea.vmem %s5, %s317
        $region40: #{transformer_forward.20} parent=15 // pred_fallthru
          _
      $region16: #{transformer_forward.20} parent=5 // pred_fallthru
        _
      %p319 = scmp.le.s32.totalorder 1, %s17
      %p320 = scmp.lt.s32.totalorder %s17, 3
      %p321 = pnand %p319, %p320
      %p322 = pneg %p321
      // Predicated region
      $region41: #{transformer_forward.20} parent=5 // pred_check
        _
      $region42: #{transformer_forward.20} parent=5 // pred_check_branch
        %324 = sbr.rel (%p321) target = $region44
      $region43: #{transformer_forward.20} parent=5 // pred_region
        %s325 = ssub.s32 %s17, 1
        %s326 = smul.u32 8, %s27
        %p327 = scmp.lt.s32.totalorder %s26, 1
        %s328 = scalar_select %p327, %s26, 1
        %p329 = scmp.lt.s32.totalorder %s326, 7
        %s330 = scalar_select %p329, %s326, 7
        %s331 = smul.addr %s330, 5
        %s332 = smul.addr %s328, 40
        %s333 = sadd.s32 %s331, %s332
        %s334 = smul.addr %s333, 4
        %s335 = scalar_lea.vmem %s0, %s334
        %p336 = pneg %p57
        %p337 = pneg %p54
        %p338 = scmp.lt.s32.totalorder %s26, 1
        %s339 = scalar_select %p338, %s26, 1
        %s340 = smul.addr %s339, 80
        %s341 = smul.addr %s340, 4
        %s342 = scalar_lea.vmem %s1, %s341
        %p343 = pneg %p83
        %p344 = pneg %p80
        %p345 = scmp.lt.s32.totalorder %s26, 1
        %s346 = scalar_select %p345, %s26, 1
        %s347 = smul.addr %s346, 8
        %s348 = smul.addr %s347, 4
        %s349 = scalar_lea.vmem %s2, %s348
        %p350 = pneg %p109
        %p351 = pneg %p106
        %s352 = smul.u32 8, %s27
        %p353 = scmp.lt.s32.totalorder %s26, 1
        %s354 = scalar_select %p353, %s26, 1
        %p355 = scmp.lt.s32.totalorder %s352, 7
        %s356 = scalar_select %p355, %s352, 7
        %s357 = smul.addr %s354, 8
        %s358 = sadd.s32 %s356, %s357
        %s359 = smul.addr %s358, 8
        %s360 = scalar_lea.vmem %s3, %s359
        %p361 = pneg %p137
        %p362 = pneg %p134
        %p363 = scmp.lt.s32.totalorder %s26, 1
        %s364 = scalar_select %p363, %s26, 1
        %s365 = scalar_lea.vmem %s4, %s364
        %p366 = pneg %p163
        %p367 = pneg %p160
        %p368 = scmp.lt.s32.totalorder %s26, 1
        %s369 = scalar_select %p368, %s26, 1
        %s370 = scalar_lea.vmem %s5, %s369
        %p371 = pneg %p189
        %p372 = pneg %p186
        %p373 = pneg %p217
        %p374 = pneg %p214
        %s375 = smul.u32 8, %s27
        %p376 = scmp.lt.s32.totalorder %s26, 1
        %s377 = scalar_select %p376, %s26, 1
        %p378 = scmp.lt.s32.totalorder %s375, 7
        %s379 = scalar_select %p378, %s375, 7
        %s380 = smul.addr %s377, 8
        %s381 = sadd.s32 %s379, %s380
        %s382 = smul.addr %s381, 8
        %s383 = scalar_lea.vmem %s6, %s382
        %p384 = pneg %p245
        %p385 = pneg %p242
        %s386 = sand.u32 %s232, 1
        %s387 = scalar_lea.sflag [#allocation4], %s386
        %s388 = sand.u32 %s232, 1
        %s389 = smul.addr %s388, 32
        %s390 = scalar_lea.vmem [#allocation3], %s389
        %s391 = smul.u32 8, %s27
        %p392 = scmp.lt.s32.totalorder %s26, 1
        %s393 = scalar_select %p392, %s26, 1
        %p394 = scmp.lt.s32.totalorder %s391, 7
        %s395 = scalar_select %p394, %s391, 7
        %s396 = smul.addr %s395, 5
        %s397 = smul.addr %s393, 40
        %s398 = sadd.s32 %s396, %s397
        %s399 = smul.addr %s398, 4
        %s400 = scalar_lea.vmem %s0, %s399
        %s401 = smul.u32 8, %s27
        %p402 = scmp.lt.s32.totalorder %s26, 1
        %s403 = scalar_select %p402, %s26, 1
        %s404 = smul.addr %s403, 80
        %s405 = smul.addr %s404, 4
        %s406 = scalar_lea.vmem %s1, %s405
        %p407 = scmp.lt.s32.totalorder %s26, 1
        %s408 = scalar_select %p407, %s26, 1
        %s409 = smul.addr %s408, 8
        %s410 = smul.addr %s409, 4
        %s411 = scalar_lea.vmem %s2, %s410
        %s412 = smul.u32 8, %s27
        %p413 = scmp.lt.s32.totalorder %s26, 1
        %s414 = scalar_select %p413, %s26, 1
        %p415 = scmp.lt.s32.totalorder %s412, 7
        %s416 = scalar_select %p415, %s412, 7
        %s417 = smul.addr %s414, 8
        %s418 = sadd.s32 %s416, %s417
        %s419 = smul.addr %s418, 8
        %s420 = scalar_lea.vmem %s3, %s419
        %s421 = smul.u32 8, %s27
        %p422 = scmp.lt.s32.totalorder %s26, 1
        %s423 = scalar_select %p422, %s26, 1
        %s424 = scalar_lea.vmem %s4, %s423
        %p425 = scmp.lt.s32.totalorder %s26, 1
        %s426 = scalar_select %p425, %s26, 1
        %s427 = scalar_lea.vmem %s5, %s426
        %s428 = smul.u32 8, %s27
        %p429 = scmp.lt.s32.totalorder %s26, 1
        %s430 = scalar_select %p429, %s26, 1
        %p431 = scmp.lt.s32.totalorder %s428, 7
        %s432 = scalar_select %p431, %s428, 7
        %s433 = smul.addr %s430, 8
        %s434 = sadd.s32 %s432, %s433
        %s435 = smul.addr %s434, 8
        %s436 = scalar_lea.vmem %s6, %s435
        %s437 = smul.u32 8, %s27
        %s438 = smul.u32 8, %s27
        %p440 = scmp.eq.s32.totalorder %s27, 0
        // Predicated region
        $region45: #{transformer_forward.20} parent=43 // pred_check
          %p441 = pneg %p440
        $region46: #{transformer_forward.20} parent=43 // pred_check_branch
          %443 = sbr.rel (%p441) target = $region48
        $region47: #{transformer_forward.20} parent=43 // pred_region
          %v444 = vld [vmem:[%s411] sm:$0xf]
          %v445 = vld [vmem:[%s411 + $0x4] sm:$0xf]
          %v446 = vld [vmem:[%s411 + $0x8] sm:$0xf]
          %v447 = vld [vmem:[%s411 + $0xc] sm:$0xf]
          %v448 = vld [vmem:[%s411 + $0x10] sm:$0xf]
          %v449 = vld [vmem:[%s411 + $0x14] sm:$0xf]
          %v450 = vld [vmem:[%s411 + $0x18] sm:$0xf]
          %v451 = vld [vmem:[%s411 + $0x1c] sm:$0xf]
          %v452 = vunpack.c.l.bf16 %v444
          %v453 = vunpack.c.l.bf16 %v445
          %v454 = vunpack.c.l.bf16 %v446
          %v455 = vunpack.c.l.bf16 %v447
          %v456 = vunpack.c.l.bf16 %v448
          %v457 = vunpack.c.l.bf16 %v449
          %v458 = vunpack.c.l.bf16 %v450
          %v459 = vunpack.c.l.bf16 %v451
          %v460 = vmul.f32 %v452, %v452
          %v461 = vmul.f32 %v453, %v453
          %v462 = vmul.f32 %v454, %v454
          %v463 = vmul.f32 %v455, %v455
          %v464 = vmul.f32 %v456, %v456
          %v465 = vmul.f32 %v457, %v457
          %v466 = vmul.f32 %v458, %v458
          %v467 = vmul.f32 %v459, %v459
          %v468 = vpack.c.bf16 %v461, %v460
          %v469 = vpack.c.bf16 %v463, %v462
          %v470 = vpack.c.bf16 %v465, %v464
          %v471 = vpack.c.bf16 %v467, %v466
          %v476 = vunpack.c.l.b16 %v468
          %v477 = vunpack.c.h.b16 %v468
          %v478 = vunpack.c.l.b16 %v469
          %v479 = vunpack.c.h.b16 %v469
          %v480 = vunpack.c.l.b16 %v470
          %v481 = vunpack.c.h.b16 %v470
          %v482 = vunpack.c.l.b16 %v471
          %v483 = vunpack.c.h.b16 %v471
          %v484 = vpack.c.b16 %v476, %v476
          %v485 = vpack.c.b16 %v477, %v477
          %v486 = vpack.c.b16 %v478, %v478
          %v487 = vpack.c.b16 %v479, %v479
          %v488 = vpack.c.b16 %v480, %v480
          %v489 = vpack.c.b16 %v481, %v481
          %v490 = vpack.c.b16 %v482, %v482
          %v491 = vpack.c.b16 %v483, %v483
          %500 = vst [vmem:[#allocation2] sm:$0xf] %v484
          %501 = vst [vmem:[#allocation2 + $0x4] sm:$0xf] %v485
          %502 = vst [vmem:[#allocation2 + $0x8] sm:$0xf] %v486
          %503 = vst [vmem:[#allocation2 + $0xc] sm:$0xf] %v487
          %504 = vst [vmem:[#allocation2 + $0x10] sm:$0xf] %v488
          %505 = vst [vmem:[#allocation2 + $0x14] sm:$0xf] %v489
          %506 = vst [vmem:[#allocation2 + $0x18] sm:$0xf] %v490
          %507 = vst [vmem:[#allocation2 + $0x1c] sm:$0xf] %v491
        $region48: #{transformer_forward.20} parent=43 // pred_fallthru
          _
        %v508 = vld [vmem:[%s400] sm:$0xff]
        %v509 = vld [vmem:[%s400 + $0x8] sm:$0xff]
        %v510 = vld [vmem:[%s400 + $0x10] sm:$0xf]
        %v511 = vld [vmem:[%s400 + $0x14] sm:$0xff]
        %v512 = vld [vmem:[%s400 + $0x1c] sm:$0xff]
        %v513 = vld [vmem:[%s400 + $0x24] sm:$0xf]
        %v514 = vld [vmem:[%s400 + $0x28] sm:$0xff]
        %v515 = vld [vmem:[%s400 + $0x30] sm:$0xff]
        %v516 = vld [vmem:[%s400 + $0x38] sm:$0xf]
        %v517 = vld [vmem:[%s400 + $0x3c] sm:$0xff]
        %v518 = vld [vmem:[%s400 + $0x44] sm:$0xff]
        %v519 = vld [vmem:[%s400 + $0x4c] sm:$0xf]
        %v520 = vld [vmem:[%s400 + $0x50] sm:$0xff]
        %v521 = vld [vmem:[%s400 + $0x58] sm:$0xff]
        %v522 = vld [vmem:[%s400 + $0x60] sm:$0xf]
        %v523 = vld [vmem:[%s400 + $0x64] sm:$0xff]
        %v524 = vld [vmem:[%s400 + $0x6c] sm:$0xff]
        %v525 = vld [vmem:[%s400 + $0x74] sm:$0xf]
        %v526 = vld [vmem:[%s400 + $0x78] sm:$0xff]
        %v527 = vld [vmem:[%s400 + $0x80] sm:$0xff]
        %v528 = vld [vmem:[%s400 + $0x88] sm:$0xf]
        %v529 = vld [vmem:[%s400 + $0x8c] sm:$0xff]
        %v530 = vld [vmem:[%s400 + $0x94] sm:$0xff]
        %v531 = vld [vmem:[%s400 + $0x9c] sm:$0xf]
        %v532 = vld [vmem:[%s406] sm:$0xf]
        %v533 = vld [vmem:[%s406 + $0x4] sm:$0xf]
        %v534 = vld [vmem:[%s406 + $0x8] sm:$0xf]
        %v535 = vld [vmem:[%s406 + $0xc] sm:$0xf]
        %v536 = vld [vmem:[%s406 + $0x10] sm:$0xf]
        %v537 = vld [vmem:[%s406 + $0x14] sm:$0xf]
        %v538 = vld [vmem:[%s406 + $0x18] sm:$0xf]
        %v539 = vld [vmem:[%s406 + $0x1c] sm:$0xf]
        %v540 = vld [vmem:[%s406 + $0x20] sm:$0xf]
        %v541 = vld [vmem:[%s406 + $0x24] sm:$0xf]
        %v542 = vld [vmem:[%s406 + $0x28] sm:$0xf]
        %v543 = vld [vmem:[%s406 + $0x2c] sm:$0xf]
        %v544 = vld [vmem:[%s406 + $0x30] sm:$0xf]
        %v545 = vld [vmem:[%s406 + $0x34] sm:$0xf]
        %v546 = vld [vmem:[%s406 + $0x38] sm:$0xf]
        %v547 = vld [vmem:[%s406 + $0x3c] sm:$0xf]
        %v548 = vld [vmem:[%s406 + $0x40] sm:$0xf]
        %v549 = vld [vmem:[%s406 + $0x44] sm:$0xf]
        %v550 = vld [vmem:[%s406 + $0x48] sm:$0xf]
        %v551 = vld [vmem:[%s406 + $0x4c] sm:$0xf]
        %v552 = vld [vmem:[%s406 + $0x50] sm:$0xf]
        %v553 = vld [vmem:[%s406 + $0x54] sm:$0xf]
        %v554 = vld [vmem:[%s406 + $0x58] sm:$0xf]
        %v555 = vld [vmem:[%s406 + $0x5c] sm:$0xf]
        %v556 = vld [vmem:[%s406 + $0x60] sm:$0xf]
        %v557 = vld [vmem:[%s406 + $0x64] sm:$0xf]
        %v558 = vld [vmem:[%s406 + $0x68] sm:$0xf]
        %v559 = vld [vmem:[%s406 + $0x6c] sm:$0xf]
        %v560 = vld [vmem:[%s406 + $0x70] sm:$0xf]
        %v561 = vld [vmem:[%s406 + $0x74] sm:$0xf]
        %v562 = vld [vmem:[%s406 + $0x78] sm:$0xf]
        %v563 = vld [vmem:[%s406 + $0x7c] sm:$0xf]
        %v564 = vld [vmem:[%s406 + $0x80] sm:$0xf]
        %v565 = vld [vmem:[%s406 + $0x84] sm:$0xf]
        %v566 = vld [vmem:[%s406 + $0x88] sm:$0xf]
        %v567 = vld [vmem:[%s406 + $0x8c] sm:$0xf]
        %v568 = vld [vmem:[%s406 + $0x90] sm:$0xf]
        %v569 = vld [vmem:[%s406 + $0x94] sm:$0xf]
        %v570 = vld [vmem:[%s406 + $0x98] sm:$0xf]
        %v571 = vld [vmem:[%s406 + $0x9c] sm:$0xf]
        %v572 = vld [vmem:[%s406 + $0xa0] sm:$0xf]
        %v573 = vld [vmem:[%s406 + $0xa4] sm:$0xf]
        %v574 = vld [vmem:[%s406 + $0xa8] sm:$0xf]
        %v575 = vld [vmem:[%s406 + $0xac] sm:$0xf]
        %v576 = vld [vmem:[%s406 + $0xb0] sm:$0xf]
        %v577 = vld [vmem:[%s406 + $0xb4] sm:$0xf]
        %v578 = vld [vmem:[%s406 + $0xb8] sm:$0xf]
        %v579 = vld [vmem:[%s406 + $0xbc] sm:$0xf]
        %v580 = vld [vmem:[%s406 + $0xc0] sm:$0xf]
        %v581 = vld [vmem:[%s406 + $0xc4] sm:$0xf]
        %v582 = vld [vmem:[%s406 + $0xc8] sm:$0xf]
        %v583 = vld [vmem:[%s406 + $0xcc] sm:$0xf]
        %v584 = vld [vmem:[%s406 + $0xd0] sm:$0xf]
        %v585 = vld [vmem:[%s406 + $0xd4] sm:$0xf]
        %v586 = vld [vmem:[%s406 + $0xd8] sm:$0xf]
        %v587 = vld [vmem:[%s406 + $0xdc] sm:$0xf]
        %v588 = vld [vmem:[%s406 + $0xe0] sm:$0xf]
        %v589 = vld [vmem:[%s406 + $0xe4] sm:$0xf]
        %v590 = vld [vmem:[%s406 + $0xe8] sm:$0xf]
        %v591 = vld [vmem:[%s406 + $0xec] sm:$0xf]
        %v592 = vld [vmem:[%s406 + $0xf0] sm:$0xf]
        %v593 = vld [vmem:[%s406 + $0xf4] sm:$0xf]
        %v594 = vld [vmem:[%s406 + $0xf8] sm:$0xf]
        %v595 = vld [vmem:[%s406 + $0xfc] sm:$0xf]
        %v596 = vld [vmem:[%s406 + $0x100] sm:$0xf]
        %v597 = vld [vmem:[%s406 + $0x104] sm:$0xf]
        %v598 = vld [vmem:[%s406 + $0x108] sm:$0xf]
        %v599 = vld [vmem:[%s406 + $0x10c] sm:$0xf]
        %v600 = vld [vmem:[%s406 + $0x110] sm:$0xf]
        %v601 = vld [vmem:[%s406 + $0x114] sm:$0xf]
        %v602 = vld [vmem:[%s406 + $0x118] sm:$0xf]
        %v603 = vld [vmem:[%s406 + $0x11c] sm:$0xf]
        %v604 = vld [vmem:[%s406 + $0x120] sm:$0xf]
        %v605 = vld [vmem:[%s406 + $0x124] sm:$0xf]
        %v606 = vld [vmem:[%s406 + $0x128] sm:$0xf]
        %v607 = vld [vmem:[%s406 + $0x12c] sm:$0xf]
        %v608 = vld [vmem:[%s406 + $0x130] sm:$0xf]
        %v609 = vld [vmem:[%s406 + $0x134] sm:$0xf]
        %v610 = vld [vmem:[%s406 + $0x138] sm:$0xf]
        %v611 = vld [vmem:[%s406 + $0x13c] sm:$0xf]
        %v636 = vunpack.c.l.b16 %v508
        %v637 = vunpack.c.h.b16 %v508
        %v638 = vunpack.c.l.b16 %v509
        %v639 = vunpack.c.h.b16 %v509
        %v640 = vunpack.c.l.b16 %v510
        %v641 = vunpack.c.l.b16 %v511
        %v642 = vunpack.c.h.b16 %v511
        %v643 = vunpack.c.l.b16 %v512
        %v644 = vunpack.c.h.b16 %v512
        %v645 = vunpack.c.l.b16 %v513
        %v646 = vunpack.c.l.b16 %v514
        %v647 = vunpack.c.h.b16 %v514
        %v648 = vunpack.c.l.b16 %v515
        %v649 = vunpack.c.h.b16 %v515
        %v650 = vunpack.c.l.b16 %v516
        %v651 = vunpack.c.l.b16 %v517
        %v652 = vunpack.c.h.b16 %v517
        %v653 = vunpack.c.l.b16 %v518
        %v654 = vunpack.c.h.b16 %v518
        %v655 = vunpack.c.l.b16 %v519
        %v656 = vunpack.c.l.b16 %v520
        %v657 = vunpack.c.h.b16 %v520
        %v658 = vunpack.c.l.b16 %v521
        %v659 = vunpack.c.h.b16 %v521
        %v660 = vunpack.c.l.b16 %v522
        %v661 = vunpack.c.l.b16 %v523
        %v662 = vunpack.c.h.b16 %v523
        %v663 = vunpack.c.l.b16 %v524
        %v664 = vunpack.c.h.b16 %v524
        %v665 = vunpack.c.l.b16 %v525
        %v666 = vunpack.c.l.b16 %v526
        %v667 = vunpack.c.h.b16 %v526
        %v668 = vunpack.c.l.b16 %v527
        %v669 = vunpack.c.h.b16 %v527
        %v670 = vunpack.c.l.b16 %v528
        %v671 = vunpack.c.l.b16 %v529
        %v672 = vunpack.c.h.b16 %v529
        %v673 = vunpack.c.l.b16 %v530
        %v674 = vunpack.c.h.b16 %v530
        %v675 = vunpack.c.l.b16 %v531
        %v676 = vpack.c.b16 %v641, %v636
        %v677 = vpack.c.b16 %v642, %v637
        %v678 = vpack.c.b16 %v643, %v638
        %v679 = vpack.c.b16 %v644, %v639
        %v680 = vpack.c.b16 %v645, %v640
        %v681 = vpack.c.b16 %v651, %v646
        %v682 = vpack.c.b16 %v652, %v647
        %v683 = vpack.c.b16 %v653, %v648
        %v684 = vpack.c.b16 %v654, %v649
        %v685 = vpack.c.b16 %v655, %v650
        %v686 = vpack.c.b16 %v661, %v656
        %v687 = vpack.c.b16 %v662, %v657
        %v688 = vpack.c.b16 %v663, %v658
        %v689 = vpack.c.b16 %v664, %v659
        %v690 = vpack.c.b16 %v665, %v660
        %v691 = vpack.c.b16 %v671, %v666
        %v692 = vpack.c.b16 %v672, %v667
        %v693 = vpack.c.b16 %v673, %v668
        %v694 = vpack.c.b16 %v674, %v669
        %v695 = vpack.c.b16 %v675, %v670
        %v796 = vunpack.c.l.b16 %v532
        %v797 = vunpack.c.l.b16 %v533
        %v798 = vunpack.c.l.b16 %v534
        %v799 = vunpack.c.l.b16 %v535
        %v800 = vunpack.c.l.b16 %v536
        %v801 = vunpack.c.l.b16 %v537
        %v802 = vunpack.c.l.b16 %v538
        %v803 = vunpack.c.l.b16 %v539
        %v804 = vunpack.c.l.b16 %v540
        %v805 = vunpack.c.l.b16 %v541
        %v806 = vunpack.c.l.b16 %v542
        %v807 = vunpack.c.l.b16 %v543
        %v808 = vunpack.c.l.b16 %v544
        %v809 = vunpack.c.l.b16 %v545
        %v810 = vunpack.c.l.b16 %v546
        %v811 = vunpack.c.l.b16 %v547
        %v812 = vunpack.c.l.b16 %v548
        %v813 = vunpack.c.l.b16 %v549
        %v814 = vunpack.c.l.b16 %v550
        %v815 = vunpack.c.l.b16 %v551
        %v816 = vunpack.c.l.b16 %v552
        %v817 = vunpack.c.l.b16 %v553
        %v818 = vunpack.c.l.b16 %v554
        %v819 = vunpack.c.l.b16 %v555
        %v820 = vunpack.c.l.b16 %v556
        %v821 = vunpack.c.l.b16 %v557
        %v822 = vunpack.c.l.b16 %v558
        %v823 = vunpack.c.l.b16 %v559
        %v824 = vunpack.c.l.b16 %v560
        %v825 = vunpack.c.l.b16 %v561
        %v826 = vunpack.c.l.b16 %v562
        %v827 = vunpack.c.l.b16 %v563
        %v828 = vunpack.c.l.b16 %v564
        %v829 = vunpack.c.l.b16 %v565
        %v830 = vunpack.c.l.b16 %v566
        %v831 = vunpack.c.l.b16 %v567
        %v832 = vunpack.c.l.b16 %v568
        %v833 = vunpack.c.l.b16 %v569
        %v834 = vunpack.c.l.b16 %v570
        %v835 = vunpack.c.l.b16 %v571
        %v836 = vunpack.c.l.b16 %v572
        %v837 = vunpack.c.l.b16 %v573
        %v838 = vunpack.c.l.b16 %v574
        %v839 = vunpack.c.l.b16 %v575
        %v840 = vunpack.c.l.b16 %v576
        %v841 = vunpack.c.l.b16 %v577
        %v842 = vunpack.c.l.b16 %v578
        %v843 = vunpack.c.l.b16 %v579
        %v844 = vunpack.c.l.b16 %v580
        %v845 = vunpack.c.l.b16 %v581
        %v846 = vunpack.c.l.b16 %v582
        %v847 = vunpack.c.l.b16 %v583
        %v848 = vunpack.c.l.b16 %v584
        %v849 = vunpack.c.l.b16 %v585
        %v850 = vunpack.c.l.b16 %v586
        %v851 = vunpack.c.l.b16 %v587
        %v852 = vunpack.c.l.b16 %v588
        %v853 = vunpack.c.l.b16 %v589
        %v854 = vunpack.c.l.b16 %v590
        %v855 = vunpack.c.l.b16 %v591
        %v856 = vunpack.c.l.b16 %v592
        %v857 = vunpack.c.l.b16 %v593
        %v858 = vunpack.c.l.b16 %v594
        %v859 = vunpack.c.l.b16 %v595
        %v860 = vunpack.c.l.b16 %v596
        %v861 = vunpack.c.l.b16 %v597
        %v862 = vunpack.c.l.b16 %v598
        %v863 = vunpack.c.l.b16 %v599
        %v864 = vunpack.c.l.b16 %v600
        %v865 = vunpack.c.l.b16 %v601
        %v866 = vunpack.c.l.b16 %v602
        %v867 = vunpack.c.l.b16 %v603
        %v868 = vunpack.c.l.b16 %v604
        %v869 = vunpack.c.l.b16 %v605
        %v870 = vunpack.c.l.b16 %v606
        %v871 = vunpack.c.l.b16 %v607
        %v872 = vunpack.c.l.b16 %v608
        %v873 = vunpack.c.l.b16 %v609
        %v874 = vunpack.c.l.b16 %v610
        %v875 = vunpack.c.l.b16 %v611
        %v876 = vpack.c.b16 %v797, %v796
        %v877 = vpack.c.b16 %v799, %v798
        %v878 = vpack.c.b16 %v801, %v800
        %v879 = vpack.c.b16 %v803, %v802
        %v880 = vpack.c.b16 %v805, %v804
        %v881 = vpack.c.b16 %v807, %v806
        %v882 = vpack.c.b16 %v809, %v808
        %v883 = vpack.c.b16 %v811, %v810
        %v884 = vpack.c.b16 %v813, %v812
        %v885 = vpack.c.b16 %v815, %v814
        %v886 = vpack.c.b16 %v817, %v816
        %v887 = vpack.c.b16 %v819, %v818
        %v888 = vpack.c.b16 %v821, %v820
        %v889 = vpack.c.b16 %v823, %v822
        %v890 = vpack.c.b16 %v825, %v824
        %v891 = vpack.c.b16 %v827, %v826
        %v892 = vpack.c.b16 %v829, %v828
        %v893 = vpack.c.b16 %v831, %v830
        %v894 = vpack.c.b16 %v833, %v832
        %v895 = vpack.c.b16 %v835, %v834
        %v896 = vpack.c.b16 %v837, %v836
        %v897 = vpack.c.b16 %v839, %v838
        %v898 = vpack.c.b16 %v841, %v840
        %v899 = vpack.c.b16 %v843, %v842
        %v900 = vpack.c.b16 %v845, %v844
        %v901 = vpack.c.b16 %v847, %v846
        %v902 = vpack.c.b16 %v849, %v848
        %v903 = vpack.c.b16 %v851, %v850
        %v904 = vpack.c.b16 %v853, %v852
        %v905 = vpack.c.b16 %v855, %v854
        %v906 = vpack.c.b16 %v857, %v856
        %v907 = vpack.c.b16 %v859, %v858
        %v908 = vpack.c.b16 %v861, %v860
        %v909 = vpack.c.b16 %v863, %v862
        %v910 = vpack.c.b16 %v865, %v864
        %v911 = vpack.c.b16 %v867, %v866
        %v912 = vpack.c.b16 %v869, %v868
        %v913 = vpack.c.b16 %v871, %v870
        %v914 = vpack.c.b16 %v873, %v872
        %v915 = vpack.c.b16 %v875, %v874
        %956 = vmatprep.subr.bf16.mxu0 0
        %957 = vmatpush1.bf16.msra.mxu0 %v883
        %958 = vmatprep.subr.bf16.mxu0 0
        %959 = vmatpush1.bf16.msra.mxu0 %v882
        %960 = vmatprep.subr.bf16.mxu0 0
        %961 = vmatpush1.bf16.msra.mxu0 %v881
        %962 = vmatprep.subr.bf16.mxu0 0
        %963 = vmatpush1.bf16.msra.mxu0 %v880
        %964 = vmatprep.subr.bf16.mxu0 0
        %965 = vmatpush1.bf16.msra.mxu0 %v879
        %966 = vmatprep.subr.bf16.mxu0 0
        %967 = vmatpush1.bf16.msra.mxu0 %v878
        %968 = vmatprep.subr.bf16.mxu0 0
        %969 = vmatpush1.bf16.msra.mxu0 %v877
        %970 = vmatprep.subr.bf16.mxu0 0
        %971 = vmatpush1.bf16.msra.mxu0 %v876
        %972 = vmatprep.subr.bf16.mxu0 0
        %973 = vmatpush2.bf16.msra.mxu0 %v891
        %974 = vmatprep.subr.bf16.mxu0 0
        %975 = vmatpush2.bf16.msra.mxu0 %v890
        %976 = vmatprep.subr.bf16.mxu0 0
        %977 = vmatpush2.bf16.msra.mxu0 %v889
        %978 = vmatprep.subr.bf16.mxu0 0
        %979 = vmatpush2.bf16.msra.mxu0 %v888
        %980 = vmatprep.subr.bf16.mxu0 0
        %981 = vmatpush2.bf16.msra.mxu0 %v887
        %982 = vmatprep.subr.bf16.mxu0 0
        %983 = vmatpush2.bf16.msra.mxu0 %v886
        %984 = vmatprep.subr.bf16.mxu0 0
        %985 = vmatpush2.bf16.msra.mxu0 %v885
        %986 = vmatprep.subr.bf16.mxu0 0
        %987 = vmatpush2.bf16.msra.mxu0 %v884
        %988 = vmatprep.mubr.bf16.mxu0 %v677
        %989 = vmatmul.mubr.bf16.gmra.mxu0 %v676
        %v990 = vpop.f32.mrf.mxu0
        %v991 = vadd.f32 0.0, %v990
        %v992 = vpop.f32.mrf.mxu0
        %v993 = vpop.f32.mrf.mxu0
        %v994 = vadd.f32 0.0, %v993
        %v995 = vpop.f32.mrf.mxu0
        %996 = vmatprep.mubr.bf16.mxu0 %v682
        %997 = vmatmul.mubr.bf16.gmra.mxu0 %v681
        %v998 = vpop.f32.mrf.mxu0
        %v999 = vadd.f32 0.0, %v998
        %v1000 = vpop.f32.mrf.mxu0
        %v1001 = vpop.f32.mrf.mxu0
        %v1002 = vadd.f32 0.0, %v1001
        %v1003 = vpop.f32.mrf.mxu0
        %1004 = vmatprep.mubr.bf16.mxu0 %v687
        %1005 = vmatmul.mubr.bf16.gmra.mxu0 %v686
        %v1006 = vpop.f32.mrf.mxu0
        %v1007 = vadd.f32 0.0, %v1006
        %v1008 = vpop.f32.mrf.mxu0
        %v1009 = vpop.f32.mrf.mxu0
        %v1010 = vadd.f32 0.0, %v1009
        %v1011 = vpop.f32.mrf.mxu0
        %1012 = vmatprep.mubr.bf16.mxu0 %v692
        %1013 = vmatmul.mubr.bf16.gmra.mxu0 %v691
        %v1014 = vpop.f32.mrf.mxu0
        %v1015 = vadd.f32 0.0, %v1014
        %v1016 = vpop.f32.mrf.mxu0
        %v1017 = vpop.f32.mrf.mxu0
        %v1018 = vadd.f32 0.0, %v1017
        %v1019 = vpop.f32.mrf.mxu0
        %1020 = vdwg.mxu0
        %1021 = vmatprep.subr.bf16.mxu0 0
        %1022 = vmatpush1.bf16.msra.mxu0 %v899
        %1023 = vmatprep.subr.bf16.mxu0 0
        %1024 = vmatpush1.bf16.msra.mxu0 %v898
        %1025 = vmatprep.subr.bf16.mxu0 0
        %1026 = vmatpush1.bf16.msra.mxu0 %v897
        %1027 = vmatprep.subr.bf16.mxu0 0
        %1028 = vmatpush1.bf16.msra.mxu0 %v896
        %1029 = vmatprep.subr.bf16.mxu0 0
        %1030 = vmatpush1.bf16.msra.mxu0 %v895
        %1031 = vmatprep.subr.bf16.mxu0 0
        %1032 = vmatpush1.bf16.msra.mxu0 %v894
        %1033 = vmatprep.subr.bf16.mxu0 0
        %1034 = vmatpush1.bf16.msra.mxu0 %v893
        %1035 = vmatprep.subr.bf16.mxu0 0
        %1036 = vmatpush1.bf16.msra.mxu0 %v892
        %1037 = vmatprep.subr.bf16.mxu0 0
        %1038 = vmatpush2.bf16.msra.mxu0 %v907
        %1039 = vmatprep.subr.bf16.mxu0 0
        %1040 = vmatpush2.bf16.msra.mxu0 %v906
        %1041 = vmatprep.subr.bf16.mxu0 0
        %1042 = vmatpush2.bf16.msra.mxu0 %v905
        %1043 = vmatprep.subr.bf16.mxu0 0
        %1044 = vmatpush2.bf16.msra.mxu0 %v904
        %1045 = vmatprep.subr.bf16.mxu0 0
        %1046 = vmatpush2.bf16.msra.mxu0 %v903
        %1047 = vmatprep.subr.bf16.mxu0 0
        %1048 = vmatpush2.bf16.msra.mxu0 %v902
        %1049 = vmatprep.subr.bf16.mxu0 0
        %1050 = vmatpush2.bf16.msra.mxu0 %v901
        %1051 = vmatprep.subr.bf16.mxu0 0
        %1052 = vmatpush2.bf16.msra.mxu0 %v900
        %1053 = vmatprep.mubr.bf16.mxu0 %v679
        %1054 = vmatmul.mubr.bf16.gmra.mxu0 %v678
        %v1055 = vpop.f32.mrf.mxu0
        %v1056 = vadd.f32 %v991, %v1055
        %v1057 = vpop.f32.mrf.mxu0
        %v1058 = vpop.f32.mrf.mxu0
        %v1059 = vadd.f32 %v994, %v1058
        %v1060 = vpop.f32.mrf.mxu0
        %1061 = vmatprep.mubr.bf16.mxu0 %v684
        %1062 = vmatmul.mubr.bf16.gmra.mxu0 %v683
        %v1063 = vpop.f32.mrf.mxu0
        %v1064 = vadd.f32 %v999, %v1063
        %v1065 = vpop.f32.mrf.mxu0
        %v1066 = vpop.f32.mrf.mxu0
        %v1067 = vadd.f32 %v1002, %v1066
        %v1068 = vpop.f32.mrf.mxu0
        %1069 = vmatprep.mubr.bf16.mxu0 %v689
        %1070 = vmatmul.mubr.bf16.gmra.mxu0 %v688
        %v1071 = vpop.f32.mrf.mxu0
        %v1072 = vadd.f32 %v1007, %v1071
        %v1073 = vpop.f32.mrf.mxu0
        %v1074 = vpop.f32.mrf.mxu0
        %v1075 = vadd.f32 %v1010, %v1074
        %v1076 = vpop.f32.mrf.mxu0
        %1077 = vmatprep.mubr.bf16.mxu0 %v694
        %1078 = vmatmul.mubr.bf16.gmra.mxu0 %v693
        %v1079 = vpop.f32.mrf.mxu0
        %v1080 = vadd.f32 %v1015, %v1079
        %v1081 = vpop.f32.mrf.mxu0
        %v1082 = vpop.f32.mrf.mxu0
        %v1083 = vadd.f32 %v1018, %v1082
        %v1084 = vpop.f32.mrf.mxu0
        %1085 = vdwg.mxu0
        %1086 = vmatprep.subr.bf16.mxu0 0
        %1087 = vmatpush1.bf16.msra.mxu0 %v915
        %1088 = vmatprep.subr.bf16.mxu0 0
        %1089 = vmatpush1.bf16.msra.mxu0 %v914
        %1090 = vmatprep.subr.bf16.mxu0 0
        %1091 = vmatpush1.bf16.msra.mxu0 %v913
        %1092 = vmatprep.subr.bf16.mxu0 0
        %1093 = vmatpush1.bf16.msra.mxu0 %v912
        %1094 = vmatprep.subr.bf16.mxu0 0
        %1095 = vmatpush1.bf16.msra.mxu0 %v911
        %1096 = vmatprep.subr.bf16.mxu0 0
        %1097 = vmatpush1.bf16.msra.mxu0 %v910
        %1098 = vmatprep.subr.bf16.mxu0 0
        %1099 = vmatpush1.bf16.msra.mxu0 %v909
        %1100 = vmatprep.subr.bf16.mxu0 0
        %1101 = vmatpush1.bf16.msra.mxu0 %v908
        %1102 = vmatprep.subr.bf16.mxu0 0
        %1103 = vmatpush2.bf16.msra.mxu0 0
        %1104 = vmatprep.subr.bf16.mxu0 0
        %1105 = vmatpush2.bf16.msra.mxu0 0
        %1106 = vmatprep.subr.bf16.mxu0 0
        %1107 = vmatpush2.bf16.msra.mxu0 0
        %1108 = vmatprep.subr.bf16.mxu0 0
        %1109 = vmatpush2.bf16.msra.mxu0 0
        %1110 = vmatprep.subr.bf16.mxu0 0
        %1111 = vmatpush2.bf16.msra.mxu0 0
        %1112 = vmatprep.subr.bf16.mxu0 0
        %1113 = vmatpush2.bf16.msra.mxu0 0
        %1114 = vmatprep.subr.bf16.mxu0 0
        %1115 = vmatpush2.bf16.msra.mxu0 0
        %1116 = vmatprep.subr.bf16.mxu0 0
        %1117 = vmatpush2.bf16.msra.mxu0 0
        %1118 = vmatprep.mubr.bf16.mxu0 0
        %1119 = vmatmul.mubr.bf16.gmra.mxu0 %v680
        %v1120 = vpop.f32.mrf.mxu0
        %v1121 = vadd.f32 %v1056, %v1120
        %v1122 = vpop.f32.mrf.mxu0
        %v1123 = vpop.f32.mrf.mxu0
        %v1124 = vadd.f32 %v1059, %v1123
        %v1125 = vpop.f32.mrf.mxu0
        %1126 = vmatprep.mubr.bf16.mxu0 0
        %1127 = vmatmul.mubr.bf16.gmra.mxu0 %v685
        %v1128 = vpop.f32.mrf.mxu0
        %v1129 = vadd.f32 %v1064, %v1128
        %v1130 = vpop.f32.mrf.mxu0
        %v1131 = vpop.f32.mrf.mxu0
        %v1132 = vadd.f32 %v1067, %v1131
        %v1133 = vpop.f32.mrf.mxu0
        %1134 = vmatprep.mubr.bf16.mxu0 0
        %1135 = vmatmul.mubr.bf16.gmra.mxu0 %v690
        %v1136 = vpop.f32.mrf.mxu0
        %v1137 = vadd.f32 %v1072, %v1136
        %v1138 = vpop.f32.mrf.mxu0
        %v1139 = vpop.f32.mrf.mxu0
        %v1140 = vadd.f32 %v1075, %v1139
        %v1141 = vpop.f32.mrf.mxu0
        %1142 = vmatprep.mubr.bf16.mxu0 0
        %1143 = vmatmul.mubr.bf16.gmra.mxu0 %v695
        %v1144 = vpop.f32.mrf.mxu0
        %v1145 = vadd.f32 %v1080, %v1144
        %v1146 = vpop.f32.mrf.mxu0
        %v1147 = vpop.f32.mrf.mxu0
        %v1148 = vadd.f32 %v1083, %v1147
        %v1149 = vpop.f32.mrf.mxu0
        %1150 = vdwg.mxu0
        %vm1151 = vcmask 523264
        %v1152 = vsel %vm1151, %v1121, -inf
        %1153 = vmax.xlane.f32.xlu0 %v1152
        %v1154 = vpop.xlane.xlu0 %1153
        %v1155 = vsel %vm1151, %v1124, -inf
        %1156 = vmax.xlane.f32.xlu0 %v1155
        %v1157 = vpop.xlane.xlu0 %1156
        %v1158 = vsel %vm1151, %v1129, -inf
        %1159 = vmax.xlane.f32.xlu0 %v1158
        %v1160 = vpop.xlane.xlu0 %1159
        %v1161 = vsel %vm1151, %v1132, -inf
        %1162 = vmax.xlane.f32.xlu0 %v1161
        %v1163 = vpop.xlane.xlu0 %1162
        %v1164 = vsel %vm1151, %v1137, -inf
        %1165 = vmax.xlane.f32.xlu0 %v1164
        %v1166 = vpop.xlane.xlu0 %1165
        %v1167 = vsel %vm1151, %v1140, -inf
        %1168 = vmax.xlane.f32.xlu0 %v1167
        %v1169 = vpop.xlane.xlu0 %1168
        %v1170 = vsel %vm1151, %v1145, -inf
        %1171 = vmax.xlane.f32.xlu0 %v1170
        %v1172 = vpop.xlane.xlu0 %1171
        %v1173 = vsel %vm1151, %v1148, -inf
        %1174 = vmax.xlane.f32.xlu0 %v1173
        %v1175 = vpop.xlane.xlu0 %1174
        %v1176 = vsub.f32 %v1121, %v1154
        %v1177 = vsub.f32 %v1124, %v1157
        %v1178 = vsub.f32 %v1129, %v1160
        %v1179 = vsub.f32 %v1132, %v1163
        %v1180 = vsub.f32 %v1137, %v1166
        %v1181 = vsub.f32 %v1140, %v1169
        %v1182 = vsub.f32 %v1145, %v1172
        %v1183 = vsub.f32 %v1148, %v1175
        %v1184 = vmul.f32 %v1176, 1.442695
        %v1185 = vpow.pop %v1184
        %v1186 = vmul.f32 %v1177, 1.442695
        %v1187 = vpow.pop %v1186
        %v1188 = vmul.f32 %v1178, 1.442695
        %v1189 = vpow.pop %v1188
        %v1190 = vmul.f32 %v1179, 1.442695
        %v1191 = vpow.pop %v1190
        %v1192 = vmul.f32 %v1180, 1.442695
        %v1193 = vpow.pop %v1192
        %v1194 = vmul.f32 %v1181, 1.442695
        %v1195 = vpow.pop %v1194
        %v1196 = vmul.f32 %v1182, 1.442695
        %v1197 = vpow.pop %v1196
        %v1198 = vmul.f32 %v1183, 1.442695
        %v1199 = vpow.pop %v1198
        %v1200 = vsel %vm1151, %v1185, 0.0
        %1201 = vadd.xlane.f32.xlu0 %v1200
        %v1202 = vpop.xlane.xlu0 %1201
        %v1203 = vsel %vm1151, %v1187, 0.0
        %1204 = vadd.xlane.f32.xlu0 %v1203
        %v1205 = vpop.xlane.xlu0 %1204
        %v1206 = vsel %vm1151, %v1189, 0.0
        %1207 = vadd.xlane.f32.xlu0 %v1206
        %v1208 = vpop.xlane.xlu0 %1207
        %v1209 = vsel %vm1151, %v1191, 0.0
        %1210 = vadd.xlane.f32.xlu0 %v1209
        %v1211 = vpop.xlane.xlu0 %1210
        %v1212 = vsel %vm1151, %v1193, 0.0
        %1213 = vadd.xlane.f32.xlu0 %v1212
        %v1214 = vpop.xlane.xlu0 %1213
        %v1215 = vsel %vm1151, %v1195, 0.0
        %1216 = vadd.xlane.f32.xlu0 %v1215
        %v1217 = vpop.xlane.xlu0 %1216
        %v1218 = vsel %vm1151, %v1197, 0.0
        %1219 = vadd.xlane.f32.xlu0 %v1218
        %v1220 = vpop.xlane.xlu0 %1219
        %v1221 = vsel %vm1151, %v1199, 0.0
        %1222 = vadd.xlane.f32.xlu0 %v1221
        %v1223 = vpop.xlane.xlu0 %1222
        %v1224 = vrcp.pop %v1202
        %v1225 = vmul.f32 %v1185, %v1224
        %v1226 = vrcp.pop %v1205
        %v1227 = vmul.f32 %v1187, %v1226
        %v1228 = vrcp.pop %v1208
        %v1229 = vmul.f32 %v1189, %v1228
        %v1230 = vrcp.pop %v1211
        %v1231 = vmul.f32 %v1191, %v1230
        %v1232 = vrcp.pop %v1214
        %v1233 = vmul.f32 %v1193, %v1232
        %v1234 = vrcp.pop %v1217
        %v1235 = vmul.f32 %v1195, %v1234
        %v1236 = vrcp.pop %v1220
        %v1237 = vmul.f32 %v1197, %v1236
        %v1238 = vrcp.pop %v1223
        %v1239 = vmul.f32 %v1199, %v1238
        %v1240 = vpack.c.bf16 %v1227, %v1225
        %v1241 = vpack.c.bf16 %v1231, %v1229
        %v1242 = vpack.c.bf16 %v1235, %v1233
        %v1243 = vpack.c.bf16 %v1239, %v1237
        %v1248 = vunpack.c.l.b16 %v1240
        %v1249 = vunpack.c.h.b16 %v1240
        %v1250 = vunpack.c.l.b16 %v1241
        %v1251 = vunpack.c.h.b16 %v1241
        %v1252 = vunpack.c.l.b16 %v1242
        %v1253 = vunpack.c.h.b16 %v1242
        %v1254 = vunpack.c.l.b16 %v1243
        %v1255 = vunpack.c.h.b16 %v1243
        %v1256 = vpack.c.b16 %v1248, %v1248
        %v1257 = vpack.c.b16 %v1249, %v1249
        %v1258 = vpack.c.b16 %v1250, %v1250
        %v1259 = vpack.c.b16 %v1251, %v1251
        %v1260 = vpack.c.b16 %v1252, %v1252
        %v1261 = vpack.c.b16 %v1253, %v1253
        %v1262 = vpack.c.b16 %v1254, %v1254
        %v1263 = vpack.c.b16 %v1255, %v1255
        %vm1272 = vcmask 519168
        %1273 = vst.msk [vmem:[%s390] sm:$0xf] %vm1272, %v1256
        %1274 = vst.msk [vmem:[%s390 + $0x4] sm:$0xf] %vm1272, %v1257
        %1275 = vst.msk [vmem:[%s390 + $0x8] sm:$0xf] %vm1272, %v1258
        %1276 = vst.msk [vmem:[%s390 + $0xc] sm:$0xf] %vm1272, %v1259
        %1277 = vst.msk [vmem:[%s390 + $0x10] sm:$0xf] %vm1272, %v1260
        %1278 = vst.msk [vmem:[%s390 + $0x14] sm:$0xf] %vm1272, %v1261
        %1279 = vst.msk [vmem:[%s390 + $0x18] sm:$0xf] %vm1272, %v1262
        %1280 = vst.msk [vmem:[%s390 + $0x1c] sm:$0xf] %vm1272, %v1263
        %v1281 = vld [vmem:[%s411] sm:$0xf]
        %v1282 = vld [vmem:[%s411 + $0x4] sm:$0xf]
        %v1283 = vld [vmem:[%s411 + $0x8] sm:$0xf]
        %v1284 = vld [vmem:[%s411 + $0xc] sm:$0xf]
        %v1285 = vld [vmem:[%s411 + $0x10] sm:$0xf]
        %v1286 = vld [vmem:[%s411 + $0x14] sm:$0xf]
        %v1287 = vld [vmem:[%s411 + $0x18] sm:$0xf]
        %v1288 = vld [vmem:[%s411 + $0x1c] sm:$0xf]
        %v1297 = vunpack.c.l.b16 %v1281
        %v1298 = vunpack.c.l.b16 %v1282
        %v1299 = vunpack.c.l.b16 %v1283
        %v1300 = vunpack.c.l.b16 %v1284
        %v1301 = vunpack.c.l.b16 %v1285
        %v1302 = vunpack.c.l.b16 %v1286
        %v1303 = vunpack.c.l.b16 %v1287
        %v1304 = vunpack.c.l.b16 %v1288
        %v1305 = vpack.c.b16 %v1298, %v1297
        %v1306 = vpack.c.b16 %v1300, %v1299
        %v1307 = vpack.c.b16 %v1302, %v1301
        %v1308 = vpack.c.b16 %v1304, %v1303
        %v1314 = vsel %vm1151, %v1240, 0
        %v1317 = vsel %vm1151, %v1241, 0
        %v1320 = vsel %vm1151, %v1242, 0
        %v1323 = vsel %vm1151, %v1243, 0
        %1325 = vmatprep.subr.bf16.mxu0 0
        %1326 = vmatpush1.bf16.msra.mxu0 0
        %1327 = vmatprep.subr.bf16.mxu0 0
        %1328 = vmatpush1.bf16.msra.mxu0 0
        %1329 = vmatprep.subr.bf16.mxu0 0
        %1330 = vmatpush1.bf16.msra.mxu0 0
        %1331 = vmatprep.subr.bf16.mxu0 0
        %1332 = vmatpush1.bf16.msra.mxu0 0
        %1333 = vmatprep.subr.bf16.mxu0 0
        %1334 = vmatpush1.bf16.msra.mxu0 %v1308
        %1335 = vmatprep.subr.bf16.mxu0 0
        %1336 = vmatpush1.bf16.msra.mxu0 %v1307
        %1337 = vmatprep.subr.bf16.mxu0 0
        %1338 = vmatpush1.bf16.msra.mxu0 %v1306
        %1339 = vmatprep.subr.bf16.mxu0 0
        %1340 = vmatpush1.bf16.msra.mxu0 %v1305
        %1341 = vmatprep.subr.bf16.mxu0 0
        %1342 = vmatpush2.bf16.msra.mxu0 0
        %1343 = vmatprep.subr.bf16.mxu0 0
        %1344 = vmatpush2.bf16.msra.mxu0 0
        %1345 = vmatprep.subr.bf16.mxu0 0
        %1346 = vmatpush2.bf16.msra.mxu0 0
        %1347 = vmatprep.subr.bf16.mxu0 0
        %1348 = vmatpush2.bf16.msra.mxu0 0
        %1349 = vmatprep.subr.bf16.mxu0 0
        %1350 = vmatpush2.bf16.msra.mxu0 0
        %1351 = vmatprep.subr.bf16.mxu0 0
        %1352 = vmatpush2.bf16.msra.mxu0 0
        %1353 = vmatprep.subr.bf16.mxu0 0
        %1354 = vmatpush2.bf16.msra.mxu0 0
        %1355 = vmatprep.subr.bf16.mxu0 0
        %1356 = vmatpush2.bf16.msra.mxu0 0
        %1357 = vmatprep.mubr.bf16.mxu0 0
        %1358 = vmatmul.mubr.bf16.gmra.mxu0 %v1314
        %v1359 = vpop.f32.mrf.mxu0
        %v1360 = vadd.f32 0.0, %v1359
        %v1361 = vpop.f32.mrf.mxu0
        %v1362 = vpop.f32.mrf.mxu0
        %v1363 = vadd.f32 0.0, %v1362
        %v1364 = vpop.f32.mrf.mxu0
        %1365 = vmatprep.mubr.bf16.mxu0 0
        %1366 = vmatmul.mubr.bf16.gmra.mxu0 %v1317
        %v1367 = vpop.f32.mrf.mxu0
        %v1368 = vadd.f32 0.0, %v1367
        %v1369 = vpop.f32.mrf.mxu0
        %v1370 = vpop.f32.mrf.mxu0
        %v1371 = vadd.f32 0.0, %v1370
        %v1372 = vpop.f32.mrf.mxu0
        %1373 = vmatprep.mubr.bf16.mxu0 0
        %1374 = vmatmul.mubr.bf16.gmra.mxu0 %v1320
        %v1375 = vpop.f32.mrf.mxu0
        %v1376 = vadd.f32 0.0, %v1375
        %v1377 = vpop.f32.mrf.mxu0
        %v1378 = vpop.f32.mrf.mxu0
        %v1379 = vadd.f32 0.0, %v1378
        %v1380 = vpop.f32.mrf.mxu0
        %1381 = vmatprep.mubr.bf16.mxu0 0
        %1382 = vmatmul.mubr.bf16.gmra.mxu0 %v1323
        %v1383 = vpop.f32.mrf.mxu0
        %v1384 = vadd.f32 0.0, %v1383
        %v1385 = vpop.f32.mrf.mxu0
        %v1386 = vpop.f32.mrf.mxu0
        %v1387 = vadd.f32 0.0, %v1386
        %v1388 = vpop.f32.mrf.mxu0
        %1389 = vdwg.mxu0
        %v1390 = vld [vmem:[#allocation2] sm:$0xf]
        %v1391 = vld [vmem:[#allocation2 + $0x4] sm:$0xf]
        %v1392 = vld [vmem:[#allocation2 + $0x8] sm:$0xf]
        %v1393 = vld [vmem:[#allocation2 + $0xc] sm:$0xf]
        %v1394 = vld [vmem:[#allocation2 + $0x10] sm:$0xf]
        %v1395 = vld [vmem:[#allocation2 + $0x14] sm:$0xf]
        %v1396 = vld [vmem:[#allocation2 + $0x18] sm:$0xf]
        %v1397 = vld [vmem:[#allocation2 + $0x1c] sm:$0xf]
        %v1406 = vunpack.c.l.b16 %v1390
        %v1407 = vunpack.c.l.b16 %v1391
        %v1408 = vunpack.c.l.b16 %v1392
        %v1409 = vunpack.c.l.b16 %v1393
        %v1410 = vunpack.c.l.b16 %v1394
        %v1411 = vunpack.c.l.b16 %v1395
        %v1412 = vunpack.c.l.b16 %v1396
        %v1413 = vunpack.c.l.b16 %v1397
        %v1414 = vpack.c.b16 %v1407, %v1406
        %v1415 = vpack.c.b16 %v1409, %v1408
        %v1416 = vpack.c.b16 %v1411, %v1410
        %v1417 = vpack.c.b16 %v1413, %v1412
        %1422 = vmatprep.subr.bf16.mxu0 0
        %1423 = vmatpush1.bf16.msra.mxu0 0
        %1424 = vmatprep.subr.bf16.mxu0 0
        %1425 = vmatpush1.bf16.msra.mxu0 0
        %1426 = vmatprep.subr.bf16.mxu0 0
        %1427 = vmatpush1.bf16.msra.mxu0 0
        %1428 = vmatprep.subr.bf16.mxu0 0
        %1429 = vmatpush1.bf16.msra.mxu0 0
        %1430 = vmatprep.subr.bf16.mxu0 0
        %1431 = vmatpush1.bf16.msra.mxu0 %v1417
        %1432 = vmatprep.subr.bf16.mxu0 0
        %1433 = vmatpush1.bf16.msra.mxu0 %v1416
        %1434 = vmatprep.subr.bf16.mxu0 0
        %1435 = vmatpush1.bf16.msra.mxu0 %v1415
        %1436 = vmatprep.subr.bf16.mxu0 0
        %1437 = vmatpush1.bf16.msra.mxu0 %v1414
        %1438 = vmatprep.subr.bf16.mxu0 0
        %1439 = vmatpush2.bf16.msra.mxu0 0
        %1440 = vmatprep.subr.bf16.mxu0 0
        %1441 = vmatpush2.bf16.msra.mxu0 0
        %1442 = vmatprep.subr.bf16.mxu0 0
        %1443 = vmatpush2.bf16.msra.mxu0 0
        %1444 = vmatprep.subr.bf16.mxu0 0
        %1445 = vmatpush2.bf16.msra.mxu0 0
        %1446 = vmatprep.subr.bf16.mxu0 0
        %1447 = vmatpush2.bf16.msra.mxu0 0
        %1448 = vmatprep.subr.bf16.mxu0 0
        %1449 = vmatpush2.bf16.msra.mxu0 0
        %1450 = vmatprep.subr.bf16.mxu0 0
        %1451 = vmatpush2.bf16.msra.mxu0 0
        %1452 = vmatprep.subr.bf16.mxu0 0
        %1453 = vmatpush2.bf16.msra.mxu0 0
        %1454 = vmatprep.mubr.bf16.mxu0 0
        %1455 = vmatmul.mubr.bf16.gmra.mxu0 %v1314
        %v1456 = vpop.f32.mrf.mxu0
        %v1457 = vadd.f32 0.0, %v1456
        %v1458 = vpop.f32.mrf.mxu0
        %v1459 = vpop.f32.mrf.mxu0
        %v1460 = vadd.f32 0.0, %v1459
        %v1461 = vpop.f32.mrf.mxu0
        %1462 = vmatprep.mubr.bf16.mxu0 0
        %1463 = vmatmul.mubr.bf16.gmra.mxu0 %v1317
        %v1464 = vpop.f32.mrf.mxu0
        %v1465 = vadd.f32 0.0, %v1464
        %v1466 = vpop.f32.mrf.mxu0
        %v1467 = vpop.f32.mrf.mxu0
        %v1468 = vadd.f32 0.0, %v1467
        %v1469 = vpop.f32.mrf.mxu0
        %1470 = vmatprep.mubr.bf16.mxu0 0
        %1471 = vmatmul.mubr.bf16.gmra.mxu0 %v1320
        %v1472 = vpop.f32.mrf.mxu0
        %v1473 = vadd.f32 0.0, %v1472
        %v1474 = vpop.f32.mrf.mxu0
        %v1475 = vpop.f32.mrf.mxu0
        %v1476 = vadd.f32 0.0, %v1475
        %v1477 = vpop.f32.mrf.mxu0
        %1478 = vmatprep.mubr.bf16.mxu0 0
        %1479 = vmatmul.mubr.bf16.gmra.mxu0 %v1323
        %v1480 = vpop.f32.mrf.mxu0
        %v1481 = vadd.f32 0.0, %v1480
        %v1482 = vpop.f32.mrf.mxu0
        %v1483 = vpop.f32.mrf.mxu0
        %v1484 = vadd.f32 0.0, %v1483
        %v1485 = vpop.f32.mrf.mxu0
        %1486 = vdwg.mxu0
        %v1487 = vmul.f32 %v1360, %v1360
        %v1488 = vmul.f32 %v1363, %v1363
        %v1489 = vmul.f32 %v1368, %v1368
        %v1490 = vmul.f32 %v1371, %v1371
        %v1491 = vmul.f32 %v1376, %v1376
        %v1492 = vmul.f32 %v1379, %v1379
        %v1493 = vmul.f32 %v1384, %v1384
        %v1494 = vmul.f32 %v1387, %v1387
        %v1495 = vsub.f32 %v1457, %v1487
        %v1496 = vsub.f32 %v1460, %v1488
        %v1497 = vsub.f32 %v1465, %v1489
        %v1498 = vsub.f32 %v1468, %v1490
        %v1499 = vsub.f32 %v1473, %v1491
        %v1500 = vsub.f32 %v1476, %v1492
        %v1501 = vsub.f32 %v1481, %v1493
        %v1502 = vsub.f32 %v1484, %v1494
        %v1503 = vmax.f32 %v1495, 0.0
        %v1504 = vmax.f32 %v1496, 0.0
        %v1505 = vmax.f32 %v1497, 0.0
        %v1506 = vmax.f32 %v1498, 0.0
        %v1507 = vmax.f32 %v1499, 0.0
        %v1508 = vmax.f32 %v1500, 0.0
        %v1509 = vmax.f32 %v1501, 0.0
        %v1510 = vmax.f32 %v1502, 0.0
        %v1511 = vrsqrt.pop %v1503
        %v1512 = vmul.f32 %v1503, %v1511
        %vm1513 = vcmp.eq.f32.partialorder %v1503, inf
        %v1514 = vsel %vm1513, %v1503, %v1512
        %vm1515 = vcmp.eq.f32.partialorder %v1503, 0.0
        %v1516 = vand.u32 %v1503, 2147483648
        %v1517 = vsel %vm1515, %v1516, %v1514
        %v1518 = vrsqrt.pop %v1504
        %v1519 = vmul.f32 %v1504, %v1518
        %vm1520 = vcmp.eq.f32.partialorder %v1504, inf
        %v1521 = vsel %vm1520, %v1504, %v1519
        %vm1522 = vcmp.eq.f32.partialorder %v1504, 0.0
        %v1523 = vand.u32 %v1504, 2147483648
        %v1524 = vsel %vm1522, %v1523, %v1521
        %v1525 = vrsqrt.pop %v1505
        %v1526 = vmul.f32 %v1505, %v1525
        %vm1527 = vcmp.eq.f32.partialorder %v1505, inf
        %v1528 = vsel %vm1527, %v1505, %v1526
        %vm1529 = vcmp.eq.f32.partialorder %v1505, 0.0
        %v1530 = vand.u32 %v1505, 2147483648
        %v1531 = vsel %vm1529, %v1530, %v1528
        %v1532 = vrsqrt.pop %v1506
        %v1533 = vmul.f32 %v1506, %v1532
        %vm1534 = vcmp.eq.f32.partialorder %v1506, inf
        %v1535 = vsel %vm1534, %v1506, %v1533
        %vm1536 = vcmp.eq.f32.partialorder %v1506, 0.0
        %v1537 = vand.u32 %v1506, 2147483648
        %v1538 = vsel %vm1536, %v1537, %v1535
        %v1539 = vrsqrt.pop %v1507
        %v1540 = vmul.f32 %v1507, %v1539
        %vm1541 = vcmp.eq.f32.partialorder %v1507, inf
        %v1542 = vsel %vm1541, %v1507, %v1540
        %vm1543 = vcmp.eq.f32.partialorder %v1507, 0.0
        %v1544 = vand.u32 %v1507, 2147483648
        %v1545 = vsel %vm1543, %v1544, %v1542
        %v1546 = vrsqrt.pop %v1508
        %v1547 = vmul.f32 %v1508, %v1546
        %vm1548 = vcmp.eq.f32.partialorder %v1508, inf
        %v1549 = vsel %vm1548, %v1508, %v1547
        %vm1550 = vcmp.eq.f32.partialorder %v1508, 0.0
        %v1551 = vand.u32 %v1508, 2147483648
        %v1552 = vsel %vm1550, %v1551, %v1549
        %v1553 = vrsqrt.pop %v1509
        %v1554 = vmul.f32 %v1509, %v1553
        %vm1555 = vcmp.eq.f32.partialorder %v1509, inf
        %v1556 = vsel %vm1555, %v1509, %v1554
        %vm1557 = vcmp.eq.f32.partialorder %v1509, 0.0
        %v1558 = vand.u32 %v1509, 2147483648
        %v1559 = vsel %vm1557, %v1558, %v1556
        %v1560 = vrsqrt.pop %v1510
        %v1561 = vmul.f32 %v1510, %v1560
        %vm1562 = vcmp.eq.f32.partialorder %v1510, inf
        %v1563 = vsel %vm1562, %v1510, %v1561
        %vm1564 = vcmp.eq.f32.partialorder %v1510, 0.0
        %v1565 = vand.u32 %v1510, 2147483648
        %v1566 = vsel %vm1564, %v1565, %v1563
        %v1567 = vld [vmem:[%s420] sm:$0xff]
        %v1568 = vld [vmem:[%s420 + $0x8] sm:$0xff]
        %v1569 = vld [vmem:[%s420 + $0x10] sm:$0xff]
        %v1570 = vld [vmem:[%s420 + $0x18] sm:$0xff]
        %v1571 = vld [vmem:[%s420 + $0x20] sm:$0xff]
        %v1572 = vld [vmem:[%s420 + $0x28] sm:$0xff]
        %v1573 = vld [vmem:[%s420 + $0x30] sm:$0xff]
        %v1574 = vld [vmem:[%s420 + $0x38] sm:$0xff]
        %v1575 = vld [vmem:[%s424] sm:$0x1]
        %v1577 = vlaneseq
        %v1578 = vshrl.u32 %v1577, 7
        %v1579 = vsub.s32 0, %v1578
        %v1580 = vrot.slane %v1575, %v1579
        %v1582 = vsub.f32 %v1567, %v1580
        %v1583 = vsub.f32 %v1568, %v1580
        %v1584 = vsub.f32 %v1569, %v1580
        %v1585 = vsub.f32 %v1570, %v1580
        %v1586 = vsub.f32 %v1571, %v1580
        %v1587 = vsub.f32 %v1572, %v1580
        %v1588 = vsub.f32 %v1573, %v1580
        %v1589 = vsub.f32 %v1574, %v1580
        %v1590 = vld [vmem:[%s427] sm:$0x1]
        %v1592 = vlaneseq
        %v1593 = vshrl.u32 %v1592, 7
        %v1594 = vsub.s32 0, %v1593
        %v1595 = vrot.slane %v1590, %v1594
        %v1597 = vmul.f32 %v1582, %v1595
        %v1598 = vmul.f32 %v1583, %v1595
        %v1599 = vmul.f32 %v1584, %v1595
        %v1600 = vmul.f32 %v1585, %v1595
        %v1601 = vmul.f32 %v1586, %v1595
        %v1602 = vmul.f32 %v1587, %v1595
        %v1603 = vmul.f32 %v1588, %v1595
        %v1604 = vmul.f32 %v1589, %v1595
        %v1605 = vmul.f32 %v1517, %v1597
        %v1606 = vmul.f32 %v1524, %v1598
        %v1607 = vmul.f32 %v1531, %v1599
        %v1608 = vmul.f32 %v1538, %v1600
        %v1609 = vmul.f32 %v1545, %v1601
        %v1610 = vmul.f32 %v1552, %v1602
        %v1611 = vmul.f32 %v1559, %v1603
        %v1612 = vmul.f32 %v1566, %v1604
        %v1613 = vadd.f32 %v1605, %v1360
        %v1614 = vadd.f32 %v1606, %v1363
        %v1615 = vadd.f32 %v1607, %v1368
        %v1616 = vadd.f32 %v1608, %v1371
        %v1617 = vadd.f32 %v1609, %v1376
        %v1618 = vadd.f32 %v1610, %v1379
        %v1619 = vadd.f32 %v1611, %v1384
        %v1620 = vadd.f32 %v1612, %v1387
        %1621 = vst [vmem:[%s436] sm:$0xff] %v1613
        %1622 = vst [vmem:[%s436 + $0x8] sm:$0xff] %v1614
        %1623 = vst [vmem:[%s436 + $0x10] sm:$0xff] %v1615
        %1624 = vst [vmem:[%s436 + $0x18] sm:$0xff] %v1616
        %1625 = vst [vmem:[%s436 + $0x20] sm:$0xff] %v1617
        %1626 = vst [vmem:[%s436 + $0x28] sm:$0xff] %v1618
        %1627 = vst [vmem:[%s436 + $0x30] sm:$0xff] %v1619
        %1628 = vst [vmem:[%s436 + $0x38] sm:$0xff] %v1620
        %s1629 = smul.u32 8, %s27
        %p1630 = scmp.lt.s32.totalorder %s26, 1
        %s1631 = scalar_select %p1630, %s26, 1
        %p1632 = scmp.lt.s32.totalorder %s1629, 7
        %s1633 = scalar_select %p1632, %s1629, 7
        %s1634 = smul.addr %s1631, 8
        %s1635 = sadd.s32 %s1633, %s1634
        %s1636 = smul.addr %s1635, 8
        %s1637 = scalar_lea.vmem %s6, %s1636
        %s1638 = sand.u32 %s232, 1
        %s1639 = scalar_lea.sflag [#allocation4], %s1638
        %s1640 = sand.u32 %s232, 1
        %s1641 = smul.addr %s1640, 32
        %s1642 = scalar_lea.vmem [#allocation3], %s1641
        // Predicated region
        $region49: #{transformer_forward.20} parent=43 // pred_check
          %p1643 = pneg %p214
        $region50: #{transformer_forward.20} parent=43 // pred_check_branch
          %1645 = sbr.rel (%p1643) target = $region52
        $region51: #{transformer_forward.20} parent=43 // pred_region
          %s1646 = smul.u32 8, %s27
        $region52: #{transformer_forward.20} parent=43 // pred_fallthru
          _
        // Predicated region
        $region53: #{transformer_forward.20} parent=43 // pred_check
          %p1647 = pneg %p242
        $region54: #{transformer_forward.20} parent=43 // pred_check_branch
          %1649 = sbr.rel (%p1647) target = $region56
        $region55: #{transformer_forward.20} parent=43 // pred_region
          %s1650 = smul.u32 8, %s27
          %s1652 = ssub.s32 512, 512
          %1653 = vsyncadd %s1639, %s1652
          %s1654 = smul.addr %s26, 8
          %s1655 = sadd.s32 %s1650, %s1654
          %s1656 = smul.addr %s1655, 64
          %s1657 = scalar_lea.hbm %s7, %s1656
          %s1658 = sshll.u32 %s1642, 4
          %s1659 = int_to_ptr.vmem [resolvable:$true] %s1658
          %1664 = dma.vmem_to_hbm [thread:$0]  %s1659, 512, %s1657, %s1639, 64, 64, 4
        $region56: #{transformer_forward.20} parent=43 // pred_fallthru
          _
      $region44: #{transformer_forward.20} parent=5 // pred_fallthru
        _
      %p1665 = scmp.le.s32.totalorder 2, %s17
      // Predicated region
      $region57: #{transformer_forward.20} parent=5 // pred_check
        %p1666 = pneg %p1665
      $region58: #{transformer_forward.20} parent=5 // pred_check_branch
        %1668 = sbr.rel (%p1666) target = $region60
      $region59: #{transformer_forward.20} parent=5 // pred_region
        %s1669 = ssub.s32 %s17, 2
        // Predicated region
        $region61: #{transformer_forward.20} parent=59 // pred_check
          %p1670 = pneg %p220
        $region62: #{transformer_forward.20} parent=59 // pred_check_branch
          %1672 = sbr.rel (%p1670) target = $region64
        $region63: #{transformer_forward.20} parent=59 // pred_region
          %s1673 = smul.u32 8, %s29
          %p1674 = scmp.lt.s32.totalorder %s28, 1
          %s1675 = scalar_select %p1674, %s28, 1
          %p1676 = scmp.lt.s32.totalorder %s1673, 7
          %s1677 = scalar_select %p1676, %s1673, 7
          %s1678 = smul.addr %s1675, 8
          %s1679 = sadd.s32 %s1677, %s1678
          %s1680 = smul.addr %s1679, 8
          %s1681 = scalar_lea.vmem %s6, %s1680
        $region64: #{transformer_forward.20} parent=59 // pred_fallthru
          _
        // Predicated region
        $region65: #{transformer_forward.20} parent=59 // pred_check
          %p1682 = pneg %p248
        $region66: #{transformer_forward.20} parent=59 // pred_check_branch
          %1684 = sbr.rel (%p1682) target = $region68
        $region67: #{transformer_forward.20} parent=59 // pred_region
          %s1685 = sand.u32 %s233, 1
          %s1686 = scalar_lea.sflag [#allocation4], %s1685
          %s1687 = sand.u32 %s233, 1
          %s1688 = smul.addr %s1687, 32
          %s1689 = scalar_lea.vmem [#allocation3], %s1688
          %1690 = dma.done %s1686, 512
        $region68: #{transformer_forward.20} parent=59 // pred_fallthru
          _
      $region60: #{transformer_forward.20} parent=5 // pred_fallthru
        _
    $region6: #{transformer_forward.20} parent=1 // loop_footer
      %s21 = sadd.s32 1, %s17
    $region7: #{transformer_forward.20} parent=1 // loop_footer_branch
      %16 = sbr.rel target = $region3
    $region8: #{transformer_forward.20} parent=1 // loop_exit
      _
    %1691 = vsyncpa [#allocation4], 1
    %s1692 = scalar_lea.sflag [#allocation4], 1
    %1693 = vsyncpa %s1692, 1

// kernel: transformer_forward.17
$region0: #{transformer_forward.17}
  #allocation0 [shape = 'u32[]', space=smem, size = 0x4, offset = 0x4, fixed_abs, tag = 'smem constant byte address 0x4 - core index']
  #allocation1 [shape = 'u32[144,128]{1,0:T(1,128)}', space=vmem, size = 0x12000, scoped, tag = 'internal scratch']
  %s0 = inlined_call_operand.vmem [shape: bf16[128,640], index: 0, kind: input, shape index: {}]
  %s1 = inlined_call_operand.vmem [shape: bf16[640,640], index: 1, kind: input, shape index: {}]
  %s2 = inlined_call_operand.vmem [shape: f32[1,640], index: 2, kind: input, shape index: {}]
  %s3 = inlined_call_operand.vmem [shape: bf16[128,640], index: 3, kind: output, shape index: {}]
  %s4 = sld [smem:[#allocation0]]
  $region45: #{transformer_forward.17} parent=0
    _
  %s6 = ssub.s32 1, %s4
  %s7 = scalar_select 0, %s6, %s4
  loop: start=0, step=1, limit=4
  $region2: #{transformer_forward.17} parent=0 // loop_pre_header
    _
  $region3: #{transformer_forward.17} parent=0 // loop_header
    %s9 = sphi 0, %s13
    %p10 = scmp.ge.s32.totalorder %s9, 4
    %s19 = sphi 0, %s21
    %s22 = sphi 0, %s19
    %s23 = sphi 0, %s22
    %s39 = sphi 0, %s23
    %s43 = sphi 0, %s43
    %s45 = sphi 0, %s43
    %s46 = sphi 0, %s45
    %s60 = sphi 0, %s46
    %s64 = sphi 0, %s64
    %s66 = sphi 0, %s64
    %s67 = sphi 0, %s66
    %s81 = sphi 0, %s67
    %s87 = sphi 0, %s89
    %s90 = sphi 0, %s87
    %s91 = sphi 0, %s90
    %s107 = sphi 0, %s91
  $region4: #{transformer_forward.17} parent=0 // loop_header_branch
    %12 = sbr.rel (%p10) target = $region8
  $region5: #{transformer_forward.17} parent=0 // loop_body
    %s14 = ssub.s32 %s9, 1
    %s15 = ssub.s32 %s9, 2
    %s16 = sadd.s32 %s9, 1
    %s17 = ssub.s32 %s9, %s16
    %p18 = scmp.eq.s32.totalorder %s17, 0
    %s20 = sadd.s32 %s19, 1
    %s21 = scalar_select %p18, %s19, %s20
    %p24 = pneg %p18
    %p25 = scmp.eq.s32.totalorder %s9, 1
    %p26 = por %p24, %p25
    %p27 = scmp.ne.s32.totalorder %s19, %s22
    %p28 = scmp.eq.s32.totalorder %s9, 0
    %p29 = por %p27, %p28
    %p30 = scmp.ne.s32.totalorder %s19, %s22
    %p31 = scmp.eq.s32.totalorder %s14, 1
    %p32 = por %p30, %p31
    %p33 = scmp.ne.s32.totalorder %s22, %s23
    %p34 = scmp.eq.s32.totalorder %s14, 0
    %p35 = por %p33, %p34
    %p36 = scmp.ne.s32.totalorder %s22, %s23
    %p37 = scmp.eq.s32.totalorder %s15, 1
    %p38 = por %p36, %p37
    %p40 = scmp.ne.s32.totalorder %s23, %s39
    %p41 = scmp.eq.s32.totalorder %s15, 0
    %p42 = por %p40, %p41
    %s44 = sadd.s32 %s43, 1
    %p47 = scmp.eq.s32.totalorder %s9, 1
    %p48 = scmp.ne.s32.totalorder %s43, %s45
    %p49 = scmp.eq.s32.totalorder %s9, 0
    %p50 = por %p48, %p49
    %p51 = scmp.ne.s32.totalorder %s43, %s45
    %p52 = scmp.eq.s32.totalorder %s14, 1
    %p53 = por %p51, %p52
    %p54 = scmp.ne.s32.totalorder %s45, %s46
    %p55 = scmp.eq.s32.totalorder %s14, 0
    %p56 = por %p54, %p55
    %p57 = scmp.ne.s32.totalorder %s45, %s46
    %p58 = scmp.eq.s32.totalorder %s15, 1
    %p59 = por %p57, %p58
    %p61 = scmp.ne.s32.totalorder %s46, %s60
    %p62 = scmp.eq.s32.totalorder %s15, 0
    %p63 = por %p61, %p62
    %s65 = sadd.s32 %s64, 1
    %p68 = scmp.eq.s32.totalorder %s9, 1
    %p69 = scmp.ne.s32.totalorder %s64, %s66
    %p70 = scmp.eq.s32.totalorder %s9, 0
    %p71 = por %p69, %p70
    %p72 = scmp.ne.s32.totalorder %s64, %s66
    %p73 = scmp.eq.s32.totalorder %s14, 1
    %p74 = por %p72, %p73
    %p75 = scmp.ne.s32.totalorder %s66, %s67
    %p76 = scmp.eq.s32.totalorder %s14, 0
    %p77 = por %p75, %p76
    %p78 = scmp.ne.s32.totalorder %s66, %s67
    %p79 = scmp.eq.s32.totalorder %s15, 1
    %p80 = por %p78, %p79
    %p82 = scmp.ne.s32.totalorder %s67, %s81
    %p83 = scmp.eq.s32.totalorder %s15, 0
    %p84 = por %p82, %p83
    %s85 = ssub.s32 %s9, %s16
    %p86 = scmp.eq.s32.totalorder %s85, 0
    %s88 = sadd.s32 %s87, 1
    %s89 = scalar_select %p86, %s87, %s88
    %p92 = pneg %p86
    %p93 = scmp.eq.s32.totalorder %s9, 1
    %p94 = por %p92, %p93
    %p95 = scmp.ne.s32.totalorder %s87, %s90
    %p96 = scmp.eq.s32.totalorder %s9, 0
    %p97 = por %p95, %p96
    %p98 = scmp.ne.s32.totalorder %s87, %s90
    %p99 = scmp.eq.s32.totalorder %s14, 1
    %p100 = por %p98, %p99
    %p101 = scmp.ne.s32.totalorder %s90, %s91
    %p102 = scmp.eq.s32.totalorder %s14, 0
    %p103 = por %p101, %p102
    %p104 = scmp.ne.s32.totalorder %s90, %s91
    %p105 = scmp.eq.s32.totalorder %s15, 1
    %p106 = por %p104, %p105
    %p108 = scmp.ne.s32.totalorder %s91, %s107
    %p109 = scmp.eq.s32.totalorder %s15, 0
    %p110 = por %p108, %p109
    %p111 = scmp.le.s32.totalorder 1, %s9
    %p112 = scmp.lt.s32.totalorder %s9, 3
    %p113 = pnand %p111, %p112
    %p114 = pneg %p113
    // Predicated region
    $region9: #{transformer_forward.17} parent=5 // pred_check
      _
    $region10: #{transformer_forward.17} parent=5 // pred_check_branch
      %116 = sbr.rel (%p113) target = $region12
    $region11: #{transformer_forward.17} parent=5 // pred_region
      %s117 = ssub.s32 %s9, 1
      // Predicated region
      $region13: #{transformer_forward.17} parent=11 // pred_check
        %p118 = pneg %p56
      $region14: #{transformer_forward.17} parent=11 // pred_check_branch
        %120 = sbr.rel (%p118) target = $region16
      $region15: #{transformer_forward.17} parent=11 // pred_region
        _
      $region16: #{transformer_forward.17} parent=11 // pred_fallthru
        _
      // Predicated region
      $region17: #{transformer_forward.17} parent=11 // pred_check
        %p121 = pneg %p77
      $region18: #{transformer_forward.17} parent=11 // pred_check_branch
        %123 = sbr.rel (%p121) target = $region20
      $region19: #{transformer_forward.17} parent=11 // pred_region
        _
      $region20: #{transformer_forward.17} parent=11 // pred_fallthru
        _
    $region12: #{transformer_forward.17} parent=5 // pred_fallthru
      _
    %p124 = scmp.lt.s32.totalorder %s9, 2
    // Predicated region
    $region21: #{transformer_forward.17} parent=5 // pred_check
      %p125 = pneg %p124
    $region22: #{transformer_forward.17} parent=5 // pred_check_branch
      %127 = sbr.rel (%p125) target = $region24
    $region23: #{transformer_forward.17} parent=5 // pred_region
      // Predicated region
      $region25: #{transformer_forward.17} parent=23 // pred_check
        %p128 = pneg %p29
      $region26: #{transformer_forward.17} parent=23 // pred_check_branch
        %130 = sbr.rel (%p128) target = $region28
      $region27: #{transformer_forward.17} parent=23 // pred_region
        %s131 = smul.u32 8, %s9
        %p132 = scmp.lt.s32.totalorder %s131, 15
        %s133 = scalar_select %p132, %s131, 15
        %s134 = smul.addr %s133, 5
        %s135 = smul.addr %s134, 4
        %s136 = scalar_lea.vmem %s0, %s135
        %s137 = smul.u32 8, %s9
      $region28: #{transformer_forward.17} parent=23 // pred_fallthru
        _
    $region24: #{transformer_forward.17} parent=5 // pred_fallthru
      _
    %p138 = scmp.le.s32.totalorder 1, %s9
    %p139 = scmp.lt.s32.totalorder %s9, 3
    %p140 = pnand %p138, %p139
    %p141 = pneg %p140
    // Predicated region
    $region29: #{transformer_forward.17} parent=5 // pred_check
      _
    $region30: #{transformer_forward.17} parent=5 // pred_check_branch
      %143 = sbr.rel (%p140) target = $region32
    $region31: #{transformer_forward.17} parent=5 // pred_region
      %s144 = ssub.s32 %s9, 1
      %s145 = smul.u32 8, %s14
      %p146 = scmp.lt.s32.totalorder %s145, 15
      %s147 = scalar_select %p146, %s145, 15
      %s148 = smul.addr %s147, 5
      %s149 = smul.addr %s148, 4
      %s150 = scalar_lea.vmem %s0, %s149
      %p151 = pneg %p35
      %p152 = pneg %p32
      %p153 = pneg %p56
      %p154 = pneg %p53
      %p155 = pneg %p77
      %p156 = pneg %p74
      %p157 = pneg %p103
      %p158 = pneg %p100
      %s159 = smul.u32 8, %s14
      %p160 = scmp.lt.s32.totalorder %s159, 15
      %s161 = scalar_select %p160, %s159, 15
      %s162 = smul.addr %s161, 5
      %s163 = smul.addr %s162, 4
      %s164 = scalar_lea.vmem %s3, %s163
      %s165 = smul.u32 8, %s14
      %p166 = scmp.lt.s32.totalorder %s165, 15
      %s167 = scalar_select %p166, %s165, 15
      %s168 = smul.addr %s167, 5
      %s169 = smul.addr %s168, 4
      %s170 = scalar_lea.vmem %s0, %s169
      %s171 = smul.u32 8, %s14
      %s172 = smul.u32 8, %s14
      %p173 = scmp.lt.s32.totalorder %s172, 15
      %s174 = scalar_select %p173, %s172, 15
      %s175 = smul.addr %s174, 5
      %s176 = smul.addr %s175, 4
      %s177 = scalar_lea.vmem %s3, %s176
      %s178 = smul.u32 8, %s14
      %v180 = vld [vmem:[%s170] sm:$0xff]
      %v181 = vld [vmem:[%s170 + $0x8] sm:$0xff]
      %v182 = vld [vmem:[%s170 + $0x10] sm:$0xf]
      %v183 = vld [vmem:[%s170 + $0x14] sm:$0xff]
      %v184 = vld [vmem:[%s170 + $0x1c] sm:$0xff]
      %v185 = vld [vmem:[%s170 + $0x24] sm:$0xf]
      %v186 = vld [vmem:[%s170 + $0x28] sm:$0xff]
      %v187 = vld [vmem:[%s170 + $0x30] sm:$0xff]
      %v188 = vld [vmem:[%s170 + $0x38] sm:$0xf]
      %v189 = vld [vmem:[%s170 + $0x3c] sm:$0xff]
      %v190 = vld [vmem:[%s170 + $0x44] sm:$0xff]
      %v191 = vld [vmem:[%s170 + $0x4c] sm:$0xf]
      %v192 = vld [vmem:[%s170 + $0x50] sm:$0xff]
      %v193 = vld [vmem:[%s170 + $0x58] sm:$0xff]
      %v194 = vld [vmem:[%s170 + $0x60] sm:$0xf]
      %v195 = vld [vmem:[%s170 + $0x64] sm:$0xff]
      %v196 = vld [vmem:[%s170 + $0x6c] sm:$0xff]
      %v197 = vld [vmem:[%s170 + $0x74] sm:$0xf]
      %v198 = vld [vmem:[%s170 + $0x78] sm:$0xff]
      %v199 = vld [vmem:[%s170 + $0x80] sm:$0xff]
      %v200 = vld [vmem:[%s170 + $0x88] sm:$0xf]
      %v201 = vld [vmem:[%s170 + $0x8c] sm:$0xff]
      %v202 = vld [vmem:[%s170 + $0x94] sm:$0xff]
      %v203 = vld [vmem:[%s170 + $0x9c] sm:$0xf]
      %v204 = vld [vmem:[%s1] sm:$0xff]
      %v205 = vld [vmem:[%s1 + $0x8] sm:$0xff]
      %v206 = vld [vmem:[%s1 + $0x10] sm:$0xf]
      %v207 = vld [vmem:[%s1 + $0x14] sm:$0xff]
      %v208 = vld [vmem:[%s1 + $0x1c] sm:$0xff]
      %v209 = vld [vmem:[%s1 + $0x24] sm:$0xf]
      %v210 = vld [vmem:[%s1 + $0x28] sm:$0xff]
      %v211 = vld [vmem:[%s1 + $0x30] sm:$0xff]
      %v212 = vld [vmem:[%s1 + $0x38] sm:$0xf]
      %v213 = vld [vmem:[%s1 + $0x3c] sm:$0xff]
      %v214 = vld [vmem:[%s1 + $0x44] sm:$0xff]
      %v215 = vld [vmem:[%s1 + $0x4c] sm:$0xf]
      %v216 = vld [vmem:[%s1 + $0x50] sm:$0xff]
      %v217 = vld [vmem:[%s1 + $0x58] sm:$0xff]
      %v218 = vld [vmem:[%s1 + $0x60] sm:$0xf]
      %v219 = vld [vmem:[%s1 + $0x64] sm:$0xff]
      %v220 = vld [vmem:[%s1 + $0x6c] sm:$0xff]
      %v221 = vld [vmem:[%s1 + $0x74] sm:$0xf]
      %v222 = vld [vmem:[%s1 + $0x78] sm:$0xff]
      %v223 = vld [vmem:[%s1 + $0x80] sm:$0xff]
      %v224 = vld [vmem:[%s1 + $0x88] sm:$0xf]
      %v225 = vld [vmem:[%s1 + $0x8c] sm:$0xff]
      %v226 = vld [vmem:[%s1 + $0x94] sm:$0xff]
      %v227 = vld [vmem:[%s1 + $0x9c] sm:$0xf]
      %v228 = vld [vmem:[%s1 + $0xa0] sm:$0xff]
      %v229 = vld [vmem:[%s1 + $0xa8] sm:$0xff]
      %v230 = vld [vmem:[%s1 + $0xb0] sm:$0xf]
      %v231 = vld [vmem:[%s1 + $0xb4] sm:$0xff]
      %v232 = vld [vmem:[%s1 + $0xbc] sm:$0xff]
      %v233 = vld [vmem:[%s1 + $0xc4] sm:$0xf]
      %v234 = vld [vmem:[%s1 + $0xc8] sm:$0xff]
      %v235 = vld [vmem:[%s1 + $0xd0] sm:$0xff]
      %v236 = vld [vmem:[%s1 + $0xd8] sm:$0xf]
      %v237 = vld [vmem:[%s1 + $0xdc] sm:$0xff]
      %v238 = vld [vmem:[%s1 + $0xe4] sm:$0xff]
      %v239 = vld [vmem:[%s1 + $0xec] sm:$0xf]
      %v240 = vld [vmem:[%s1 + $0xf0] sm:$0xff]
      %v241 = vld [vmem:[%s1 + $0xf8] sm:$0xff]
      %v242 = vld [vmem:[%s1 + $0x100] sm:$0xf]
      %v243 = vld [vmem:[%s1 + $0x104] sm:$0xff]
      %v244 = vld [vmem:[%s1 + $0x10c] sm:$0xff]
      %v245 = vld [vmem:[%s1 + $0x114] sm:$0xf]
      %v246 = vld [vmem:[%s1 + $0x118] sm:$0xff]
      %v247 = vld [vmem:[%s1 + $0x120] sm:$0xff]
      %v248 = vld [vmem:[%s1 + $0x128] sm:$0xf]
      %v249 = vld [vmem:[%s1 + $0x12c] sm:$0xff]
      %v250 = vld [vmem:[%s1 + $0x134] sm:$0xff]
      %v251 = vld [vmem:[%s1 + $0x13c] sm:$0xf]
      %v252 = vld [vmem:[%s1 + $0x140] sm:$0xff]
      %v253 = vld [vmem:[%s1 + $0x148] sm:$0xff]
      %v254 = vld [vmem:[%s1 + $0x150] sm:$0xf]
      %v255 = vld [vmem:[%s1 + $0x154] sm:$0xff]
      %v256 = vld [vmem:[%s1 + $0x15c] sm:$0xff]
      %v257 = vld [vmem:[%s1 + $0x164] sm:$0xf]
      %v258 = vld [vmem:[%s1 + $0x168] sm:$0xff]
      %v259 = vld [vmem:[%s1 + $0x170] sm:$0xff]
      %v260 = vld [vmem:[%s1 + $0x178] sm:$0xf]
      %v261 = vld [vmem:[%s1 + $0x17c] sm:$0xff]
      %v262 = vld [vmem:[%s1 + $0x184] sm:$0xff]
      %v263 = vld [vmem:[%s1 + $0x18c] sm:$0xf]
      %v264 = vld [vmem:[%s1 + $0x190] sm:$0xff]
      %v265 = vld [vmem:[%s1 + $0x198] sm:$0xff]
      %v266 = vld [vmem:[%s1 + $0x1a0] sm:$0xf]
      %v267 = vld [vmem:[%s1 + $0x1a4] sm:$0xff]
      %v268 = vld [vmem:[%s1 + $0x1ac] sm:$0xff]
      %v269 = vld [vmem:[%s1 + $0x1b4] sm:$0xf]
      %v270 = vld [vmem:[%s1 + $0x1b8] sm:$0xff]
      %v271 = vld [vmem:[%s1 + $0x1c0] sm:$0xff]
      %v272 = vld [vmem:[%s1 + $0x1c8] sm:$0xf]
      %v273 = vld [vmem:[%s1 + $0x1cc] sm:$0xff]
      %v274 = vld [vmem:[%s1 + $0x1d4] sm:$0xff]
      %v275 = vld [vmem:[%s1 + $0x1dc] sm:$0xf]
      %v276 = vld [vmem:[%s1 + $0x1e0] sm:$0xff]
      %v277 = vld [vmem:[%s1 + $0x1e8] sm:$0xff]
      %v278 = vld [vmem:[%s1 + $0x1f0] sm:$0xf]
      %v279 = vld [vmem:[%s1 + $0x1f4] sm:$0xff]
      %v280 = vld [vmem:[%s1 + $0x1fc] sm:$0xff]
      %v281 = vld [vmem:[%s1 + $0x204] sm:$0xf]
      %v282 = vld [vmem:[%s1 + $0x208] sm:$0xff]
      %v283 = vld [vmem:[%s1 + $0x210] sm:$0xff]
      %v284 = vld [vmem:[%s1 + $0x218] sm:$0xf]
      %v285 = vld [vmem:[%s1 + $0x21c] sm:$0xff]
      %v286 = vld [vmem:[%s1 + $0x224] sm:$0xff]
      %v287 = vld [vmem:[%s1 + $0x22c] sm:$0xf]
      %v288 = vld [vmem:[%s1 + $0x230] sm:$0xff]
      %v289 = vld [vmem:[%s1 + $0x238] sm:$0xff]
      %v290 = vld [vmem:[%s1 + $0x240] sm:$0xf]
      %v291 = vld [vmem:[%s1 + $0x244] sm:$0xff]
      %v292 = vld [vmem:[%s1 + $0x24c] sm:$0xff]
      %v293 = vld [vmem:[%s1 + $0x254] sm:$0xf]
      %v294 = vld [vmem:[%s1 + $0x258] sm:$0xff]
      %v295 = vld [vmem:[%s1 + $0x260] sm:$0xff]
      %v296 = vld [vmem:[%s1 + $0x268] sm:$0xf]
      %v297 = vld [vmem:[%s1 + $0x26c] sm:$0xff]
      %v298 = vld [vmem:[%s1 + $0x274] sm:$0xff]
      %v299 = vld [vmem:[%s1 + $0x27c] sm:$0xf]
      %v300 = vld [vmem:[%s1 + $0x280] sm:$0xff]
      %v301 = vld [vmem:[%s1 + $0x288] sm:$0xff]
      %v302 = vld [vmem:[%s1 + $0x290] sm:$0xf]
      %v303 = vld [vmem:[%s1 + $0x294] sm:$0xff]
      %v304 = vld [vmem:[%s1 + $0x29c] sm:$0xff]
      %v305 = vld [vmem:[%s1 + $0x2a4] sm:$0xf]
      %v306 = vld [vmem:[%s1 + $0x2a8] sm:$0xff]
      %v307 = vld [vmem:[%s1 + $0x2b0] sm:$0xff]
      %v308 = vld [vmem:[%s1 + $0x2b8] sm:$0xf]
      %v309 = vld [vmem:[%s1 + $0x2bc] sm:$0xff]
      %v310 = vld [vmem:[%s1 + $0x2c4] sm:$0xff]
      %v311 = vld [vmem:[%s1 + $0x2cc] sm:$0xf]
      %v312 = vld [vmem:[%s1 + $0x2d0] sm:$0xff]
      %v313 = vld [vmem:[%s1 + $0x2d8] sm:$0xff]
      %v314 = vld [vmem:[%s1 + $0x2e0] sm:$0xf]
      %v315 = vld [vmem:[%s1 + $0x2e4] sm:$0xff]
      %v316 = vld [vmem:[%s1 + $0x2ec] sm:$0xff]
      %v317 = vld [vmem:[%s1 + $0x2f4] sm:$0xf]
      %v318 = vld [vmem:[%s1 + $0x2f8] sm:$0xff]
      %v319 = vld [vmem:[%s1 + $0x300] sm:$0xff]
      %v320 = vld [vmem:[%s1 + $0x308] sm:$0xf]
      %v321 = vld [vmem:[%s1 + $0x30c] sm:$0xff]
      %v322 = vld [vmem:[%s1 + $0x314] sm:$0xff]
      %v323 = vld [vmem:[%s1 + $0x31c] sm:$0xf]
      %v324 = vld [vmem:[%s1 + $0x320] sm:$0xff]
      %v325 = vld [vmem:[%s1 + $0x328] sm:$0xff]
      %v326 = vld [vmem:[%s1 + $0x330] sm:$0xf]
      %v327 = vld [vmem:[%s1 + $0x334] sm:$0xff]
      %v328 = vld [vmem:[%s1 + $0x33c] sm:$0xff]
      %v329 = vld [vmem:[%s1 + $0x344] sm:$0xf]
      %v330 = vld [vmem:[%s1 + $0x348] sm:$0xff]
      %v331 = vld [vmem:[%s1 + $0x350] sm:$0xff]
      %v332 = vld [vmem:[%s1 + $0x358] sm:$0xf]
      %v333 = vld [vmem:[%s1 + $0x35c] sm:$0xff]
      %v334 = vld [vmem:[%s1 + $0x364] sm:$0xff]
      %v335 = vld [vmem:[%s1 + $0x36c] sm:$0xf]
      %v336 = vld [vmem:[%s1 + $0x370] sm:$0xff]
      %v337 = vld [vmem:[%s1 + $0x378] sm:$0xff]
      %v338 = vld [vmem:[%s1 + $0x380] sm:$0xf]
      %v339 = vld [vmem:[%s1 + $0x384] sm:$0xff]
      %v340 = vld [vmem:[%s1 + $0x38c] sm:$0xff]
      %v341 = vld [vmem:[%s1 + $0x394] sm:$0xf]
      %v342 = vld [vmem:[%s1 + $0x398] sm:$0xff]
      %v343 = vld [vmem:[%s1 + $0x3a0] sm:$0xff]
      %v344 = vld [vmem:[%s1 + $0x3a8] sm:$0xf]
      %v345 = vld [vmem:[%s1 + $0x3ac] sm:$0xff]
      %v346 = vld [vmem:[%s1 + $0x3b4] sm:$0xff]
      %v347 = vld [vmem:[%s1 + $0x3bc] sm:$0xf]
      %v348 = vld [vmem:[%s1 + $0x3c0] sm:$0xff]
      %v349 = vld [vmem:[%s1 + $0x3c8] sm:$0xff]
      %v350 = vld [vmem:[%s1 + $0x3d0] sm:$0xf]
      %v351 = vld [vmem:[%s1 + $0x3d4] sm:$0xff]
      %v352 = vld [vmem:[%s1 + $0x3dc] sm:$0xff]
      %v353 = vld [vmem:[%s1 + $0x3e4] sm:$0xf]
      %v354 = vld [vmem:[%s1 + $0x3e8] sm:$0xff]
      %v355 = vld [vmem:[%s1 + $0x3f0] sm:$0xff]
      %v356 = vld [vmem:[%s1 + $0x3f8] sm:$0xf]
      %v357 = vld [vmem:[%s1 + $0x3fc] sm:$0xff]
      %v358 = vld [vmem:[%s1 + $0x404] sm:$0xff]
      %v359 = vld [vmem:[%s1 + $0x40c] sm:$0xf]
      %v360 = vld [vmem:[%s1 + $0x410] sm:$0xff]
      %v361 = vld [vmem:[%s1 + $0x418] sm:$0xff]
      %v362 = vld [vmem:[%s1 + $0x420] sm:$0xf]
      %v363 = vld [vmem:[%s1 + $0x424] sm:$0xff]
      %v364 = vld [vmem:[%s1 + $0x42c] sm:$0xff]
      %v365 = vld [vmem:[%s1 + $0x434] sm:$0xf]
      %v366 = vld [vmem:[%s1 + $0x438] sm:$0xff]
      %v367 = vld [vmem:[%s1 + $0x440] sm:$0xff]
      %v368 = vld [vmem:[%s1 + $0x448] sm:$0xf]
      %v369 = vld [vmem:[%s1 + $0x44c] sm:$0xff]
      %v370 = vld [vmem:[%s1 + $0x454] sm:$0xff]
      %v371 = vld [vmem:[%s1 + $0x45c] sm:$0xf]
      %v372 = vld [vmem:[%s1 + $0x460] sm:$0xff]
      %v373 = vld [vmem:[%s1 + $0x468] sm:$0xff]
      %v374 = vld [vmem:[%s1 + $0x470] sm:$0xf]
      %v375 = vld [vmem:[%s1 + $0x474] sm:$0xff]
      %v376 = vld [vmem:[%s1 + $0x47c] sm:$0xff]
      %v377 = vld [vmem:[%s1 + $0x484] sm:$0xf]
      %v378 = vld [vmem:[%s1 + $0x488] sm:$0xff]
      %v379 = vld [vmem:[%s1 + $0x490] sm:$0xff]
      %v380 = vld [vmem:[%s1 + $0x498] sm:$0xf]
      %v381 = vld [vmem:[%s1 + $0x49c] sm:$0xff]
      %v382 = vld [vmem:[%s1 + $0x4a4] sm:$0xff]
      %v383 = vld [vmem:[%s1 + $0x4ac] sm:$0xf]
      %v384 = vld [vmem:[%s1 + $0x4b0] sm:$0xff]
      %v385 = vld [vmem:[%s1 + $0x4b8] sm:$0xff]
      %v386 = vld [vmem:[%s1 + $0x4c0] sm:$0xf]
      %v387 = vld [vmem:[%s1 + $0x4c4] sm:$0xff]
      %v388 = vld [vmem:[%s1 + $0x4cc] sm:$0xff]
      %v389 = vld [vmem:[%s1 + $0x4d4] sm:$0xf]
      %v390 = vld [vmem:[%s1 + $0x4d8] sm:$0xff]
      %v391 = vld [vmem:[%s1 + $0x4e0] sm:$0xff]
      %v392 = vld [vmem:[%s1 + $0x4e8] sm:$0xf]
      %v393 = vld [vmem:[%s1 + $0x4ec] sm:$0xff]
      %v394 = vld [vmem:[%s1 + $0x4f4] sm:$0xff]
      %v395 = vld [vmem:[%s1 + $0x4fc] sm:$0xf]
      %v396 = vld [vmem:[%s1 + $0x500] sm:$0xff]
      %v397 = vld [vmem:[%s1 + $0x508] sm:$0xff]
      %v398 = vld [vmem:[%s1 + $0x510] sm:$0xf]
      %v399 = vld [vmem:[%s1 + $0x514] sm:$0xff]
      %v400 = vld [vmem:[%s1 + $0x51c] sm:$0xff]
      %v401 = vld [vmem:[%s1 + $0x524] sm:$0xf]
      %v402 = vld [vmem:[%s1 + $0x528] sm:$0xff]
      %v403 = vld [vmem:[%s1 + $0x530] sm:$0xff]
      %v404 = vld [vmem:[%s1 + $0x538] sm:$0xf]
      %v405 = vld [vmem:[%s1 + $0x53c] sm:$0xff]
      %v406 = vld [vmem:[%s1 + $0x544] sm:$0xff]
      %v407 = vld [vmem:[%s1 + $0x54c] sm:$0xf]
      %v408 = vld [vmem:[%s1 + $0x550] sm:$0xff]
      %v409 = vld [vmem:[%s1 + $0x558] sm:$0xff]
      %v410 = vld [vmem:[%s1 + $0x560] sm:$0xf]
      %v411 = vld [vmem:[%s1 + $0x564] sm:$0xff]
      %v412 = vld [vmem:[%s1 + $0x56c] sm:$0xff]
      %v413 = vld [vmem:[%s1 + $0x574] sm:$0xf]
      %v414 = vld [vmem:[%s1 + $0x578] sm:$0xff]
      %v415 = vld [vmem:[%s1 + $0x580] sm:$0xff]
      %v416 = vld [vmem:[%s1 + $0x588] sm:$0xf]
      %v417 = vld [vmem:[%s1 + $0x58c] sm:$0xff]
      %v418 = vld [vmem:[%s1 + $0x594] sm:$0xff]
      %v419 = vld [vmem:[%s1 + $0x59c] sm:$0xf]
      %v420 = vld [vmem:[%s1 + $0x5a0] sm:$0xff]
      %v421 = vld [vmem:[%s1 + $0x5a8] sm:$0xff]
      %v422 = vld [vmem:[%s1 + $0x5b0] sm:$0xf]
      %v423 = vld [vmem:[%s1 + $0x5b4] sm:$0xff]
      %v424 = vld [vmem:[%s1 + $0x5bc] sm:$0xff]
      %v425 = vld [vmem:[%s1 + $0x5c4] sm:$0xf]
      %v426 = vld [vmem:[%s1 + $0x5c8] sm:$0xff]
      %v427 = vld [vmem:[%s1 + $0x5d0] sm:$0xff]
      %v428 = vld [vmem:[%s1 + $0x5d8] sm:$0xf]
      %v429 = vld [vmem:[%s1 + $0x5dc] sm:$0xff]
      %v430 = vld [vmem:[%s1 + $0x5e4] sm:$0xff]
      %v431 = vld [vmem:[%s1 + $0x5ec] sm:$0xf]
      %v432 = vld [vmem:[%s1 + $0x5f0] sm:$0xff]
      %v433 = vld [vmem:[%s1 + $0x5f8] sm:$0xff]
      %v434 = vld [vmem:[%s1 + $0x600] sm:$0xf]
      %v435 = vld [vmem:[%s1 + $0x604] sm:$0xff]
      %v436 = vld [vmem:[%s1 + $0x60c] sm:$0xff]
      %v437 = vld [vmem:[%s1 + $0x614] sm:$0xf]
      %v438 = vld [vmem:[%s1 + $0x618] sm:$0xff]
      %v439 = vld [vmem:[%s1 + $0x620] sm:$0xff]
      %v440 = vld [vmem:[%s1 + $0x628] sm:$0xf]
      %v441 = vld [vmem:[%s1 + $0x62c] sm:$0xff]
      %v442 = vld [vmem:[%s1 + $0x634] sm:$0xff]
      %v443 = vld [vmem:[%s1 + $0x63c] sm:$0xf]
      %v444 = vld [vmem:[%s2] sm:$0x1f]
      %v446 = vlaneseq
      %v447 = vshrl.u32 %v446, 7
      %v448 = vsub.s32 0, %v447
      %v449 = vrot.slane %v444, %v448
      %v450 = vlaneseq
      %v451 = vshrl.u32 %v450, 7
      %v452 = vsub.s32 1, %v451
      %v453 = vrot.slane %v444, %v452
      %v454 = vlaneseq
      %v455 = vshrl.u32 %v454, 7
      %v456 = vsub.s32 2, %v455
      %v457 = vrot.slane %v444, %v456
      %v458 = vlaneseq
      %v459 = vshrl.u32 %v458, 7
      %v460 = vsub.s32 3, %v459
      %v461 = vrot.slane %v444, %v460
      %v462 = vlaneseq
      %v463 = vshrl.u32 %v462, 7
      %v464 = vsub.s32 4, %v463
      %v465 = vrot.slane %v444, %v464
      %v495 = vunpack.c.l.b16 %v180
      %v496 = vunpack.c.h.b16 %v180
      %v497 = vunpack.c.l.b16 %v181
      %v498 = vunpack.c.h.b16 %v181
      %v499 = vunpack.c.l.b16 %v182
      %v500 = vunpack.c.l.b16 %v183
      %v501 = vunpack.c.h.b16 %v183
      %v502 = vunpack.c.l.b16 %v184
      %v503 = vunpack.c.h.b16 %v184
      %v504 = vunpack.c.l.b16 %v185
      %v505 = vunpack.c.l.b16 %v186
      %v506 = vunpack.c.h.b16 %v186
      %v507 = vunpack.c.l.b16 %v187
      %v508 = vunpack.c.h.b16 %v187
      %v509 = vunpack.c.l.b16 %v188
      %v510 = vunpack.c.l.b16 %v189
      %v511 = vunpack.c.h.b16 %v189
      %v512 = vunpack.c.l.b16 %v190
      %v513 = vunpack.c.h.b16 %v190
      %v514 = vunpack.c.l.b16 %v191
      %v515 = vunpack.c.l.b16 %v192
      %v516 = vunpack.c.h.b16 %v192
      %v517 = vunpack.c.l.b16 %v193
      %v518 = vunpack.c.h.b16 %v193
      %v519 = vunpack.c.l.b16 %v194
      %v520 = vunpack.c.l.b16 %v195
      %v521 = vunpack.c.h.b16 %v195
      %v522 = vunpack.c.l.b16 %v196
      %v523 = vunpack.c.h.b16 %v196
      %v524 = vunpack.c.l.b16 %v197
      %v525 = vunpack.c.l.b16 %v198
      %v526 = vunpack.c.h.b16 %v198
      %v527 = vunpack.c.l.b16 %v199
      %v528 = vunpack.c.h.b16 %v199
      %v529 = vunpack.c.l.b16 %v200
      %v530 = vunpack.c.l.b16 %v201
      %v531 = vunpack.c.h.b16 %v201
      %v532 = vunpack.c.l.b16 %v202
      %v533 = vunpack.c.h.b16 %v202
      %v534 = vunpack.c.l.b16 %v203
      %v535 = vpack.c.b16 %v500, %v495
      %v536 = vpack.c.b16 %v501, %v496
      %v537 = vpack.c.b16 %v502, %v497
      %v538 = vpack.c.b16 %v503, %v498
      %v539 = vpack.c.b16 %v504, %v499
      %v540 = vpack.c.b16 %v510, %v505
      %v541 = vpack.c.b16 %v511, %v506
      %v542 = vpack.c.b16 %v512, %v507
      %v543 = vpack.c.b16 %v513, %v508
      %v544 = vpack.c.b16 %v514, %v509
      %v545 = vpack.c.b16 %v520, %v515
      %v546 = vpack.c.b16 %v521, %v516
      %v547 = vpack.c.b16 %v522, %v517
      %v548 = vpack.c.b16 %v523, %v518
      %v549 = vpack.c.b16 %v524, %v519
      %v550 = vpack.c.b16 %v530, %v525
      %v551 = vpack.c.b16 %v531, %v526
      %v552 = vpack.c.b16 %v532, %v527
      %v553 = vpack.c.b16 %v533, %v528
      %v554 = vpack.c.b16 %v534, %v529
      %v815 = vunpack.c.l.b16 %v204
      %v816 = vunpack.c.h.b16 %v204
      %v817 = vunpack.c.l.b16 %v205
      %v818 = vunpack.c.h.b16 %v205
      %v819 = vunpack.c.l.b16 %v206
      %v820 = vunpack.c.l.b16 %v207
      %v821 = vunpack.c.h.b16 %v207
      %v822 = vunpack.c.l.b16 %v208
      %v823 = vunpack.c.h.b16 %v208
      %v824 = vunpack.c.l.b16 %v209
      %v825 = vunpack.c.l.b16 %v210
      %v826 = vunpack.c.h.b16 %v210
      %v827 = vunpack.c.l.b16 %v211
      %v828 = vunpack.c.h.b16 %v211
      %v829 = vunpack.c.l.b16 %v212
      %v830 = vunpack.c.l.b16 %v213
      %v831 = vunpack.c.h.b16 %v213
      %v832 = vunpack.c.l.b16 %v214
      %v833 = vunpack.c.h.b16 %v214
      %v834 = vunpack.c.l.b16 %v215
      %v835 = vunpack.c.l.b16 %v216
      %v836 = vunpack.c.h.b16 %v216
      %v837 = vunpack.c.l.b16 %v217
      %v838 = vunpack.c.h.b16 %v217
      %v839 = vunpack.c.l.b16 %v218
      %v840 = vunpack.c.l.b16 %v219
      %v841 = vunpack.c.h.b16 %v219
      %v842 = vunpack.c.l.b16 %v220
      %v843 = vunpack.c.h.b16 %v220
      %v844 = vunpack.c.l.b16 %v221
      %v845 = vunpack.c.l.b16 %v222
      %v846 = vunpack.c.h.b16 %v222
      %v847 = vunpack.c.l.b16 %v223
      %v848 = vunpack.c.h.b16 %v223
      %v849 = vunpack.c.l.b16 %v224
      %v850 = vunpack.c.l.b16 %v225
      %v851 = vunpack.c.h.b16 %v225
      %v852 = vunpack.c.l.b16 %v226
      %v853 = vunpack.c.h.b16 %v226
      %v854 = vunpack.c.l.b16 %v227
      %v855 = vunpack.c.l.b16 %v228
      %v856 = vunpack.c.h.b16 %v228
      %v857 = vunpack.c.l.b16 %v229
      %v858 = vunpack.c.h.b16 %v229
      %v859 = vunpack.c.l.b16 %v230
      %v860 = vunpack.c.l.b16 %v231
      %v861 = vunpack.c.h.b16 %v231
      %v862 = vunpack.c.l.b16 %v232
      %v863 = vunpack.c.h.b16 %v232
      %v864 = vunpack.c.l.b16 %v233
      %v865 = vunpack.c.l.b16 %v234
      %v866 = vunpack.c.h.b16 %v234
      %v867 = vunpack.c.l.b16 %v235
      %v868 = vunpack.c.h.b16 %v235
      %v869 = vunpack.c.l.b16 %v236
      %v870 = vunpack.c.l.b16 %v237
      %v871 = vunpack.c.h.b16 %v237
      %v872 = vunpack.c.l.b16 %v238
      %v873 = vunpack.c.h.b16 %v238
      %v874 = vunpack.c.l.b16 %v239
      %v875 = vunpack.c.l.b16 %v240
      %v876 = vunpack.c.h.b16 %v240
      %v877 = vunpack.c.l.b16 %v241
      %v878 = vunpack.c.h.b16 %v241
      %v879 = vunpack.c.l.b16 %v242
      %v880 = vunpack.c.l.b16 %v243
      %v881 = vunpack.c.h.b16 %v243
      %v882 = vunpack.c.l.b16 %v244
      %v883 = vunpack.c.h.b16 %v244
      %v884 = vunpack.c.l.b16 %v245
      %v885 = vunpack.c.l.b16 %v246
      %v886 = vunpack.c.h.b16 %v246
      %v887 = vunpack.c.l.b16 %v247
      %v888 = vunpack.c.h.b16 %v247
      %v889 = vunpack.c.l.b16 %v248
      %v890 = vunpack.c.l.b16 %v249
      %v891 = vunpack.c.h.b16 %v249
      %v892 = vunpack.c.l.b16 %v250
      %v893 = vunpack.c.h.b16 %v250
      %v894 = vunpack.c.l.b16 %v251
      %v895 = vunpack.c.l.b16 %v252
      %v896 = vunpack.c.h.b16 %v252
      %v897 = vunpack.c.l.b16 %v253
      %v898 = vunpack.c.h.b16 %v253
      %v899 = vunpack.c.l.b16 %v254
      %v900 = vunpack.c.l.b16 %v255
      %v901 = vunpack.c.h.b16 %v255
      %v902 = vunpack.c.l.b16 %v256
      %v903 = vunpack.c.h.b16 %v256
      %v904 = vunpack.c.l.b16 %v257
      %v905 = vunpack.c.l.b16 %v258
      %v906 = vunpack.c.h.b16 %v258
      %v907 = vunpack.c.l.b16 %v259
      %v908 = vunpack.c.h.b16 %v259
      %v909 = vunpack.c.l.b16 %v260
      %v910 = vunpack.c.l.b16 %v261
      %v911 = vunpack.c.h.b16 %v261
      %v912 = vunpack.c.l.b16 %v262
      %v913 = vunpack.c.h.b16 %v262
      %v914 = vunpack.c.l.b16 %v263
      %v915 = vunpack.c.l.b16 %v264
      %v916 = vunpack.c.h.b16 %v264
      %v917 = vunpack.c.l.b16 %v265
      %v918 = vunpack.c.h.b16 %v265
      %v919 = vunpack.c.l.b16 %v266
      %v920 = vunpack.c.l.b16 %v267
      %v921 = vunpack.c.h.b16 %v267
      %v922 = vunpack.c.l.b16 %v268
      %v923 = vunpack.c.h.b16 %v268
      %v924 = vunpack.c.l.b16 %v269
      %v925 = vunpack.c.l.b16 %v270
      %v926 = vunpack.c.h.b16 %v270
      %v927 = vunpack.c.l.b16 %v271
      %v928 = vunpack.c.h.b16 %v271
      %v929 = vunpack.c.l.b16 %v272
      %v930 = vunpack.c.l.b16 %v273
      %v931 = vunpack.c.h.b16 %v273
      %v932 = vunpack.c.l.b16 %v274
      %v933 = vunpack.c.h.b16 %v274
      %v934 = vunpack.c.l.b16 %v275
      %v935 = vunpack.c.l.b16 %v276
      %v936 = vunpack.c.h.b16 %v276
      %v937 = vunpack.c.l.b16 %v277
      %v938 = vunpack.c.h.b16 %v277
      %v939 = vunpack.c.l.b16 %v278
      %v940 = vunpack.c.l.b16 %v279
      %v941 = vunpack.c.h.b16 %v279
      %v942 = vunpack.c.l.b16 %v280
      %v943 = vunpack.c.h.b16 %v280
      %v944 = vunpack.c.l.b16 %v281
      %v945 = vunpack.c.l.b16 %v282
      %v946 = vunpack.c.h.b16 %v282
      %v947 = vunpack.c.l.b16 %v283
      %v948 = vunpack.c.h.b16 %v283
      %v949 = vunpack.c.l.b16 %v284
      %v950 = vunpack.c.l.b16 %v285
      %v951 = vunpack.c.h.b16 %v285
      %v952 = vunpack.c.l.b16 %v286
      %v953 = vunpack.c.h.b16 %v286
      %v954 = vunpack.c.l.b16 %v287
      %v955 = vunpack.c.l.b16 %v288
      %v956 = vunpack.c.h.b16 %v288
      %v957 = vunpack.c.l.b16 %v289
      %v958 = vunpack.c.h.b16 %v289
      %v959 = vunpack.c.l.b16 %v290
      %v960 = vunpack.c.l.b16 %v291
      %v961 = vunpack.c.h.b16 %v291
      %v962 = vunpack.c.l.b16 %v292
      %v963 = vunpack.c.h.b16 %v292
      %v964 = vunpack.c.l.b16 %v293
      %v965 = vunpack.c.l.b16 %v294
      %v966 = vunpack.c.h.b16 %v294
      %v967 = vunpack.c.l.b16 %v295
      %v968 = vunpack.c.h.b16 %v295
      %v969 = vunpack.c.l.b16 %v296
      %v970 = vunpack.c.l.b16 %v297
      %v971 = vunpack.c.h.b16 %v297
      %v972 = vunpack.c.l.b16 %v298
      %v973 = vunpack.c.h.b16 %v298
      %v974 = vunpack.c.l.b16 %v299
      %v975 = vunpack.c.l.b16 %v300
      %v976 = vunpack.c.h.b16 %v300
      %v977 = vunpack.c.l.b16 %v301
      %v978 = vunpack.c.h.b16 %v301
      %v979 = vunpack.c.l.b16 %v302
      %v980 = vunpack.c.l.b16 %v303
      %v981 = vunpack.c.h.b16 %v303
      %v982 = vunpack.c.l.b16 %v304
      %v983 = vunpack.c.h.b16 %v304
      %v984 = vunpack.c.l.b16 %v305
      %v985 = vunpack.c.l.b16 %v306
      %v986 = vunpack.c.h.b16 %v306
      %v987 = vunpack.c.l.b16 %v307
      %v988 = vunpack.c.h.b16 %v307
      %v989 = vunpack.c.l.b16 %v308
      %v990 = vunpack.c.l.b16 %v309
      %v991 = vunpack.c.h.b16 %v309
      %v992 = vunpack.c.l.b16 %v310
      %v993 = vunpack.c.h.b16 %v310
      %v994 = vunpack.c.l.b16 %v311
      %v995 = vunpack.c.l.b16 %v312
      %v996 = vunpack.c.h.b16 %v312
      %v997 = vunpack.c.l.b16 %v313
      %v998 = vunpack.c.h.b16 %v313
      %v999 = vunpack.c.l.b16 %v314
      %v1000 = vunpack.c.l.b16 %v315
      %v1001 = vunpack.c.h.b16 %v315
      %v1002 = vunpack.c.l.b16 %v316
      %v1003 = vunpack.c.h.b16 %v316
      %v1004 = vunpack.c.l.b16 %v317
      %v1005 = vunpack.c.l.b16 %v318
      %v1006 = vunpack.c.h.b16 %v318
      %v1007 = vunpack.c.l.b16 %v319
      %v1008 = vunpack.c.h.b16 %v319
      %v1009 = vunpack.c.l.b16 %v320
      %v1010 = vunpack.c.l.b16 %v321
      %v1011 = vunpack.c.h.b16 %v321
      %v1012 = vunpack.c.l.b16 %v322
      %v1013 = vunpack.c.h.b16 %v322
      %v1014 = vunpack.c.l.b16 %v323
      %v1015 = vunpack.c.l.b16 %v324
      %v1016 = vunpack.c.h.b16 %v324
      %v1017 = vunpack.c.l.b16 %v325
      %v1018 = vunpack.c.h.b16 %v325
      %v1019 = vunpack.c.l.b16 %v326
      %v1020 = vunpack.c.l.b16 %v327
      %v1021 = vunpack.c.h.b16 %v327
      %v1022 = vunpack.c.l.b16 %v328
      %v1023 = vunpack.c.h.b16 %v328
      %v1024 = vunpack.c.l.b16 %v329
      %v1025 = vunpack.c.l.b16 %v330
      %v1026 = vunpack.c.h.b16 %v330
      %v1027 = vunpack.c.l.b16 %v331
      %v1028 = vunpack.c.h.b16 %v331
      %v1029 = vunpack.c.l.b16 %v332
      %v1030 = vunpack.c.l.b16 %v333
      %v1031 = vunpack.c.h.b16 %v333
      %v1032 = vunpack.c.l.b16 %v334
      %v1033 = vunpack.c.h.b16 %v334
      %v1034 = vunpack.c.l.b16 %v335
      %v1035 = vunpack.c.l.b16 %v336
      %v1036 = vunpack.c.h.b16 %v336
      %v1037 = vunpack.c.l.b16 %v337
      %v1038 = vunpack.c.h.b16 %v337
      %v1039 = vunpack.c.l.b16 %v338
      %v1040 = vunpack.c.l.b16 %v339
      %v1041 = vunpack.c.h.b16 %v339
      %v1042 = vunpack.c.l.b16 %v340
      %v1043 = vunpack.c.h.b16 %v340
      %v1044 = vunpack.c.l.b16 %v341
      %v1045 = vunpack.c.l.b16 %v342
      %v1046 = vunpack.c.h.b16 %v342
      %v1047 = vunpack.c.l.b16 %v343
      %v1048 = vunpack.c.h.b16 %v343
      %v1049 = vunpack.c.l.b16 %v344
      %v1050 = vunpack.c.l.b16 %v345
      %v1051 = vunpack.c.h.b16 %v345
      %v1052 = vunpack.c.l.b16 %v346
      %v1053 = vunpack.c.h.b16 %v346
      %v1054 = vunpack.c.l.b16 %v347
      %v1055 = vunpack.c.l.b16 %v348
      %v1056 = vunpack.c.h.b16 %v348
      %v1057 = vunpack.c.l.b16 %v349
      %v1058 = vunpack.c.h.b16 %v349
      %v1059 = vunpack.c.l.b16 %v350
      %v1060 = vunpack.c.l.b16 %v351
      %v1061 = vunpack.c.h.b16 %v351
      %v1062 = vunpack.c.l.b16 %v352
      %v1063 = vunpack.c.h.b16 %v352
      %v1064 = vunpack.c.l.b16 %v353
      %v1065 = vunpack.c.l.b16 %v354
      %v1066 = vunpack.c.h.b16 %v354
      %v1067 = vunpack.c.l.b16 %v355
      %v1068 = vunpack.c.h.b16 %v355
      %v1069 = vunpack.c.l.b16 %v356
      %v1070 = vunpack.c.l.b16 %v357
      %v1071 = vunpack.c.h.b16 %v357
      %v1072 = vunpack.c.l.b16 %v358
      %v1073 = vunpack.c.h.b16 %v358
      %v1074 = vunpack.c.l.b16 %v359
      %v1075 = vunpack.c.l.b16 %v360
      %v1076 = vunpack.c.h.b16 %v360
      %v1077 = vunpack.c.l.b16 %v361
      %v1078 = vunpack.c.h.b16 %v361
      %v1079 = vunpack.c.l.b16 %v362
      %v1080 = vunpack.c.l.b16 %v363
      %v1081 = vunpack.c.h.b16 %v363
      %v1082 = vunpack.c.l.b16 %v364
      %v1083 = vunpack.c.h.b16 %v364
      %v1084 = vunpack.c.l.b16 %v365
      %v1085 = vunpack.c.l.b16 %v366
      %v1086 = vunpack.c.h.b16 %v366
      %v1087 = vunpack.c.l.b16 %v367
      %v1088 = vunpack.c.h.b16 %v367
      %v1089 = vunpack.c.l.b16 %v368
      %v1090 = vunpack.c.l.b16 %v369
      %v1091 = vunpack.c.h.b16 %v369
      %v1092 = vunpack.c.l.b16 %v370
      %v1093 = vunpack.c.h.b16 %v370
      %v1094 = vunpack.c.l.b16 %v371
      %v1095 = vunpack.c.l.b16 %v372
      %v1096 = vunpack.c.h.b16 %v372
      %v1097 = vunpack.c.l.b16 %v373
      %v1098 = vunpack.c.h.b16 %v373
      %v1099 = vunpack.c.l.b16 %v374
      %v1100 = vunpack.c.l.b16 %v375
      %v1101 = vunpack.c.h.b16 %v375
      %v1102 = vunpack.c.l.b16 %v376
      %v1103 = vunpack.c.h.b16 %v376
      %v1104 = vunpack.c.l.b16 %v377
      %v1105 = vunpack.c.l.b16 %v378
      %v1106 = vunpack.c.h.b16 %v378
      %v1107 = vunpack.c.l.b16 %v379
      %v1108 = vunpack.c.h.b16 %v379
      %v1109 = vunpack.c.l.b16 %v380
      %v1110 = vunpack.c.l.b16 %v381
      %v1111 = vunpack.c.h.b16 %v381
      %v1112 = vunpack.c.l.b16 %v382
      %v1113 = vunpack.c.h.b16 %v382
      %v1114 = vunpack.c.l.b16 %v383
      %v1115 = vunpack.c.l.b16 %v384
      %v1116 = vunpack.c.h.b16 %v384
      %v1117 = vunpack.c.l.b16 %v385
      %v1118 = vunpack.c.h.b16 %v385
      %v1119 = vunpack.c.l.b16 %v386
      %v1120 = vunpack.c.l.b16 %v387
      %v1121 = vunpack.c.h.b16 %v387
      %v1122 = vunpack.c.l.b16 %v388
      %v1123 = vunpack.c.h.b16 %v388
      %v1124 = vunpack.c.l.b16 %v389
      %v1125 = vunpack.c.l.b16 %v390
      %v1126 = vunpack.c.h.b16 %v390
      %v1127 = vunpack.c.l.b16 %v391
      %v1128 = vunpack.c.h.b16 %v391
      %v1129 = vunpack.c.l.b16 %v392
      %v1130 = vunpack.c.l.b16 %v393
      %v1131 = vunpack.c.h.b16 %v393
      %v1132 = vunpack.c.l.b16 %v394
      %v1133 = vunpack.c.h.b16 %v394
      %v1134 = vunpack.c.l.b16 %v395
      %v1135 = vunpack.c.l.b16 %v396
      %v1136 = vunpack.c.h.b16 %v396
      %v1137 = vunpack.c.l.b16 %v397
      %v1138 = vunpack.c.h.b16 %v397
      %v1139 = vunpack.c.l.b16 %v398
      %v1140 = vunpack.c.l.b16 %v399
      %v1141 = vunpack.c.h.b16 %v399
      %v1142 = vunpack.c.l.b16 %v400
      %v1143 = vunpack.c.h.b16 %v400
      %v1144 = vunpack.c.l.b16 %v401
      %v1145 = vunpack.c.l.b16 %v402
      %v1146 = vunpack.c.h.b16 %v402
      %v1147 = vunpack.c.l.b16 %v403
      %v1148 = vunpack.c.h.b16 %v403
      %v1149 = vunpack.c.l.b16 %v404
      %v1150 = vunpack.c.l.b16 %v405
      %v1151 = vunpack.c.h.b16 %v405
      %v1152 = vunpack.c.l.b16 %v406
      %v1153 = vunpack.c.h.b16 %v406
      %v1154 = vunpack.c.l.b16 %v407
      %v1155 = vunpack.c.l.b16 %v408
      %v1156 = vunpack.c.h.b16 %v408
      %v1157 = vunpack.c.l.b16 %v409
      %v1158 = vunpack.c.h.b16 %v409
      %v1159 = vunpack.c.l.b16 %v410
      %v1160 = vunpack.c.l.b16 %v411
      %v1161 = vunpack.c.h.b16 %v411
      %v1162 = vunpack.c.l.b16 %v412
      %v1163 = vunpack.c.h.b16 %v412
      %v1164 = vunpack.c.l.b16 %v413
      %v1165 = vunpack.c.l.b16 %v414
      %v1166 = vunpack.c.h.b16 %v414
      %v1167 = vunpack.c.l.b16 %v415
      %v1168 = vunpack.c.h.b16 %v415
      %v1169 = vunpack.c.l.b16 %v416
      %v1170 = vunpack.c.l.b16 %v417
      %v1171 = vunpack.c.h.b16 %v417
      %v1172 = vunpack.c.l.b16 %v418
      %v1173 = vunpack.c.h.b16 %v418
      %v1174 = vunpack.c.l.b16 %v419
      %v1175 = vunpack.c.l.b16 %v420
      %v1176 = vunpack.c.h.b16 %v420
      %v1177 = vunpack.c.l.b16 %v421
      %v1178 = vunpack.c.h.b16 %v421
      %v1179 = vunpack.c.l.b16 %v422
      %v1180 = vunpack.c.l.b16 %v423
      %v1181 = vunpack.c.h.b16 %v423
      %v1182 = vunpack.c.l.b16 %v424
      %v1183 = vunpack.c.h.b16 %v424
      %v1184 = vunpack.c.l.b16 %v425
      %v1185 = vunpack.c.l.b16 %v426
      %v1186 = vunpack.c.h.b16 %v426
      %v1187 = vunpack.c.l.b16 %v427
      %v1188 = vunpack.c.h.b16 %v427
      %v1189 = vunpack.c.l.b16 %v428
      %v1190 = vunpack.c.l.b16 %v429
      %v1191 = vunpack.c.h.b16 %v429
      %v1192 = vunpack.c.l.b16 %v430
      %v1193 = vunpack.c.h.b16 %v430
      %v1194 = vunpack.c.l.b16 %v431
      %v1195 = vunpack.c.l.b16 %v432
      %v1196 = vunpack.c.h.b16 %v432
      %v1197 = vunpack.c.l.b16 %v433
      %v1198 = vunpack.c.h.b16 %v433
      %v1199 = vunpack.c.l.b16 %v434
      %v1200 = vunpack.c.l.b16 %v435
      %v1201 = vunpack.c.h.b16 %v435
      %v1202 = vunpack.c.l.b16 %v436
      %v1203 = vunpack.c.h.b16 %v436
      %v1204 = vunpack.c.l.b16 %v437
      %v1205 = vunpack.c.l.b16 %v438
      %v1206 = vunpack.c.h.b16 %v438
      %v1207 = vunpack.c.l.b16 %v439
      %v1208 = vunpack.c.h.b16 %v439
      %v1209 = vunpack.c.l.b16 %v440
      %v1210 = vunpack.c.l.b16 %v441
      %v1211 = vunpack.c.h.b16 %v441
      %v1212 = vunpack.c.l.b16 %v442
      %v1213 = vunpack.c.h.b16 %v442
      %v1214 = vunpack.c.l.b16 %v443
      %v1215 = vpack.c.b16 %v820, %v815
      %v1216 = vpack.c.b16 %v821, %v816
      %v1217 = vpack.c.b16 %v822, %v817
      %v1218 = vpack.c.b16 %v823, %v818
      %v1219 = vpack.c.b16 %v824, %v819
      %v1220 = vpack.c.b16 %v830, %v825
      %v1221 = vpack.c.b16 %v831, %v826
      %v1222 = vpack.c.b16 %v832, %v827
      %v1223 = vpack.c.b16 %v833, %v828
      %v1224 = vpack.c.b16 %v834, %v829
      %v1225 = vpack.c.b16 %v840, %v835
      %v1226 = vpack.c.b16 %v841, %v836
      %v1227 = vpack.c.b16 %v842, %v837
      %v1228 = vpack.c.b16 %v843, %v838
      %v1229 = vpack.c.b16 %v844, %v839
      %v1230 = vpack.c.b16 %v850, %v845
      %v1231 = vpack.c.b16 %v851, %v846
      %v1232 = vpack.c.b16 %v852, %v847
      %v1233 = vpack.c.b16 %v853, %v848
      %v1234 = vpack.c.b16 %v854, %v849
      %v1235 = vpack.c.b16 %v860, %v855
      %v1236 = vpack.c.b16 %v861, %v856
      %v1237 = vpack.c.b16 %v862, %v857
      %v1238 = vpack.c.b16 %v863, %v858
      %v1239 = vpack.c.b16 %v864, %v859
      %v1240 = vpack.c.b16 %v870, %v865
      %v1241 = vpack.c.b16 %v871, %v866
      %v1242 = vpack.c.b16 %v872, %v867
      %v1243 = vpack.c.b16 %v873, %v868
      %v1244 = vpack.c.b16 %v874, %v869
      %v1245 = vpack.c.b16 %v880, %v875
      %v1246 = vpack.c.b16 %v881, %v876
      %v1247 = vpack.c.b16 %v882, %v877
      %v1248 = vpack.c.b16 %v883, %v878
      %v1249 = vpack.c.b16 %v884, %v879
      %v1250 = vpack.c.b16 %v890, %v885
      %v1251 = vpack.c.b16 %v891, %v886
      %v1252 = vpack.c.b16 %v892, %v887
      %v1253 = vpack.c.b16 %v893, %v888
      %v1254 = vpack.c.b16 %v894, %v889
      %v1255 = vpack.c.b16 %v900, %v895
      %v1256 = vpack.c.b16 %v901, %v896
      %v1257 = vpack.c.b16 %v902, %v897
      %v1258 = vpack.c.b16 %v903, %v898
      %v1259 = vpack.c.b16 %v904, %v899
      %v1260 = vpack.c.b16 %v910, %v905
      %v1261 = vpack.c.b16 %v911, %v906
      %v1262 = vpack.c.b16 %v912, %v907
      %v1263 = vpack.c.b16 %v913, %v908
      %v1264 = vpack.c.b16 %v914, %v909
      %v1265 = vpack.c.b16 %v920, %v915
      %v1266 = vpack.c.b16 %v921, %v916
      %v1267 = vpack.c.b16 %v922, %v917
      %v1268 = vpack.c.b16 %v923, %v918
      %v1269 = vpack.c.b16 %v924, %v919
      %v1270 = vpack.c.b16 %v930, %v925
      %v1271 = vpack.c.b16 %v931, %v926
      %v1272 = vpack.c.b16 %v932, %v927
      %v1273 = vpack.c.b16 %v933, %v928
      %v1274 = vpack.c.b16 %v934, %v929
      %v1275 = vpack.c.b16 %v940, %v935
      %v1276 = vpack.c.b16 %v941, %v936
      %v1277 = vpack.c.b16 %v942, %v937
      %v1278 = vpack.c.b16 %v943, %v938
      %v1279 = vpack.c.b16 %v944, %v939
      %v1280 = vpack.c.b16 %v950, %v945
      %v1281 = vpack.c.b16 %v951, %v946
      %v1282 = vpack.c.b16 %v952, %v947
      %v1283 = vpack.c.b16 %v953, %v948
      %v1284 = vpack.c.b16 %v954, %v949
      %v1285 = vpack.c.b16 %v960, %v955
      %v1286 = vpack.c.b16 %v961, %v956
      %v1287 = vpack.c.b16 %v962, %v957
      %v1288 = vpack.c.b16 %v963, %v958
      %v1289 = vpack.c.b16 %v964, %v959
      %v1290 = vpack.c.b16 %v970, %v965
      %v1291 = vpack.c.b16 %v971, %v966
      %v1292 = vpack.c.b16 %v972, %v967
      %v1293 = vpack.c.b16 %v973, %v968
      %v1294 = vpack.c.b16 %v974, %v969
      %v1295 = vpack.c.b16 %v980, %v975
      %v1296 = vpack.c.b16 %v981, %v976
      %v1297 = vpack.c.b16 %v982, %v977
      %v1298 = vpack.c.b16 %v983, %v978
      %v1299 = vpack.c.b16 %v984, %v979
      %v1300 = vpack.c.b16 %v990, %v985
      %v1301 = vpack.c.b16 %v991, %v986
      %v1302 = vpack.c.b16 %v992, %v987
      %v1303 = vpack.c.b16 %v993, %v988
      %v1304 = vpack.c.b16 %v994, %v989
      %v1305 = vpack.c.b16 %v1000, %v995
      %v1306 = vpack.c.b16 %v1001, %v996
      %v1307 = vpack.c.b16 %v1002, %v997
      %v1308 = vpack.c.b16 %v1003, %v998
      %v1309 = vpack.c.b16 %v1004, %v999
      %v1310 = vpack.c.b16 %v1010, %v1005
      %v1311 = vpack.c.b16 %v1011, %v1006
      %v1312 = vpack.c.b16 %v1012, %v1007
      %v1313 = vpack.c.b16 %v1013, %v1008
      %v1314 = vpack.c.b16 %v1014, %v1009
      %v1315 = vpack.c.b16 %v1020, %v1015
      %v1316 = vpack.c.b16 %v1021, %v1016
      %v1317 = vpack.c.b16 %v1022, %v1017
      %v1318 = vpack.c.b16 %v1023, %v1018
      %v1319 = vpack.c.b16 %v1024, %v1019
      %v1320 = vpack.c.b16 %v1030, %v1025
      %v1321 = vpack.c.b16 %v1031, %v1026
      %v1322 = vpack.c.b16 %v1032, %v1027
      %v1323 = vpack.c.b16 %v1033, %v1028
      %v1324 = vpack.c.b16 %v1034, %v1029
      %v1325 = vpack.c.b16 %v1040, %v1035
      %v1326 = vpack.c.b16 %v1041, %v1036
      %v1327 = vpack.c.b16 %v1042, %v1037
      %v1328 = vpack.c.b16 %v1043, %v1038
      %v1329 = vpack.c.b16 %v1044, %v1039
      %v1330 = vpack.c.b16 %v1050, %v1045
      %v1331 = vpack.c.b16 %v1051, %v1046
      %v1332 = vpack.c.b16 %v1052, %v1047
      %v1333 = vpack.c.b16 %v1053, %v1048
      %v1334 = vpack.c.b16 %v1054, %v1049
      %v1335 = vpack.c.b16 %v1060, %v1055
      %v1336 = vpack.c.b16 %v1061, %v1056
      %v1337 = vpack.c.b16 %v1062, %v1057
      %v1338 = vpack.c.b16 %v1063, %v1058
      %v1339 = vpack.c.b16 %v1064, %v1059
      %v1340 = vpack.c.b16 %v1070, %v1065
      %v1341 = vpack.c.b16 %v1071, %v1066
      %v1342 = vpack.c.b16 %v1072, %v1067
      %v1343 = vpack.c.b16 %v1073, %v1068
      %v1344 = vpack.c.b16 %v1074, %v1069
      %v1345 = vpack.c.b16 %v1080, %v1075
      %v1346 = vpack.c.b16 %v1081, %v1076
      %v1347 = vpack.c.b16 %v1082, %v1077
      %v1348 = vpack.c.b16 %v1083, %v1078
      %v1349 = vpack.c.b16 %v1084, %v1079
      %v1350 = vpack.c.b16 %v1090, %v1085
      %v1351 = vpack.c.b16 %v1091, %v1086
      %v1352 = vpack.c.b16 %v1092, %v1087
      %v1353 = vpack.c.b16 %v1093, %v1088
      %v1354 = vpack.c.b16 %v1094, %v1089
      %v1355 = vpack.c.b16 %v1100, %v1095
      %v1356 = vpack.c.b16 %v1101, %v1096
      %v1357 = vpack.c.b16 %v1102, %v1097
      %v1358 = vpack.c.b16 %v1103, %v1098
      %v1359 = vpack.c.b16 %v1104, %v1099
      %v1360 = vpack.c.b16 %v1110, %v1105
      %v1361 = vpack.c.b16 %v1111, %v1106
      %v1362 = vpack.c.b16 %v1112, %v1107
      %v1363 = vpack.c.b16 %v1113, %v1108
      %v1364 = vpack.c.b16 %v1114, %v1109
      %v1365 = vpack.c.b16 %v1120, %v1115
      %v1366 = vpack.c.b16 %v1121, %v1116
      %v1367 = vpack.c.b16 %v1122, %v1117
      %v1368 = vpack.c.b16 %v1123, %v1118
      %v1369 = vpack.c.b16 %v1124, %v1119
      %v1370 = vpack.c.b16 %v1130, %v1125
      %v1371 = vpack.c.b16 %v1131, %v1126
      %v1372 = vpack.c.b16 %v1132, %v1127
      %v1373 = vpack.c.b16 %v1133, %v1128
      %v1374 = vpack.c.b16 %v1134, %v1129
      %v1375 = vpack.c.b16 %v1140, %v1135
      %v1376 = vpack.c.b16 %v1141, %v1136
      %v1377 = vpack.c.b16 %v1142, %v1137
      %v1378 = vpack.c.b16 %v1143, %v1138
      %v1379 = vpack.c.b16 %v1144, %v1139
      %v1380 = vpack.c.b16 %v1150, %v1145
      %v1381 = vpack.c.b16 %v1151, %v1146
      %v1382 = vpack.c.b16 %v1152, %v1147
      %v1383 = vpack.c.b16 %v1153, %v1148
      %v1384 = vpack.c.b16 %v1154, %v1149
      %v1385 = vpack.c.b16 %v1160, %v1155
      %v1386 = vpack.c.b16 %v1161, %v1156
      %v1387 = vpack.c.b16 %v1162, %v1157
      %v1388 = vpack.c.b16 %v1163, %v1158
      %v1389 = vpack.c.b16 %v1164, %v1159
      %v1390 = vpack.c.b16 %v1170, %v1165
      %v1391 = vpack.c.b16 %v1171, %v1166
      %v1392 = vpack.c.b16 %v1172, %v1167
      %v1393 = vpack.c.b16 %v1173, %v1168
      %v1394 = vpack.c.b16 %v1174, %v1169
      %v1395 = vpack.c.b16 %v1180, %v1175
      %v1396 = vpack.c.b16 %v1181, %v1176
      %v1397 = vpack.c.b16 %v1182, %v1177
      %v1398 = vpack.c.b16 %v1183, %v1178
      %v1399 = vpack.c.b16 %v1184, %v1179
      %v1400 = vpack.c.b16 %v1190, %v1185
      %v1401 = vpack.c.b16 %v1191, %v1186
      %v1402 = vpack.c.b16 %v1192, %v1187
      %v1403 = vpack.c.b16 %v1193, %v1188
      %v1404 = vpack.c.b16 %v1194, %v1189
      %v1405 = vpack.c.b16 %v1200, %v1195
      %v1406 = vpack.c.b16 %v1201, %v1196
      %v1407 = vpack.c.b16 %v1202, %v1197
      %v1408 = vpack.c.b16 %v1203, %v1198
      %v1409 = vpack.c.b16 %v1204, %v1199
      %v1410 = vpack.c.b16 %v1210, %v1205
      %v1411 = vpack.c.b16 %v1211, %v1206
      %v1412 = vpack.c.b16 %v1212, %v1207
      %v1413 = vpack.c.b16 %v1213, %v1208
      %v1414 = vpack.c.b16 %v1214, %v1209
      %1615 = vmatprep.subr.bf16.mxu0 %v1251
      %1616 = vmatpush1.bf16.msra.mxu0 %v1250
      %1617 = vmatprep.subr.bf16.mxu0 %v1246
      %1618 = vmatpush1.bf16.msra.mxu0 %v1245
      %1619 = vmatprep.subr.bf16.mxu0 %v1241
      %1620 = vmatpush1.bf16.msra.mxu0 %v1240
      %1621 = vmatprep.subr.bf16.mxu0 %v1236
      %1622 = vmatpush1.bf16.msra.mxu0 %v1235
      %1623 = vmatprep.subr.bf16.mxu0 %v1231
      %1624 = vmatpush1.bf16.msra.mxu0 %v1230
      %1625 = vmatprep.subr.bf16.mxu0 %v1226
      %1626 = vmatpush1.bf16.msra.mxu0 %v1225
      %1627 = vmatprep.subr.bf16.mxu0 %v1221
      %1628 = vmatpush1.bf16.msra.mxu0 %v1220
      %1629 = vmatprep.subr.bf16.mxu0 %v1216
      %1630 = vmatpush1.bf16.msra.mxu0 %v1215
      %1631 = vmatprep.subr.bf16.mxu0 %v1291
      %1632 = vmatpush2.bf16.msra.mxu0 %v1290
      %1633 = vmatprep.subr.bf16.mxu0 %v1286
      %1634 = vmatpush2.bf16.msra.mxu0 %v1285
      %1635 = vmatprep.subr.bf16.mxu0 %v1281
      %1636 = vmatpush2.bf16.msra.mxu0 %v1280
      %1637 = vmatprep.subr.bf16.mxu0 %v1276
      %1638 = vmatpush2.bf16.msra.mxu0 %v1275
      %1639 = vmatprep.subr.bf16.mxu0 %v1271
      %1640 = vmatpush2.bf16.msra.mxu0 %v1270
      %1641 = vmatprep.subr.bf16.mxu0 %v1266
      %1642 = vmatpush2.bf16.msra.mxu0 %v1265
      %1643 = vmatprep.subr.bf16.mxu0 %v1261
      %1644 = vmatpush2.bf16.msra.mxu0 %v1260
      %1645 = vmatprep.subr.bf16.mxu0 %v1256
      %1646 = vmatpush2.bf16.msra.mxu0 %v1255
      %1647 = vmatprep.mubr.bf16.mxu0 %v536
      %1648 = vmatmul.mubr.bf16.gmra.mxu0 %v535
      %v1649 = vpop.f32.mrf.mxu0
      %v1650 = vadd.f32 %v449, %v1649
      %v1651 = vpop.f32.mrf.mxu0
      %v1652 = vadd.f32 %v453, %v1651
      %v1653 = vpop.f32.mrf.mxu0
      %v1654 = vadd.f32 %v449, %v1653
      %v1655 = vpop.f32.mrf.mxu0
      %v1656 = vadd.f32 %v453, %v1655
      %1657 = vmatprep.mubr.bf16.mxu0 %v541
      %1658 = vmatmul.mubr.bf16.gmra.mxu0 %v540
      %v1659 = vpop.f32.mrf.mxu0
      %v1660 = vadd.f32 %v449, %v1659
      %v1661 = vpop.f32.mrf.mxu0
      %v1662 = vadd.f32 %v453, %v1661
      %v1663 = vpop.f32.mrf.mxu0
      %v1664 = vadd.f32 %v449, %v1663
      %v1665 = vpop.f32.mrf.mxu0
      %v1666 = vadd.f32 %v453, %v1665
      %1667 = vmatprep.mubr.bf16.mxu0 %v546
      %1668 = vmatmul.mubr.bf16.gmra.mxu0 %v545
      %v1669 = vpop.f32.mrf.mxu0
      %v1670 = vadd.f32 %v449, %v1669
      %v1671 = vpop.f32.mrf.mxu0
      %v1672 = vadd.f32 %v453, %v1671
      %v1673 = vpop.f32.mrf.mxu0
      %v1674 = vadd.f32 %v449, %v1673
      %v1675 = vpop.f32.mrf.mxu0
      %v1676 = vadd.f32 %v453, %v1675
      %1677 = vmatprep.mubr.bf16.mxu0 %v551
      %1678 = vmatmul.mubr.bf16.gmra.mxu0 %v550
      %v1679 = vpop.f32.mrf.mxu0
      %v1680 = vadd.f32 %v449, %v1679
      %v1681 = vpop.f32.mrf.mxu0
      %v1682 = vadd.f32 %v453, %v1681
      %v1683 = vpop.f32.mrf.mxu0
      %v1684 = vadd.f32 %v449, %v1683
      %v1685 = vpop.f32.mrf.mxu0
      %v1686 = vadd.f32 %v453, %v1685
      %1687 = vdwg.mxu0
      %1688 = vmatprep.subr.bf16.mxu0 %v1331
      %1689 = vmatpush1.bf16.msra.mxu0 %v1330
      %1690 = vmatprep.subr.bf16.mxu0 %v1326
      %1691 = vmatpush1.bf16.msra.mxu0 %v1325
      %1692 = vmatprep.subr.bf16.mxu0 %v1321
      %1693 = vmatpush1.bf16.msra.mxu0 %v1320
      %1694 = vmatprep.subr.bf16.mxu0 %v1316
      %1695 = vmatpush1.bf16.msra.mxu0 %v1315
      %1696 = vmatprep.subr.bf16.mxu0 %v1311
      %1697 = vmatpush1.bf16.msra.mxu0 %v1310
      %1698 = vmatprep.subr.bf16.mxu0 %v1306
      %1699 = vmatpush1.bf16.msra.mxu0 %v1305
      %1700 = vmatprep.subr.bf16.mxu0 %v1301
      %1701 = vmatpush1.bf16.msra.mxu0 %v1300
      %1702 = vmatprep.subr.bf16.mxu0 %v1296
      %1703 = vmatpush1.bf16.msra.mxu0 %v1295
      %1704 = vmatprep.subr.bf16.mxu0 %v1371
      %1705 = vmatpush2.bf16.msra.mxu0 %v1370
      %1706 = vmatprep.subr.bf16.mxu0 %v1366
      %1707 = vmatpush2.bf16.msra.mxu0 %v1365
      %1708 = vmatprep.subr.bf16.mxu0 %v1361
      %1709 = vmatpush2.bf16.msra.mxu0 %v1360
      %1710 = vmatprep.subr.bf16.mxu0 %v1356
      %1711 = vmatpush2.bf16.msra.mxu0 %v1355
      %1712 = vmatprep.subr.bf16.mxu0 %v1351
      %1713 = vmatpush2.bf16.msra.mxu0 %v1350
      %1714 = vmatprep.subr.bf16.mxu0 %v1346
      %1715 = vmatpush2.bf16.msra.mxu0 %v1345
      %1716 = vmatprep.subr.bf16.mxu0 %v1341
      %1717 = vmatpush2.bf16.msra.mxu0 %v1340
      %1718 = vmatprep.subr.bf16.mxu0 %v1336
      %1719 = vmatpush2.bf16.msra.mxu0 %v1335
      %1720 = vmatprep.mubr.bf16.mxu0 %v538
      %1721 = vmatmul.mubr.bf16.gmra.mxu0 %v537
      %v1722 = vpop.f32.mrf.mxu0
      %v1723 = vadd.f32 %v1650, %v1722
      %v1724 = vpop.f32.mrf.mxu0
      %v1725 = vadd.f32 %v1652, %v1724
      %v1726 = vpop.f32.mrf.mxu0
      %v1727 = vadd.f32 %v1654, %v1726
      %v1728 = vpop.f32.mrf.mxu0
      %v1729 = vadd.f32 %v1656, %v1728
      %1730 = vmatprep.mubr.bf16.mxu0 %v543
      %1731 = vmatmul.mubr.bf16.gmra.mxu0 %v542
      %v1732 = vpop.f32.mrf.mxu0
      %v1733 = vadd.f32 %v1660, %v1732
      %v1734 = vpop.f32.mrf.mxu0
      %v1735 = vadd.f32 %v1662, %v1734
      %v1736 = vpop.f32.mrf.mxu0
      %v1737 = vadd.f32 %v1664, %v1736
      %v1738 = vpop.f32.mrf.mxu0
      %v1739 = vadd.f32 %v1666, %v1738
      %1740 = vmatprep.mubr.bf16.mxu0 %v548
      %1741 = vmatmul.mubr.bf16.gmra.mxu0 %v547
      %v1742 = vpop.f32.mrf.mxu0
      %v1743 = vadd.f32 %v1670, %v1742
      %v1744 = vpop.f32.mrf.mxu0
      %v1745 = vadd.f32 %v1672, %v1744
      %v1746 = vpop.f32.mrf.mxu0
      %v1747 = vadd.f32 %v1674, %v1746
      %v1748 = vpop.f32.mrf.mxu0
      %v1749 = vadd.f32 %v1676, %v1748
      %1750 = vmatprep.mubr.bf16.mxu0 %v553
      %1751 = vmatmul.mubr.bf16.gmra.mxu0 %v552
      %v1752 = vpop.f32.mrf.mxu0
      %v1753 = vadd.f32 %v1680, %v1752
      %v1754 = vpop.f32.mrf.mxu0
      %v1755 = vadd.f32 %v1682, %v1754
      %v1756 = vpop.f32.mrf.mxu0
      %v1757 = vadd.f32 %v1684, %v1756
      %v1758 = vpop.f32.mrf.mxu0
      %v1759 = vadd.f32 %v1686, %v1758
      %1760 = vdwg.mxu0
      %1761 = vmatprep.subr.bf16.mxu0 %v1411
      %1762 = vmatpush1.bf16.msra.mxu0 %v1410
      %1763 = vmatprep.subr.bf16.mxu0 %v1406
      %1764 = vmatpush1.bf16.msra.mxu0 %v1405
      %1765 = vmatprep.subr.bf16.mxu0 %v1401
      %1766 = vmatpush1.bf16.msra.mxu0 %v1400
      %1767 = vmatprep.subr.bf16.mxu0 %v1396
      %1768 = vmatpush1.bf16.msra.mxu0 %v1395
      %1769 = vmatprep.subr.bf16.mxu0 %v1391
      %1770 = vmatpush1.bf16.msra.mxu0 %v1390
      %1771 = vmatprep.subr.bf16.mxu0 %v1386
      %1772 = vmatpush1.bf16.msra.mxu0 %v1385
      %1773 = vmatprep.subr.bf16.mxu0 %v1381
      %1774 = vmatpush1.bf16.msra.mxu0 %v1380
      %1775 = vmatprep.subr.bf16.mxu0 %v1376
      %1776 = vmatpush1.bf16.msra.mxu0 %v1375
      %1777 = vmatprep.subr.bf16.mxu0 0
      %1778 = vmatpush2.bf16.msra.mxu0 0
      %1779 = vmatprep.subr.bf16.mxu0 0
      %1780 = vmatpush2.bf16.msra.mxu0 0
      %1781 = vmatprep.subr.bf16.mxu0 0
      %1782 = vmatpush2.bf16.msra.mxu0 0
      %1783 = vmatprep.subr.bf16.mxu0 0
      %1784 = vmatpush2.bf16.msra.mxu0 0
      %1785 = vmatprep.subr.bf16.mxu0 0
      %1786 = vmatpush2.bf16.msra.mxu0 0
      %1787 = vmatprep.subr.bf16.mxu0 0
      %1788 = vmatpush2.bf16.msra.mxu0 0
      %1789 = vmatprep.subr.bf16.mxu0 0
      %1790 = vmatpush2.bf16.msra.mxu0 0
      %1791 = vmatprep.subr.bf16.mxu0 0
      %1792 = vmatpush2.bf16.msra.mxu0 0
      %1793 = vmatprep.mubr.bf16.mxu0 0
      %1794 = vmatmul.mubr.bf16.gmra.mxu0 %v539
      %v1795 = vpop.f32.mrf.mxu0
      %v1796 = vadd.f32 %v1723, %v1795
      %v1797 = vpop.f32.mrf.mxu0
      %v1798 = vadd.f32 %v1725, %v1797
      %v1799 = vpop.f32.mrf.mxu0
      %v1800 = vadd.f32 %v1727, %v1799
      %v1801 = vpop.f32.mrf.mxu0
      %v1802 = vadd.f32 %v1729, %v1801
      %1803 = vmatprep.mubr.bf16.mxu0 0
      %1804 = vmatmul.mubr.bf16.gmra.mxu0 %v544
      %v1805 = vpop.f32.mrf.mxu0
      %v1806 = vadd.f32 %v1733, %v1805
      %v1807 = vpop.f32.mrf.mxu0
      %v1808 = vadd.f32 %v1735, %v1807
      %v1809 = vpop.f32.mrf.mxu0
      %v1810 = vadd.f32 %v1737, %v1809
      %v1811 = vpop.f32.mrf.mxu0
      %v1812 = vadd.f32 %v1739, %v1811
      %1813 = vmatprep.mubr.bf16.mxu0 0
      %1814 = vmatmul.mubr.bf16.gmra.mxu0 %v549
      %v1815 = vpop.f32.mrf.mxu0
      %v1816 = vadd.f32 %v1743, %v1815
      %v1817 = vpop.f32.mrf.mxu0
      %v1818 = vadd.f32 %v1745, %v1817
      %v1819 = vpop.f32.mrf.mxu0
      %v1820 = vadd.f32 %v1747, %v1819
      %v1821 = vpop.f32.mrf.mxu0
      %v1822 = vadd.f32 %v1749, %v1821
      %1823 = vmatprep.mubr.bf16.mxu0 0
      %1824 = vmatmul.mubr.bf16.gmra.mxu0 %v554
      %v1825 = vpop.f32.mrf.mxu0
      %v1826 = vadd.f32 %v1753, %v1825
      %v1827 = vpop.f32.mrf.mxu0
      %v1828 = vadd.f32 %v1755, %v1827
      %v1829 = vpop.f32.mrf.mxu0
      %v1830 = vadd.f32 %v1757, %v1829
      %v1831 = vpop.f32.mrf.mxu0
      %v1832 = vadd.f32 %v1759, %v1831
      %1833 = vdwg.mxu0
      %1834 = vmatprep.subr.bf16.mxu0 %v1253
      %1835 = vmatpush1.bf16.msra.mxu0 %v1252
      %1836 = vmatprep.subr.bf16.mxu0 %v1248
      %1837 = vmatpush1.bf16.msra.mxu0 %v1247
      %1838 = vmatprep.subr.bf16.mxu0 %v1243
      %1839 = vmatpush1.bf16.msra.mxu0 %v1242
      %1840 = vmatprep.subr.bf16.mxu0 %v1238
      %1841 = vmatpush1.bf16.msra.mxu0 %v1237
      %1842 = vmatprep.subr.bf16.mxu0 %v1233
      %1843 = vmatpush1.bf16.msra.mxu0 %v1232
      %1844 = vmatprep.subr.bf16.mxu0 %v1228
      %1845 = vmatpush1.bf16.msra.mxu0 %v1227
      %1846 = vmatprep.subr.bf16.mxu0 %v1223
      %1847 = vmatpush1.bf16.msra.mxu0 %v1222
      %1848 = vmatprep.subr.bf16.mxu0 %v1218
      %1849 = vmatpush1.bf16.msra.mxu0 %v1217
      %1850 = vmatprep.subr.bf16.mxu0 %v1293
      %1851 = vmatpush2.bf16.msra.mxu0 %v1292
      %1852 = vmatprep.subr.bf16.mxu0 %v1288
      %1853 = vmatpush2.bf16.msra.mxu0 %v1287
      %1854 = vmatprep.subr.bf16.mxu0 %v1283
      %1855 = vmatpush2.bf16.msra.mxu0 %v1282
      %1856 = vmatprep.subr.bf16.mxu0 %v1278
      %1857 = vmatpush2.bf16.msra.mxu0 %v1277
      %1858 = vmatprep.subr.bf16.mxu0 %v1273
      %1859 = vmatpush2.bf16.msra.mxu0 %v1272
      %1860 = vmatprep.subr.bf16.mxu0 %v1268
      %1861 = vmatpush2.bf16.msra.mxu0 %v1267
      %1862 = vmatprep.subr.bf16.mxu0 %v1263
      %1863 = vmatpush2.bf16.msra.mxu0 %v1262
      %1864 = vmatprep.subr.bf16.mxu0 %v1258
      %1865 = vmatpush2.bf16.msra.mxu0 %v1257
      %1866 = vmatprep.mubr.bf16.mxu0 %v536
      %1867 = vmatmul.mubr.bf16.gmra.mxu0 %v535
      %v1868 = vpop.f32.mrf.mxu0
      %v1869 = vadd.f32 %v457, %v1868
      %v1870 = vpop.f32.mrf.mxu0
      %v1871 = vadd.f32 %v461, %v1870
      %v1872 = vpop.f32.mrf.mxu0
      %v1873 = vadd.f32 %v457, %v1872
      %v1874 = vpop.f32.mrf.mxu0
      %v1875 = vadd.f32 %v461, %v1874
      %1876 = vmatprep.mubr.bf16.mxu0 %v541
      %1877 = vmatmul.mubr.bf16.gmra.mxu0 %v540
      %v1878 = vpop.f32.mrf.mxu0
      %v1879 = vadd.f32 %v457, %v1878
      %v1880 = vpop.f32.mrf.mxu0
      %v1881 = vadd.f32 %v461, %v1880
      %v1882 = vpop.f32.mrf.mxu0
      %v1883 = vadd.f32 %v457, %v1882
      %v1884 = vpop.f32.mrf.mxu0
      %v1885 = vadd.f32 %v461, %v1884
      %1886 = vmatprep.mubr.bf16.mxu0 %v546
      %1887 = vmatmul.mubr.bf16.gmra.mxu0 %v545
      %v1888 = vpop.f32.mrf.mxu0
      %v1889 = vadd.f32 %v457, %v1888
      %v1890 = vpop.f32.mrf.mxu0
      %v1891 = vadd.f32 %v461, %v1890
      %v1892 = vpop.f32.mrf.mxu0
      %v1893 = vadd.f32 %v457, %v1892
      %v1894 = vpop.f32.mrf.mxu0
      %v1895 = vadd.f32 %v461, %v1894
      %1896 = vmatprep.mubr.bf16.mxu0 %v551
      %1897 = vmatmul.mubr.bf16.gmra.mxu0 %v550
      %v1898 = vpop.f32.mrf.mxu0
      %v1899 = vadd.f32 %v457, %v1898
      %v1900 = vpop.f32.mrf.mxu0
      %v1901 = vadd.f32 %v461, %v1900
      %v1902 = vpop.f32.mrf.mxu0
      %v1903 = vadd.f32 %v457, %v1902
      %v1904 = vpop.f32.mrf.mxu0
      %v1905 = vadd.f32 %v461, %v1904
      %1906 = vdwg.mxu0
      %1907 = vmatprep.subr.bf16.mxu0 %v1333
      %1908 = vmatpush1.bf16.msra.mxu0 %v1332
      %1909 = vmatprep.subr.bf16.mxu0 %v1328
      %1910 = vmatpush1.bf16.msra.mxu0 %v1327
      %1911 = vmatprep.subr.bf16.mxu0 %v1323
      %1912 = vmatpush1.bf16.msra.mxu0 %v1322
      %1913 = vmatprep.subr.bf16.mxu0 %v1318
      %1914 = vmatpush1.bf16.msra.mxu0 %v1317
      %1915 = vmatprep.subr.bf16.mxu0 %v1313
      %1916 = vmatpush1.bf16.msra.mxu0 %v1312
      %1917 = vmatprep.subr.bf16.mxu0 %v1308
      %1918 = vmatpush1.bf16.msra.mxu0 %v1307
      %1919 = vmatprep.subr.bf16.mxu0 %v1303
      %1920 = vmatpush1.bf16.msra.mxu0 %v1302
      %1921 = vmatprep.subr.bf16.mxu0 %v1298
      %1922 = vmatpush1.bf16.msra.mxu0 %v1297
      %1923 = vmatprep.subr.bf16.mxu0 %v1373
      %1924 = vmatpush2.bf16.msra.mxu0 %v1372
      %1925 = vmatprep.subr.bf16.mxu0 %v1368
      %1926 = vmatpush2.bf16.msra.mxu0 %v1367
      %1927 = vmatprep.subr.bf16.mxu0 %v1363
      %1928 = vmatpush2.bf16.msra.mxu0 %v1362
      %1929 = vmatprep.subr.bf16.mxu0 %v1358
      %1930 = vmatpush2.bf16.msra.mxu0 %v1357
      %1931 = vmatprep.subr.bf16.mxu0 %v1353
      %1932 = vmatpush2.bf16.msra.mxu0 %v1352
      %1933 = vmatprep.subr.bf16.mxu0 %v1348
      %1934 = vmatpush2.bf16.msra.mxu0 %v1347
      %1935 = vmatprep.subr.bf16.mxu0 %v1343
      %1936 = vmatpush2.bf16.msra.mxu0 %v1342
      %1937 = vmatprep.subr.bf16.mxu0 %v1338
      %1938 = vmatpush2.bf16.msra.mxu0 %v1337
      %1939 = vmatprep.mubr.bf16.mxu0 %v538
      %1940 = vmatmul.mubr.bf16.gmra.mxu0 %v537
      %v1941 = vpop.f32.mrf.mxu0
      %v1942 = vadd.f32 %v1869, %v1941
      %v1943 = vpop.f32.mrf.mxu0
      %v1944 = vadd.f32 %v1871, %v1943
      %v1945 = vpop.f32.mrf.mxu0
      %v1946 = vadd.f32 %v1873, %v1945
      %v1947 = vpop.f32.mrf.mxu0
      %v1948 = vadd.f32 %v1875, %v1947
      %1949 = vmatprep.mubr.bf16.mxu0 %v543
      %1950 = vmatmul.mubr.bf16.gmra.mxu0 %v542
      %v1951 = vpop.f32.mrf.mxu0
      %v1952 = vadd.f32 %v1879, %v1951
      %v1953 = vpop.f32.mrf.mxu0
      %v1954 = vadd.f32 %v1881, %v1953
      %v1955 = vpop.f32.mrf.mxu0
      %v1956 = vadd.f32 %v1883, %v1955
      %v1957 = vpop.f32.mrf.mxu0
      %v1958 = vadd.f32 %v1885, %v1957
      %1959 = vmatprep.mubr.bf16.mxu0 %v548
      %1960 = vmatmul.mubr.bf16.gmra.mxu0 %v547
      %v1961 = vpop.f32.mrf.mxu0
      %v1962 = vadd.f32 %v1889, %v1961
      %v1963 = vpop.f32.mrf.mxu0
      %v1964 = vadd.f32 %v1891, %v1963
      %v1965 = vpop.f32.mrf.mxu0
      %v1966 = vadd.f32 %v1893, %v1965
      %v1967 = vpop.f32.mrf.mxu0
      %v1968 = vadd.f32 %v1895, %v1967
      %1969 = vmatprep.mubr.bf16.mxu0 %v553
      %1970 = vmatmul.mubr.bf16.gmra.mxu0 %v552
      %v1971 = vpop.f32.mrf.mxu0
      %v1972 = vadd.f32 %v1899, %v1971
      %v1973 = vpop.f32.mrf.mxu0
      %v1974 = vadd.f32 %v1901, %v1973
      %v1975 = vpop.f32.mrf.mxu0
      %v1976 = vadd.f32 %v1903, %v1975
      %v1977 = vpop.f32.mrf.mxu0
      %v1978 = vadd.f32 %v1905, %v1977
      %1979 = vdwg.mxu0
      %1980 = vmatprep.subr.bf16.mxu0 %v1413
      %1981 = vmatpush1.bf16.msra.mxu0 %v1412
      %1982 = vmatprep.subr.bf16.mxu0 %v1408
      %1983 = vmatpush1.bf16.msra.mxu0 %v1407
      %1984 = vmatprep.subr.bf16.mxu0 %v1403
      %1985 = vmatpush1.bf16.msra.mxu0 %v1402
      %1986 = vmatprep.subr.bf16.mxu0 %v1398
      %1987 = vmatpush1.bf16.msra.mxu0 %v1397
      %1988 = vmatprep.subr.bf16.mxu0 %v1393
      %1989 = vmatpush1.bf16.msra.mxu0 %v1392
      %1990 = vmatprep.subr.bf16.mxu0 %v1388
      %1991 = vmatpush1.bf16.msra.mxu0 %v1387
      %1992 = vmatprep.subr.bf16.mxu0 %v1383
      %1993 = vmatpush1.bf16.msra.mxu0 %v1382
      %1994 = vmatprep.subr.bf16.mxu0 %v1378
      %1995 = vmatpush1.bf16.msra.mxu0 %v1377
      %1996 = vmatprep.subr.bf16.mxu0 0
      %1997 = vmatpush2.bf16.msra.mxu0 0
      %1998 = vmatprep.subr.bf16.mxu0 0
      %1999 = vmatpush2.bf16.msra.mxu0 0
      %2000 = vmatprep.subr.bf16.mxu0 0
      %2001 = vmatpush2.bf16.msra.mxu0 0
      %2002 = vmatprep.subr.bf16.mxu0 0
      %2003 = vmatpush2.bf16.msra.mxu0 0
      %2004 = vmatprep.subr.bf16.mxu0 0
      %2005 = vmatpush2.bf16.msra.mxu0 0
      %2006 = vmatprep.subr.bf16.mxu0 0
      %2007 = vmatpush2.bf16.msra.mxu0 0
      %2008 = vmatprep.subr.bf16.mxu0 0
      %2009 = vmatpush2.bf16.msra.mxu0 0
      %2010 = vmatprep.subr.bf16.mxu0 0
      %2011 = vmatpush2.bf16.msra.mxu0 0
      %2012 = vmatprep.mubr.bf16.mxu0 0
      %2013 = vmatmul.mubr.bf16.gmra.mxu0 %v539
      %v2014 = vpop.f32.mrf.mxu0
      %v2015 = vadd.f32 %v1942, %v2014
      %v2016 = vpop.f32.mrf.mxu0
      %v2017 = vadd.f32 %v1944, %v2016
      %v2018 = vpop.f32.mrf.mxu0
      %v2019 = vadd.f32 %v1946, %v2018
      %v2020 = vpop.f32.mrf.mxu0
      %v2021 = vadd.f32 %v1948, %v2020
      %2022 = vmatprep.mubr.bf16.mxu0 0
      %2023 = vmatmul.mubr.bf16.gmra.mxu0 %v544
      %v2024 = vpop.f32.mrf.mxu0
      %v2025 = vadd.f32 %v1952, %v2024
      %v2026 = vpop.f32.mrf.mxu0
      %v2027 = vadd.f32 %v1954, %v2026
      %v2028 = vpop.f32.mrf.mxu0
      %v2029 = vadd.f32 %v1956, %v2028
      %v2030 = vpop.f32.mrf.mxu0
      %v2031 = vadd.f32 %v1958, %v2030
      %2032 = vmatprep.mubr.bf16.mxu0 0
      %2033 = vmatmul.mubr.bf16.gmra.mxu0 %v549
      %v2034 = vpop.f32.mrf.mxu0
      %v2035 = vadd.f32 %v1962, %v2034
      %v2036 = vpop.f32.mrf.mxu0
      %v2037 = vadd.f32 %v1964, %v2036
      %v2038 = vpop.f32.mrf.mxu0
      %v2039 = vadd.f32 %v1966, %v2038
      %v2040 = vpop.f32.mrf.mxu0
      %v2041 = vadd.f32 %v1968, %v2040
      %2042 = vmatprep.mubr.bf16.mxu0 0
      %2043 = vmatmul.mubr.bf16.gmra.mxu0 %v554
      %v2044 = vpop.f32.mrf.mxu0
      %v2045 = vadd.f32 %v1972, %v2044
      %v2046 = vpop.f32.mrf.mxu0
      %v2047 = vadd.f32 %v1974, %v2046
      %v2048 = vpop.f32.mrf.mxu0
      %v2049 = vadd.f32 %v1976, %v2048
      %v2050 = vpop.f32.mrf.mxu0
      %v2051 = vadd.f32 %v1978, %v2050
      %2052 = vdwg.mxu0
      %2053 = vmatprep.subr.bf16.mxu0 0
      %2054 = vmatpush1.bf16.msra.mxu0 %v1254
      %2055 = vmatprep.subr.bf16.mxu0 0
      %2056 = vmatpush1.bf16.msra.mxu0 %v1249
      %2057 = vmatprep.subr.bf16.mxu0 0
      %2058 = vmatpush1.bf16.msra.mxu0 %v1244
      %2059 = vmatprep.subr.bf16.mxu0 0
      %2060 = vmatpush1.bf16.msra.mxu0 %v1239
      %2061 = vmatprep.subr.bf16.mxu0 0
      %2062 = vmatpush1.bf16.msra.mxu0 %v1234
      %2063 = vmatprep.subr.bf16.mxu0 0
      %2064 = vmatpush1.bf16.msra.mxu0 %v1229
      %2065 = vmatprep.subr.bf16.mxu0 0
      %2066 = vmatpush1.bf16.msra.mxu0 %v1224
      %2067 = vmatprep.subr.bf16.mxu0 0
      %2068 = vmatpush1.bf16.msra.mxu0 %v1219
      %2069 = vmatprep.subr.bf16.mxu0 0
      %2070 = vmatpush2.bf16.msra.mxu0 %v1294
      %2071 = vmatprep.subr.bf16.mxu0 0
      %2072 = vmatpush2.bf16.msra.mxu0 %v1289
      %2073 = vmatprep.subr.bf16.mxu0 0
      %2074 = vmatpush2.bf16.msra.mxu0 %v1284
      %2075 = vmatprep.subr.bf16.mxu0 0
      %2076 = vmatpush2.bf16.msra.mxu0 %v1279
      %2077 = vmatprep.subr.bf16.mxu0 0
      %2078 = vmatpush2.bf16.msra.mxu0 %v1274
      %2079 = vmatprep.subr.bf16.mxu0 0
      %2080 = vmatpush2.bf16.msra.mxu0 %v1269
      %2081 = vmatprep.subr.bf16.mxu0 0
      %2082 = vmatpush2.bf16.msra.mxu0 %v1264
      %2083 = vmatprep.subr.bf16.mxu0 0
      %2084 = vmatpush2.bf16.msra.mxu0 %v1259
      %2085 = vmatprep.mubr.bf16.mxu0 %v536
      %2086 = vmatmul.mubr.bf16.gmra.mxu0 %v535
      %v2087 = vpop.f32.mrf.mxu0
      %v2088 = vadd.f32 %v465, %v2087
      %v2089 = vpop.f32.mrf.mxu0
      %v2090 = vpop.f32.mrf.mxu0
      %v2091 = vadd.f32 %v465, %v2090
      %v2092 = vpop.f32.mrf.mxu0
      %2093 = vmatprep.mubr.bf16.mxu0 %v541
      %2094 = vmatmul.mubr.bf16.gmra.mxu0 %v540
      %v2095 = vpop.f32.mrf.mxu0
      %v2096 = vadd.f32 %v465, %v2095
      %v2097 = vpop.f32.mrf.mxu0
      %v2098 = vpop.f32.mrf.mxu0
      %v2099 = vadd.f32 %v465, %v2098
      %v2100 = vpop.f32.mrf.mxu0
      %2101 = vmatprep.mubr.bf16.mxu0 %v546
      %2102 = vmatmul.mubr.bf16.gmra.mxu0 %v545
      %v2103 = vpop.f32.mrf.mxu0
      %v2104 = vadd.f32 %v465, %v2103
      %v2105 = vpop.f32.mrf.mxu0
      %v2106 = vpop.f32.mrf.mxu0
      %v2107 = vadd.f32 %v465, %v2106
      %v2108 = vpop.f32.mrf.mxu0
      %2109 = vmatprep.mubr.bf16.mxu0 %v551
      %2110 = vmatmul.mubr.bf16.gmra.mxu0 %v550
      %v2111 = vpop.f32.mrf.mxu0
      %v2112 = vadd.f32 %v465, %v2111
      %v2113 = vpop.f32.mrf.mxu0
      %v2114 = vpop.f32.mrf.mxu0
      %v2115 = vadd.f32 %v465, %v2114
      %v2116 = vpop.f32.mrf.mxu0
      %2117 = vdwg.mxu0
      %2118 = vmatprep.subr.bf16.mxu0 0
      %2119 = vmatpush1.bf16.msra.mxu0 %v1334
      %2120 = vmatprep.subr.bf16.mxu0 0
      %2121 = vmatpush1.bf16.msra.mxu0 %v1329
      %2122 = vmatprep.subr.bf16.mxu0 0
      %2123 = vmatpush1.bf16.msra.mxu0 %v1324
      %2124 = vmatprep.subr.bf16.mxu0 0
      %2125 = vmatpush1.bf16.msra.mxu0 %v1319
      %2126 = vmatprep.subr.bf16.mxu0 0
      %2127 = vmatpush1.bf16.msra.mxu0 %v1314
      %2128 = vmatprep.subr.bf16.mxu0 0
      %2129 = vmatpush1.bf16.msra.mxu0 %v1309
      %2130 = vmatprep.subr.bf16.mxu0 0
      %2131 = vmatpush1.bf16.msra.mxu0 %v1304
      %2132 = vmatprep.subr.bf16.mxu0 0
      %2133 = vmatpush1.bf16.msra.mxu0 %v1299
      %2134 = vmatprep.subr.bf16.mxu0 0
      %2135 = vmatpush2.bf16.msra.mxu0 %v1374
      %2136 = vmatprep.subr.bf16.mxu0 0
      %2137 = vmatpush2.bf16.msra.mxu0 %v1369
      %2138 = vmatprep.subr.bf16.mxu0 0
      %2139 = vmatpush2.bf16.msra.mxu0 %v1364
      %2140 = vmatprep.subr.bf16.mxu0 0
      %2141 = vmatpush2.bf16.msra.mxu0 %v1359
      %2142 = vmatprep.subr.bf16.mxu0 0
      %2143 = vmatpush2.bf16.msra.mxu0 %v1354
      %2144 = vmatprep.subr.bf16.mxu0 0
      %2145 = vmatpush2.bf16.msra.mxu0 %v1349
      %2146 = vmatprep.subr.bf16.mxu0 0
      %2147 = vmatpush2.bf16.msra.mxu0 %v1344
      %2148 = vmatprep.subr.bf16.mxu0 0
      %2149 = vmatpush2.bf16.msra.mxu0 %v1339
      %2150 = vmatprep.mubr.bf16.mxu0 %v538
      %2151 = vmatmul.mubr.bf16.gmra.mxu0 %v537
      %v2152 = vpop.f32.mrf.mxu0
      %v2153 = vadd.f32 %v2088, %v2152
      %v2154 = vpop.f32.mrf.mxu0
      %v2155 = vpop.f32.mrf.mxu0
      %v2156 = vadd.f32 %v2091, %v2155
      %v2157 = vpop.f32.mrf.mxu0
      %2158 = vmatprep.mubr.bf16.mxu0 %v543
      %2159 = vmatmul.mubr.bf16.gmra.mxu0 %v542
      %v2160 = vpop.f32.mrf.mxu0
      %v2161 = vadd.f32 %v2096, %v2160
      %v2162 = vpop.f32.mrf.mxu0
      %v2163 = vpop.f32.mrf.mxu0
      %v2164 = vadd.f32 %v2099, %v2163
      %v2165 = vpop.f32.mrf.mxu0
      %2166 = vmatprep.mubr.bf16.mxu0 %v548
      %2167 = vmatmul.mubr.bf16.gmra.mxu0 %v547
      %v2168 = vpop.f32.mrf.mxu0
      %v2169 = vadd.f32 %v2104, %v2168
      %v2170 = vpop.f32.mrf.mxu0
      %v2171 = vpop.f32.mrf.mxu0
      %v2172 = vadd.f32 %v2107, %v2171
      %v2173 = vpop.f32.mrf.mxu0
      %2174 = vmatprep.mubr.bf16.mxu0 %v553
      %2175 = vmatmul.mubr.bf16.gmra.mxu0 %v552
      %v2176 = vpop.f32.mrf.mxu0
      %v2177 = vadd.f32 %v2112, %v2176
      %v2178 = vpop.f32.mrf.mxu0
      %v2179 = vpop.f32.mrf.mxu0
      %v2180 = vadd.f32 %v2115, %v2179
      %v2181 = vpop.f32.mrf.mxu0
      %2182 = vdwg.mxu0
      %2183 = vmatprep.subr.bf16.mxu0 0
      %2184 = vmatpush1.bf16.msra.mxu0 %v1414
      %2185 = vmatprep.subr.bf16.mxu0 0
      %2186 = vmatpush1.bf16.msra.mxu0 %v1409
      %2187 = vmatprep.subr.bf16.mxu0 0
      %2188 = vmatpush1.bf16.msra.mxu0 %v1404
      %2189 = vmatprep.subr.bf16.mxu0 0
      %2190 = vmatpush1.bf16.msra.mxu0 %v1399
      %2191 = vmatprep.subr.bf16.mxu0 0
      %2192 = vmatpush1.bf16.msra.mxu0 %v1394
      %2193 = vmatprep.subr.bf16.mxu0 0
      %2194 = vmatpush1.bf16.msra.mxu0 %v1389
      %2195 = vmatprep.subr.bf16.mxu0 0
      %2196 = vmatpush1.bf16.msra.mxu0 %v1384
      %2197 = vmatprep.subr.bf16.mxu0 0
      %2198 = vmatpush1.bf16.msra.mxu0 %v1379
      %2199 = vmatprep.subr.bf16.mxu0 0
      %2200 = vmatpush2.bf16.msra.mxu0 0
      %2201 = vmatprep.subr.bf16.mxu0 0
      %2202 = vmatpush2.bf16.msra.mxu0 0
      %2203 = vmatprep.subr.bf16.mxu0 0
      %2204 = vmatpush2.bf16.msra.mxu0 0
      %2205 = vmatprep.subr.bf16.mxu0 0
      %2206 = vmatpush2.bf16.msra.mxu0 0
      %2207 = vmatprep.subr.bf16.mxu0 0
      %2208 = vmatpush2.bf16.msra.mxu0 0
      %2209 = vmatprep.subr.bf16.mxu0 0
      %2210 = vmatpush2.bf16.msra.mxu0 0
      %2211 = vmatprep.subr.bf16.mxu0 0
      %2212 = vmatpush2.bf16.msra.mxu0 0
      %2213 = vmatprep.subr.bf16.mxu0 0
      %2214 = vmatpush2.bf16.msra.mxu0 0
      %2215 = vmatprep.mubr.bf16.mxu0 0
      %2216 = vmatmul.mubr.bf16.gmra.mxu0 %v539
      %v2217 = vpop.f32.mrf.mxu0
      %v2218 = vadd.f32 %v2153, %v2217
      %v2219 = vpop.f32.mrf.mxu0
      %v2220 = vpop.f32.mrf.mxu0
      %v2221 = vadd.f32 %v2156, %v2220
      %v2222 = vpop.f32.mrf.mxu0
      %2223 = vmatprep.mubr.bf16.mxu0 0
      %2224 = vmatmul.mubr.bf16.gmra.mxu0 %v544
      %v2225 = vpop.f32.mrf.mxu0
      %v2226 = vadd.f32 %v2161, %v2225
      %v2227 = vpop.f32.mrf.mxu0
      %v2228 = vpop.f32.mrf.mxu0
      %v2229 = vadd.f32 %v2164, %v2228
      %v2230 = vpop.f32.mrf.mxu0
      %2231 = vmatprep.mubr.bf16.mxu0 0
      %2232 = vmatmul.mubr.bf16.gmra.mxu0 %v549
      %v2233 = vpop.f32.mrf.mxu0
      %v2234 = vadd.f32 %v2169, %v2233
      %v2235 = vpop.f32.mrf.mxu0
      %v2236 = vpop.f32.mrf.mxu0
      %v2237 = vadd.f32 %v2172, %v2236
      %v2238 = vpop.f32.mrf.mxu0
      %2239 = vmatprep.mubr.bf16.mxu0 0
      %2240 = vmatmul.mubr.bf16.gmra.mxu0 %v554
      %v2241 = vpop.f32.mrf.mxu0
      %v2242 = vadd.f32 %v2177, %v2241
      %v2243 = vpop.f32.mrf.mxu0
      %v2244 = vpop.f32.mrf.mxu0
      %v2245 = vadd.f32 %v2180, %v2244
      %v2246 = vpop.f32.mrf.mxu0
      %2247 = vdwg.mxu0
      %v2248 = vpack.c.bf16 %v1800, %v1796
      %v2249 = vpack.c.bf16 %v1802, %v1798
      %v2250 = vpack.c.bf16 %v2019, %v2015
      %v2251 = vpack.c.bf16 %v2021, %v2017
      %v2252 = vpack.c.bf16 %v2221, %v2218
      %v2253 = vpack.c.bf16 %v1810, %v1806
      %v2254 = vpack.c.bf16 %v1812, %v1808
      %v2255 = vpack.c.bf16 %v2029, %v2025
      %v2256 = vpack.c.bf16 %v2031, %v2027
      %v2257 = vpack.c.bf16 %v2229, %v2226
      %v2258 = vpack.c.bf16 %v1820, %v1816
      %v2259 = vpack.c.bf16 %v1822, %v1818
      %v2260 = vpack.c.bf16 %v2039, %v2035
      %v2261 = vpack.c.bf16 %v2041, %v2037
      %v2262 = vpack.c.bf16 %v2237, %v2234
      %v2263 = vpack.c.bf16 %v1830, %v1826
      %v2264 = vpack.c.bf16 %v1832, %v1828
      %v2265 = vpack.c.bf16 %v2049, %v2045
      %v2266 = vpack.c.bf16 %v2051, %v2047
      %v2267 = vpack.c.bf16 %v2245, %v2242
      %v2288 = vunpack.c.l.b16 %v2248
      %v2289 = vunpack.c.l.b16 %v2249
      %v2290 = vunpack.c.l.b16 %v2250
      %v2291 = vunpack.c.l.b16 %v2251
      %v2292 = vunpack.c.l.b16 %v2252
      %v2293 = vunpack.c.h.b16 %v2248
      %v2294 = vunpack.c.h.b16 %v2249
      %v2295 = vunpack.c.h.b16 %v2250
      %v2296 = vunpack.c.h.b16 %v2251
      %v2297 = vunpack.c.h.b16 %v2252
      %v2298 = vunpack.c.l.b16 %v2253
      %v2299 = vunpack.c.l.b16 %v2254
      %v2300 = vunpack.c.l.b16 %v2255
      %v2301 = vunpack.c.l.b16 %v2256
      %v2302 = vunpack.c.l.b16 %v2257
      %v2303 = vunpack.c.h.b16 %v2253
      %v2304 = vunpack.c.h.b16 %v2254
      %v2305 = vunpack.c.h.b16 %v2255
      %v2306 = vunpack.c.h.b16 %v2256
      %v2307 = vunpack.c.h.b16 %v2257
      %v2308 = vunpack.c.l.b16 %v2258
      %v2309 = vunpack.c.l.b16 %v2259
      %v2310 = vunpack.c.l.b16 %v2260
      %v2311 = vunpack.c.l.b16 %v2261
      %v2312 = vunpack.c.l.b16 %v2262
      %v2313 = vunpack.c.h.b16 %v2258
      %v2314 = vunpack.c.h.b16 %v2259
      %v2315 = vunpack.c.h.b16 %v2260
      %v2316 = vunpack.c.h.b16 %v2261
      %v2317 = vunpack.c.h.b16 %v2262
      %v2318 = vunpack.c.l.b16 %v2263
      %v2319 = vunpack.c.l.b16 %v2264
      %v2320 = vunpack.c.l.b16 %v2265
      %v2321 = vunpack.c.l.b16 %v2266
      %v2322 = vunpack.c.l.b16 %v2267
      %v2323 = vunpack.c.h.b16 %v2263
      %v2324 = vunpack.c.h.b16 %v2264
      %v2325 = vunpack.c.h.b16 %v2265
      %v2326 = vunpack.c.h.b16 %v2266
      %v2327 = vunpack.c.h.b16 %v2267
      %v2328 = vpack.c.b16 %v2289, %v2288
      %v2329 = vpack.c.b16 %v2291, %v2290
      %v2330 = vpack.c.b16 %v2292, %v2292
      %v2331 = vpack.c.b16 %v2294, %v2293
      %v2332 = vpack.c.b16 %v2296, %v2295
      %v2333 = vpack.c.b16 %v2297, %v2297
      %v2334 = vpack.c.b16 %v2299, %v2298
      %v2335 = vpack.c.b16 %v2301, %v2300
      %v2336 = vpack.c.b16 %v2302, %v2302
      %v2337 = vpack.c.b16 %v2304, %v2303
      %v2338 = vpack.c.b16 %v2306, %v2305
      %v2339 = vpack.c.b16 %v2307, %v2307
      %v2340 = vpack.c.b16 %v2309, %v2308
      %v2341 = vpack.c.b16 %v2311, %v2310
      %v2342 = vpack.c.b16 %v2312, %v2312
      %v2343 = vpack.c.b16 %v2314, %v2313
      %v2344 = vpack.c.b16 %v2316, %v2315
      %v2345 = vpack.c.b16 %v2317, %v2317
      %v2346 = vpack.c.b16 %v2319, %v2318
      %v2347 = vpack.c.b16 %v2321, %v2320
      %v2348 = vpack.c.b16 %v2322, %v2322
      %v2349 = vpack.c.b16 %v2324, %v2323
      %v2350 = vpack.c.b16 %v2326, %v2325
      %v2351 = vpack.c.b16 %v2327, %v2327
      %2376 = vst [vmem:[%s177] sm:$0xff] %v2328
      %2377 = vst [vmem:[%s177 + $0x8] sm:$0xff] %v2329
      %2378 = vst [vmem:[%s177 + $0x10] sm:$0xf] %v2330
      %2379 = vst [vmem:[%s177 + $0x14] sm:$0xff] %v2331
      %2380 = vst [vmem:[%s177 + $0x1c] sm:$0xff] %v2332
      %2381 = vst [vmem:[%s177 + $0x24] sm:$0xf] %v2333
      %2382 = vst [vmem:[%s177 + $0x28] sm:$0xff] %v2334
      %2383 = vst [vmem:[%s177 + $0x30] sm:$0xff] %v2335
      %2384 = vst [vmem:[%s177 + $0x38] sm:$0xf] %v2336
      %2385 = vst [vmem:[%s177 + $0x3c] sm:$0xff] %v2337
      %2386 = vst [vmem:[%s177 + $0x44] sm:$0xff] %v2338
      %2387 = vst [vmem:[%s177 + $0x4c] sm:$0xf] %v2339
      %2388 = vst [vmem:[%s177 + $0x50] sm:$0xff] %v2340
      %2389 = vst [vmem:[%s177 + $0x58] sm:$0xff] %v2341
      %2390 = vst [vmem:[%s177 + $0x60] sm:$0xf] %v2342
      %2391 = vst [vmem:[%s177 + $0x64] sm:$0xff] %v2343
      %2392 = vst [vmem:[%s177 + $0x6c] sm:$0xff] %v2344
      %2393 = vst [vmem:[%s177 + $0x74] sm:$0xf] %v2345
      %2394 = vst [vmem:[%s177 + $0x78] sm:$0xff] %v2346
      %2395 = vst [vmem:[%s177 + $0x80] sm:$0xff] %v2347
      %2396 = vst [vmem:[%s177 + $0x88] sm:$0xf] %v2348
      %2397 = vst [vmem:[%s177 + $0x8c] sm:$0xff] %v2349
      %2398 = vst [vmem:[%s177 + $0x94] sm:$0xff] %v2350
      %2399 = vst [vmem:[%s177 + $0x9c] sm:$0xf] %v2351
      %s2400 = smul.u32 8, %s14
      %p2401 = scmp.lt.s32.totalorder %s2400, 15
      %s2402 = scalar_select %p2401, %s2400, 15
      %s2403 = smul.addr %s2402, 5
      %s2404 = smul.addr %s2403, 4
      %s2405 = scalar_lea.vmem %s3, %s2404
      // Predicated region
      $region33: #{transformer_forward.17} parent=31 // pred_check
        %p2406 = pneg %p100
      $region34: #{transformer_forward.17} parent=31 // pred_check_branch
        %2408 = sbr.rel (%p2406) target = $region36
      $region35: #{transformer_forward.17} parent=31 // pred_region
        %s2409 = smul.u32 8, %s14
      $region36: #{transformer_forward.17} parent=31 // pred_fallthru
        _
    $region32: #{transformer_forward.17} parent=5 // pred_fallthru
      _
    %p2410 = scmp.le.s32.totalorder 2, %s9
    // Predicated region
    $region37: #{transformer_forward.17} parent=5 // pred_check
      %p2411 = pneg %p2410
    $region38: #{transformer_forward.17} parent=5 // pred_check_branch
      %2413 = sbr.rel (%p2411) target = $region40
    $region39: #{transformer_forward.17} parent=5 // pred_region
      %s2414 = ssub.s32 %s9, 2
      // Predicated region
      $region41: #{transformer_forward.17} parent=39 // pred_check
        %p2415 = pneg %p106
      $region42: #{transformer_forward.17} parent=39 // pred_check_branch
        %2417 = sbr.rel (%p2415) target = $region44
      $region43: #{transformer_forward.17} parent=39 // pred_region
        %s2418 = smul.u32 8, %s15
        %p2419 = scmp.lt.s32.totalorder %s2418, 15
        %s2420 = scalar_select %p2419, %s2418, 15
        %s2421 = smul.addr %s2420, 5
        %s2422 = smul.addr %s2421, 4
        %s2423 = scalar_lea.vmem %s3, %s2422
      $region44: #{transformer_forward.17} parent=39 // pred_fallthru
        _
    $region40: #{transformer_forward.17} parent=5 // pred_fallthru
      _
  $region6: #{transformer_forward.17} parent=0 // loop_footer
    %s13 = sadd.s32 1, %s9
  $region7: #{transformer_forward.17} parent=0 // loop_footer_branch
    %8 = sbr.rel target = $region3
  $region8: #{transformer_forward.17} parent=0 // loop_exit
    _

// kernel: transformer_forward.14
$region0: #{transformer_forward.14}
  #allocation0 [shape = 'u32[]', space=smem, size = 0x4, offset = 0x4, fixed_abs, tag = 'smem constant byte address 0x4 - core index']
  #allocation1 [shape = 'u32[144,128]{1,0:T(1,128)}', space=vmem, size = 0x12000, scoped, tag = 'internal scratch']
  %s0 = inlined_call_operand.vmem [shape: f32[2,256,128], index: 0, kind: input, shape index: {}]
  %s1 = inlined_call_operand.vmem [shape: f32[2,1,128], index: 1, kind: output, shape index: {0}]
  %s2 = inlined_call_operand.vmem [shape: f32[2,1,128], index: 2, kind: output, shape index: {1}]
  %3 = xla_tuple %s1, %s2
  %s4 = sld [smem:[#allocation0]]
  $region45: #{transformer_forward.14} parent=0
    _
  %s6 = ssub.s32 1, %s4
  %s7 = scalar_select 0, %s6, %s4
  loop: start=0, step=1, limit=4
  $region2: #{transformer_forward.14} parent=0 // loop_pre_header
    _
  $region3: #{transformer_forward.14} parent=0 // loop_header
    %s9 = sphi 0, %s13
    %p10 = scmp.ge.s32.totalorder %s9, 4
    %s19 = sphi 0, %s21
    %s22 = sphi 0, %s19
    %s23 = sphi 0, %s22
    %s39 = sphi 0, %s23
    %s45 = sphi 0, %s47
    %s48 = sphi 0, %s45
    %s49 = sphi 0, %s48
    %s65 = sphi 0, %s49
    %s71 = sphi 0, %s73
    %s74 = sphi 0, %s71
    %s75 = sphi 0, %s74
    %s91 = sphi 0, %s75
  $region4: #{transformer_forward.14} parent=0 // loop_header_branch
    %12 = sbr.rel (%p10) target = $region8
  $region5: #{transformer_forward.14} parent=0 // loop_body
    %s14 = ssub.s32 %s9, 1
    %s15 = ssub.s32 %s9, 2
    %s16 = sadd.s32 %s9, 1
    %s17 = ssub.s32 %s9, %s16
    %p18 = scmp.eq.s32.totalorder %s17, 0
    %s20 = sadd.s32 %s19, 1
    %s21 = scalar_select %p18, %s19, %s20
    %p24 = pneg %p18
    %p25 = scmp.eq.s32.totalorder %s9, 1
    %p26 = por %p24, %p25
    %p27 = scmp.ne.s32.totalorder %s19, %s22
    %p28 = scmp.eq.s32.totalorder %s9, 0
    %p29 = por %p27, %p28
    %p30 = scmp.ne.s32.totalorder %s19, %s22
    %p31 = scmp.eq.s32.totalorder %s14, 1
    %p32 = por %p30, %p31
    %p33 = scmp.ne.s32.totalorder %s22, %s23
    %p34 = scmp.eq.s32.totalorder %s14, 0
    %p35 = por %p33, %p34
    %p36 = scmp.ne.s32.totalorder %s22, %s23
    %p37 = scmp.eq.s32.totalorder %s15, 1
    %p38 = por %p36, %p37
    %p40 = scmp.ne.s32.totalorder %s23, %s39
    %p41 = scmp.eq.s32.totalorder %s15, 0
    %p42 = por %p40, %p41
    %s43 = ssub.s32 %s9, %s16
    %p44 = scmp.eq.s32.totalorder %s43, 0
    %s46 = sadd.s32 %s45, 1
    %s47 = scalar_select %p44, %s45, %s46
    %p50 = pneg %p44
    %p51 = scmp.eq.s32.totalorder %s9, 1
    %p52 = por %p50, %p51
    %p53 = scmp.ne.s32.totalorder %s45, %s48
    %p54 = scmp.eq.s32.totalorder %s9, 0
    %p55 = por %p53, %p54
    %p56 = scmp.ne.s32.totalorder %s45, %s48
    %p57 = scmp.eq.s32.totalorder %s14, 1
    %p58 = por %p56, %p57
    %p59 = scmp.ne.s32.totalorder %s48, %s49
    %p60 = scmp.eq.s32.totalorder %s14, 0
    %p61 = por %p59, %p60
    %p62 = scmp.ne.s32.totalorder %s48, %s49
    %p63 = scmp.eq.s32.totalorder %s15, 1
    %p64 = por %p62, %p63
    %p66 = scmp.ne.s32.totalorder %s49, %s65
    %p67 = scmp.eq.s32.totalorder %s15, 0
    %p68 = por %p66, %p67
    %s69 = ssub.s32 %s9, %s16
    %p70 = scmp.eq.s32.totalorder %s69, 0
    %s72 = sadd.s32 %s71, 1
    %s73 = scalar_select %p70, %s71, %s72
    %p76 = pneg %p70
    %p77 = scmp.eq.s32.totalorder %s9, 1
    %p78 = por %p76, %p77
    %p79 = scmp.ne.s32.totalorder %s71, %s74
    %p80 = scmp.eq.s32.totalorder %s9, 0
    %p81 = por %p79, %p80
    %p82 = scmp.ne.s32.totalorder %s71, %s74
    %p83 = scmp.eq.s32.totalorder %s14, 1
    %p84 = por %p82, %p83
    %p85 = scmp.ne.s32.totalorder %s74, %s75
    %p86 = scmp.eq.s32.totalorder %s14, 0
    %p87 = por %p85, %p86
    %p88 = scmp.ne.s32.totalorder %s74, %s75
    %p89 = scmp.eq.s32.totalorder %s15, 1
    %p90 = por %p88, %p89
    %p92 = scmp.ne.s32.totalorder %s75, %s91
    %p93 = scmp.eq.s32.totalorder %s15, 0
    %p94 = por %p92, %p93
    %p95 = scmp.le.s32.totalorder 1, %s9
    %p96 = scmp.lt.s32.totalorder %s9, 3
    %p97 = pnand %p95, %p96
    %p98 = pneg %p97
    // Predicated region
    $region9: #{transformer_forward.14} parent=5 // pred_check
      _
    $region10: #{transformer_forward.14} parent=5 // pred_check_branch
      %100 = sbr.rel (%p97) target = $region12
    $region11: #{transformer_forward.14} parent=5 // pred_region
      %s101 = ssub.s32 %s9, 1
    $region12: #{transformer_forward.14} parent=5 // pred_fallthru
      _
    %p102 = scmp.lt.s32.totalorder %s9, 2
    // Predicated region
    $region13: #{transformer_forward.14} parent=5 // pred_check
      %p103 = pneg %p102
    $region14: #{transformer_forward.14} parent=5 // pred_check_branch
      %105 = sbr.rel (%p103) target = $region16
    $region15: #{transformer_forward.14} parent=5 // pred_region
      // Predicated region
      $region17: #{transformer_forward.14} parent=15 // pred_check
        %p106 = pneg %p29
      $region18: #{transformer_forward.14} parent=15 // pred_check_branch
        %108 = sbr.rel (%p106) target = $region20
      $region19: #{transformer_forward.14} parent=15 // pred_region
        %p109 = scmp.lt.s32.totalorder %s9, 1
        %s110 = scalar_select %p109, %s9, 1
        %s111 = smul.addr %s110, 32
        %s112 = smul.addr %s111, 8
        %s113 = scalar_lea.vmem %s0, %s112
      $region20: #{transformer_forward.14} parent=15 // pred_fallthru
        _
    $region16: #{transformer_forward.14} parent=5 // pred_fallthru
      _
    %p114 = scmp.le.s32.totalorder 1, %s9
    %p115 = scmp.lt.s32.totalorder %s9, 3
    %p116 = pnand %p114, %p115
    %p117 = pneg %p116
    // Predicated region
    $region21: #{transformer_forward.14} parent=5 // pred_check
      _
    $region22: #{transformer_forward.14} parent=5 // pred_check_branch
      %119 = sbr.rel (%p116) target = $region24
    $region23: #{transformer_forward.14} parent=5 // pred_region
      %s120 = ssub.s32 %s9, 1
      %p121 = scmp.lt.s32.totalorder %s14, 1
      %s122 = scalar_select %p121, %s14, 1
      %s123 = smul.addr %s122, 32
      %s124 = smul.addr %s123, 8
      %s125 = scalar_lea.vmem %s0, %s124
      %p126 = pneg %p35
      %p127 = pneg %p32
      %p128 = pneg %p61
      %p129 = pneg %p58
      %p130 = scmp.lt.s32.totalorder %s14, 1
      %s131 = scalar_select %p130, %s14, 1
      %s132 = scalar_lea.vmem %s1, %s131
      %p133 = pneg %p87
      %p134 = pneg %p84
      %p135 = scmp.lt.s32.totalorder %s14, 1
      %s136 = scalar_select %p135, %s14, 1
      %s137 = scalar_lea.vmem %s2, %s136
      %p138 = scmp.lt.s32.totalorder %s14, 1
      %s139 = scalar_select %p138, %s14, 1
      %s140 = smul.addr %s139, 32
      %s141 = smul.addr %s140, 8
      %s142 = scalar_lea.vmem %s0, %s141
      %p143 = scmp.lt.s32.totalorder %s14, 1
      %s144 = scalar_select %p143, %s14, 1
      %s145 = scalar_lea.vmem %s1, %s144
      %p146 = scmp.lt.s32.totalorder %s14, 1
      %s147 = scalar_select %p146, %s14, 1
      %s148 = scalar_lea.vmem %s2, %s147
      %v149 = vld [vmem:[%s142] sm:$0xff]
      %v150 = vld [vmem:[%s142 + $0x8] sm:$0xff]
      %v151 = vld [vmem:[%s142 + $0x10] sm:$0xff]
      %v152 = vld [vmem:[%s142 + $0x18] sm:$0xff]
      %v153 = vld [vmem:[%s142 + $0x20] sm:$0xff]
      %v154 = vld [vmem:[%s142 + $0x28] sm:$0xff]
      %v155 = vld [vmem:[%s142 + $0x30] sm:$0xff]
      %v156 = vld [vmem:[%s142 + $0x38] sm:$0xff]
      %v157 = vld [vmem:[%s142 + $0x40] sm:$0xff]
      %v158 = vld [vmem:[%s142 + $0x48] sm:$0xff]
      %v159 = vld [vmem:[%s142 + $0x50] sm:$0xff]
      %v160 = vld [vmem:[%s142 + $0x58] sm:$0xff]
      %v161 = vld [vmem:[%s142 + $0x60] sm:$0xff]
      %v162 = vld [vmem:[%s142 + $0x68] sm:$0xff]
      %v163 = vld [vmem:[%s142 + $0x70] sm:$0xff]
      %v164 = vld [vmem:[%s142 + $0x78] sm:$0xff]
      %v165 = vld [vmem:[%s142 + $0x80] sm:$0xff]
      %v166 = vld [vmem:[%s142 + $0x88] sm:$0xff]
      %v167 = vld [vmem:[%s142 + $0x90] sm:$0xff]
      %v168 = vld [vmem:[%s142 + $0x98] sm:$0xff]
      %v169 = vld [vmem:[%s142 + $0xa0] sm:$0xff]
      %v170 = vld [vmem:[%s142 + $0xa8] sm:$0xff]
      %v171 = vld [vmem:[%s142 + $0xb0] sm:$0xff]
      %v172 = vld [vmem:[%s142 + $0xb8] sm:$0xff]
      %v173 = vld [vmem:[%s142 + $0xc0] sm:$0xff]
      %v174 = vld [vmem:[%s142 + $0xc8] sm:$0xff]
      %v175 = vld [vmem:[%s142 + $0xd0] sm:$0xff]
      %v176 = vld [vmem:[%s142 + $0xd8] sm:$0xff]
      %v177 = vld [vmem:[%s142 + $0xe0] sm:$0xff]
      %v178 = vld [vmem:[%s142 + $0xe8] sm:$0xff]
      %v179 = vld [vmem:[%s142 + $0xf0] sm:$0xff]
      %v180 = vld [vmem:[%s142 + $0xf8] sm:$0xff]
      %v181 = vadd.f32 %v149, %v150
      %v182 = vadd.f32 %v181, %v151
      %v183 = vadd.f32 %v182, %v152
      %v184 = vadd.f32 %v183, %v153
      %v185 = vadd.f32 %v184, %v154
      %v186 = vadd.f32 %v185, %v155
      %v187 = vadd.f32 %v186, %v156
      %v188 = vadd.f32 %v187, %v157
      %v189 = vadd.f32 %v188, %v158
      %v190 = vadd.f32 %v189, %v159
      %v191 = vadd.f32 %v190, %v160
      %v192 = vadd.f32 %v191, %v161
      %v193 = vadd.f32 %v192, %v162
      %v194 = vadd.f32 %v193, %v163
      %v195 = vadd.f32 %v194, %v164
      %v196 = vadd.f32 %v195, %v165
      %v197 = vadd.f32 %v196, %v166
      %v198 = vadd.f32 %v197, %v167
      %v199 = vadd.f32 %v198, %v168
      %v200 = vadd.f32 %v199, %v169
      %v201 = vadd.f32 %v200, %v170
      %v202 = vadd.f32 %v201, %v171
      %v203 = vadd.f32 %v202, %v172
      %v204 = vadd.f32 %v203, %v173
      %v205 = vadd.f32 %v204, %v174
      %v206 = vadd.f32 %v205, %v175
      %v207 = vadd.f32 %v206, %v176
      %v208 = vadd.f32 %v207, %v177
      %v209 = vadd.f32 %v208, %v178
      %v210 = vadd.f32 %v209, %v179
      %v211 = vadd.f32 %v210, %v180
      %v212 = vrot.slane %v211, 4
      %v213 = vadd.f32 %v211, %v212
      %v214 = vrot.slane %v213, 2
      %v215 = vadd.f32 %v213, %v214
      %v216 = vrot.slane %v215, 1
      %v217 = vadd.f32 %v215, %v216
      %v218 = vrcp.pop 256.0
      %v219 = vmul.f32 %v217, %v218
      %v220 = vsub.f32 %v149, %v219
      %v221 = vsub.f32 %v150, %v219
      %v222 = vsub.f32 %v151, %v219
      %v223 = vsub.f32 %v152, %v219
      %v224 = vsub.f32 %v153, %v219
      %v225 = vsub.f32 %v154, %v219
      %v226 = vsub.f32 %v155, %v219
      %v227 = vsub.f32 %v156, %v219
      %v228 = vsub.f32 %v157, %v219
      %v229 = vsub.f32 %v158, %v219
      %v230 = vsub.f32 %v159, %v219
      %v231 = vsub.f32 %v160, %v219
      %v232 = vsub.f32 %v161, %v219
      %v233 = vsub.f32 %v162, %v219
      %v234 = vsub.f32 %v163, %v219
      %v235 = vsub.f32 %v164, %v219
      %v236 = vsub.f32 %v165, %v219
      %v237 = vsub.f32 %v166, %v219
      %v238 = vsub.f32 %v167, %v219
      %v239 = vsub.f32 %v168, %v219
      %v240 = vsub.f32 %v169, %v219
      %v241 = vsub.f32 %v170, %v219
      %v242 = vsub.f32 %v171, %v219
      %v243 = vsub.f32 %v172, %v219
      %v244 = vsub.f32 %v173, %v219
      %v245 = vsub.f32 %v174, %v219
      %v246 = vsub.f32 %v175, %v219
      %v247 = vsub.f32 %v176, %v219
      %v248 = vsub.f32 %v177, %v219
      %v249 = vsub.f32 %v178, %v219
      %v250 = vsub.f32 %v179, %v219
      %v251 = vsub.f32 %v180, %v219
      %v252 = vmul.f32 %v220, %v220
      %v253 = vmul.f32 %v221, %v221
      %v254 = vmul.f32 %v222, %v222
      %v255 = vmul.f32 %v223, %v223
      %v256 = vmul.f32 %v224, %v224
      %v257 = vmul.f32 %v225, %v225
      %v258 = vmul.f32 %v226, %v226
      %v259 = vmul.f32 %v227, %v227
      %v260 = vmul.f32 %v228, %v228
      %v261 = vmul.f32 %v229, %v229
      %v262 = vmul.f32 %v230, %v230
      %v263 = vmul.f32 %v231, %v231
      %v264 = vmul.f32 %v232, %v232
      %v265 = vmul.f32 %v233, %v233
      %v266 = vmul.f32 %v234, %v234
      %v267 = vmul.f32 %v235, %v235
      %v268 = vmul.f32 %v236, %v236
      %v269 = vmul.f32 %v237, %v237
      %v270 = vmul.f32 %v238, %v238
      %v271 = vmul.f32 %v239, %v239
      %v272 = vmul.f32 %v240, %v240
      %v273 = vmul.f32 %v241, %v241
      %v274 = vmul.f32 %v242, %v242
      %v275 = vmul.f32 %v243, %v243
      %v276 = vmul.f32 %v244, %v244
      %v277 = vmul.f32 %v245, %v245
      %v278 = vmul.f32 %v246, %v246
      %v279 = vmul.f32 %v247, %v247
      %v280 = vmul.f32 %v248, %v248
      %v281 = vmul.f32 %v249, %v249
      %v282 = vmul.f32 %v250, %v250
      %v283 = vmul.f32 %v251, %v251
      %v284 = vadd.f32 %v252, %v253
      %v285 = vadd.f32 %v284, %v254
      %v286 = vadd.f32 %v285, %v255
      %v287 = vadd.f32 %v286, %v256
      %v288 = vadd.f32 %v287, %v257
      %v289 = vadd.f32 %v288, %v258
      %v290 = vadd.f32 %v289, %v259
      %v291 = vadd.f32 %v290, %v260
      %v292 = vadd.f32 %v291, %v261
      %v293 = vadd.f32 %v292, %v262
      %v294 = vadd.f32 %v293, %v263
      %v295 = vadd.f32 %v294, %v264
      %v296 = vadd.f32 %v295, %v265
      %v297 = vadd.f32 %v296, %v266
      %v298 = vadd.f32 %v297, %v267
      %v299 = vadd.f32 %v298, %v268
      %v300 = vadd.f32 %v299, %v269
      %v301 = vadd.f32 %v300, %v270
      %v302 = vadd.f32 %v301, %v271
      %v303 = vadd.f32 %v302, %v272
      %v304 = vadd.f32 %v303, %v273
      %v305 = vadd.f32 %v304, %v274
      %v306 = vadd.f32 %v305, %v275
      %v307 = vadd.f32 %v306, %v276
      %v308 = vadd.f32 %v307, %v277
      %v309 = vadd.f32 %v308, %v278
      %v310 = vadd.f32 %v309, %v279
      %v311 = vadd.f32 %v310, %v280
      %v312 = vadd.f32 %v311, %v281
      %v313 = vadd.f32 %v312, %v282
      %v314 = vadd.f32 %v313, %v283
      %v315 = vrot.slane %v314, 4
      %v316 = vadd.f32 %v314, %v315
      %v317 = vrot.slane %v316, 2
      %v318 = vadd.f32 %v316, %v317
      %v319 = vrot.slane %v318, 1
      %v320 = vadd.f32 %v318, %v319
      %v321 = vmul.f32 %v320, 0.003921569
      %322 = vst [vmem:[%s145] sm:$0x1] %v219
      %v323 = vadd.f32 %v321, 1e-05
      %v324 = vrsqrt.pop %v323
      %325 = vst [vmem:[%s148] sm:$0x1] %v324
      %p326 = scmp.lt.s32.totalorder %s14, 1
      %s327 = scalar_select %p326, %s14, 1
      %s328 = scalar_lea.vmem %s1, %s327
      %p329 = scmp.lt.s32.totalorder %s14, 1
      %s330 = scalar_select %p329, %s14, 1
      %s331 = scalar_lea.vmem %s2, %s330
      // Predicated region
      $region25: #{transformer_forward.14} parent=23 // pred_check
        %p332 = pneg %p58
      $region26: #{transformer_forward.14} parent=23 // pred_check_branch
        %334 = sbr.rel (%p332) target = $region28
      $region27: #{transformer_forward.14} parent=23 // pred_region
        _
      $region28: #{transformer_forward.14} parent=23 // pred_fallthru
        _
      // Predicated region
      $region29: #{transformer_forward.14} parent=23 // pred_check
        %p335 = pneg %p84
      $region30: #{transformer_forward.14} parent=23 // pred_check_branch
        %337 = sbr.rel (%p335) target = $region32
      $region31: #{transformer_forward.14} parent=23 // pred_region
        _
      $region32: #{transformer_forward.14} parent=23 // pred_fallthru
        _
    $region24: #{transformer_forward.14} parent=5 // pred_fallthru
      _
    %p338 = scmp.le.s32.totalorder 2, %s9
    // Predicated region
    $region33: #{transformer_forward.14} parent=5 // pred_check
      %p339 = pneg %p338
    $region34: #{transformer_forward.14} parent=5 // pred_check_branch
      %341 = sbr.rel (%p339) target = $region36
    $region35: #{transformer_forward.14} parent=5 // pred_region
      %s342 = ssub.s32 %s9, 2
      // Predicated region
      $region37: #{transformer_forward.14} parent=35 // pred_check
        %p343 = pneg %p64
      $region38: #{transformer_forward.14} parent=35 // pred_check_branch
        %345 = sbr.rel (%p343) target = $region40
      $region39: #{transformer_forward.14} parent=35 // pred_region
        %p346 = scmp.lt.s32.totalorder %s15, 1
        %s347 = scalar_select %p346, %s15, 1
        %s348 = scalar_lea.vmem %s1, %s347
      $region40: #{transformer_forward.14} parent=35 // pred_fallthru
        _
      // Predicated region
      $region41: #{transformer_forward.14} parent=35 // pred_check
        %p349 = pneg %p90
      $region42: #{transformer_forward.14} parent=35 // pred_check_branch
        %351 = sbr.rel (%p349) target = $region44
      $region43: #{transformer_forward.14} parent=35 // pred_region
        %p352 = scmp.lt.s32.totalorder %s15, 1
        %s353 = scalar_select %p352, %s15, 1
        %s354 = scalar_lea.vmem %s2, %s353
      $region44: #{transformer_forward.14} parent=35 // pred_fallthru
        _
    $region36: #{transformer_forward.14} parent=5 // pred_fallthru
      _
  $region6: #{transformer_forward.14} parent=0 // loop_footer
    %s13 = sadd.s32 1, %s9
  $region7: #{transformer_forward.14} parent=0 // loop_footer_branch
    %8 = sbr.rel target = $region3
  $region8: #{transformer_forward.14} parent=0 // loop_exit
    _

// kernel: transformer_forward.15
$region0: #{transformer_forward.15}
  #allocation0 [shape = 'u32[]', space=smem, size = 0x4, offset = 0x4, fixed_abs, tag = 'smem constant byte address 0x4 - core index']
  #allocation1 [shape = 'u32[144,128]{1,0:T(1,128)}', space=vmem, size = 0x12000, scoped, tag = 'internal scratch']
  #allocation2 [shape = 'bf16[256,128]{1,0:T(8,128)(2,1)}', space=vmem, size = 0x10000, scoped, tag = 'scratch operand']
  %s0 = inlined_call_operand.vmem [shape: bf16[2,256,128], index: 0, kind: input, shape index: {}]
  %s1 = inlined_call_operand.vmem [shape: bf16[2,128,256], index: 1, kind: input, shape index: {}]
  %s2 = inlined_call_operand.vmem [shape: bf16[2,256,128], index: 2, kind: input, shape index: {}]
  %s3 = inlined_call_operand.vmem [shape: f32[2,256,128], index: 3, kind: input, shape index: {}]
  %s4 = inlined_call_operand.vmem [shape: f32[2,1,128], index: 4, kind: input, shape index: {}]
  %s5 = inlined_call_operand.vmem [shape: f32[2,1,128], index: 5, kind: input, shape index: {}]
  %s6 = inlined_call_operand.vmem [shape: f32[2,256,128], index: 6, kind: output, shape index: {0}]
  %s7 = inlined_call_operand.hbm [shape: bf16[2,256,256], index: 7, kind: output, shape index: {1}]
  %8 = xla_tuple %s6, %s7
  %s9 = sld [smem:[#allocation0]]
  $region69: #{transformer_forward.15} parent=0
    _
  %s11 = ssub.s32 1, %s9
  %s12 = scalar_select 0, %s11, %s9
  $region1: #{transformer_forward.15} parent=0
    #allocation3 [shape = 'u8[262144]{0}', space=vmem, size = 0x40000, scoped, tag = 'output window, operand 1']
    #allocation4 [shape = 's32[2]{0}', space=sflag, size = 0x8, scoped, tag = 'scoped memory for transformer_forward.15']
    %13 = vsyncpa [#allocation4], 0
    %s14 = scalar_lea.sflag [#allocation4], 1
    %15 = vsyncpa %s14, 0
    loop: start=0, step=1, limit=4
    $region2: #{transformer_forward.15} parent=1 // loop_pre_header
      _
    $region3: #{transformer_forward.15} parent=1 // loop_header
      %s17 = sphi 0, %s21
      %p18 = scmp.ge.s32.totalorder %s17, 4
      %s24 = sphi 0, %s36
      %s25 = sphi 0, %s32
      %s26 = sphi 0, %s24
      %s27 = sphi 0, %s25
      %s28 = sphi 0, %s26
      %s29 = sphi 0, %s27
      %s41 = sphi 0, %s43
      %s44 = sphi 0, %s41
      %s45 = sphi 0, %s44
      %s61 = sphi 0, %s45
      %s67 = sphi 0, %s69
      %s70 = sphi 0, %s67
      %s71 = sphi 0, %s70
      %s87 = sphi 0, %s71
      %s93 = sphi 0, %s95
      %s96 = sphi 0, %s93
      %s97 = sphi 0, %s96
      %s113 = sphi 0, %s97
      %s121 = sphi 0, %s123
      %s124 = sphi 0, %s121
      %s125 = sphi 0, %s124
      %s141 = sphi 0, %s125
      %s147 = sphi 0, %s149
      %s150 = sphi 0, %s147
      %s151 = sphi 0, %s150
      %s167 = sphi 0, %s151
      %s173 = sphi 0, %s175
      %s176 = sphi 0, %s173
      %s177 = sphi 0, %s176
      %s193 = sphi 0, %s177
      %s201 = sphi 0, %s203
      %s204 = sphi 0, %s201
      %s205 = sphi 0, %s204
      %s221 = sphi 0, %s205
      %s229 = sphi 0, %s231
      %s232 = sphi 0, %s229
      %s233 = sphi 0, %s232
      %s249 = sphi 0, %s233
    $region4: #{transformer_forward.15} parent=1 // loop_header_branch
      %20 = sbr.rel (%p18) target = $region8
    $region5: #{transformer_forward.15} parent=1 // loop_body
      %s22 = ssub.s32 %s17, 1
      %s23 = ssub.s32 %s17, 2
      %s30 = sadd.s32 1, %s25
      %p31 = scmp.ge.s32.totalorder %s30, 1
      %s32 = scalar_select %p31, 0, %s30
      %s33 = sadd.s32 1, %s24
      %s34 = scalar_select %p31, %s33, %s24
      %p35 = scmp.ge.s32.totalorder %s34, 2
      %s36 = scalar_select %p35, 0, %s34
      %s37 = ssub.s32 %s24, %s36
      %s38 = ssub.s32 %s25, %s32
      %s39 = sor.u32 %s37, %s38
      %p40 = scmp.eq.s32.totalorder %s39, 0
      %s42 = sadd.s32 %s41, 1
      %s43 = scalar_select %p40, %s41, %s42
      %p46 = pneg %p40
      %p47 = scmp.eq.s32.totalorder %s17, 1
      %p48 = por %p46, %p47
      %p49 = scmp.ne.s32.totalorder %s41, %s44
      %p50 = scmp.eq.s32.totalorder %s17, 0
      %p51 = por %p49, %p50
      %p52 = scmp.ne.s32.totalorder %s41, %s44
      %p53 = scmp.eq.s32.totalorder %s22, 1
      %p54 = por %p52, %p53
      %p55 = scmp.ne.s32.totalorder %s44, %s45
      %p56 = scmp.eq.s32.totalorder %s22, 0
      %p57 = por %p55, %p56
      %p58 = scmp.ne.s32.totalorder %s44, %s45
      %p59 = scmp.eq.s32.totalorder %s23, 1
      %p60 = por %p58, %p59
      %p62 = scmp.ne.s32.totalorder %s45, %s61
      %p63 = scmp.eq.s32.totalorder %s23, 0
      %p64 = por %p62, %p63
      %s65 = ssub.s32 %s24, %s36
      %p66 = scmp.eq.s32.totalorder %s65, 0
      %s68 = sadd.s32 %s67, 1
      %s69 = scalar_select %p66, %s67, %s68
      %p72 = pneg %p66
      %p73 = scmp.eq.s32.totalorder %s17, 1
      %p74 = por %p72, %p73
      %p75 = scmp.ne.s32.totalorder %s67, %s70
      %p76 = scmp.eq.s32.totalorder %s17, 0
      %p77 = por %p75, %p76
      %p78 = scmp.ne.s32.totalorder %s67, %s70
      %p79 = scmp.eq.s32.totalorder %s22, 1
      %p80 = por %p78, %p79
      %p81 = scmp.ne.s32.totalorder %s70, %s71
      %p82 = scmp.eq.s32.totalorder %s22, 0
      %p83 = por %p81, %p82
      %p84 = scmp.ne.s32.totalorder %s70, %s71
      %p85 = scmp.eq.s32.totalorder %s23, 1
      %p86 = por %p84, %p85
      %p88 = scmp.ne.s32.totalorder %s71, %s87
      %p89 = scmp.eq.s32.totalorder %s23, 0
      %p90 = por %p88, %p89
      %s91 = ssub.s32 %s24, %s36
      %p92 = scmp.eq.s32.totalorder %s91, 0
      %s94 = sadd.s32 %s93, 1
      %s95 = scalar_select %p92, %s93, %s94
      %p98 = pneg %p92
      %p99 = scmp.eq.s32.totalorder %s17, 1
      %p100 = por %p98, %p99
      %p101 = scmp.ne.s32.totalorder %s93, %s96
      %p102 = scmp.eq.s32.totalorder %s17, 0
      %p103 = por %p101, %p102
      %p104 = scmp.ne.s32.totalorder %s93, %s96
      %p105 = scmp.eq.s32.totalorder %s22, 1
      %p106 = por %p104, %p105
      %p107 = scmp.ne.s32.totalorder %s96, %s97
      %p108 = scmp.eq.s32.totalorder %s22, 0
      %p109 = por %p107, %p108
      %p110 = scmp.ne.s32.totalorder %s96, %s97
      %p111 = scmp.eq.s32.totalorder %s23, 1
      %p112 = por %p110, %p111
      %p114 = scmp.ne.s32.totalorder %s97, %s113
      %p115 = scmp.eq.s32.totalorder %s23, 0
      %p116 = por %p114, %p115
      %s117 = ssub.s32 %s24, %s36
      %s118 = ssub.s32 %s25, %s32
      %s119 = sor.u32 %s117, %s118
      %p120 = scmp.eq.s32.totalorder %s119, 0
      %s122 = sadd.s32 %s121, 1
      %s123 = scalar_select %p120, %s121, %s122
      %p126 = pneg %p120
      %p127 = scmp.eq.s32.totalorder %s17, 1
      %p128 = por %p126, %p127
      %p129 = scmp.ne.s32.totalorder %s121, %s124
      %p130 = scmp.eq.s32.totalorder %s17, 0
      %p131 = por %p129, %p130
      %p132 = scmp.ne.s32.totalorder %s121, %s124
      %p133 = scmp.eq.s32.totalorder %s22, 1
      %p134 = por %p132, %p133
      %p135 = scmp.ne.s32.totalorder %s124, %s125
      %p136 = scmp.eq.s32.totalorder %s22, 0
      %p137 = por %p135, %p136
      %p138 = scmp.ne.s32.totalorder %s124, %s125
      %p139 = scmp.eq.s32.totalorder %s23, 1
      %p140 = por %p138, %p139
      %p142 = scmp.ne.s32.totalorder %s125, %s141
      %p143 = scmp.eq.s32.totalorder %s23, 0
      %p144 = por %p142, %p143
      %s145 = ssub.s32 %s24, %s36
      %p146 = scmp.eq.s32.totalorder %s145, 0
      %s148 = sadd.s32 %s147, 1
      %s149 = scalar_select %p146, %s147, %s148
      %p152 = pneg %p146
      %p153 = scmp.eq.s32.totalorder %s17, 1
      %p154 = por %p152, %p153
      %p155 = scmp.ne.s32.totalorder %s147, %s150
      %p156 = scmp.eq.s32.totalorder %s17, 0
      %p157 = por %p155, %p156
      %p158 = scmp.ne.s32.totalorder %s147, %s150
      %p159 = scmp.eq.s32.totalorder %s22, 1
      %p160 = por %p158, %p159
      %p161 = scmp.ne.s32.totalorder %s150, %s151
      %p162 = scmp.eq.s32.totalorder %s22, 0
      %p163 = por %p161, %p162
      %p164 = scmp.ne.s32.totalorder %s150, %s151
      %p165 = scmp.eq.s32.totalorder %s23, 1
      %p166 = por %p164, %p165
      %p168 = scmp.ne.s32.totalorder %s151, %s167
      %p169 = scmp.eq.s32.totalorder %s23, 0
      %p170 = por %p168, %p169
      %s171 = ssub.s32 %s24, %s36
      %p172 = scmp.eq.s32.totalorder %s171, 0
      %s174 = sadd.s32 %s173, 1
      %s175 = scalar_select %p172, %s173, %s174
      %p178 = pneg %p172
      %p179 = scmp.eq.s32.totalorder %s17, 1
      %p180 = por %p178, %p179
      %p181 = scmp.ne.s32.totalorder %s173, %s176
      %p182 = scmp.eq.s32.totalorder %s17, 0
      %p183 = por %p181, %p182
      %p184 = scmp.ne.s32.totalorder %s173, %s176
      %p185 = scmp.eq.s32.totalorder %s22, 1
      %p186 = por %p184, %p185
      %p187 = scmp.ne.s32.totalorder %s176, %s177
      %p188 = scmp.eq.s32.totalorder %s22, 0
      %p189 = por %p187, %p188
      %p190 = scmp.ne.s32.totalorder %s176, %s177
      %p191 = scmp.eq.s32.totalorder %s23, 1
      %p192 = por %p190, %p191
      %p194 = scmp.ne.s32.totalorder %s177, %s193
      %p195 = scmp.eq.s32.totalorder %s23, 0
      %p196 = por %p194, %p195
      %s197 = ssub.s32 %s24, %s36
      %s198 = ssub.s32 %s25, %s32
      %s199 = sor.u32 %s197, %s198
      %p200 = scmp.eq.s32.totalorder %s199, 0
      %s202 = sadd.s32 %s201, 1
      %s203 = scalar_select %p200, %s201, %s202
      %p206 = pneg %p200
      %p207 = scmp.eq.s32.totalorder %s17, 1
      %p208 = por %p206, %p207
      %p209 = scmp.ne.s32.totalorder %s201, %s204
      %p210 = scmp.eq.s32.totalorder %s17, 0
      %p211 = por %p209, %p210
      %p212 = scmp.ne.s32.totalorder %s201, %s204
      %p213 = scmp.eq.s32.totalorder %s22, 1
      %p214 = por %p212, %p213
      %p215 = scmp.ne.s32.totalorder %s204, %s205
      %p216 = scmp.eq.s32.totalorder %s22, 0
      %p217 = por %p215, %p216
      %p218 = scmp.ne.s32.totalorder %s204, %s205
      %p219 = scmp.eq.s32.totalorder %s23, 1
      %p220 = por %p218, %p219
      %p222 = scmp.ne.s32.totalorder %s205, %s221
      %p223 = scmp.eq.s32.totalorder %s23, 0
      %p224 = por %p222, %p223
      %s225 = ssub.s32 %s24, %s36
      %s226 = ssub.s32 %s25, %s32
      %s227 = sor.u32 %s225, %s226
      %p228 = scmp.eq.s32.totalorder %s227, 0
      %s230 = sadd.s32 %s229, 1
      %s231 = scalar_select %p228, %s229, %s230
      %p234 = pneg %p228
      %p235 = scmp.eq.s32.totalorder %s17, 1
      %p236 = por %p234, %p235
      %p237 = scmp.ne.s32.totalorder %s229, %s232
      %p238 = scmp.eq.s32.totalorder %s17, 0
      %p239 = por %p237, %p238
      %p240 = scmp.ne.s32.totalorder %s229, %s232
      %p241 = scmp.eq.s32.totalorder %s22, 1
      %p242 = por %p240, %p241
      %p243 = scmp.ne.s32.totalorder %s232, %s233
      %p244 = scmp.eq.s32.totalorder %s22, 0
      %p245 = por %p243, %p244
      %p246 = scmp.ne.s32.totalorder %s232, %s233
      %p247 = scmp.eq.s32.totalorder %s23, 1
      %p248 = por %p246, %p247
      %p250 = scmp.ne.s32.totalorder %s233, %s249
      %p251 = scmp.eq.s32.totalorder %s23, 0
      %p252 = por %p250, %p251
      %p253 = scmp.le.s32.totalorder 1, %s17
      %p254 = scmp.lt.s32.totalorder %s17, 3
      %p255 = pnand %p253, %p254
      %p256 = pneg %p255
      // Predicated region
      $region9: #{transformer_forward.15} parent=5 // pred_check
        _
      $region10: #{transformer_forward.15} parent=5 // pred_check_branch
        %258 = sbr.rel (%p255) target = $region12
      $region11: #{transformer_forward.15} parent=5 // pred_region
        %s259 = ssub.s32 %s17, 1
      $region12: #{transformer_forward.15} parent=5 // pred_fallthru
        _
      %p260 = scmp.lt.s32.totalorder %s17, 2
      // Predicated region
      $region13: #{transformer_forward.15} parent=5 // pred_check
        %p261 = pneg %p260
      $region14: #{transformer_forward.15} parent=5 // pred_check_branch
        %263 = sbr.rel (%p261) target = $region16
      $region15: #{transformer_forward.15} parent=5 // pred_region
        // Predicated region
        $region17: #{transformer_forward.15} parent=15 // pred_check
          %p264 = pneg %p51
        $region18: #{transformer_forward.15} parent=15 // pred_check_branch
          %266 = sbr.rel (%p264) target = $region20
        $region19: #{transformer_forward.15} parent=15 // pred_region
          %s267 = smul.u32 32, %s25
          %p268 = scmp.lt.s32.totalorder %s24, 1
          %s269 = scalar_select %p268, %s24, 1
          %p270 = scmp.lt.s32.totalorder %s267, 31
          %s271 = scalar_select %p270, %s267, 31
          %s272 = smul.addr %s269, 32
          %s273 = sadd.s32 %s271, %s272
          %s274 = smul.addr %s273, 4
          %s275 = scalar_lea.vmem %s0, %s274
          %s276 = smul.u32 32, %s25
        $region20: #{transformer_forward.15} parent=15 // pred_fallthru
          _
        // Predicated region
        $region21: #{transformer_forward.15} parent=15 // pred_check
          %p277 = pneg %p77
        $region22: #{transformer_forward.15} parent=15 // pred_check_branch
          %279 = sbr.rel (%p277) target = $region24
        $region23: #{transformer_forward.15} parent=15 // pred_region
          %p280 = scmp.lt.s32.totalorder %s24, 1
          %s281 = scalar_select %p280, %s24, 1
          %s282 = smul.addr %s281, 32
          %s283 = smul.addr %s282, 4
          %s284 = scalar_lea.vmem %s1, %s283
        $region24: #{transformer_forward.15} parent=15 // pred_fallthru
          _
        // Predicated region
        $region25: #{transformer_forward.15} parent=15 // pred_check
          %p285 = pneg %p103
        $region26: #{transformer_forward.15} parent=15 // pred_check_branch
          %287 = sbr.rel (%p285) target = $region28
        $region27: #{transformer_forward.15} parent=15 // pred_region
          %p288 = scmp.lt.s32.totalorder %s24, 1
          %s289 = scalar_select %p288, %s24, 1
          %s290 = smul.addr %s289, 32
          %s291 = smul.addr %s290, 4
          %s292 = scalar_lea.vmem %s2, %s291
        $region28: #{transformer_forward.15} parent=15 // pred_fallthru
          _
        // Predicated region
        $region29: #{transformer_forward.15} parent=15 // pred_check
          %p293 = pneg %p131
        $region30: #{transformer_forward.15} parent=15 // pred_check_branch
          %295 = sbr.rel (%p293) target = $region32
        $region31: #{transformer_forward.15} parent=15 // pred_region
          %s296 = smul.u32 32, %s25
          %p297 = scmp.lt.s32.totalorder %s24, 1
          %s298 = scalar_select %p297, %s24, 1
          %p299 = scmp.lt.s32.totalorder %s296, 31
          %s300 = scalar_select %p299, %s296, 31
          %s301 = smul.addr %s298, 32
          %s302 = sadd.s32 %s300, %s301
          %s303 = smul.addr %s302, 8
          %s304 = scalar_lea.vmem %s3, %s303
          %s305 = smul.u32 32, %s25
        $region32: #{transformer_forward.15} parent=15 // pred_fallthru
          _
        // Predicated region
        $region33: #{transformer_forward.15} parent=15 // pred_check
          %p306 = pneg %p157
        $region34: #{transformer_forward.15} parent=15 // pred_check_branch
          %308 = sbr.rel (%p306) target = $region36
        $region35: #{transformer_forward.15} parent=15 // pred_region
          %p309 = scmp.lt.s32.totalorder %s24, 1
          %s310 = scalar_select %p309, %s24, 1
          %s311 = scalar_lea.vmem %s4, %s310
        $region36: #{transformer_forward.15} parent=15 // pred_fallthru
          _
        // Predicated region
        $region37: #{transformer_forward.15} parent=15 // pred_check
          %p312 = pneg %p183
        $region38: #{transformer_forward.15} parent=15 // pred_check_branch
          %314 = sbr.rel (%p312) target = $region40
        $region39: #{transformer_forward.15} parent=15 // pred_region
          %p315 = scmp.lt.s32.totalorder %s24, 1
          %s316 = scalar_select %p315, %s24, 1
          %s317 = scalar_lea.vmem %s5, %s316
        $region40: #{transformer_forward.15} parent=15 // pred_fallthru
          _
      $region16: #{transformer_forward.15} parent=5 // pred_fallthru
        _
      %p318 = scmp.le.s32.totalorder 1, %s17
      %p319 = scmp.lt.s32.totalorder %s17, 3
      %p320 = pnand %p318, %p319
      %p321 = pneg %p320
      // Predicated region
      $region41: #{transformer_forward.15} parent=5 // pred_check
        _
      $region42: #{transformer_forward.15} parent=5 // pred_check_branch
        %323 = sbr.rel (%p320) target = $region44
      $region43: #{transformer_forward.15} parent=5 // pred_region
        %s324 = ssub.s32 %s17, 1
        %s325 = smul.u32 32, %s27
        %p326 = scmp.lt.s32.totalorder %s26, 1
        %s327 = scalar_select %p326, %s26, 1
        %p328 = scmp.lt.s32.totalorder %s325, 31
        %s329 = scalar_select %p328, %s325, 31
        %s330 = smul.addr %s327, 32
        %s331 = sadd.s32 %s329, %s330
        %s332 = smul.addr %s331, 4
        %s333 = scalar_lea.vmem %s0, %s332
        %p334 = pneg %p57
        %p335 = pneg %p54
        %p336 = scmp.lt.s32.totalorder %s26, 1
        %s337 = scalar_select %p336, %s26, 1
        %s338 = smul.addr %s337, 32
        %s339 = smul.addr %s338, 4
        %s340 = scalar_lea.vmem %s1, %s339
        %p341 = pneg %p83
        %p342 = pneg %p80
        %p343 = scmp.lt.s32.totalorder %s26, 1
        %s344 = scalar_select %p343, %s26, 1
        %s345 = smul.addr %s344, 32
        %s346 = smul.addr %s345, 4
        %s347 = scalar_lea.vmem %s2, %s346
        %p348 = pneg %p109
        %p349 = pneg %p106
        %s350 = smul.u32 32, %s27
        %p351 = scmp.lt.s32.totalorder %s26, 1
        %s352 = scalar_select %p351, %s26, 1
        %p353 = scmp.lt.s32.totalorder %s350, 31
        %s354 = scalar_select %p353, %s350, 31
        %s355 = smul.addr %s352, 32
        %s356 = sadd.s32 %s354, %s355
        %s357 = smul.addr %s356, 8
        %s358 = scalar_lea.vmem %s3, %s357
        %p359 = pneg %p137
        %p360 = pneg %p134
        %p361 = scmp.lt.s32.totalorder %s26, 1
        %s362 = scalar_select %p361, %s26, 1
        %s363 = scalar_lea.vmem %s4, %s362
        %p364 = pneg %p163
        %p365 = pneg %p160
        %p366 = scmp.lt.s32.totalorder %s26, 1
        %s367 = scalar_select %p366, %s26, 1
        %s368 = scalar_lea.vmem %s5, %s367
        %p369 = pneg %p189
        %p370 = pneg %p186
        %p371 = pneg %p217
        %p372 = pneg %p214
        %s373 = smul.u32 32, %s27
        %p374 = scmp.lt.s32.totalorder %s26, 1
        %s375 = scalar_select %p374, %s26, 1
        %p376 = scmp.lt.s32.totalorder %s373, 31
        %s377 = scalar_select %p376, %s373, 31
        %s378 = smul.addr %s375, 32
        %s379 = sadd.s32 %s377, %s378
        %s380 = smul.addr %s379, 8
        %s381 = scalar_lea.vmem %s6, %s380
        %p382 = pneg %p245
        %p383 = pneg %p242
        %s384 = sand.u32 %s232, 1
        %s385 = scalar_lea.sflag [#allocation4], %s384
        %s386 = sand.u32 %s232, 1
        %s387 = smul.addr %s386, 256
        %s388 = scalar_lea.vmem [#allocation3], %s387
        %s389 = smul.u32 32, %s27
        %p390 = scmp.lt.s32.totalorder %s26, 1
        %s391 = scalar_select %p390, %s26, 1
        %p392 = scmp.lt.s32.totalorder %s389, 31
        %s393 = scalar_select %p392, %s389, 31
        %s394 = smul.addr %s391, 32
        %s395 = sadd.s32 %s393, %s394
        %s396 = smul.addr %s395, 4
        %s397 = scalar_lea.vmem %s0, %s396
        %s398 = smul.u32 32, %s27
        %p399 = scmp.lt.s32.totalorder %s26, 1
        %s400 = scalar_select %p399, %s26, 1
        %s401 = smul.addr %s400, 32
        %s402 = smul.addr %s401, 4
        %s403 = scalar_lea.vmem %s1, %s402
        %p404 = scmp.lt.s32.totalorder %s26, 1
        %s405 = scalar_select %p404, %s26, 1
        %s406 = smul.addr %s405, 32
        %s407 = smul.addr %s406, 4
        %s408 = scalar_lea.vmem %s2, %s407
        %s409 = smul.u32 32, %s27
        %p410 = scmp.lt.s32.totalorder %s26, 1
        %s411 = scalar_select %p410, %s26, 1
        %p412 = scmp.lt.s32.totalorder %s409, 31
        %s413 = scalar_select %p412, %s409, 31
        %s414 = smul.addr %s411, 32
        %s415 = sadd.s32 %s413, %s414
        %s416 = smul.addr %s415, 8
        %s417 = scalar_lea.vmem %s3, %s416
        %s418 = smul.u32 32, %s27
        %p419 = scmp.lt.s32.totalorder %s26, 1
        %s420 = scalar_select %p419, %s26, 1
        %s421 = scalar_lea.vmem %s4, %s420
        %p422 = scmp.lt.s32.totalorder %s26, 1
        %s423 = scalar_select %p422, %s26, 1
        %s424 = scalar_lea.vmem %s5, %s423
        %s425 = smul.u32 32, %s27
        %p426 = scmp.lt.s32.totalorder %s26, 1
        %s427 = scalar_select %p426, %s26, 1
        %p428 = scmp.lt.s32.totalorder %s425, 31
        %s429 = scalar_select %p428, %s425, 31
        %s430 = smul.addr %s427, 32
        %s431 = sadd.s32 %s429, %s430
        %s432 = smul.addr %s431, 8
        %s433 = scalar_lea.vmem %s6, %s432
        %s434 = smul.u32 32, %s27
        %s435 = smul.u32 32, %s27
        %p437 = scmp.eq.s32.totalorder %s27, 0
        // Predicated region
        $region45: #{transformer_forward.15} parent=43 // pred_check
          %p438 = pneg %p437
        $region46: #{transformer_forward.15} parent=43 // pred_check_branch
          %440 = sbr.rel (%p438) target = $region48
        $region47: #{transformer_forward.15} parent=43 // pred_region
          %v441 = vld [vmem:[%s408] sm:$0xf]
          %v442 = vld [vmem:[%s408 + $0x4] sm:$0xf]
          %v443 = vld [vmem:[%s408 + $0x8] sm:$0xf]
          %v444 = vld [vmem:[%s408 + $0xc] sm:$0xf]
          %v445 = vld [vmem:[%s408 + $0x10] sm:$0xf]
          %v446 = vld [vmem:[%s408 + $0x14] sm:$0xf]
          %v447 = vld [vmem:[%s408 + $0x18] sm:$0xf]
          %v448 = vld [vmem:[%s408 + $0x1c] sm:$0xf]
          %v449 = vld [vmem:[%s408 + $0x20] sm:$0xf]
          %v450 = vld [vmem:[%s408 + $0x24] sm:$0xf]
          %v451 = vld [vmem:[%s408 + $0x28] sm:$0xf]
          %v452 = vld [vmem:[%s408 + $0x2c] sm:$0xf]
          %v453 = vld [vmem:[%s408 + $0x30] sm:$0xf]
          %v454 = vld [vmem:[%s408 + $0x34] sm:$0xf]
          %v455 = vld [vmem:[%s408 + $0x38] sm:$0xf]
          %v456 = vld [vmem:[%s408 + $0x3c] sm:$0xf]
          %v457 = vld [vmem:[%s408 + $0x40] sm:$0xf]
          %v458 = vld [vmem:[%s408 + $0x44] sm:$0xf]
          %v459 = vld [vmem:[%s408 + $0x48] sm:$0xf]
          %v460 = vld [vmem:[%s408 + $0x4c] sm:$0xf]
          %v461 = vld [vmem:[%s408 + $0x50] sm:$0xf]
          %v462 = vld [vmem:[%s408 + $0x54] sm:$0xf]
          %v463 = vld [vmem:[%s408 + $0x58] sm:$0xf]
          %v464 = vld [vmem:[%s408 + $0x5c] sm:$0xf]
          %v465 = vld [vmem:[%s408 + $0x60] sm:$0xf]
          %v466 = vld [vmem:[%s408 + $0x64] sm:$0xf]
          %v467 = vld [vmem:[%s408 + $0x68] sm:$0xf]
          %v468 = vld [vmem:[%s408 + $0x6c] sm:$0xf]
          %v469 = vld [vmem:[%s408 + $0x70] sm:$0xf]
          %v470 = vld [vmem:[%s408 + $0x74] sm:$0xf]
          %v471 = vld [vmem:[%s408 + $0x78] sm:$0xf]
          %v472 = vld [vmem:[%s408 + $0x7c] sm:$0xf]
          %v473 = vunpack.c.l.bf16 %v441
          %v474 = vunpack.c.l.bf16 %v442
          %v475 = vunpack.c.l.bf16 %v443
          %v476 = vunpack.c.l.bf16 %v444
          %v477 = vunpack.c.l.bf16 %v445
          %v478 = vunpack.c.l.bf16 %v446
          %v479 = vunpack.c.l.bf16 %v447
          %v480 = vunpack.c.l.bf16 %v448
          %v481 = vunpack.c.l.bf16 %v449
          %v482 = vunpack.c.l.bf16 %v450
          %v483 = vunpack.c.l.bf16 %v451
          %v484 = vunpack.c.l.bf16 %v452
          %v485 = vunpack.c.l.bf16 %v453
          %v486 = vunpack.c.l.bf16 %v454
          %v487 = vunpack.c.l.bf16 %v455
          %v488 = vunpack.c.l.bf16 %v456
          %v489 = vunpack.c.l.bf16 %v457
          %v490 = vunpack.c.l.bf16 %v458
          %v491 = vunpack.c.l.bf16 %v459
          %v492 = vunpack.c.l.bf16 %v460
          %v493 = vunpack.c.l.bf16 %v461
          %v494 = vunpack.c.l.bf16 %v462
          %v495 = vunpack.c.l.bf16 %v463
          %v496 = vunpack.c.l.bf16 %v464
          %v497 = vunpack.c.l.bf16 %v465
          %v498 = vunpack.c.l.bf16 %v466
          %v499 = vunpack.c.l.bf16 %v467
          %v500 = vunpack.c.l.bf16 %v468
          %v501 = vunpack.c.l.bf16 %v469
          %v502 = vunpack.c.l.bf16 %v470
          %v503 = vunpack.c.l.bf16 %v471
          %v504 = vunpack.c.l.bf16 %v472
          %v505 = vmul.f32 %v473, %v473
          %v506 = vmul.f32 %v474, %v474
          %v507 = vmul.f32 %v475, %v475
          %v508 = vmul.f32 %v476, %v476
          %v509 = vmul.f32 %v477, %v477
          %v510 = vmul.f32 %v478, %v478
          %v511 = vmul.f32 %v479, %v479
          %v512 = vmul.f32 %v480, %v480
          %v513 = vmul.f32 %v481, %v481
          %v514 = vmul.f32 %v482, %v482
          %v515 = vmul.f32 %v483, %v483
          %v516 = vmul.f32 %v484, %v484
          %v517 = vmul.f32 %v485, %v485
          %v518 = vmul.f32 %v486, %v486
          %v519 = vmul.f32 %v487, %v487
          %v520 = vmul.f32 %v488, %v488
          %v521 = vmul.f32 %v489, %v489
          %v522 = vmul.f32 %v490, %v490
          %v523 = vmul.f32 %v491, %v491
          %v524 = vmul.f32 %v492, %v492
          %v525 = vmul.f32 %v493, %v493
          %v526 = vmul.f32 %v494, %v494
          %v527 = vmul.f32 %v495, %v495
          %v528 = vmul.f32 %v496, %v496
          %v529 = vmul.f32 %v497, %v497
          %v530 = vmul.f32 %v498, %v498
          %v531 = vmul.f32 %v499, %v499
          %v532 = vmul.f32 %v500, %v500
          %v533 = vmul.f32 %v501, %v501
          %v534 = vmul.f32 %v502, %v502
          %v535 = vmul.f32 %v503, %v503
          %v536 = vmul.f32 %v504, %v504
          %v537 = vpack.c.bf16 %v506, %v505
          %v538 = vpack.c.bf16 %v508, %v507
          %v539 = vpack.c.bf16 %v510, %v509
          %v540 = vpack.c.bf16 %v512, %v511
          %v541 = vpack.c.bf16 %v514, %v513
          %v542 = vpack.c.bf16 %v516, %v515
          %v543 = vpack.c.bf16 %v518, %v517
          %v544 = vpack.c.bf16 %v520, %v519
          %v545 = vpack.c.bf16 %v522, %v521
          %v546 = vpack.c.bf16 %v524, %v523
          %v547 = vpack.c.bf16 %v526, %v525
          %v548 = vpack.c.bf16 %v528, %v527
          %v549 = vpack.c.bf16 %v530, %v529
          %v550 = vpack.c.bf16 %v532, %v531
          %v551 = vpack.c.bf16 %v534, %v533
          %v552 = vpack.c.bf16 %v536, %v535
          %v569 = vunpack.c.l.b16 %v537
          %v570 = vunpack.c.h.b16 %v537
          %v571 = vunpack.c.l.b16 %v538
          %v572 = vunpack.c.h.b16 %v538
          %v573 = vunpack.c.l.b16 %v539
          %v574 = vunpack.c.h.b16 %v539
          %v575 = vunpack.c.l.b16 %v540
          %v576 = vunpack.c.h.b16 %v540
          %v577 = vunpack.c.l.b16 %v541
          %v578 = vunpack.c.h.b16 %v541
          %v579 = vunpack.c.l.b16 %v542
          %v580 = vunpack.c.h.b16 %v542
          %v581 = vunpack.c.l.b16 %v543
          %v582 = vunpack.c.h.b16 %v543
          %v583 = vunpack.c.l.b16 %v544
          %v584 = vunpack.c.h.b16 %v544
          %v585 = vunpack.c.l.b16 %v545
          %v586 = vunpack.c.h.b16 %v545
          %v587 = vunpack.c.l.b16 %v546
          %v588 = vunpack.c.h.b16 %v546
          %v589 = vunpack.c.l.b16 %v547
          %v590 = vunpack.c.h.b16 %v547
          %v591 = vunpack.c.l.b16 %v548
          %v592 = vunpack.c.h.b16 %v548
          %v593 = vunpack.c.l.b16 %v549
          %v594 = vunpack.c.h.b16 %v549
          %v595 = vunpack.c.l.b16 %v550
          %v596 = vunpack.c.h.b16 %v550
          %v597 = vunpack.c.l.b16 %v551
          %v598 = vunpack.c.h.b16 %v551
          %v599 = vunpack.c.l.b16 %v552
          %v600 = vunpack.c.h.b16 %v552
          %v601 = vpack.c.b16 %v569, %v569
          %v602 = vpack.c.b16 %v570, %v570
          %v603 = vpack.c.b16 %v571, %v571
          %v604 = vpack.c.b16 %v572, %v572
          %v605 = vpack.c.b16 %v573, %v573
          %v606 = vpack.c.b16 %v574, %v574
          %v607 = vpack.c.b16 %v575, %v575
          %v608 = vpack.c.b16 %v576, %v576
          %v609 = vpack.c.b16 %v577, %v577
          %v610 = vpack.c.b16 %v578, %v578
          %v611 = vpack.c.b16 %v579, %v579
          %v612 = vpack.c.b16 %v580, %v580
          %v613 = vpack.c.b16 %v581, %v581
          %v614 = vpack.c.b16 %v582, %v582
          %v615 = vpack.c.b16 %v583, %v583
          %v616 = vpack.c.b16 %v584, %v584
          %v617 = vpack.c.b16 %v585, %v585
          %v618 = vpack.c.b16 %v586, %v586
          %v619 = vpack.c.b16 %v587, %v587
          %v620 = vpack.c.b16 %v588, %v588
          %v621 = vpack.c.b16 %v589, %v589
          %v622 = vpack.c.b16 %v590, %v590
          %v623 = vpack.c.b16 %v591, %v591
          %v624 = vpack.c.b16 %v592, %v592
          %v625 = vpack.c.b16 %v593, %v593
          %v626 = vpack.c.b16 %v594, %v594
          %v627 = vpack.c.b16 %v595, %v595
          %v628 = vpack.c.b16 %v596, %v596
          %v629 = vpack.c.b16 %v597, %v597
          %v630 = vpack.c.b16 %v598, %v598
          %v631 = vpack.c.b16 %v599, %v599
          %v632 = vpack.c.b16 %v600, %v600
          %665 = vst [vmem:[#allocation2] sm:$0xf] %v601
          %666 = vst [vmem:[#allocation2 + $0x4] sm:$0xf] %v602
          %667 = vst [vmem:[#allocation2 + $0x8] sm:$0xf] %v603
          %668 = vst [vmem:[#allocation2 + $0xc] sm:$0xf] %v604
          %669 = vst [vmem:[#allocation2 + $0x10] sm:$0xf] %v605
          %670 = vst [vmem:[#allocation2 + $0x14] sm:$0xf] %v606
          %671 = vst [vmem:[#allocation2 + $0x18] sm:$0xf] %v607
          %672 = vst [vmem:[#allocation2 + $0x1c] sm:$0xf] %v608
          %673 = vst [vmem:[#allocation2 + $0x20] sm:$0xf] %v609
          %674 = vst [vmem:[#allocation2 + $0x24] sm:$0xf] %v610
          %675 = vst [vmem:[#allocation2 + $0x28] sm:$0xf] %v611
          %676 = vst [vmem:[#allocation2 + $0x2c] sm:$0xf] %v612
          %677 = vst [vmem:[#allocation2 + $0x30] sm:$0xf] %v613
          %678 = vst [vmem:[#allocation2 + $0x34] sm:$0xf] %v614
          %679 = vst [vmem:[#allocation2 + $0x38] sm:$0xf] %v615
          %680 = vst [vmem:[#allocation2 + $0x3c] sm:$0xf] %v616
          %681 = vst [vmem:[#allocation2 + $0x40] sm:$0xf] %v617
          %682 = vst [vmem:[#allocation2 + $0x44] sm:$0xf] %v618
          %683 = vst [vmem:[#allocation2 + $0x48] sm:$0xf] %v619
          %684 = vst [vmem:[#allocation2 + $0x4c] sm:$0xf] %v620
          %685 = vst [vmem:[#allocation2 + $0x50] sm:$0xf] %v621
          %686 = vst [vmem:[#allocation2 + $0x54] sm:$0xf] %v622
          %687 = vst [vmem:[#allocation2 + $0x58] sm:$0xf] %v623
          %688 = vst [vmem:[#allocation2 + $0x5c] sm:$0xf] %v624
          %689 = vst [vmem:[#allocation2 + $0x60] sm:$0xf] %v625
          %690 = vst [vmem:[#allocation2 + $0x64] sm:$0xf] %v626
          %691 = vst [vmem:[#allocation2 + $0x68] sm:$0xf] %v627
          %692 = vst [vmem:[#allocation2 + $0x6c] sm:$0xf] %v628
          %693 = vst [vmem:[#allocation2 + $0x70] sm:$0xf] %v629
          %694 = vst [vmem:[#allocation2 + $0x74] sm:$0xf] %v630
          %695 = vst [vmem:[#allocation2 + $0x78] sm:$0xf] %v631
          %696 = vst [vmem:[#allocation2 + $0x7c] sm:$0xf] %v632
        $region48: #{transformer_forward.15} parent=43 // pred_fallthru
          _
        %v697 = vld [vmem:[%s397] sm:$0xf]
        %v698 = vld [vmem:[%s397 + $0x4] sm:$0xf]
        %v699 = vld [vmem:[%s397 + $0x8] sm:$0xf]
        %v700 = vld [vmem:[%s397 + $0xc] sm:$0xf]
        %v701 = vld [vmem:[%s397 + $0x10] sm:$0xf]
        %v702 = vld [vmem:[%s397 + $0x14] sm:$0xf]
        %v703 = vld [vmem:[%s397 + $0x18] sm:$0xf]
        %v704 = vld [vmem:[%s397 + $0x1c] sm:$0xf]
        %v705 = vld [vmem:[%s397 + $0x20] sm:$0xf]
        %v706 = vld [vmem:[%s397 + $0x24] sm:$0xf]
        %v707 = vld [vmem:[%s397 + $0x28] sm:$0xf]
        %v708 = vld [vmem:[%s397 + $0x2c] sm:$0xf]
        %v709 = vld [vmem:[%s397 + $0x30] sm:$0xf]
        %v710 = vld [vmem:[%s397 + $0x34] sm:$0xf]
        %v711 = vld [vmem:[%s397 + $0x38] sm:$0xf]
        %v712 = vld [vmem:[%s397 + $0x3c] sm:$0xf]
        %v713 = vld [vmem:[%s397 + $0x40] sm:$0xf]
        %v714 = vld [vmem:[%s397 + $0x44] sm:$0xf]
        %v715 = vld [vmem:[%s397 + $0x48] sm:$0xf]
        %v716 = vld [vmem:[%s397 + $0x4c] sm:$0xf]
        %v717 = vld [vmem:[%s397 + $0x50] sm:$0xf]
        %v718 = vld [vmem:[%s397 + $0x54] sm:$0xf]
        %v719 = vld [vmem:[%s397 + $0x58] sm:$0xf]
        %v720 = vld [vmem:[%s397 + $0x5c] sm:$0xf]
        %v721 = vld [vmem:[%s397 + $0x60] sm:$0xf]
        %v722 = vld [vmem:[%s397 + $0x64] sm:$0xf]
        %v723 = vld [vmem:[%s397 + $0x68] sm:$0xf]
        %v724 = vld [vmem:[%s397 + $0x6c] sm:$0xf]
        %v725 = vld [vmem:[%s397 + $0x70] sm:$0xf]
        %v726 = vld [vmem:[%s397 + $0x74] sm:$0xf]
        %v727 = vld [vmem:[%s397 + $0x78] sm:$0xf]
        %v728 = vld [vmem:[%s397 + $0x7c] sm:$0xf]
        %v729 = vld [vmem:[%s403] sm:$0xff]
        %v730 = vld [vmem:[%s403 + $0x8] sm:$0xff]
        %v731 = vld [vmem:[%s403 + $0x10] sm:$0xff]
        %v732 = vld [vmem:[%s403 + $0x18] sm:$0xff]
        %v733 = vld [vmem:[%s403 + $0x20] sm:$0xff]
        %v734 = vld [vmem:[%s403 + $0x28] sm:$0xff]
        %v735 = vld [vmem:[%s403 + $0x30] sm:$0xff]
        %v736 = vld [vmem:[%s403 + $0x38] sm:$0xff]
        %v737 = vld [vmem:[%s403 + $0x40] sm:$0xff]
        %v738 = vld [vmem:[%s403 + $0x48] sm:$0xff]
        %v739 = vld [vmem:[%s403 + $0x50] sm:$0xff]
        %v740 = vld [vmem:[%s403 + $0x58] sm:$0xff]
        %v741 = vld [vmem:[%s403 + $0x60] sm:$0xff]
        %v742 = vld [vmem:[%s403 + $0x68] sm:$0xff]
        %v743 = vld [vmem:[%s403 + $0x70] sm:$0xff]
        %v744 = vld [vmem:[%s403 + $0x78] sm:$0xff]
        %v777 = vunpack.c.l.b16 %v697
        %v778 = vunpack.c.l.b16 %v698
        %v779 = vunpack.c.l.b16 %v699
        %v780 = vunpack.c.l.b16 %v700
        %v781 = vunpack.c.l.b16 %v701
        %v782 = vunpack.c.l.b16 %v702
        %v783 = vunpack.c.l.b16 %v703
        %v784 = vunpack.c.l.b16 %v704
        %v785 = vunpack.c.l.b16 %v705
        %v786 = vunpack.c.l.b16 %v706
        %v787 = vunpack.c.l.b16 %v707
        %v788 = vunpack.c.l.b16 %v708
        %v789 = vunpack.c.l.b16 %v709
        %v790 = vunpack.c.l.b16 %v710
        %v791 = vunpack.c.l.b16 %v711
        %v792 = vunpack.c.l.b16 %v712
        %v793 = vunpack.c.l.b16 %v713
        %v794 = vunpack.c.l.b16 %v714
        %v795 = vunpack.c.l.b16 %v715
        %v796 = vunpack.c.l.b16 %v716
        %v797 = vunpack.c.l.b16 %v717
        %v798 = vunpack.c.l.b16 %v718
        %v799 = vunpack.c.l.b16 %v719
        %v800 = vunpack.c.l.b16 %v720
        %v801 = vunpack.c.l.b16 %v721
        %v802 = vunpack.c.l.b16 %v722
        %v803 = vunpack.c.l.b16 %v723
        %v804 = vunpack.c.l.b16 %v724
        %v805 = vunpack.c.l.b16 %v725
        %v806 = vunpack.c.l.b16 %v726
        %v807 = vunpack.c.l.b16 %v727
        %v808 = vunpack.c.l.b16 %v728
        %v809 = vpack.c.b16 %v778, %v777
        %v810 = vpack.c.b16 %v780, %v779
        %v811 = vpack.c.b16 %v782, %v781
        %v812 = vpack.c.b16 %v784, %v783
        %v813 = vpack.c.b16 %v786, %v785
        %v814 = vpack.c.b16 %v788, %v787
        %v815 = vpack.c.b16 %v790, %v789
        %v816 = vpack.c.b16 %v792, %v791
        %v817 = vpack.c.b16 %v794, %v793
        %v818 = vpack.c.b16 %v796, %v795
        %v819 = vpack.c.b16 %v798, %v797
        %v820 = vpack.c.b16 %v800, %v799
        %v821 = vpack.c.b16 %v802, %v801
        %v822 = vpack.c.b16 %v804, %v803
        %v823 = vpack.c.b16 %v806, %v805
        %v824 = vpack.c.b16 %v808, %v807
        %v857 = vunpack.c.l.b16 %v729
        %v858 = vunpack.c.h.b16 %v729
        %v859 = vunpack.c.l.b16 %v730
        %v860 = vunpack.c.h.b16 %v730
        %v861 = vunpack.c.l.b16 %v731
        %v862 = vunpack.c.h.b16 %v731
        %v863 = vunpack.c.l.b16 %v732
        %v864 = vunpack.c.h.b16 %v732
        %v865 = vunpack.c.l.b16 %v733
        %v866 = vunpack.c.h.b16 %v733
        %v867 = vunpack.c.l.b16 %v734
        %v868 = vunpack.c.h.b16 %v734
        %v869 = vunpack.c.l.b16 %v735
        %v870 = vunpack.c.h.b16 %v735
        %v871 = vunpack.c.l.b16 %v736
        %v872 = vunpack.c.h.b16 %v736
        %v873 = vunpack.c.l.b16 %v737
        %v874 = vunpack.c.h.b16 %v737
        %v875 = vunpack.c.l.b16 %v738
        %v876 = vunpack.c.h.b16 %v738
        %v877 = vunpack.c.l.b16 %v739
        %v878 = vunpack.c.h.b16 %v739
        %v879 = vunpack.c.l.b16 %v740
        %v880 = vunpack.c.h.b16 %v740
        %v881 = vunpack.c.l.b16 %v741
        %v882 = vunpack.c.h.b16 %v741
        %v883 = vunpack.c.l.b16 %v742
        %v884 = vunpack.c.h.b16 %v742
        %v885 = vunpack.c.l.b16 %v743
        %v886 = vunpack.c.h.b16 %v743
        %v887 = vunpack.c.l.b16 %v744
        %v888 = vunpack.c.h.b16 %v744
        %v889 = vpack.c.b16 %v859, %v857
        %v890 = vpack.c.b16 %v860, %v858
        %v891 = vpack.c.b16 %v863, %v861
        %v892 = vpack.c.b16 %v864, %v862
        %v893 = vpack.c.b16 %v867, %v865
        %v894 = vpack.c.b16 %v868, %v866
        %v895 = vpack.c.b16 %v871, %v869
        %v896 = vpack.c.b16 %v872, %v870
        %v897 = vpack.c.b16 %v875, %v873
        %v898 = vpack.c.b16 %v876, %v874
        %v899 = vpack.c.b16 %v879, %v877
        %v900 = vpack.c.b16 %v880, %v878
        %v901 = vpack.c.b16 %v883, %v881
        %v902 = vpack.c.b16 %v884, %v882
        %v903 = vpack.c.b16 %v887, %v885
        %v904 = vpack.c.b16 %v888, %v886
        %921 = vmatprep.subr.bf16.mxu0 %v904
        %922 = vmatpush1.bf16.msra.mxu0 %v903
        %923 = vmatprep.subr.bf16.mxu0 %v902
        %924 = vmatpush1.bf16.msra.mxu0 %v901
        %925 = vmatprep.subr.bf16.mxu0 %v900
        %926 = vmatpush1.bf16.msra.mxu0 %v899
        %927 = vmatprep.subr.bf16.mxu0 %v898
        %928 = vmatpush1.bf16.msra.mxu0 %v897
        %929 = vmatprep.subr.bf16.mxu0 %v896
        %930 = vmatpush1.bf16.msra.mxu0 %v895
        %931 = vmatprep.subr.bf16.mxu0 %v894
        %932 = vmatpush1.bf16.msra.mxu0 %v893
        %933 = vmatprep.subr.bf16.mxu0 %v892
        %934 = vmatpush1.bf16.msra.mxu0 %v891
        %935 = vmatprep.subr.bf16.mxu0 %v890
        %936 = vmatpush1.bf16.msra.mxu0 %v889
        %937 = vmatprep.subr.bf16.mxu0 0
        %938 = vmatpush2.bf16.msra.mxu0 0
        %939 = vmatprep.subr.bf16.mxu0 0
        %940 = vmatpush2.bf16.msra.mxu0 0
        %941 = vmatprep.subr.bf16.mxu0 0
        %942 = vmatpush2.bf16.msra.mxu0 0
        %943 = vmatprep.subr.bf16.mxu0 0
        %944 = vmatpush2.bf16.msra.mxu0 0
        %945 = vmatprep.subr.bf16.mxu0 0
        %946 = vmatpush2.bf16.msra.mxu0 0
        %947 = vmatprep.subr.bf16.mxu0 0
        %948 = vmatpush2.bf16.msra.mxu0 0
        %949 = vmatprep.subr.bf16.mxu0 0
        %950 = vmatpush2.bf16.msra.mxu0 0
        %951 = vmatprep.subr.bf16.mxu0 0
        %952 = vmatpush2.bf16.msra.mxu0 0
        %953 = vmatprep.mubr.bf16.mxu0 0
        %954 = vmatmul.mubr.bf16.gmra.mxu0 %v809
        %v955 = vpop.f32.mrf.mxu0
        %v956 = vadd.f32 0.0, %v955
        %v957 = vpop.f32.mrf.mxu0
        %v958 = vadd.f32 0.0, %v957
        %v959 = vpop.f32.mrf.mxu0
        %v960 = vadd.f32 0.0, %v959
        %v961 = vpop.f32.mrf.mxu0
        %v962 = vadd.f32 0.0, %v961
        %963 = vmatprep.mubr.bf16.mxu0 0
        %964 = vmatmul.mubr.bf16.gmra.mxu0 %v810
        %v965 = vpop.f32.mrf.mxu0
        %v966 = vadd.f32 0.0, %v965
        %v967 = vpop.f32.mrf.mxu0
        %v968 = vadd.f32 0.0, %v967
        %v969 = vpop.f32.mrf.mxu0
        %v970 = vadd.f32 0.0, %v969
        %v971 = vpop.f32.mrf.mxu0
        %v972 = vadd.f32 0.0, %v971
        %973 = vmatprep.mubr.bf16.mxu0 0
        %974 = vmatmul.mubr.bf16.gmra.mxu0 %v811
        %v975 = vpop.f32.mrf.mxu0
        %v976 = vadd.f32 0.0, %v975
        %v977 = vpop.f32.mrf.mxu0
        %v978 = vadd.f32 0.0, %v977
        %v979 = vpop.f32.mrf.mxu0
        %v980 = vadd.f32 0.0, %v979
        %v981 = vpop.f32.mrf.mxu0
        %v982 = vadd.f32 0.0, %v981
        %983 = vmatprep.mubr.bf16.mxu0 0
        %984 = vmatmul.mubr.bf16.gmra.mxu0 %v812
        %v985 = vpop.f32.mrf.mxu0
        %v986 = vadd.f32 0.0, %v985
        %v987 = vpop.f32.mrf.mxu0
        %v988 = vadd.f32 0.0, %v987
        %v989 = vpop.f32.mrf.mxu0
        %v990 = vadd.f32 0.0, %v989
        %v991 = vpop.f32.mrf.mxu0
        %v992 = vadd.f32 0.0, %v991
        %993 = vmatprep.mubr.bf16.mxu0 0
        %994 = vmatmul.mubr.bf16.gmra.mxu0 %v813
        %v995 = vpop.f32.mrf.mxu0
        %v996 = vadd.f32 0.0, %v995
        %v997 = vpop.f32.mrf.mxu0
        %v998 = vadd.f32 0.0, %v997
        %v999 = vpop.f32.mrf.mxu0
        %v1000 = vadd.f32 0.0, %v999
        %v1001 = vpop.f32.mrf.mxu0
        %v1002 = vadd.f32 0.0, %v1001
        %1003 = vmatprep.mubr.bf16.mxu0 0
        %1004 = vmatmul.mubr.bf16.gmra.mxu0 %v814
        %v1005 = vpop.f32.mrf.mxu0
        %v1006 = vadd.f32 0.0, %v1005
        %v1007 = vpop.f32.mrf.mxu0
        %v1008 = vadd.f32 0.0, %v1007
        %v1009 = vpop.f32.mrf.mxu0
        %v1010 = vadd.f32 0.0, %v1009
        %v1011 = vpop.f32.mrf.mxu0
        %v1012 = vadd.f32 0.0, %v1011
        %1013 = vmatprep.mubr.bf16.mxu0 0
        %1014 = vmatmul.mubr.bf16.gmra.mxu0 %v815
        %v1015 = vpop.f32.mrf.mxu0
        %v1016 = vadd.f32 0.0, %v1015
        %v1017 = vpop.f32.mrf.mxu0
        %v1018 = vadd.f32 0.0, %v1017
        %v1019 = vpop.f32.mrf.mxu0
        %v1020 = vadd.f32 0.0, %v1019
        %v1021 = vpop.f32.mrf.mxu0
        %v1022 = vadd.f32 0.0, %v1021
        %1023 = vmatprep.mubr.bf16.mxu0 0
        %1024 = vmatmul.mubr.bf16.gmra.mxu0 %v816
        %v1025 = vpop.f32.mrf.mxu0
        %v1026 = vadd.f32 0.0, %v1025
        %v1027 = vpop.f32.mrf.mxu0
        %v1028 = vadd.f32 0.0, %v1027
        %v1029 = vpop.f32.mrf.mxu0
        %v1030 = vadd.f32 0.0, %v1029
        %v1031 = vpop.f32.mrf.mxu0
        %v1032 = vadd.f32 0.0, %v1031
        %1033 = vmatprep.mubr.bf16.mxu0 0
        %1034 = vmatmul.mubr.bf16.gmra.mxu0 %v817
        %v1035 = vpop.f32.mrf.mxu0
        %v1036 = vadd.f32 0.0, %v1035
        %v1037 = vpop.f32.mrf.mxu0
        %v1038 = vadd.f32 0.0, %v1037
        %v1039 = vpop.f32.mrf.mxu0
        %v1040 = vadd.f32 0.0, %v1039
        %v1041 = vpop.f32.mrf.mxu0
        %v1042 = vadd.f32 0.0, %v1041
        %1043 = vmatprep.mubr.bf16.mxu0 0
        %1044 = vmatmul.mubr.bf16.gmra.mxu0 %v818
        %v1045 = vpop.f32.mrf.mxu0
        %v1046 = vadd.f32 0.0, %v1045
        %v1047 = vpop.f32.mrf.mxu0
        %v1048 = vadd.f32 0.0, %v1047
        %v1049 = vpop.f32.mrf.mxu0
        %v1050 = vadd.f32 0.0, %v1049
        %v1051 = vpop.f32.mrf.mxu0
        %v1052 = vadd.f32 0.0, %v1051
        %1053 = vmatprep.mubr.bf16.mxu0 0
        %1054 = vmatmul.mubr.bf16.gmra.mxu0 %v819
        %v1055 = vpop.f32.mrf.mxu0
        %v1056 = vadd.f32 0.0, %v1055
        %v1057 = vpop.f32.mrf.mxu0
        %v1058 = vadd.f32 0.0, %v1057
        %v1059 = vpop.f32.mrf.mxu0
        %v1060 = vadd.f32 0.0, %v1059
        %v1061 = vpop.f32.mrf.mxu0
        %v1062 = vadd.f32 0.0, %v1061
        %1063 = vmatprep.mubr.bf16.mxu0 0
        %1064 = vmatmul.mubr.bf16.gmra.mxu0 %v820
        %v1065 = vpop.f32.mrf.mxu0
        %v1066 = vadd.f32 0.0, %v1065
        %v1067 = vpop.f32.mrf.mxu0
        %v1068 = vadd.f32 0.0, %v1067
        %v1069 = vpop.f32.mrf.mxu0
        %v1070 = vadd.f32 0.0, %v1069
        %v1071 = vpop.f32.mrf.mxu0
        %v1072 = vadd.f32 0.0, %v1071
        %1073 = vmatprep.mubr.bf16.mxu0 0
        %1074 = vmatmul.mubr.bf16.gmra.mxu0 %v821
        %v1075 = vpop.f32.mrf.mxu0
        %v1076 = vadd.f32 0.0, %v1075
        %v1077 = vpop.f32.mrf.mxu0
        %v1078 = vadd.f32 0.0, %v1077
        %v1079 = vpop.f32.mrf.mxu0
        %v1080 = vadd.f32 0.0, %v1079
        %v1081 = vpop.f32.mrf.mxu0
        %v1082 = vadd.f32 0.0, %v1081
        %1083 = vmatprep.mubr.bf16.mxu0 0
        %1084 = vmatmul.mubr.bf16.gmra.mxu0 %v822
        %v1085 = vpop.f32.mrf.mxu0
        %v1086 = vadd.f32 0.0, %v1085
        %v1087 = vpop.f32.mrf.mxu0
        %v1088 = vadd.f32 0.0, %v1087
        %v1089 = vpop.f32.mrf.mxu0
        %v1090 = vadd.f32 0.0, %v1089
        %v1091 = vpop.f32.mrf.mxu0
        %v1092 = vadd.f32 0.0, %v1091
        %1093 = vmatprep.mubr.bf16.mxu0 0
        %1094 = vmatmul.mubr.bf16.gmra.mxu0 %v823
        %v1095 = vpop.f32.mrf.mxu0
        %v1096 = vadd.f32 0.0, %v1095
        %v1097 = vpop.f32.mrf.mxu0
        %v1098 = vadd.f32 0.0, %v1097
        %v1099 = vpop.f32.mrf.mxu0
        %v1100 = vadd.f32 0.0, %v1099
        %v1101 = vpop.f32.mrf.mxu0
        %v1102 = vadd.f32 0.0, %v1101
        %1103 = vmatprep.mubr.bf16.mxu0 0
        %1104 = vmatmul.mubr.bf16.gmra.mxu0 %v824
        %v1105 = vpop.f32.mrf.mxu0
        %v1106 = vadd.f32 0.0, %v1105
        %v1107 = vpop.f32.mrf.mxu0
        %v1108 = vadd.f32 0.0, %v1107
        %v1109 = vpop.f32.mrf.mxu0
        %v1110 = vadd.f32 0.0, %v1109
        %v1111 = vpop.f32.mrf.mxu0
        %v1112 = vadd.f32 0.0, %v1111
        %1113 = vdwg.mxu0
        %v1114 = vmax.f32 %v956, %v958
        %1115 = vmax.xlane.f32.xlu0 %v1114
        %v1116 = vpop.xlane.xlu0 %1115
        %v1117 = vmax.f32 %v960, %v962
        %1118 = vmax.xlane.f32.xlu0 %v1117
        %v1119 = vpop.xlane.xlu0 %1118
        %v1120 = vmax.f32 %v966, %v968
        %1121 = vmax.xlane.f32.xlu0 %v1120
        %v1122 = vpop.xlane.xlu0 %1121
        %v1123 = vmax.f32 %v970, %v972
        %1124 = vmax.xlane.f32.xlu0 %v1123
        %v1125 = vpop.xlane.xlu0 %1124
        %v1126 = vmax.f32 %v976, %v978
        %1127 = vmax.xlane.f32.xlu0 %v1126
        %v1128 = vpop.xlane.xlu0 %1127
        %v1129 = vmax.f32 %v980, %v982
        %1130 = vmax.xlane.f32.xlu0 %v1129
        %v1131 = vpop.xlane.xlu0 %1130
        %v1132 = vmax.f32 %v986, %v988
        %1133 = vmax.xlane.f32.xlu0 %v1132
        %v1134 = vpop.xlane.xlu0 %1133
        %v1135 = vmax.f32 %v990, %v992
        %1136 = vmax.xlane.f32.xlu0 %v1135
        %v1137 = vpop.xlane.xlu0 %1136
        %v1138 = vmax.f32 %v996, %v998
        %1139 = vmax.xlane.f32.xlu0 %v1138
        %v1140 = vpop.xlane.xlu0 %1139
        %v1141 = vmax.f32 %v1000, %v1002
        %1142 = vmax.xlane.f32.xlu0 %v1141
        %v1143 = vpop.xlane.xlu0 %1142
        %v1144 = vmax.f32 %v1006, %v1008
        %1145 = vmax.xlane.f32.xlu0 %v1144
        %v1146 = vpop.xlane.xlu0 %1145
        %v1147 = vmax.f32 %v1010, %v1012
        %1148 = vmax.xlane.f32.xlu0 %v1147
        %v1149 = vpop.xlane.xlu0 %1148
        %v1150 = vmax.f32 %v1016, %v1018
        %1151 = vmax.xlane.f32.xlu0 %v1150
        %v1152 = vpop.xlane.xlu0 %1151
        %v1153 = vmax.f32 %v1020, %v1022
        %1154 = vmax.xlane.f32.xlu0 %v1153
        %v1155 = vpop.xlane.xlu0 %1154
        %v1156 = vmax.f32 %v1026, %v1028
        %1157 = vmax.xlane.f32.xlu0 %v1156
        %v1158 = vpop.xlane.xlu0 %1157
        %v1159 = vmax.f32 %v1030, %v1032
        %1160 = vmax.xlane.f32.xlu0 %v1159
        %v1161 = vpop.xlane.xlu0 %1160
        %v1162 = vmax.f32 %v1036, %v1038
        %1163 = vmax.xlane.f32.xlu0 %v1162
        %v1164 = vpop.xlane.xlu0 %1163
        %v1165 = vmax.f32 %v1040, %v1042
        %1166 = vmax.xlane.f32.xlu0 %v1165
        %v1167 = vpop.xlane.xlu0 %1166
        %v1168 = vmax.f32 %v1046, %v1048
        %1169 = vmax.xlane.f32.xlu0 %v1168
        %v1170 = vpop.xlane.xlu0 %1169
        %v1171 = vmax.f32 %v1050, %v1052
        %1172 = vmax.xlane.f32.xlu0 %v1171
        %v1173 = vpop.xlane.xlu0 %1172
        %v1174 = vmax.f32 %v1056, %v1058
        %1175 = vmax.xlane.f32.xlu0 %v1174
        %v1176 = vpop.xlane.xlu0 %1175
        %v1177 = vmax.f32 %v1060, %v1062
        %1178 = vmax.xlane.f32.xlu0 %v1177
        %v1179 = vpop.xlane.xlu0 %1178
        %v1180 = vmax.f32 %v1066, %v1068
        %1181 = vmax.xlane.f32.xlu0 %v1180
        %v1182 = vpop.xlane.xlu0 %1181
        %v1183 = vmax.f32 %v1070, %v1072
        %1184 = vmax.xlane.f32.xlu0 %v1183
        %v1185 = vpop.xlane.xlu0 %1184
        %v1186 = vmax.f32 %v1076, %v1078
        %1187 = vmax.xlane.f32.xlu0 %v1186
        %v1188 = vpop.xlane.xlu0 %1187
        %v1189 = vmax.f32 %v1080, %v1082
        %1190 = vmax.xlane.f32.xlu0 %v1189
        %v1191 = vpop.xlane.xlu0 %1190
        %v1192 = vmax.f32 %v1086, %v1088
        %1193 = vmax.xlane.f32.xlu0 %v1192
        %v1194 = vpop.xlane.xlu0 %1193
        %v1195 = vmax.f32 %v1090, %v1092
        %1196 = vmax.xlane.f32.xlu0 %v1195
        %v1197 = vpop.xlane.xlu0 %1196
        %v1198 = vmax.f32 %v1096, %v1098
        %1199 = vmax.xlane.f32.xlu0 %v1198
        %v1200 = vpop.xlane.xlu0 %1199
        %v1201 = vmax.f32 %v1100, %v1102
        %1202 = vmax.xlane.f32.xlu0 %v1201
        %v1203 = vpop.xlane.xlu0 %1202
        %v1204 = vmax.f32 %v1106, %v1108
        %1205 = vmax.xlane.f32.xlu0 %v1204
        %v1206 = vpop.xlane.xlu0 %1205
        %v1207 = vmax.f32 %v1110, %v1112
        %1208 = vmax.xlane.f32.xlu0 %v1207
        %v1209 = vpop.xlane.xlu0 %1208
        %v1210 = vsub.f32 %v956, %v1116
        %v1211 = vsub.f32 %v958, %v1116
        %v1212 = vsub.f32 %v960, %v1119
        %v1213 = vsub.f32 %v962, %v1119
        %v1214 = vsub.f32 %v966, %v1122
        %v1215 = vsub.f32 %v968, %v1122
        %v1216 = vsub.f32 %v970, %v1125
        %v1217 = vsub.f32 %v972, %v1125
        %v1218 = vsub.f32 %v976, %v1128
        %v1219 = vsub.f32 %v978, %v1128
        %v1220 = vsub.f32 %v980, %v1131
        %v1221 = vsub.f32 %v982, %v1131
        %v1222 = vsub.f32 %v986, %v1134
        %v1223 = vsub.f32 %v988, %v1134
        %v1224 = vsub.f32 %v990, %v1137
        %v1225 = vsub.f32 %v992, %v1137
        %v1226 = vsub.f32 %v996, %v1140
        %v1227 = vsub.f32 %v998, %v1140
        %v1228 = vsub.f32 %v1000, %v1143
        %v1229 = vsub.f32 %v1002, %v1143
        %v1230 = vsub.f32 %v1006, %v1146
        %v1231 = vsub.f32 %v1008, %v1146
        %v1232 = vsub.f32 %v1010, %v1149
        %v1233 = vsub.f32 %v1012, %v1149
        %v1234 = vsub.f32 %v1016, %v1152
        %v1235 = vsub.f32 %v1018, %v1152
        %v1236 = vsub.f32 %v1020, %v1155
        %v1237 = vsub.f32 %v1022, %v1155
        %v1238 = vsub.f32 %v1026, %v1158
        %v1239 = vsub.f32 %v1028, %v1158
        %v1240 = vsub.f32 %v1030, %v1161
        %v1241 = vsub.f32 %v1032, %v1161
        %v1242 = vsub.f32 %v1036, %v1164
        %v1243 = vsub.f32 %v1038, %v1164
        %v1244 = vsub.f32 %v1040, %v1167
        %v1245 = vsub.f32 %v1042, %v1167
        %v1246 = vsub.f32 %v1046, %v1170
        %v1247 = vsub.f32 %v1048, %v1170
        %v1248 = vsub.f32 %v1050, %v1173
        %v1249 = vsub.f32 %v1052, %v1173
        %v1250 = vsub.f32 %v1056, %v1176
        %v1251 = vsub.f32 %v1058, %v1176
        %v1252 = vsub.f32 %v1060, %v1179
        %v1253 = vsub.f32 %v1062, %v1179
        %v1254 = vsub.f32 %v1066, %v1182
        %v1255 = vsub.f32 %v1068, %v1182
        %v1256 = vsub.f32 %v1070, %v1185
        %v1257 = vsub.f32 %v1072, %v1185
        %v1258 = vsub.f32 %v1076, %v1188
        %v1259 = vsub.f32 %v1078, %v1188
        %v1260 = vsub.f32 %v1080, %v1191
        %v1261 = vsub.f32 %v1082, %v1191
        %v1262 = vsub.f32 %v1086, %v1194
        %v1263 = vsub.f32 %v1088, %v1194
        %v1264 = vsub.f32 %v1090, %v1197
        %v1265 = vsub.f32 %v1092, %v1197
        %v1266 = vsub.f32 %v1096, %v1200
        %v1267 = vsub.f32 %v1098, %v1200
        %v1268 = vsub.f32 %v1100, %v1203
        %v1269 = vsub.f32 %v1102, %v1203
        %v1270 = vsub.f32 %v1106, %v1206
        %v1271 = vsub.f32 %v1108, %v1206
        %v1272 = vsub.f32 %v1110, %v1209
        %v1273 = vsub.f32 %v1112, %v1209
        %v1274 = vmul.f32 %v1210, 1.442695
        %v1275 = vpow.pop %v1274
        %v1276 = vmul.f32 %v1211, 1.442695
        %v1277 = vpow.pop %v1276
        %v1278 = vmul.f32 %v1212, 1.442695
        %v1279 = vpow.pop %v1278
        %v1280 = vmul.f32 %v1213, 1.442695
        %v1281 = vpow.pop %v1280
        %v1282 = vmul.f32 %v1214, 1.442695
        %v1283 = vpow.pop %v1282
        %v1284 = vmul.f32 %v1215, 1.442695
        %v1285 = vpow.pop %v1284
        %v1286 = vmul.f32 %v1216, 1.442695
        %v1287 = vpow.pop %v1286
        %v1288 = vmul.f32 %v1217, 1.442695
        %v1289 = vpow.pop %v1288
        %v1290 = vmul.f32 %v1218, 1.442695
        %v1291 = vpow.pop %v1290
        %v1292 = vmul.f32 %v1219, 1.442695
        %v1293 = vpow.pop %v1292
        %v1294 = vmul.f32 %v1220, 1.442695
        %v1295 = vpow.pop %v1294
        %v1296 = vmul.f32 %v1221, 1.442695
        %v1297 = vpow.pop %v1296
        %v1298 = vmul.f32 %v1222, 1.442695
        %v1299 = vpow.pop %v1298
        %v1300 = vmul.f32 %v1223, 1.442695
        %v1301 = vpow.pop %v1300
        %v1302 = vmul.f32 %v1224, 1.442695
        %v1303 = vpow.pop %v1302
        %v1304 = vmul.f32 %v1225, 1.442695
        %v1305 = vpow.pop %v1304
        %v1306 = vmul.f32 %v1226, 1.442695
        %v1307 = vpow.pop %v1306
        %v1308 = vmul.f32 %v1227, 1.442695
        %v1309 = vpow.pop %v1308
        %v1310 = vmul.f32 %v1228, 1.442695
        %v1311 = vpow.pop %v1310
        %v1312 = vmul.f32 %v1229, 1.442695
        %v1313 = vpow.pop %v1312
        %v1314 = vmul.f32 %v1230, 1.442695
        %v1315 = vpow.pop %v1314
        %v1316 = vmul.f32 %v1231, 1.442695
        %v1317 = vpow.pop %v1316
        %v1318 = vmul.f32 %v1232, 1.442695
        %v1319 = vpow.pop %v1318
        %v1320 = vmul.f32 %v1233, 1.442695
        %v1321 = vpow.pop %v1320
        %v1322 = vmul.f32 %v1234, 1.442695
        %v1323 = vpow.pop %v1322
        %v1324 = vmul.f32 %v1235, 1.442695
        %v1325 = vpow.pop %v1324
        %v1326 = vmul.f32 %v1236, 1.442695
        %v1327 = vpow.pop %v1326
        %v1328 = vmul.f32 %v1237, 1.442695
        %v1329 = vpow.pop %v1328
        %v1330 = vmul.f32 %v1238, 1.442695
        %v1331 = vpow.pop %v1330
        %v1332 = vmul.f32 %v1239, 1.442695
        %v1333 = vpow.pop %v1332
        %v1334 = vmul.f32 %v1240, 1.442695
        %v1335 = vpow.pop %v1334
        %v1336 = vmul.f32 %v1241, 1.442695
        %v1337 = vpow.pop %v1336
        %v1338 = vmul.f32 %v1242, 1.442695
        %v1339 = vpow.pop %v1338
        %v1340 = vmul.f32 %v1243, 1.442695
        %v1341 = vpow.pop %v1340
        %v1342 = vmul.f32 %v1244, 1.442695
        %v1343 = vpow.pop %v1342
        %v1344 = vmul.f32 %v1245, 1.442695
        %v1345 = vpow.pop %v1344
        %v1346 = vmul.f32 %v1246, 1.442695
        %v1347 = vpow.pop %v1346
        %v1348 = vmul.f32 %v1247, 1.442695
        %v1349 = vpow.pop %v1348
        %v1350 = vmul.f32 %v1248, 1.442695
        %v1351 = vpow.pop %v1350
        %v1352 = vmul.f32 %v1249, 1.442695
        %v1353 = vpow.pop %v1352
        %v1354 = vmul.f32 %v1250, 1.442695
        %v1355 = vpow.pop %v1354
        %v1356 = vmul.f32 %v1251, 1.442695
        %v1357 = vpow.pop %v1356
        %v1358 = vmul.f32 %v1252, 1.442695
        %v1359 = vpow.pop %v1358
        %v1360 = vmul.f32 %v1253, 1.442695
        %v1361 = vpow.pop %v1360
        %v1362 = vmul.f32 %v1254, 1.442695
        %v1363 = vpow.pop %v1362
        %v1364 = vmul.f32 %v1255, 1.442695
        %v1365 = vpow.pop %v1364
        %v1366 = vmul.f32 %v1256, 1.442695
        %v1367 = vpow.pop %v1366
        %v1368 = vmul.f32 %v1257, 1.442695
        %v1369 = vpow.pop %v1368
        %v1370 = vmul.f32 %v1258, 1.442695
        %v1371 = vpow.pop %v1370
        %v1372 = vmul.f32 %v1259, 1.442695
        %v1373 = vpow.pop %v1372
        %v1374 = vmul.f32 %v1260, 1.442695
        %v1375 = vpow.pop %v1374
        %v1376 = vmul.f32 %v1261, 1.442695
        %v1377 = vpow.pop %v1376
        %v1378 = vmul.f32 %v1262, 1.442695
        %v1379 = vpow.pop %v1378
        %v1380 = vmul.f32 %v1263, 1.442695
        %v1381 = vpow.pop %v1380
        %v1382 = vmul.f32 %v1264, 1.442695
        %v1383 = vpow.pop %v1382
        %v1384 = vmul.f32 %v1265, 1.442695
        %v1385 = vpow.pop %v1384
        %v1386 = vmul.f32 %v1266, 1.442695
        %v1387 = vpow.pop %v1386
        %v1388 = vmul.f32 %v1267, 1.442695
        %v1389 = vpow.pop %v1388
        %v1390 = vmul.f32 %v1268, 1.442695
        %v1391 = vpow.pop %v1390
        %v1392 = vmul.f32 %v1269, 1.442695
        %v1393 = vpow.pop %v1392
        %v1394 = vmul.f32 %v1270, 1.442695
        %v1395 = vpow.pop %v1394
        %v1396 = vmul.f32 %v1271, 1.442695
        %v1397 = vpow.pop %v1396
        %v1398 = vmul.f32 %v1272, 1.442695
        %v1399 = vpow.pop %v1398
        %v1400 = vmul.f32 %v1273, 1.442695
        %v1401 = vpow.pop %v1400
        %v1402 = vadd.f32 %v1275, %v1277
        %1403 = vadd.xlane.f32.xlu0 %v1402
        %v1404 = vpop.xlane.xlu0 %1403
        %v1405 = vadd.f32 %v1279, %v1281
        %1406 = vadd.xlane.f32.xlu0 %v1405
        %v1407 = vpop.xlane.xlu0 %1406
        %v1408 = vadd.f32 %v1283, %v1285
        %1409 = vadd.xlane.f32.xlu0 %v1408
        %v1410 = vpop.xlane.xlu0 %1409
        %v1411 = vadd.f32 %v1287, %v1289
        %1412 = vadd.xlane.f32.xlu0 %v1411
        %v1413 = vpop.xlane.xlu0 %1412
        %v1414 = vadd.f32 %v1291, %v1293
        %1415 = vadd.xlane.f32.xlu0 %v1414
        %v1416 = vpop.xlane.xlu0 %1415
        %v1417 = vadd.f32 %v1295, %v1297
        %1418 = vadd.xlane.f32.xlu0 %v1417
        %v1419 = vpop.xlane.xlu0 %1418
        %v1420 = vadd.f32 %v1299, %v1301
        %1421 = vadd.xlane.f32.xlu0 %v1420
        %v1422 = vpop.xlane.xlu0 %1421
        %v1423 = vadd.f32 %v1303, %v1305
        %1424 = vadd.xlane.f32.xlu0 %v1423
        %v1425 = vpop.xlane.xlu0 %1424
        %v1426 = vadd.f32 %v1307, %v1309
        %1427 = vadd.xlane.f32.xlu0 %v1426
        %v1428 = vpop.xlane.xlu0 %1427
        %v1429 = vadd.f32 %v1311, %v1313
        %1430 = vadd.xlane.f32.xlu0 %v1429
        %v1431 = vpop.xlane.xlu0 %1430
        %v1432 = vadd.f32 %v1315, %v1317
        %1433 = vadd.xlane.f32.xlu0 %v1432
        %v1434 = vpop.xlane.xlu0 %1433
        %v1435 = vadd.f32 %v1319, %v1321
        %1436 = vadd.xlane.f32.xlu0 %v1435
        %v1437 = vpop.xlane.xlu0 %1436
        %v1438 = vadd.f32 %v1323, %v1325
        %1439 = vadd.xlane.f32.xlu0 %v1438
        %v1440 = vpop.xlane.xlu0 %1439
        %v1441 = vadd.f32 %v1327, %v1329
        %1442 = vadd.xlane.f32.xlu0 %v1441
        %v1443 = vpop.xlane.xlu0 %1442
        %v1444 = vadd.f32 %v1331, %v1333
        %1445 = vadd.xlane.f32.xlu0 %v1444
        %v1446 = vpop.xlane.xlu0 %1445
        %v1447 = vadd.f32 %v1335, %v1337
        %1448 = vadd.xlane.f32.xlu0 %v1447
        %v1449 = vpop.xlane.xlu0 %1448
        %v1450 = vadd.f32 %v1339, %v1341
        %1451 = vadd.xlane.f32.xlu0 %v1450
        %v1452 = vpop.xlane.xlu0 %1451
        %v1453 = vadd.f32 %v1343, %v1345
        %1454 = vadd.xlane.f32.xlu0 %v1453
        %v1455 = vpop.xlane.xlu0 %1454
        %v1456 = vadd.f32 %v1347, %v1349
        %1457 = vadd.xlane.f32.xlu0 %v1456
        %v1458 = vpop.xlane.xlu0 %1457
        %v1459 = vadd.f32 %v1351, %v1353
        %1460 = vadd.xlane.f32.xlu0 %v1459
        %v1461 = vpop.xlane.xlu0 %1460
        %v1462 = vadd.f32 %v1355, %v1357
        %1463 = vadd.xlane.f32.xlu0 %v1462
        %v1464 = vpop.xlane.xlu0 %1463
        %v1465 = vadd.f32 %v1359, %v1361
        %1466 = vadd.xlane.f32.xlu0 %v1465
        %v1467 = vpop.xlane.xlu0 %1466
        %v1468 = vadd.f32 %v1363, %v1365
        %1469 = vadd.xlane.f32.xlu0 %v1468
        %v1470 = vpop.xlane.xlu0 %1469
        %v1471 = vadd.f32 %v1367, %v1369
        %1472 = vadd.xlane.f32.xlu0 %v1471
        %v1473 = vpop.xlane.xlu0 %1472
        %v1474 = vadd.f32 %v1371, %v1373
        %1475 = vadd.xlane.f32.xlu0 %v1474
        %v1476 = vpop.xlane.xlu0 %1475
        %v1477 = vadd.f32 %v1375, %v1377
        %1478 = vadd.xlane.f32.xlu0 %v1477
        %v1479 = vpop.xlane.xlu0 %1478
        %v1480 = vadd.f32 %v1379, %v1381
        %1481 = vadd.xlane.f32.xlu0 %v1480
        %v1482 = vpop.xlane.xlu0 %1481
        %v1483 = vadd.f32 %v1383, %v1385
        %1484 = vadd.xlane.f32.xlu0 %v1483
        %v1485 = vpop.xlane.xlu0 %1484
        %v1486 = vadd.f32 %v1387, %v1389
        %1487 = vadd.xlane.f32.xlu0 %v1486
        %v1488 = vpop.xlane.xlu0 %1487
        %v1489 = vadd.f32 %v1391, %v1393
        %1490 = vadd.xlane.f32.xlu0 %v1489
        %v1491 = vpop.xlane.xlu0 %1490
        %v1492 = vadd.f32 %v1395, %v1397
        %1493 = vadd.xlane.f32.xlu0 %v1492
        %v1494 = vpop.xlane.xlu0 %1493
        %v1495 = vadd.f32 %v1399, %v1401
        %1496 = vadd.xlane.f32.xlu0 %v1495
        %v1497 = vpop.xlane.xlu0 %1496
        %v1498 = vrcp.pop %v1404
        %v1499 = vmul.f32 %v1275, %v1498
        %v1500 = vmul.f32 %v1277, %v1498
        %v1501 = vrcp.pop %v1407
        %v1502 = vmul.f32 %v1279, %v1501
        %v1503 = vmul.f32 %v1281, %v1501
        %v1504 = vrcp.pop %v1410
        %v1505 = vmul.f32 %v1283, %v1504
        %v1506 = vmul.f32 %v1285, %v1504
        %v1507 = vrcp.pop %v1413
        %v1508 = vmul.f32 %v1287, %v1507
        %v1509 = vmul.f32 %v1289, %v1507
        %v1510 = vrcp.pop %v1416
        %v1511 = vmul.f32 %v1291, %v1510
        %v1512 = vmul.f32 %v1293, %v1510
        %v1513 = vrcp.pop %v1419
        %v1514 = vmul.f32 %v1295, %v1513
        %v1515 = vmul.f32 %v1297, %v1513
        %v1516 = vrcp.pop %v1422
        %v1517 = vmul.f32 %v1299, %v1516
        %v1518 = vmul.f32 %v1301, %v1516
        %v1519 = vrcp.pop %v1425
        %v1520 = vmul.f32 %v1303, %v1519
        %v1521 = vmul.f32 %v1305, %v1519
        %v1522 = vrcp.pop %v1428
        %v1523 = vmul.f32 %v1307, %v1522
        %v1524 = vmul.f32 %v1309, %v1522
        %v1525 = vrcp.pop %v1431
        %v1526 = vmul.f32 %v1311, %v1525
        %v1527 = vmul.f32 %v1313, %v1525
        %v1528 = vrcp.pop %v1434
        %v1529 = vmul.f32 %v1315, %v1528
        %v1530 = vmul.f32 %v1317, %v1528
        %v1531 = vrcp.pop %v1437
        %v1532 = vmul.f32 %v1319, %v1531
        %v1533 = vmul.f32 %v1321, %v1531
        %v1534 = vrcp.pop %v1440
        %v1535 = vmul.f32 %v1323, %v1534
        %v1536 = vmul.f32 %v1325, %v1534
        %v1537 = vrcp.pop %v1443
        %v1538 = vmul.f32 %v1327, %v1537
        %v1539 = vmul.f32 %v1329, %v1537
        %v1540 = vrcp.pop %v1446
        %v1541 = vmul.f32 %v1331, %v1540
        %v1542 = vmul.f32 %v1333, %v1540
        %v1543 = vrcp.pop %v1449
        %v1544 = vmul.f32 %v1335, %v1543
        %v1545 = vmul.f32 %v1337, %v1543
        %v1546 = vrcp.pop %v1452
        %v1547 = vmul.f32 %v1339, %v1546
        %v1548 = vmul.f32 %v1341, %v1546
        %v1549 = vrcp.pop %v1455
        %v1550 = vmul.f32 %v1343, %v1549
        %v1551 = vmul.f32 %v1345, %v1549
        %v1552 = vrcp.pop %v1458
        %v1553 = vmul.f32 %v1347, %v1552
        %v1554 = vmul.f32 %v1349, %v1552
        %v1555 = vrcp.pop %v1461
        %v1556 = vmul.f32 %v1351, %v1555
        %v1557 = vmul.f32 %v1353, %v1555
        %v1558 = vrcp.pop %v1464
        %v1559 = vmul.f32 %v1355, %v1558
        %v1560 = vmul.f32 %v1357, %v1558
        %v1561 = vrcp.pop %v1467
        %v1562 = vmul.f32 %v1359, %v1561
        %v1563 = vmul.f32 %v1361, %v1561
        %v1564 = vrcp.pop %v1470
        %v1565 = vmul.f32 %v1363, %v1564
        %v1566 = vmul.f32 %v1365, %v1564
        %v1567 = vrcp.pop %v1473
        %v1568 = vmul.f32 %v1367, %v1567
        %v1569 = vmul.f32 %v1369, %v1567
        %v1570 = vrcp.pop %v1476
        %v1571 = vmul.f32 %v1371, %v1570
        %v1572 = vmul.f32 %v1373, %v1570
        %v1573 = vrcp.pop %v1479
        %v1574 = vmul.f32 %v1375, %v1573
        %v1575 = vmul.f32 %v1377, %v1573
        %v1576 = vrcp.pop %v1482
        %v1577 = vmul.f32 %v1379, %v1576
        %v1578 = vmul.f32 %v1381, %v1576
        %v1579 = vrcp.pop %v1485
        %v1580 = vmul.f32 %v1383, %v1579
        %v1581 = vmul.f32 %v1385, %v1579
        %v1582 = vrcp.pop %v1488
        %v1583 = vmul.f32 %v1387, %v1582
        %v1584 = vmul.f32 %v1389, %v1582
        %v1585 = vrcp.pop %v1491
        %v1586 = vmul.f32 %v1391, %v1585
        %v1587 = vmul.f32 %v1393, %v1585
        %v1588 = vrcp.pop %v1494
        %v1589 = vmul.f32 %v1395, %v1588
        %v1590 = vmul.f32 %v1397, %v1588
        %v1591 = vrcp.pop %v1497
        %v1592 = vmul.f32 %v1399, %v1591
        %v1593 = vmul.f32 %v1401, %v1591
        %v1594 = vpack.c.bf16 %v1502, %v1499
        %v1595 = vpack.c.bf16 %v1503, %v1500
        %v1596 = vpack.c.bf16 %v1508, %v1505
        %v1597 = vpack.c.bf16 %v1509, %v1506
        %v1598 = vpack.c.bf16 %v1514, %v1511
        %v1599 = vpack.c.bf16 %v1515, %v1512
        %v1600 = vpack.c.bf16 %v1520, %v1517
        %v1601 = vpack.c.bf16 %v1521, %v1518
        %v1602 = vpack.c.bf16 %v1526, %v1523
        %v1603 = vpack.c.bf16 %v1527, %v1524
        %v1604 = vpack.c.bf16 %v1532, %v1529
        %v1605 = vpack.c.bf16 %v1533, %v1530
        %v1606 = vpack.c.bf16 %v1538, %v1535
        %v1607 = vpack.c.bf16 %v1539, %v1536
        %v1608 = vpack.c.bf16 %v1544, %v1541
        %v1609 = vpack.c.bf16 %v1545, %v1542
        %v1610 = vpack.c.bf16 %v1550, %v1547
        %v1611 = vpack.c.bf16 %v1551, %v1548
        %v1612 = vpack.c.bf16 %v1556, %v1553
        %v1613 = vpack.c.bf16 %v1557, %v1554
        %v1614 = vpack.c.bf16 %v1562, %v1559
        %v1615 = vpack.c.bf16 %v1563, %v1560
        %v1616 = vpack.c.bf16 %v1568, %v1565
        %v1617 = vpack.c.bf16 %v1569, %v1566
        %v1618 = vpack.c.bf16 %v1574, %v1571
        %v1619 = vpack.c.bf16 %v1575, %v1572
        %v1620 = vpack.c.bf16 %v1580, %v1577
        %v1621 = vpack.c.bf16 %v1581, %v1578
        %v1622 = vpack.c.bf16 %v1586, %v1583
        %v1623 = vpack.c.bf16 %v1587, %v1584
        %v1624 = vpack.c.bf16 %v1592, %v1589
        %v1625 = vpack.c.bf16 %v1593, %v1590
        %v1658 = vunpack.c.l.b16 %v1594
        %v1659 = vunpack.c.l.b16 %v1595
        %v1660 = vunpack.c.h.b16 %v1594
        %v1661 = vunpack.c.h.b16 %v1595
        %v1662 = vunpack.c.l.b16 %v1596
        %v1663 = vunpack.c.l.b16 %v1597
        %v1664 = vunpack.c.h.b16 %v1596
        %v1665 = vunpack.c.h.b16 %v1597
        %v1666 = vunpack.c.l.b16 %v1598
        %v1667 = vunpack.c.l.b16 %v1599
        %v1668 = vunpack.c.h.b16 %v1598
        %v1669 = vunpack.c.h.b16 %v1599
        %v1670 = vunpack.c.l.b16 %v1600
        %v1671 = vunpack.c.l.b16 %v1601
        %v1672 = vunpack.c.h.b16 %v1600
        %v1673 = vunpack.c.h.b16 %v1601
        %v1674 = vunpack.c.l.b16 %v1602
        %v1675 = vunpack.c.l.b16 %v1603
        %v1676 = vunpack.c.h.b16 %v1602
        %v1677 = vunpack.c.h.b16 %v1603
        %v1678 = vunpack.c.l.b16 %v1604
        %v1679 = vunpack.c.l.b16 %v1605
        %v1680 = vunpack.c.h.b16 %v1604
        %v1681 = vunpack.c.h.b16 %v1605
        %v1682 = vunpack.c.l.b16 %v1606
        %v1683 = vunpack.c.l.b16 %v1607
        %v1684 = vunpack.c.h.b16 %v1606
        %v1685 = vunpack.c.h.b16 %v1607
        %v1686 = vunpack.c.l.b16 %v1608
        %v1687 = vunpack.c.l.b16 %v1609
        %v1688 = vunpack.c.h.b16 %v1608
        %v1689 = vunpack.c.h.b16 %v1609
        %v1690 = vunpack.c.l.b16 %v1610
        %v1691 = vunpack.c.l.b16 %v1611
        %v1692 = vunpack.c.h.b16 %v1610
        %v1693 = vunpack.c.h.b16 %v1611
        %v1694 = vunpack.c.l.b16 %v1612
        %v1695 = vunpack.c.l.b16 %v1613
        %v1696 = vunpack.c.h.b16 %v1612
        %v1697 = vunpack.c.h.b16 %v1613
        %v1698 = vunpack.c.l.b16 %v1614
        %v1699 = vunpack.c.l.b16 %v1615
        %v1700 = vunpack.c.h.b16 %v1614
        %v1701 = vunpack.c.h.b16 %v1615
        %v1702 = vunpack.c.l.b16 %v1616
        %v1703 = vunpack.c.l.b16 %v1617
        %v1704 = vunpack.c.h.b16 %v1616
        %v1705 = vunpack.c.h.b16 %v1617
        %v1706 = vunpack.c.l.b16 %v1618
        %v1707 = vunpack.c.l.b16 %v1619
        %v1708 = vunpack.c.h.b16 %v1618
        %v1709 = vunpack.c.h.b16 %v1619
        %v1710 = vunpack.c.l.b16 %v1620
        %v1711 = vunpack.c.l.b16 %v1621
        %v1712 = vunpack.c.h.b16 %v1620
        %v1713 = vunpack.c.h.b16 %v1621
        %v1714 = vunpack.c.l.b16 %v1622
        %v1715 = vunpack.c.l.b16 %v1623
        %v1716 = vunpack.c.h.b16 %v1622
        %v1717 = vunpack.c.h.b16 %v1623
        %v1718 = vunpack.c.l.b16 %v1624
        %v1719 = vunpack.c.l.b16 %v1625
        %v1720 = vunpack.c.h.b16 %v1624
        %v1721 = vunpack.c.h.b16 %v1625
        %v1722 = vpack.c.b16 %v1659, %v1658
        %v1723 = vpack.c.b16 %v1661, %v1660
        %v1724 = vpack.c.b16 %v1663, %v1662
        %v1725 = vpack.c.b16 %v1665, %v1664
        %v1726 = vpack.c.b16 %v1667, %v1666
        %v1727 = vpack.c.b16 %v1669, %v1668
        %v1728 = vpack.c.b16 %v1671, %v1670
        %v1729 = vpack.c.b16 %v1673, %v1672
        %v1730 = vpack.c.b16 %v1675, %v1674
        %v1731 = vpack.c.b16 %v1677, %v1676
        %v1732 = vpack.c.b16 %v1679, %v1678
        %v1733 = vpack.c.b16 %v1681, %v1680
        %v1734 = vpack.c.b16 %v1683, %v1682
        %v1735 = vpack.c.b16 %v1685, %v1684
        %v1736 = vpack.c.b16 %v1687, %v1686
        %v1737 = vpack.c.b16 %v1689, %v1688
        %v1738 = vpack.c.b16 %v1691, %v1690
        %v1739 = vpack.c.b16 %v1693, %v1692
        %v1740 = vpack.c.b16 %v1695, %v1694
        %v1741 = vpack.c.b16 %v1697, %v1696
        %v1742 = vpack.c.b16 %v1699, %v1698
        %v1743 = vpack.c.b16 %v1701, %v1700
        %v1744 = vpack.c.b16 %v1703, %v1702
        %v1745 = vpack.c.b16 %v1705, %v1704
        %v1746 = vpack.c.b16 %v1707, %v1706
        %v1747 = vpack.c.b16 %v1709, %v1708
        %v1748 = vpack.c.b16 %v1711, %v1710
        %v1749 = vpack.c.b16 %v1713, %v1712
        %v1750 = vpack.c.b16 %v1715, %v1714
        %v1751 = vpack.c.b16 %v1717, %v1716
        %v1752 = vpack.c.b16 %v1719, %v1718
        %v1753 = vpack.c.b16 %v1721, %v1720
        %1786 = vst [vmem:[%s388] sm:$0xff] %v1722
        %1787 = vst [vmem:[%s388 + $0x8] sm:$0xff] %v1723
        %1788 = vst [vmem:[%s388 + $0x10] sm:$0xff] %v1724
        %1789 = vst [vmem:[%s388 + $0x18] sm:$0xff] %v1725
        %1790 = vst [vmem:[%s388 + $0x20] sm:$0xff] %v1726
        %1791 = vst [vmem:[%s388 + $0x28] sm:$0xff] %v1727
        %1792 = vst [vmem:[%s388 + $0x30] sm:$0xff] %v1728
        %1793 = vst [vmem:[%s388 + $0x38] sm:$0xff] %v1729
        %1794 = vst [vmem:[%s388 + $0x40] sm:$0xff] %v1730
        %1795 = vst [vmem:[%s388 + $0x48] sm:$0xff] %v1731
        %1796 = vst [vmem:[%s388 + $0x50] sm:$0xff] %v1732
        %1797 = vst [vmem:[%s388 + $0x58] sm:$0xff] %v1733
        %1798 = vst [vmem:[%s388 + $0x60] sm:$0xff] %v1734
        %1799 = vst [vmem:[%s388 + $0x68] sm:$0xff] %v1735
        %1800 = vst [vmem:[%s388 + $0x70] sm:$0xff] %v1736
        %1801 = vst [vmem:[%s388 + $0x78] sm:$0xff] %v1737
        %1802 = vst [vmem:[%s388 + $0x80] sm:$0xff] %v1738
        %1803 = vst [vmem:[%s388 + $0x88] sm:$0xff] %v1739
        %1804 = vst [vmem:[%s388 + $0x90] sm:$0xff] %v1740
        %1805 = vst [vmem:[%s388 + $0x98] sm:$0xff] %v1741
        %1806 = vst [vmem:[%s388 + $0xa0] sm:$0xff] %v1742
        %1807 = vst [vmem:[%s388 + $0xa8] sm:$0xff] %v1743
        %1808 = vst [vmem:[%s388 + $0xb0] sm:$0xff] %v1744
        %1809 = vst [vmem:[%s388 + $0xb8] sm:$0xff] %v1745
        %1810 = vst [vmem:[%s388 + $0xc0] sm:$0xff] %v1746
        %1811 = vst [vmem:[%s388 + $0xc8] sm:$0xff] %v1747
        %1812 = vst [vmem:[%s388 + $0xd0] sm:$0xff] %v1748
        %1813 = vst [vmem:[%s388 + $0xd8] sm:$0xff] %v1749
        %1814 = vst [vmem:[%s388 + $0xe0] sm:$0xff] %v1750
        %1815 = vst [vmem:[%s388 + $0xe8] sm:$0xff] %v1751
        %1816 = vst [vmem:[%s388 + $0xf0] sm:$0xff] %v1752
        %1817 = vst [vmem:[%s388 + $0xf8] sm:$0xff] %v1753
        %v1818 = vld [vmem:[%s408] sm:$0xf]
        %v1819 = vld [vmem:[%s408 + $0x4] sm:$0xf]
        %v1820 = vld [vmem:[%s408 + $0x8] sm:$0xf]
        %v1821 = vld [vmem:[%s408 + $0xc] sm:$0xf]
        %v1822 = vld [vmem:[%s408 + $0x10] sm:$0xf]
        %v1823 = vld [vmem:[%s408 + $0x14] sm:$0xf]
        %v1824 = vld [vmem:[%s408 + $0x18] sm:$0xf]
        %v1825 = vld [vmem:[%s408 + $0x1c] sm:$0xf]
        %v1826 = vld [vmem:[%s408 + $0x20] sm:$0xf]
        %v1827 = vld [vmem:[%s408 + $0x24] sm:$0xf]
        %v1828 = vld [vmem:[%s408 + $0x28] sm:$0xf]
        %v1829 = vld [vmem:[%s408 + $0x2c] sm:$0xf]
        %v1830 = vld [vmem:[%s408 + $0x30] sm:$0xf]
        %v1831 = vld [vmem:[%s408 + $0x34] sm:$0xf]
        %v1832 = vld [vmem:[%s408 + $0x38] sm:$0xf]
        %v1833 = vld [vmem:[%s408 + $0x3c] sm:$0xf]
        %v1834 = vld [vmem:[%s408 + $0x40] sm:$0xf]
        %v1835 = vld [vmem:[%s408 + $0x44] sm:$0xf]
        %v1836 = vld [vmem:[%s408 + $0x48] sm:$0xf]
        %v1837 = vld [vmem:[%s408 + $0x4c] sm:$0xf]
        %v1838 = vld [vmem:[%s408 + $0x50] sm:$0xf]
        %v1839 = vld [vmem:[%s408 + $0x54] sm:$0xf]
        %v1840 = vld [vmem:[%s408 + $0x58] sm:$0xf]
        %v1841 = vld [vmem:[%s408 + $0x5c] sm:$0xf]
        %v1842 = vld [vmem:[%s408 + $0x60] sm:$0xf]
        %v1843 = vld [vmem:[%s408 + $0x64] sm:$0xf]
        %v1844 = vld [vmem:[%s408 + $0x68] sm:$0xf]
        %v1845 = vld [vmem:[%s408 + $0x6c] sm:$0xf]
        %v1846 = vld [vmem:[%s408 + $0x70] sm:$0xf]
        %v1847 = vld [vmem:[%s408 + $0x74] sm:$0xf]
        %v1848 = vld [vmem:[%s408 + $0x78] sm:$0xf]
        %v1849 = vld [vmem:[%s408 + $0x7c] sm:$0xf]
        %v1882 = vunpack.c.l.b16 %v1818
        %v1883 = vunpack.c.l.b16 %v1819
        %v1884 = vunpack.c.l.b16 %v1820
        %v1885 = vunpack.c.l.b16 %v1821
        %v1886 = vunpack.c.l.b16 %v1822
        %v1887 = vunpack.c.l.b16 %v1823
        %v1888 = vunpack.c.l.b16 %v1824
        %v1889 = vunpack.c.l.b16 %v1825
        %v1890 = vunpack.c.l.b16 %v1826
        %v1891 = vunpack.c.l.b16 %v1827
        %v1892 = vunpack.c.l.b16 %v1828
        %v1893 = vunpack.c.l.b16 %v1829
        %v1894 = vunpack.c.l.b16 %v1830
        %v1895 = vunpack.c.l.b16 %v1831
        %v1896 = vunpack.c.l.b16 %v1832
        %v1897 = vunpack.c.l.b16 %v1833
        %v1898 = vunpack.c.l.b16 %v1834
        %v1899 = vunpack.c.l.b16 %v1835
        %v1900 = vunpack.c.l.b16 %v1836
        %v1901 = vunpack.c.l.b16 %v1837
        %v1902 = vunpack.c.l.b16 %v1838
        %v1903 = vunpack.c.l.b16 %v1839
        %v1904 = vunpack.c.l.b16 %v1840
        %v1905 = vunpack.c.l.b16 %v1841
        %v1906 = vunpack.c.l.b16 %v1842
        %v1907 = vunpack.c.l.b16 %v1843
        %v1908 = vunpack.c.l.b16 %v1844
        %v1909 = vunpack.c.l.b16 %v1845
        %v1910 = vunpack.c.l.b16 %v1846
        %v1911 = vunpack.c.l.b16 %v1847
        %v1912 = vunpack.c.l.b16 %v1848
        %v1913 = vunpack.c.l.b16 %v1849
        %v1914 = vpack.c.b16 %v1883, %v1882
        %v1915 = vpack.c.b16 %v1885, %v1884
        %v1916 = vpack.c.b16 %v1887, %v1886
        %v1917 = vpack.c.b16 %v1889, %v1888
        %v1918 = vpack.c.b16 %v1891, %v1890
        %v1919 = vpack.c.b16 %v1893, %v1892
        %v1920 = vpack.c.b16 %v1895, %v1894
        %v1921 = vpack.c.b16 %v1897, %v1896
        %v1922 = vpack.c.b16 %v1899, %v1898
        %v1923 = vpack.c.b16 %v1901, %v1900
        %v1924 = vpack.c.b16 %v1903, %v1902
        %v1925 = vpack.c.b16 %v1905, %v1904
        %v1926 = vpack.c.b16 %v1907, %v1906
        %v1927 = vpack.c.b16 %v1909, %v1908
        %v1928 = vpack.c.b16 %v1911, %v1910
        %v1929 = vpack.c.b16 %v1913, %v1912
        %1946 = vmatprep.subr.bf16.mxu0 0
        %1947 = vmatpush1.bf16.msra.mxu0 %v1921
        %1948 = vmatprep.subr.bf16.mxu0 0
        %1949 = vmatpush1.bf16.msra.mxu0 %v1920
        %1950 = vmatprep.subr.bf16.mxu0 0
        %1951 = vmatpush1.bf16.msra.mxu0 %v1919
        %1952 = vmatprep.subr.bf16.mxu0 0
        %1953 = vmatpush1.bf16.msra.mxu0 %v1918
        %1954 = vmatprep.subr.bf16.mxu0 0
        %1955 = vmatpush1.bf16.msra.mxu0 %v1917
        %1956 = vmatprep.subr.bf16.mxu0 0
        %1957 = vmatpush1.bf16.msra.mxu0 %v1916
        %1958 = vmatprep.subr.bf16.mxu0 0
        %1959 = vmatpush1.bf16.msra.mxu0 %v1915
        %1960 = vmatprep.subr.bf16.mxu0 0
        %1961 = vmatpush1.bf16.msra.mxu0 %v1914
        %1962 = vmatprep.subr.bf16.mxu0 0
        %1963 = vmatpush2.bf16.msra.mxu0 %v1929
        %1964 = vmatprep.subr.bf16.mxu0 0
        %1965 = vmatpush2.bf16.msra.mxu0 %v1928
        %1966 = vmatprep.subr.bf16.mxu0 0
        %1967 = vmatpush2.bf16.msra.mxu0 %v1927
        %1968 = vmatprep.subr.bf16.mxu0 0
        %1969 = vmatpush2.bf16.msra.mxu0 %v1926
        %1970 = vmatprep.subr.bf16.mxu0 0
        %1971 = vmatpush2.bf16.msra.mxu0 %v1925
        %1972 = vmatprep.subr.bf16.mxu0 0
        %1973 = vmatpush2.bf16.msra.mxu0 %v1924
        %1974 = vmatprep.subr.bf16.mxu0 0
        %1975 = vmatpush2.bf16.msra.mxu0 %v1923
        %1976 = vmatprep.subr.bf16.mxu0 0
        %1977 = vmatpush2.bf16.msra.mxu0 %v1922
        %1978 = vmatprep.mubr.bf16.mxu0 %v1595
        %1979 = vmatmul.mubr.bf16.gmra.mxu0 %v1594
        %v1980 = vpop.f32.mrf.mxu0
        %v1981 = vadd.f32 0.0, %v1980
        %v1982 = vpop.f32.mrf.mxu0
        %v1983 = vpop.f32.mrf.mxu0
        %v1984 = vadd.f32 0.0, %v1983
        %v1985 = vpop.f32.mrf.mxu0
        %1986 = vmatprep.mubr.bf16.mxu0 %v1597
        %1987 = vmatmul.mubr.bf16.gmra.mxu0 %v1596
        %v1988 = vpop.f32.mrf.mxu0
        %v1989 = vadd.f32 0.0, %v1988
        %v1990 = vpop.f32.mrf.mxu0
        %v1991 = vpop.f32.mrf.mxu0
        %v1992 = vadd.f32 0.0, %v1991
        %v1993 = vpop.f32.mrf.mxu0
        %1994 = vmatprep.mubr.bf16.mxu0 %v1599
        %1995 = vmatmul.mubr.bf16.gmra.mxu0 %v1598
        %v1996 = vpop.f32.mrf.mxu0
        %v1997 = vadd.f32 0.0, %v1996
        %v1998 = vpop.f32.mrf.mxu0
        %v1999 = vpop.f32.mrf.mxu0
        %v2000 = vadd.f32 0.0, %v1999
        %v2001 = vpop.f32.mrf.mxu0
        %2002 = vmatprep.mubr.bf16.mxu0 %v1601
        %2003 = vmatmul.mubr.bf16.gmra.mxu0 %v1600
        %v2004 = vpop.f32.mrf.mxu0
        %v2005 = vadd.f32 0.0, %v2004
        %v2006 = vpop.f32.mrf.mxu0
        %v2007 = vpop.f32.mrf.mxu0
        %v2008 = vadd.f32 0.0, %v2007
        %v2009 = vpop.f32.mrf.mxu0
        %2010 = vmatprep.mubr.bf16.mxu0 %v1603
        %2011 = vmatmul.mubr.bf16.gmra.mxu0 %v1602
        %v2012 = vpop.f32.mrf.mxu0
        %v2013 = vadd.f32 0.0, %v2012
        %v2014 = vpop.f32.mrf.mxu0
        %v2015 = vpop.f32.mrf.mxu0
        %v2016 = vadd.f32 0.0, %v2015
        %v2017 = vpop.f32.mrf.mxu0
        %2018 = vmatprep.mubr.bf16.mxu0 %v1605
        %2019 = vmatmul.mubr.bf16.gmra.mxu0 %v1604
        %v2020 = vpop.f32.mrf.mxu0
        %v2021 = vadd.f32 0.0, %v2020
        %v2022 = vpop.f32.mrf.mxu0
        %v2023 = vpop.f32.mrf.mxu0
        %v2024 = vadd.f32 0.0, %v2023
        %v2025 = vpop.f32.mrf.mxu0
        %2026 = vmatprep.mubr.bf16.mxu0 %v1607
        %2027 = vmatmul.mubr.bf16.gmra.mxu0 %v1606
        %v2028 = vpop.f32.mrf.mxu0
        %v2029 = vadd.f32 0.0, %v2028
        %v2030 = vpop.f32.mrf.mxu0
        %v2031 = vpop.f32.mrf.mxu0
        %v2032 = vadd.f32 0.0, %v2031
        %v2033 = vpop.f32.mrf.mxu0
        %2034 = vmatprep.mubr.bf16.mxu0 %v1609
        %2035 = vmatmul.mubr.bf16.gmra.mxu0 %v1608
        %v2036 = vpop.f32.mrf.mxu0
        %v2037 = vadd.f32 0.0, %v2036
        %v2038 = vpop.f32.mrf.mxu0
        %v2039 = vpop.f32.mrf.mxu0
        %v2040 = vadd.f32 0.0, %v2039
        %v2041 = vpop.f32.mrf.mxu0
        %2042 = vmatprep.mubr.bf16.mxu0 %v1611
        %2043 = vmatmul.mubr.bf16.gmra.mxu0 %v1610
        %v2044 = vpop.f32.mrf.mxu0
        %v2045 = vadd.f32 0.0, %v2044
        %v2046 = vpop.f32.mrf.mxu0
        %v2047 = vpop.f32.mrf.mxu0
        %v2048 = vadd.f32 0.0, %v2047
        %v2049 = vpop.f32.mrf.mxu0
        %2050 = vmatprep.mubr.bf16.mxu0 %v1613
        %2051 = vmatmul.mubr.bf16.gmra.mxu0 %v1612
        %v2052 = vpop.f32.mrf.mxu0
        %v2053 = vadd.f32 0.0, %v2052
        %v2054 = vpop.f32.mrf.mxu0
        %v2055 = vpop.f32.mrf.mxu0
        %v2056 = vadd.f32 0.0, %v2055
        %v2057 = vpop.f32.mrf.mxu0
        %2058 = vmatprep.mubr.bf16.mxu0 %v1615
        %2059 = vmatmul.mubr.bf16.gmra.mxu0 %v1614
        %v2060 = vpop.f32.mrf.mxu0
        %v2061 = vadd.f32 0.0, %v2060
        %v2062 = vpop.f32.mrf.mxu0
        %v2063 = vpop.f32.mrf.mxu0
        %v2064 = vadd.f32 0.0, %v2063
        %v2065 = vpop.f32.mrf.mxu0
        %2066 = vmatprep.mubr.bf16.mxu0 %v1617
        %2067 = vmatmul.mubr.bf16.gmra.mxu0 %v1616
        %v2068 = vpop.f32.mrf.mxu0
        %v2069 = vadd.f32 0.0, %v2068
        %v2070 = vpop.f32.mrf.mxu0
        %v2071 = vpop.f32.mrf.mxu0
        %v2072 = vadd.f32 0.0, %v2071
        %v2073 = vpop.f32.mrf.mxu0
        %2074 = vmatprep.mubr.bf16.mxu0 %v1619
        %2075 = vmatmul.mubr.bf16.gmra.mxu0 %v1618
        %v2076 = vpop.f32.mrf.mxu0
        %v2077 = vadd.f32 0.0, %v2076
        %v2078 = vpop.f32.mrf.mxu0
        %v2079 = vpop.f32.mrf.mxu0
        %v2080 = vadd.f32 0.0, %v2079
        %v2081 = vpop.f32.mrf.mxu0
        %2082 = vmatprep.mubr.bf16.mxu0 %v1621
        %2083 = vmatmul.mubr.bf16.gmra.mxu0 %v1620
        %v2084 = vpop.f32.mrf.mxu0
        %v2085 = vadd.f32 0.0, %v2084
        %v2086 = vpop.f32.mrf.mxu0
        %v2087 = vpop.f32.mrf.mxu0
        %v2088 = vadd.f32 0.0, %v2087
        %v2089 = vpop.f32.mrf.mxu0
        %2090 = vmatprep.mubr.bf16.mxu0 %v1623
        %2091 = vmatmul.mubr.bf16.gmra.mxu0 %v1622
        %v2092 = vpop.f32.mrf.mxu0
        %v2093 = vadd.f32 0.0, %v2092
        %v2094 = vpop.f32.mrf.mxu0
        %v2095 = vpop.f32.mrf.mxu0
        %v2096 = vadd.f32 0.0, %v2095
        %v2097 = vpop.f32.mrf.mxu0
        %2098 = vmatprep.mubr.bf16.mxu0 %v1625
        %2099 = vmatmul.mubr.bf16.gmra.mxu0 %v1624
        %v2100 = vpop.f32.mrf.mxu0
        %v2101 = vadd.f32 0.0, %v2100
        %v2102 = vpop.f32.mrf.mxu0
        %v2103 = vpop.f32.mrf.mxu0
        %v2104 = vadd.f32 0.0, %v2103
        %v2105 = vpop.f32.mrf.mxu0
        %2106 = vdwg.mxu0
        %v2107 = vld [vmem:[#allocation2] sm:$0xf]
        %v2108 = vld [vmem:[#allocation2 + $0x4] sm:$0xf]
        %v2109 = vld [vmem:[#allocation2 + $0x8] sm:$0xf]
        %v2110 = vld [vmem:[#allocation2 + $0xc] sm:$0xf]
        %v2111 = vld [vmem:[#allocation2 + $0x10] sm:$0xf]
        %v2112 = vld [vmem:[#allocation2 + $0x14] sm:$0xf]
        %v2113 = vld [vmem:[#allocation2 + $0x18] sm:$0xf]
        %v2114 = vld [vmem:[#allocation2 + $0x1c] sm:$0xf]
        %v2115 = vld [vmem:[#allocation2 + $0x20] sm:$0xf]
        %v2116 = vld [vmem:[#allocation2 + $0x24] sm:$0xf]
        %v2117 = vld [vmem:[#allocation2 + $0x28] sm:$0xf]
        %v2118 = vld [vmem:[#allocation2 + $0x2c] sm:$0xf]
        %v2119 = vld [vmem:[#allocation2 + $0x30] sm:$0xf]
        %v2120 = vld [vmem:[#allocation2 + $0x34] sm:$0xf]
        %v2121 = vld [vmem:[#allocation2 + $0x38] sm:$0xf]
        %v2122 = vld [vmem:[#allocation2 + $0x3c] sm:$0xf]
        %v2123 = vld [vmem:[#allocation2 + $0x40] sm:$0xf]
        %v2124 = vld [vmem:[#allocation2 + $0x44] sm:$0xf]
        %v2125 = vld [vmem:[#allocation2 + $0x48] sm:$0xf]
        %v2126 = vld [vmem:[#allocation2 + $0x4c] sm:$0xf]
        %v2127 = vld [vmem:[#allocation2 + $0x50] sm:$0xf]
        %v2128 = vld [vmem:[#allocation2 + $0x54] sm:$0xf]
        %v2129 = vld [vmem:[#allocation2 + $0x58] sm:$0xf]
        %v2130 = vld [vmem:[#allocation2 + $0x5c] sm:$0xf]
        %v2131 = vld [vmem:[#allocation2 + $0x60] sm:$0xf]
        %v2132 = vld [vmem:[#allocation2 + $0x64] sm:$0xf]
        %v2133 = vld [vmem:[#allocation2 + $0x68] sm:$0xf]
        %v2134 = vld [vmem:[#allocation2 + $0x6c] sm:$0xf]
        %v2135 = vld [vmem:[#allocation2 + $0x70] sm:$0xf]
        %v2136 = vld [vmem:[#allocation2 + $0x74] sm:$0xf]
        %v2137 = vld [vmem:[#allocation2 + $0x78] sm:$0xf]
        %v2138 = vld [vmem:[#allocation2 + $0x7c] sm:$0xf]
        %v2171 = vunpack.c.l.b16 %v2107
        %v2172 = vunpack.c.l.b16 %v2108
        %v2173 = vunpack.c.l.b16 %v2109
        %v2174 = vunpack.c.l.b16 %v2110
        %v2175 = vunpack.c.l.b16 %v2111
        %v2176 = vunpack.c.l.b16 %v2112
        %v2177 = vunpack.c.l.b16 %v2113
        %v2178 = vunpack.c.l.b16 %v2114
        %v2179 = vunpack.c.l.b16 %v2115
        %v2180 = vunpack.c.l.b16 %v2116
        %v2181 = vunpack.c.l.b16 %v2117
        %v2182 = vunpack.c.l.b16 %v2118
        %v2183 = vunpack.c.l.b16 %v2119
        %v2184 = vunpack.c.l.b16 %v2120
        %v2185 = vunpack.c.l.b16 %v2121
        %v2186 = vunpack.c.l.b16 %v2122
        %v2187 = vunpack.c.l.b16 %v2123
        %v2188 = vunpack.c.l.b16 %v2124
        %v2189 = vunpack.c.l.b16 %v2125
        %v2190 = vunpack.c.l.b16 %v2126
        %v2191 = vunpack.c.l.b16 %v2127
        %v2192 = vunpack.c.l.b16 %v2128
        %v2193 = vunpack.c.l.b16 %v2129
        %v2194 = vunpack.c.l.b16 %v2130
        %v2195 = vunpack.c.l.b16 %v2131
        %v2196 = vunpack.c.l.b16 %v2132
        %v2197 = vunpack.c.l.b16 %v2133
        %v2198 = vunpack.c.l.b16 %v2134
        %v2199 = vunpack.c.l.b16 %v2135
        %v2200 = vunpack.c.l.b16 %v2136
        %v2201 = vunpack.c.l.b16 %v2137
        %v2202 = vunpack.c.l.b16 %v2138
        %v2203 = vpack.c.b16 %v2172, %v2171
        %v2204 = vpack.c.b16 %v2174, %v2173
        %v2205 = vpack.c.b16 %v2176, %v2175
        %v2206 = vpack.c.b16 %v2178, %v2177
        %v2207 = vpack.c.b16 %v2180, %v2179
        %v2208 = vpack.c.b16 %v2182, %v2181
        %v2209 = vpack.c.b16 %v2184, %v2183
        %v2210 = vpack.c.b16 %v2186, %v2185
        %v2211 = vpack.c.b16 %v2188, %v2187
        %v2212 = vpack.c.b16 %v2190, %v2189
        %v2213 = vpack.c.b16 %v2192, %v2191
        %v2214 = vpack.c.b16 %v2194, %v2193
        %v2215 = vpack.c.b16 %v2196, %v2195
        %v2216 = vpack.c.b16 %v2198, %v2197
        %v2217 = vpack.c.b16 %v2200, %v2199
        %v2218 = vpack.c.b16 %v2202, %v2201
        %2235 = vmatprep.subr.bf16.mxu0 0
        %2236 = vmatpush1.bf16.msra.mxu0 %v2210
        %2237 = vmatprep.subr.bf16.mxu0 0
        %2238 = vmatpush1.bf16.msra.mxu0 %v2209
        %2239 = vmatprep.subr.bf16.mxu0 0
        %2240 = vmatpush1.bf16.msra.mxu0 %v2208
        %2241 = vmatprep.subr.bf16.mxu0 0
        %2242 = vmatpush1.bf16.msra.mxu0 %v2207
        %2243 = vmatprep.subr.bf16.mxu0 0
        %2244 = vmatpush1.bf16.msra.mxu0 %v2206
        %2245 = vmatprep.subr.bf16.mxu0 0
        %2246 = vmatpush1.bf16.msra.mxu0 %v2205
        %2247 = vmatprep.subr.bf16.mxu0 0
        %2248 = vmatpush1.bf16.msra.mxu0 %v2204
        %2249 = vmatprep.subr.bf16.mxu0 0
        %2250 = vmatpush1.bf16.msra.mxu0 %v2203
        %2251 = vmatprep.subr.bf16.mxu0 0
        %2252 = vmatpush2.bf16.msra.mxu0 %v2218
        %2253 = vmatprep.subr.bf16.mxu0 0
        %2254 = vmatpush2.bf16.msra.mxu0 %v2217
        %2255 = vmatprep.subr.bf16.mxu0 0
        %2256 = vmatpush2.bf16.msra.mxu0 %v2216
        %2257 = vmatprep.subr.bf16.mxu0 0
        %2258 = vmatpush2.bf16.msra.mxu0 %v2215
        %2259 = vmatprep.subr.bf16.mxu0 0
        %2260 = vmatpush2.bf16.msra.mxu0 %v2214
        %2261 = vmatprep.subr.bf16.mxu0 0
        %2262 = vmatpush2.bf16.msra.mxu0 %v2213
        %2263 = vmatprep.subr.bf16.mxu0 0
        %2264 = vmatpush2.bf16.msra.mxu0 %v2212
        %2265 = vmatprep.subr.bf16.mxu0 0
        %2266 = vmatpush2.bf16.msra.mxu0 %v2211
        %2267 = vmatprep.mubr.bf16.mxu0 %v1595
        %2268 = vmatmul.mubr.bf16.gmra.mxu0 %v1594
        %v2269 = vpop.f32.mrf.mxu0
        %v2270 = vadd.f32 0.0, %v2269
        %v2271 = vpop.f32.mrf.mxu0
        %v2272 = vpop.f32.mrf.mxu0
        %v2273 = vadd.f32 0.0, %v2272
        %v2274 = vpop.f32.mrf.mxu0
        %2275 = vmatprep.mubr.bf16.mxu0 %v1597
        %2276 = vmatmul.mubr.bf16.gmra.mxu0 %v1596
        %v2277 = vpop.f32.mrf.mxu0
        %v2278 = vadd.f32 0.0, %v2277
        %v2279 = vpop.f32.mrf.mxu0
        %v2280 = vpop.f32.mrf.mxu0
        %v2281 = vadd.f32 0.0, %v2280
        %v2282 = vpop.f32.mrf.mxu0
        %2283 = vmatprep.mubr.bf16.mxu0 %v1599
        %2284 = vmatmul.mubr.bf16.gmra.mxu0 %v1598
        %v2285 = vpop.f32.mrf.mxu0
        %v2286 = vadd.f32 0.0, %v2285
        %v2287 = vpop.f32.mrf.mxu0
        %v2288 = vpop.f32.mrf.mxu0
        %v2289 = vadd.f32 0.0, %v2288
        %v2290 = vpop.f32.mrf.mxu0
        %2291 = vmatprep.mubr.bf16.mxu0 %v1601
        %2292 = vmatmul.mubr.bf16.gmra.mxu0 %v1600
        %v2293 = vpop.f32.mrf.mxu0
        %v2294 = vadd.f32 0.0, %v2293
        %v2295 = vpop.f32.mrf.mxu0
        %v2296 = vpop.f32.mrf.mxu0
        %v2297 = vadd.f32 0.0, %v2296
        %v2298 = vpop.f32.mrf.mxu0
        %2299 = vmatprep.mubr.bf16.mxu0 %v1603
        %2300 = vmatmul.mubr.bf16.gmra.mxu0 %v1602
        %v2301 = vpop.f32.mrf.mxu0
        %v2302 = vadd.f32 0.0, %v2301
        %v2303 = vpop.f32.mrf.mxu0
        %v2304 = vpop.f32.mrf.mxu0
        %v2305 = vadd.f32 0.0, %v2304
        %v2306 = vpop.f32.mrf.mxu0
        %2307 = vmatprep.mubr.bf16.mxu0 %v1605
        %2308 = vmatmul.mubr.bf16.gmra.mxu0 %v1604
        %v2309 = vpop.f32.mrf.mxu0
        %v2310 = vadd.f32 0.0, %v2309
        %v2311 = vpop.f32.mrf.mxu0
        %v2312 = vpop.f32.mrf.mxu0
        %v2313 = vadd.f32 0.0, %v2312
        %v2314 = vpop.f32.mrf.mxu0
        %2315 = vmatprep.mubr.bf16.mxu0 %v1607
        %2316 = vmatmul.mubr.bf16.gmra.mxu0 %v1606
        %v2317 = vpop.f32.mrf.mxu0
        %v2318 = vadd.f32 0.0, %v2317
        %v2319 = vpop.f32.mrf.mxu0
        %v2320 = vpop.f32.mrf.mxu0
        %v2321 = vadd.f32 0.0, %v2320
        %v2322 = vpop.f32.mrf.mxu0
        %2323 = vmatprep.mubr.bf16.mxu0 %v1609
        %2324 = vmatmul.mubr.bf16.gmra.mxu0 %v1608
        %v2325 = vpop.f32.mrf.mxu0
        %v2326 = vadd.f32 0.0, %v2325
        %v2327 = vpop.f32.mrf.mxu0
        %v2328 = vpop.f32.mrf.mxu0
        %v2329 = vadd.f32 0.0, %v2328
        %v2330 = vpop.f32.mrf.mxu0
        %2331 = vmatprep.mubr.bf16.mxu0 %v1611
        %2332 = vmatmul.mubr.bf16.gmra.mxu0 %v1610
        %v2333 = vpop.f32.mrf.mxu0
        %v2334 = vadd.f32 0.0, %v2333
        %v2335 = vpop.f32.mrf.mxu0
        %v2336 = vpop.f32.mrf.mxu0
        %v2337 = vadd.f32 0.0, %v2336
        %v2338 = vpop.f32.mrf.mxu0
        %2339 = vmatprep.mubr.bf16.mxu0 %v1613
        %2340 = vmatmul.mubr.bf16.gmra.mxu0 %v1612
        %v2341 = vpop.f32.mrf.mxu0
        %v2342 = vadd.f32 0.0, %v2341
        %v2343 = vpop.f32.mrf.mxu0
        %v2344 = vpop.f32.mrf.mxu0
        %v2345 = vadd.f32 0.0, %v2344
        %v2346 = vpop.f32.mrf.mxu0
        %2347 = vmatprep.mubr.bf16.mxu0 %v1615
        %2348 = vmatmul.mubr.bf16.gmra.mxu0 %v1614
        %v2349 = vpop.f32.mrf.mxu0
        %v2350 = vadd.f32 0.0, %v2349
        %v2351 = vpop.f32.mrf.mxu0
        %v2352 = vpop.f32.mrf.mxu0
        %v2353 = vadd.f32 0.0, %v2352
        %v2354 = vpop.f32.mrf.mxu0
        %2355 = vmatprep.mubr.bf16.mxu0 %v1617
        %2356 = vmatmul.mubr.bf16.gmra.mxu0 %v1616
        %v2357 = vpop.f32.mrf.mxu0
        %v2358 = vadd.f32 0.0, %v2357
        %v2359 = vpop.f32.mrf.mxu0
        %v2360 = vpop.f32.mrf.mxu0
        %v2361 = vadd.f32 0.0, %v2360
        %v2362 = vpop.f32.mrf.mxu0
        %2363 = vmatprep.mubr.bf16.mxu0 %v1619
        %2364 = vmatmul.mubr.bf16.gmra.mxu0 %v1618
        %v2365 = vpop.f32.mrf.mxu0
        %v2366 = vadd.f32 0.0, %v2365
        %v2367 = vpop.f32.mrf.mxu0
        %v2368 = vpop.f32.mrf.mxu0
        %v2369 = vadd.f32 0.0, %v2368
        %v2370 = vpop.f32.mrf.mxu0
        %2371 = vmatprep.mubr.bf16.mxu0 %v1621
        %2372 = vmatmul.mubr.bf16.gmra.mxu0 %v1620
        %v2373 = vpop.f32.mrf.mxu0
        %v2374 = vadd.f32 0.0, %v2373
        %v2375 = vpop.f32.mrf.mxu0
        %v2376 = vpop.f32.mrf.mxu0
        %v2377 = vadd.f32 0.0, %v2376
        %v2378 = vpop.f32.mrf.mxu0
        %2379 = vmatprep.mubr.bf16.mxu0 %v1623
        %2380 = vmatmul.mubr.bf16.gmra.mxu0 %v1622
        %v2381 = vpop.f32.mrf.mxu0
        %v2382 = vadd.f32 0.0, %v2381
        %v2383 = vpop.f32.mrf.mxu0
        %v2384 = vpop.f32.mrf.mxu0
        %v2385 = vadd.f32 0.0, %v2384
        %v2386 = vpop.f32.mrf.mxu0
        %2387 = vmatprep.mubr.bf16.mxu0 %v1625
        %2388 = vmatmul.mubr.bf16.gmra.mxu0 %v1624
        %v2389 = vpop.f32.mrf.mxu0
        %v2390 = vadd.f32 0.0, %v2389
        %v2391 = vpop.f32.mrf.mxu0
        %v2392 = vpop.f32.mrf.mxu0
        %v2393 = vadd.f32 0.0, %v2392
        %v2394 = vpop.f32.mrf.mxu0
        %2395 = vdwg.mxu0
        %v2396 = vmul.f32 %v1981, %v1981
        %v2397 = vmul.f32 %v1984, %v1984
        %v2398 = vmul.f32 %v1989, %v1989
        %v2399 = vmul.f32 %v1992, %v1992
        %v2400 = vmul.f32 %v1997, %v1997
        %v2401 = vmul.f32 %v2000, %v2000
        %v2402 = vmul.f32 %v2005, %v2005
        %v2403 = vmul.f32 %v2008, %v2008
        %v2404 = vmul.f32 %v2013, %v2013
        %v2405 = vmul.f32 %v2016, %v2016
        %v2406 = vmul.f32 %v2021, %v2021
        %v2407 = vmul.f32 %v2024, %v2024
        %v2408 = vmul.f32 %v2029, %v2029
        %v2409 = vmul.f32 %v2032, %v2032
        %v2410 = vmul.f32 %v2037, %v2037
        %v2411 = vmul.f32 %v2040, %v2040
        %v2412 = vmul.f32 %v2045, %v2045
        %v2413 = vmul.f32 %v2048, %v2048
        %v2414 = vmul.f32 %v2053, %v2053
        %v2415 = vmul.f32 %v2056, %v2056
        %v2416 = vmul.f32 %v2061, %v2061
        %v2417 = vmul.f32 %v2064, %v2064
        %v2418 = vmul.f32 %v2069, %v2069
        %v2419 = vmul.f32 %v2072, %v2072
        %v2420 = vmul.f32 %v2077, %v2077
        %v2421 = vmul.f32 %v2080, %v2080
        %v2422 = vmul.f32 %v2085, %v2085
        %v2423 = vmul.f32 %v2088, %v2088
        %v2424 = vmul.f32 %v2093, %v2093
        %v2425 = vmul.f32 %v2096, %v2096
        %v2426 = vmul.f32 %v2101, %v2101
        %v2427 = vmul.f32 %v2104, %v2104
        %v2428 = vsub.f32 %v2270, %v2396
        %v2429 = vsub.f32 %v2273, %v2397
        %v2430 = vsub.f32 %v2278, %v2398
        %v2431 = vsub.f32 %v2281, %v2399
        %v2432 = vsub.f32 %v2286, %v2400
        %v2433 = vsub.f32 %v2289, %v2401
        %v2434 = vsub.f32 %v2294, %v2402
        %v2435 = vsub.f32 %v2297, %v2403
        %v2436 = vsub.f32 %v2302, %v2404
        %v2437 = vsub.f32 %v2305, %v2405
        %v2438 = vsub.f32 %v2310, %v2406
        %v2439 = vsub.f32 %v2313, %v2407
        %v2440 = vsub.f32 %v2318, %v2408
        %v2441 = vsub.f32 %v2321, %v2409
        %v2442 = vsub.f32 %v2326, %v2410
        %v2443 = vsub.f32 %v2329, %v2411
        %v2444 = vsub.f32 %v2334, %v2412
        %v2445 = vsub.f32 %v2337, %v2413
        %v2446 = vsub.f32 %v2342, %v2414
        %v2447 = vsub.f32 %v2345, %v2415
        %v2448 = vsub.f32 %v2350, %v2416
        %v2449 = vsub.f32 %v2353, %v2417
        %v2450 = vsub.f32 %v2358, %v2418
        %v2451 = vsub.f32 %v2361, %v2419
        %v2452 = vsub.f32 %v2366, %v2420
        %v2453 = vsub.f32 %v2369, %v2421
        %v2454 = vsub.f32 %v2374, %v2422
        %v2455 = vsub.f32 %v2377, %v2423
        %v2456 = vsub.f32 %v2382, %v2424
        %v2457 = vsub.f32 %v2385, %v2425
        %v2458 = vsub.f32 %v2390, %v2426
        %v2459 = vsub.f32 %v2393, %v2427
        %v2460 = vmax.f32 %v2428, 0.0
        %v2461 = vmax.f32 %v2429, 0.0
        %v2462 = vmax.f32 %v2430, 0.0
        %v2463 = vmax.f32 %v2431, 0.0
        %v2464 = vmax.f32 %v2432, 0.0
        %v2465 = vmax.f32 %v2433, 0.0
        %v2466 = vmax.f32 %v2434, 0.0
        %v2467 = vmax.f32 %v2435, 0.0
        %v2468 = vmax.f32 %v2436, 0.0
        %v2469 = vmax.f32 %v2437, 0.0
        %v2470 = vmax.f32 %v2438, 0.0
        %v2471 = vmax.f32 %v2439, 0.0
        %v2472 = vmax.f32 %v2440, 0.0
        %v2473 = vmax.f32 %v2441, 0.0
        %v2474 = vmax.f32 %v2442, 0.0
        %v2475 = vmax.f32 %v2443, 0.0
        %v2476 = vmax.f32 %v2444, 0.0
        %v2477 = vmax.f32 %v2445, 0.0
        %v2478 = vmax.f32 %v2446, 0.0
        %v2479 = vmax.f32 %v2447, 0.0
        %v2480 = vmax.f32 %v2448, 0.0
        %v2481 = vmax.f32 %v2449, 0.0
        %v2482 = vmax.f32 %v2450, 0.0
        %v2483 = vmax.f32 %v2451, 0.0
        %v2484 = vmax.f32 %v2452, 0.0
        %v2485 = vmax.f32 %v2453, 0.0
        %v2486 = vmax.f32 %v2454, 0.0
        %v2487 = vmax.f32 %v2455, 0.0
        %v2488 = vmax.f32 %v2456, 0.0
        %v2489 = vmax.f32 %v2457, 0.0
        %v2490 = vmax.f32 %v2458, 0.0
        %v2491 = vmax.f32 %v2459, 0.0
        %v2492 = vrsqrt.pop %v2460
        %v2493 = vmul.f32 %v2460, %v2492
        %vm2494 = vcmp.eq.f32.partialorder %v2460, inf
        %v2495 = vsel %vm2494, %v2460, %v2493
        %vm2496 = vcmp.eq.f32.partialorder %v2460, 0.0
        %v2497 = vand.u32 %v2460, 2147483648
        %v2498 = vsel %vm2496, %v2497, %v2495
        %v2499 = vrsqrt.pop %v2461
        %v2500 = vmul.f32 %v2461, %v2499
        %vm2501 = vcmp.eq.f32.partialorder %v2461, inf
        %v2502 = vsel %vm2501, %v2461, %v2500
        %vm2503 = vcmp.eq.f32.partialorder %v2461, 0.0
        %v2504 = vand.u32 %v2461, 2147483648
        %v2505 = vsel %vm2503, %v2504, %v2502
        %v2506 = vrsqrt.pop %v2462
        %v2507 = vmul.f32 %v2462, %v2506
        %vm2508 = vcmp.eq.f32.partialorder %v2462, inf
        %v2509 = vsel %vm2508, %v2462, %v2507
        %vm2510 = vcmp.eq.f32.partialorder %v2462, 0.0
        %v2511 = vand.u32 %v2462, 2147483648
        %v2512 = vsel %vm2510, %v2511, %v2509
        %v2513 = vrsqrt.pop %v2463
        %v2514 = vmul.f32 %v2463, %v2513
        %vm2515 = vcmp.eq.f32.partialorder %v2463, inf
        %v2516 = vsel %vm2515, %v2463, %v2514
        %vm2517 = vcmp.eq.f32.partialorder %v2463, 0.0
        %v2518 = vand.u32 %v2463, 2147483648
        %v2519 = vsel %vm2517, %v2518, %v2516
        %v2520 = vrsqrt.pop %v2464
        %v2521 = vmul.f32 %v2464, %v2520
        %vm2522 = vcmp.eq.f32.partialorder %v2464, inf
        %v2523 = vsel %vm2522, %v2464, %v2521
        %vm2524 = vcmp.eq.f32.partialorder %v2464, 0.0
        %v2525 = vand.u32 %v2464, 2147483648
        %v2526 = vsel %vm2524, %v2525, %v2523
        %v2527 = vrsqrt.pop %v2465
        %v2528 = vmul.f32 %v2465, %v2527
        %vm2529 = vcmp.eq.f32.partialorder %v2465, inf
        %v2530 = vsel %vm2529, %v2465, %v2528
        %vm2531 = vcmp.eq.f32.partialorder %v2465, 0.0
        %v2532 = vand.u32 %v2465, 2147483648
        %v2533 = vsel %vm2531, %v2532, %v2530
        %v2534 = vrsqrt.pop %v2466
        %v2535 = vmul.f32 %v2466, %v2534
        %vm2536 = vcmp.eq.f32.partialorder %v2466, inf
        %v2537 = vsel %vm2536, %v2466, %v2535
        %vm2538 = vcmp.eq.f32.partialorder %v2466, 0.0
        %v2539 = vand.u32 %v2466, 2147483648
        %v2540 = vsel %vm2538, %v2539, %v2537
        %v2541 = vrsqrt.pop %v2467
        %v2542 = vmul.f32 %v2467, %v2541
        %vm2543 = vcmp.eq.f32.partialorder %v2467, inf
        %v2544 = vsel %vm2543, %v2467, %v2542
        %vm2545 = vcmp.eq.f32.partialorder %v2467, 0.0
        %v2546 = vand.u32 %v2467, 2147483648
        %v2547 = vsel %vm2545, %v2546, %v2544
        %v2548 = vrsqrt.pop %v2468
        %v2549 = vmul.f32 %v2468, %v2548
        %vm2550 = vcmp.eq.f32.partialorder %v2468, inf
        %v2551 = vsel %vm2550, %v2468, %v2549
        %vm2552 = vcmp.eq.f32.partialorder %v2468, 0.0
        %v2553 = vand.u32 %v2468, 2147483648
        %v2554 = vsel %vm2552, %v2553, %v2551
        %v2555 = vrsqrt.pop %v2469
        %v2556 = vmul.f32 %v2469, %v2555
        %vm2557 = vcmp.eq.f32.partialorder %v2469, inf
        %v2558 = vsel %vm2557, %v2469, %v2556
        %vm2559 = vcmp.eq.f32.partialorder %v2469, 0.0
        %v2560 = vand.u32 %v2469, 2147483648
        %v2561 = vsel %vm2559, %v2560, %v2558
        %v2562 = vrsqrt.pop %v2470
        %v2563 = vmul.f32 %v2470, %v2562
        %vm2564 = vcmp.eq.f32.partialorder %v2470, inf
        %v2565 = vsel %vm2564, %v2470, %v2563
        %vm2566 = vcmp.eq.f32.partialorder %v2470, 0.0
        %v2567 = vand.u32 %v2470, 2147483648
        %v2568 = vsel %vm2566, %v2567, %v2565
        %v2569 = vrsqrt.pop %v2471
        %v2570 = vmul.f32 %v2471, %v2569
        %vm2571 = vcmp.eq.f32.partialorder %v2471, inf
        %v2572 = vsel %vm2571, %v2471, %v2570
        %vm2573 = vcmp.eq.f32.partialorder %v2471, 0.0
        %v2574 = vand.u32 %v2471, 2147483648
        %v2575 = vsel %vm2573, %v2574, %v2572
        %v2576 = vrsqrt.pop %v2472
        %v2577 = vmul.f32 %v2472, %v2576
        %vm2578 = vcmp.eq.f32.partialorder %v2472, inf
        %v2579 = vsel %vm2578, %v2472, %v2577
        %vm2580 = vcmp.eq.f32.partialorder %v2472, 0.0
        %v2581 = vand.u32 %v2472, 2147483648
        %v2582 = vsel %vm2580, %v2581, %v2579
        %v2583 = vrsqrt.pop %v2473
        %v2584 = vmul.f32 %v2473, %v2583
        %vm2585 = vcmp.eq.f32.partialorder %v2473, inf
        %v2586 = vsel %vm2585, %v2473, %v2584
        %vm2587 = vcmp.eq.f32.partialorder %v2473, 0.0
        %v2588 = vand.u32 %v2473, 2147483648
        %v2589 = vsel %vm2587, %v2588, %v2586
        %v2590 = vrsqrt.pop %v2474
        %v2591 = vmul.f32 %v2474, %v2590
        %vm2592 = vcmp.eq.f32.partialorder %v2474, inf
        %v2593 = vsel %vm2592, %v2474, %v2591
        %vm2594 = vcmp.eq.f32.partialorder %v2474, 0.0
        %v2595 = vand.u32 %v2474, 2147483648
        %v2596 = vsel %vm2594, %v2595, %v2593
        %v2597 = vrsqrt.pop %v2475
        %v2598 = vmul.f32 %v2475, %v2597
        %vm2599 = vcmp.eq.f32.partialorder %v2475, inf
        %v2600 = vsel %vm2599, %v2475, %v2598
        %vm2601 = vcmp.eq.f32.partialorder %v2475, 0.0
        %v2602 = vand.u32 %v2475, 2147483648
        %v2603 = vsel %vm2601, %v2602, %v2600
        %v2604 = vrsqrt.pop %v2476
        %v2605 = vmul.f32 %v2476, %v2604
        %vm2606 = vcmp.eq.f32.partialorder %v2476, inf
        %v2607 = vsel %vm2606, %v2476, %v2605
        %vm2608 = vcmp.eq.f32.partialorder %v2476, 0.0
        %v2609 = vand.u32 %v2476, 2147483648
        %v2610 = vsel %vm2608, %v2609, %v2607
        %v2611 = vrsqrt.pop %v2477
        %v2612 = vmul.f32 %v2477, %v2611
        %vm2613 = vcmp.eq.f32.partialorder %v2477, inf
        %v2614 = vsel %vm2613, %v2477, %v2612
        %vm2615 = vcmp.eq.f32.partialorder %v2477, 0.0
        %v2616 = vand.u32 %v2477, 2147483648
        %v2617 = vsel %vm2615, %v2616, %v2614
        %v2618 = vrsqrt.pop %v2478
        %v2619 = vmul.f32 %v2478, %v2618
        %vm2620 = vcmp.eq.f32.partialorder %v2478, inf
        %v2621 = vsel %vm2620, %v2478, %v2619
        %vm2622 = vcmp.eq.f32.partialorder %v2478, 0.0
        %v2623 = vand.u32 %v2478, 2147483648
        %v2624 = vsel %vm2622, %v2623, %v2621
        %v2625 = vrsqrt.pop %v2479
        %v2626 = vmul.f32 %v2479, %v2625
        %vm2627 = vcmp.eq.f32.partialorder %v2479, inf
        %v2628 = vsel %vm2627, %v2479, %v2626
        %vm2629 = vcmp.eq.f32.partialorder %v2479, 0.0
        %v2630 = vand.u32 %v2479, 2147483648
        %v2631 = vsel %vm2629, %v2630, %v2628
        %v2632 = vrsqrt.pop %v2480
        %v2633 = vmul.f32 %v2480, %v2632
        %vm2634 = vcmp.eq.f32.partialorder %v2480, inf
        %v2635 = vsel %vm2634, %v2480, %v2633
        %vm2636 = vcmp.eq.f32.partialorder %v2480, 0.0
        %v2637 = vand.u32 %v2480, 2147483648
        %v2638 = vsel %vm2636, %v2637, %v2635
        %v2639 = vrsqrt.pop %v2481
        %v2640 = vmul.f32 %v2481, %v2639
        %vm2641 = vcmp.eq.f32.partialorder %v2481, inf
        %v2642 = vsel %vm2641, %v2481, %v2640
        %vm2643 = vcmp.eq.f32.partialorder %v2481, 0.0
        %v2644 = vand.u32 %v2481, 2147483648
        %v2645 = vsel %vm2643, %v2644, %v2642
        %v2646 = vrsqrt.pop %v2482
        %v2647 = vmul.f32 %v2482, %v2646
        %vm2648 = vcmp.eq.f32.partialorder %v2482, inf
        %v2649 = vsel %vm2648, %v2482, %v2647
        %vm2650 = vcmp.eq.f32.partialorder %v2482, 0.0
        %v2651 = vand.u32 %v2482, 2147483648
        %v2652 = vsel %vm2650, %v2651, %v2649
        %v2653 = vrsqrt.pop %v2483
        %v2654 = vmul.f32 %v2483, %v2653
        %vm2655 = vcmp.eq.f32.partialorder %v2483, inf
        %v2656 = vsel %vm2655, %v2483, %v2654
        %vm2657 = vcmp.eq.f32.partialorder %v2483, 0.0
        %v2658 = vand.u32 %v2483, 2147483648
        %v2659 = vsel %vm2657, %v2658, %v2656
        %v2660 = vrsqrt.pop %v2484
        %v2661 = vmul.f32 %v2484, %v2660
        %vm2662 = vcmp.eq.f32.partialorder %v2484, inf
        %v2663 = vsel %vm2662, %v2484, %v2661
        %vm2664 = vcmp.eq.f32.partialorder %v2484, 0.0
        %v2665 = vand.u32 %v2484, 2147483648
        %v2666 = vsel %vm2664, %v2665, %v2663
        %v2667 = vrsqrt.pop %v2485
        %v2668 = vmul.f32 %v2485, %v2667
        %vm2669 = vcmp.eq.f32.partialorder %v2485, inf
        %v2670 = vsel %vm2669, %v2485, %v2668
        %vm2671 = vcmp.eq.f32.partialorder %v2485, 0.0
        %v2672 = vand.u32 %v2485, 2147483648
        %v2673 = vsel %vm2671, %v2672, %v2670
        %v2674 = vrsqrt.pop %v2486
        %v2675 = vmul.f32 %v2486, %v2674
        %vm2676 = vcmp.eq.f32.partialorder %v2486, inf
        %v2677 = vsel %vm2676, %v2486, %v2675
        %vm2678 = vcmp.eq.f32.partialorder %v2486, 0.0
        %v2679 = vand.u32 %v2486, 2147483648
        %v2680 = vsel %vm2678, %v2679, %v2677
        %v2681 = vrsqrt.pop %v2487
        %v2682 = vmul.f32 %v2487, %v2681
        %vm2683 = vcmp.eq.f32.partialorder %v2487, inf
        %v2684 = vsel %vm2683, %v2487, %v2682
        %vm2685 = vcmp.eq.f32.partialorder %v2487, 0.0
        %v2686 = vand.u32 %v2487, 2147483648
        %v2687 = vsel %vm2685, %v2686, %v2684
        %v2688 = vrsqrt.pop %v2488
        %v2689 = vmul.f32 %v2488, %v2688
        %vm2690 = vcmp.eq.f32.partialorder %v2488, inf
        %v2691 = vsel %vm2690, %v2488, %v2689
        %vm2692 = vcmp.eq.f32.partialorder %v2488, 0.0
        %v2693 = vand.u32 %v2488, 2147483648
        %v2694 = vsel %vm2692, %v2693, %v2691
        %v2695 = vrsqrt.pop %v2489
        %v2696 = vmul.f32 %v2489, %v2695
        %vm2697 = vcmp.eq.f32.partialorder %v2489, inf
        %v2698 = vsel %vm2697, %v2489, %v2696
        %vm2699 = vcmp.eq.f32.partialorder %v2489, 0.0
        %v2700 = vand.u32 %v2489, 2147483648
        %v2701 = vsel %vm2699, %v2700, %v2698
        %v2702 = vrsqrt.pop %v2490
        %v2703 = vmul.f32 %v2490, %v2702
        %vm2704 = vcmp.eq.f32.partialorder %v2490, inf
        %v2705 = vsel %vm2704, %v2490, %v2703
        %vm2706 = vcmp.eq.f32.partialorder %v2490, 0.0
        %v2707 = vand.u32 %v2490, 2147483648
        %v2708 = vsel %vm2706, %v2707, %v2705
        %v2709 = vrsqrt.pop %v2491
        %v2710 = vmul.f32 %v2491, %v2709
        %vm2711 = vcmp.eq.f32.partialorder %v2491, inf
        %v2712 = vsel %vm2711, %v2491, %v2710
        %vm2713 = vcmp.eq.f32.partialorder %v2491, 0.0
        %v2714 = vand.u32 %v2491, 2147483648
        %v2715 = vsel %vm2713, %v2714, %v2712
        %v2716 = vld [vmem:[%s417] sm:$0xff]
        %v2717 = vld [vmem:[%s417 + $0x8] sm:$0xff]
        %v2718 = vld [vmem:[%s417 + $0x10] sm:$0xff]
        %v2719 = vld [vmem:[%s417 + $0x18] sm:$0xff]
        %v2720 = vld [vmem:[%s417 + $0x20] sm:$0xff]
        %v2721 = vld [vmem:[%s417 + $0x28] sm:$0xff]
        %v2722 = vld [vmem:[%s417 + $0x30] sm:$0xff]
        %v2723 = vld [vmem:[%s417 + $0x38] sm:$0xff]
        %v2724 = vld [vmem:[%s417 + $0x40] sm:$0xff]
        %v2725 = vld [vmem:[%s417 + $0x48] sm:$0xff]
        %v2726 = vld [vmem:[%s417 + $0x50] sm:$0xff]
        %v2727 = vld [vmem:[%s417 + $0x58] sm:$0xff]
        %v2728 = vld [vmem:[%s417 + $0x60] sm:$0xff]
        %v2729 = vld [vmem:[%s417 + $0x68] sm:$0xff]
        %v2730 = vld [vmem:[%s417 + $0x70] sm:$0xff]
        %v2731 = vld [vmem:[%s417 + $0x78] sm:$0xff]
        %v2732 = vld [vmem:[%s417 + $0x80] sm:$0xff]
        %v2733 = vld [vmem:[%s417 + $0x88] sm:$0xff]
        %v2734 = vld [vmem:[%s417 + $0x90] sm:$0xff]
        %v2735 = vld [vmem:[%s417 + $0x98] sm:$0xff]
        %v2736 = vld [vmem:[%s417 + $0xa0] sm:$0xff]
        %v2737 = vld [vmem:[%s417 + $0xa8] sm:$0xff]
        %v2738 = vld [vmem:[%s417 + $0xb0] sm:$0xff]
        %v2739 = vld [vmem:[%s417 + $0xb8] sm:$0xff]
        %v2740 = vld [vmem:[%s417 + $0xc0] sm:$0xff]
        %v2741 = vld [vmem:[%s417 + $0xc8] sm:$0xff]
        %v2742 = vld [vmem:[%s417 + $0xd0] sm:$0xff]
        %v2743 = vld [vmem:[%s417 + $0xd8] sm:$0xff]
        %v2744 = vld [vmem:[%s417 + $0xe0] sm:$0xff]
        %v2745 = vld [vmem:[%s417 + $0xe8] sm:$0xff]
        %v2746 = vld [vmem:[%s417 + $0xf0] sm:$0xff]
        %v2747 = vld [vmem:[%s417 + $0xf8] sm:$0xff]
        %v2748 = vld [vmem:[%s421] sm:$0x1]
        %v2750 = vlaneseq
        %v2751 = vshrl.u32 %v2750, 7
        %v2752 = vsub.s32 0, %v2751
        %v2753 = vrot.slane %v2748, %v2752
        %v2755 = vsub.f32 %v2716, %v2753
        %v2756 = vsub.f32 %v2717, %v2753
        %v2757 = vsub.f32 %v2718, %v2753
        %v2758 = vsub.f32 %v2719, %v2753
        %v2759 = vsub.f32 %v2720, %v2753
        %v2760 = vsub.f32 %v2721, %v2753
        %v2761 = vsub.f32 %v2722, %v2753
        %v2762 = vsub.f32 %v2723, %v2753
        %v2763 = vsub.f32 %v2724, %v2753
        %v2764 = vsub.f32 %v2725, %v2753
        %v2765 = vsub.f32 %v2726, %v2753
        %v2766 = vsub.f32 %v2727, %v2753
        %v2767 = vsub.f32 %v2728, %v2753
        %v2768 = vsub.f32 %v2729, %v2753
        %v2769 = vsub.f32 %v2730, %v2753
        %v2770 = vsub.f32 %v2731, %v2753
        %v2771 = vsub.f32 %v2732, %v2753
        %v2772 = vsub.f32 %v2733, %v2753
        %v2773 = vsub.f32 %v2734, %v2753
        %v2774 = vsub.f32 %v2735, %v2753
        %v2775 = vsub.f32 %v2736, %v2753
        %v2776 = vsub.f32 %v2737, %v2753
        %v2777 = vsub.f32 %v2738, %v2753
        %v2778 = vsub.f32 %v2739, %v2753
        %v2779 = vsub.f32 %v2740, %v2753
        %v2780 = vsub.f32 %v2741, %v2753
        %v2781 = vsub.f32 %v2742, %v2753
        %v2782 = vsub.f32 %v2743, %v2753
        %v2783 = vsub.f32 %v2744, %v2753
        %v2784 = vsub.f32 %v2745, %v2753
        %v2785 = vsub.f32 %v2746, %v2753
        %v2786 = vsub.f32 %v2747, %v2753
        %v2787 = vld [vmem:[%s424] sm:$0x1]
        %v2789 = vlaneseq
        %v2790 = vshrl.u32 %v2789, 7
        %v2791 = vsub.s32 0, %v2790
        %v2792 = vrot.slane %v2787, %v2791
        %v2794 = vmul.f32 %v2755, %v2792
        %v2795 = vmul.f32 %v2756, %v2792
        %v2796 = vmul.f32 %v2757, %v2792
        %v2797 = vmul.f32 %v2758, %v2792
        %v2798 = vmul.f32 %v2759, %v2792
        %v2799 = vmul.f32 %v2760, %v2792
        %v2800 = vmul.f32 %v2761, %v2792
        %v2801 = vmul.f32 %v2762, %v2792
        %v2802 = vmul.f32 %v2763, %v2792
        %v2803 = vmul.f32 %v2764, %v2792
        %v2804 = vmul.f32 %v2765, %v2792
        %v2805 = vmul.f32 %v2766, %v2792
        %v2806 = vmul.f32 %v2767, %v2792
        %v2807 = vmul.f32 %v2768, %v2792
        %v2808 = vmul.f32 %v2769, %v2792
        %v2809 = vmul.f32 %v2770, %v2792
        %v2810 = vmul.f32 %v2771, %v2792
        %v2811 = vmul.f32 %v2772, %v2792
        %v2812 = vmul.f32 %v2773, %v2792
        %v2813 = vmul.f32 %v2774, %v2792
        %v2814 = vmul.f32 %v2775, %v2792
        %v2815 = vmul.f32 %v2776, %v2792
        %v2816 = vmul.f32 %v2777, %v2792
        %v2817 = vmul.f32 %v2778, %v2792
        %v2818 = vmul.f32 %v2779, %v2792
        %v2819 = vmul.f32 %v2780, %v2792
        %v2820 = vmul.f32 %v2781, %v2792
        %v2821 = vmul.f32 %v2782, %v2792
        %v2822 = vmul.f32 %v2783, %v2792
        %v2823 = vmul.f32 %v2784, %v2792
        %v2824 = vmul.f32 %v2785, %v2792
        %v2825 = vmul.f32 %v2786, %v2792
        %v2826 = vmul.f32 %v2498, %v2794
        %v2827 = vmul.f32 %v2505, %v2795
        %v2828 = vmul.f32 %v2512, %v2796
        %v2829 = vmul.f32 %v2519, %v2797
        %v2830 = vmul.f32 %v2526, %v2798
        %v2831 = vmul.f32 %v2533, %v2799
        %v2832 = vmul.f32 %v2540, %v2800
        %v2833 = vmul.f32 %v2547, %v2801
        %v2834 = vmul.f32 %v2554, %v2802
        %v2835 = vmul.f32 %v2561, %v2803
        %v2836 = vmul.f32 %v2568, %v2804
        %v2837 = vmul.f32 %v2575, %v2805
        %v2838 = vmul.f32 %v2582, %v2806
        %v2839 = vmul.f32 %v2589, %v2807
        %v2840 = vmul.f32 %v2596, %v2808
        %v2841 = vmul.f32 %v2603, %v2809
        %v2842 = vmul.f32 %v2610, %v2810
        %v2843 = vmul.f32 %v2617, %v2811
        %v2844 = vmul.f32 %v2624, %v2812
        %v2845 = vmul.f32 %v2631, %v2813
        %v2846 = vmul.f32 %v2638, %v2814
        %v2847 = vmul.f32 %v2645, %v2815
        %v2848 = vmul.f32 %v2652, %v2816
        %v2849 = vmul.f32 %v2659, %v2817
        %v2850 = vmul.f32 %v2666, %v2818
        %v2851 = vmul.f32 %v2673, %v2819
        %v2852 = vmul.f32 %v2680, %v2820
        %v2853 = vmul.f32 %v2687, %v2821
        %v2854 = vmul.f32 %v2694, %v2822
        %v2855 = vmul.f32 %v2701, %v2823
        %v2856 = vmul.f32 %v2708, %v2824
        %v2857 = vmul.f32 %v2715, %v2825
        %v2858 = vadd.f32 %v2826, %v1981
        %v2859 = vadd.f32 %v2827, %v1984
        %v2860 = vadd.f32 %v2828, %v1989
        %v2861 = vadd.f32 %v2829, %v1992
        %v2862 = vadd.f32 %v2830, %v1997
        %v2863 = vadd.f32 %v2831, %v2000
        %v2864 = vadd.f32 %v2832, %v2005
        %v2865 = vadd.f32 %v2833, %v2008
        %v2866 = vadd.f32 %v2834, %v2013
        %v2867 = vadd.f32 %v2835, %v2016
        %v2868 = vadd.f32 %v2836, %v2021
        %v2869 = vadd.f32 %v2837, %v2024
        %v2870 = vadd.f32 %v2838, %v2029
        %v2871 = vadd.f32 %v2839, %v2032
        %v2872 = vadd.f32 %v2840, %v2037
        %v2873 = vadd.f32 %v2841, %v2040
        %v2874 = vadd.f32 %v2842, %v2045
        %v2875 = vadd.f32 %v2843, %v2048
        %v2876 = vadd.f32 %v2844, %v2053
        %v2877 = vadd.f32 %v2845, %v2056
        %v2878 = vadd.f32 %v2846, %v2061
        %v2879 = vadd.f32 %v2847, %v2064
        %v2880 = vadd.f32 %v2848, %v2069
        %v2881 = vadd.f32 %v2849, %v2072
        %v2882 = vadd.f32 %v2850, %v2077
        %v2883 = vadd.f32 %v2851, %v2080
        %v2884 = vadd.f32 %v2852, %v2085
        %v2885 = vadd.f32 %v2853, %v2088
        %v2886 = vadd.f32 %v2854, %v2093
        %v2887 = vadd.f32 %v2855, %v2096
        %v2888 = vadd.f32 %v2856, %v2101
        %v2889 = vadd.f32 %v2857, %v2104
        %2890 = vst [vmem:[%s433] sm:$0xff] %v2858
        %2891 = vst [vmem:[%s433 + $0x8] sm:$0xff] %v2859
        %2892 = vst [vmem:[%s433 + $0x10] sm:$0xff] %v2860
        %2893 = vst [vmem:[%s433 + $0x18] sm:$0xff] %v2861
        %2894 = vst [vmem:[%s433 + $0x20] sm:$0xff] %v2862
        %2895 = vst [vmem:[%s433 + $0x28] sm:$0xff] %v2863
        %2896 = vst [vmem:[%s433 + $0x30] sm:$0xff] %v2864
        %2897 = vst [vmem:[%s433 + $0x38] sm:$0xff] %v2865
        %2898 = vst [vmem:[%s433 + $0x40] sm:$0xff] %v2866
        %2899 = vst [vmem:[%s433 + $0x48] sm:$0xff] %v2867
        %2900 = vst [vmem:[%s433 + $0x50] sm:$0xff] %v2868
        %2901 = vst [vmem:[%s433 + $0x58] sm:$0xff] %v2869
        %2902 = vst [vmem:[%s433 + $0x60] sm:$0xff] %v2870
        %2903 = vst [vmem:[%s433 + $0x68] sm:$0xff] %v2871
        %2904 = vst [vmem:[%s433 + $0x70] sm:$0xff] %v2872
        %2905 = vst [vmem:[%s433 + $0x78] sm:$0xff] %v2873
        %2906 = vst [vmem:[%s433 + $0x80] sm:$0xff] %v2874
        %2907 = vst [vmem:[%s433 + $0x88] sm:$0xff] %v2875
        %2908 = vst [vmem:[%s433 + $0x90] sm:$0xff] %v2876
        %2909 = vst [vmem:[%s433 + $0x98] sm:$0xff] %v2877
        %2910 = vst [vmem:[%s433 + $0xa0] sm:$0xff] %v2878
        %2911 = vst [vmem:[%s433 + $0xa8] sm:$0xff] %v2879
        %2912 = vst [vmem:[%s433 + $0xb0] sm:$0xff] %v2880
        %2913 = vst [vmem:[%s433 + $0xb8] sm:$0xff] %v2881
        %2914 = vst [vmem:[%s433 + $0xc0] sm:$0xff] %v2882
        %2915 = vst [vmem:[%s433 + $0xc8] sm:$0xff] %v2883
        %2916 = vst [vmem:[%s433 + $0xd0] sm:$0xff] %v2884
        %2917 = vst [vmem:[%s433 + $0xd8] sm:$0xff] %v2885
        %2918 = vst [vmem:[%s433 + $0xe0] sm:$0xff] %v2886
        %2919 = vst [vmem:[%s433 + $0xe8] sm:$0xff] %v2887
        %2920 = vst [vmem:[%s433 + $0xf0] sm:$0xff] %v2888
        %2921 = vst [vmem:[%s433 + $0xf8] sm:$0xff] %v2889
        %s2922 = smul.u32 32, %s27
        %p2923 = scmp.lt.s32.totalorder %s26, 1
        %s2924 = scalar_select %p2923, %s26, 1
        %p2925 = scmp.lt.s32.totalorder %s2922, 31
        %s2926 = scalar_select %p2925, %s2922, 31
        %s2927 = smul.addr %s2924, 32
        %s2928 = sadd.s32 %s2926, %s2927
        %s2929 = smul.addr %s2928, 8
        %s2930 = scalar_lea.vmem %s6, %s2929
        %s2931 = sand.u32 %s232, 1
        %s2932 = scalar_lea.sflag [#allocation4], %s2931
        %s2933 = sand.u32 %s232, 1
        %s2934 = smul.addr %s2933, 256
        %s2935 = scalar_lea.vmem [#allocation3], %s2934
        // Predicated region
        $region49: #{transformer_forward.15} parent=43 // pred_check
          %p2936 = pneg %p214
        $region50: #{transformer_forward.15} parent=43 // pred_check_branch
          %2938 = sbr.rel (%p2936) target = $region52
        $region51: #{transformer_forward.15} parent=43 // pred_region
          %s2939 = smul.u32 32, %s27
        $region52: #{transformer_forward.15} parent=43 // pred_fallthru
          _
        // Predicated region
        $region53: #{transformer_forward.15} parent=43 // pred_check
          %p2940 = pneg %p242
        $region54: #{transformer_forward.15} parent=43 // pred_check_branch
          %2942 = sbr.rel (%p2940) target = $region56
        $region55: #{transformer_forward.15} parent=43 // pred_region
          %s2943 = smul.u32 32, %s27
          %s2945 = ssub.s32 4096, 4096
          %2946 = vsyncadd %s2932, %s2945
          %s2947 = smul.addr %s2943, 2
          %s2948 = smul.addr %s26, 64
          %s2949 = sadd.s32 %s2947, %s2948
          %s2950 = smul.addr %s2949, 64
          %s2951 = scalar_lea.hbm %s7, %s2950
          %s2952 = sshll.u32 %s2935, 4
          %s2953 = int_to_ptr.vmem [resolvable:$true] %s2952
          %2958 = dma.vmem_to_hbm [thread:$0]  %s2953, 4096, %s2951, %s2932, 128, 128, 8
        $region56: #{transformer_forward.15} parent=43 // pred_fallthru
          _
      $region44: #{transformer_forward.15} parent=5 // pred_fallthru
        _
      %p2959 = scmp.le.s32.totalorder 2, %s17
      // Predicated region
      $region57: #{transformer_forward.15} parent=5 // pred_check
        %p2960 = pneg %p2959
      $region58: #{transformer_forward.15} parent=5 // pred_check_branch
        %2962 = sbr.rel (%p2960) target = $region60
      $region59: #{transformer_forward.15} parent=5 // pred_region
        %s2963 = ssub.s32 %s17, 2
        // Predicated region
        $region61: #{transformer_forward.15} parent=59 // pred_check
          %p2964 = pneg %p220
        $region62: #{transformer_forward.15} parent=59 // pred_check_branch
          %2966 = sbr.rel (%p2964) target = $region64
        $region63: #{transformer_forward.15} parent=59 // pred_region
          %s2967 = smul.u32 32, %s29
          %p2968 = scmp.lt.s32.totalorder %s28, 1
          %s2969 = scalar_select %p2968, %s28, 1
          %p2970 = scmp.lt.s32.totalorder %s2967, 31
          %s2971 = scalar_select %p2970, %s2967, 31
          %s2972 = smul.addr %s2969, 32
          %s2973 = sadd.s32 %s2971, %s2972
          %s2974 = smul.addr %s2973, 8
          %s2975 = scalar_lea.vmem %s6, %s2974
        $region64: #{transformer_forward.15} parent=59 // pred_fallthru
          _
        // Predicated region
        $region65: #{transformer_forward.15} parent=59 // pred_check
          %p2976 = pneg %p248
        $region66: #{transformer_forward.15} parent=59 // pred_check_branch
          %2978 = sbr.rel (%p2976) target = $region68
        $region67: #{transformer_forward.15} parent=59 // pred_region
          %s2979 = sand.u32 %s233, 1
          %s2980 = scalar_lea.sflag [#allocation4], %s2979
          %s2981 = sand.u32 %s233, 1
          %s2982 = smul.addr %s2981, 256
          %s2983 = scalar_lea.vmem [#allocation3], %s2982
          %2984 = dma.done %s2980, 4096
        $region68: #{transformer_forward.15} parent=59 // pred_fallthru
          _
      $region60: #{transformer_forward.15} parent=5 // pred_fallthru
        _
    $region6: #{transformer_forward.15} parent=1 // loop_footer
      %s21 = sadd.s32 1, %s17
    $region7: #{transformer_forward.15} parent=1 // loop_footer_branch
      %16 = sbr.rel target = $region3
    $region8: #{transformer_forward.15} parent=1 // loop_exit
      _
    %2985 = vsyncpa [#allocation4], 1
    %s2986 = scalar_lea.sflag [#allocation4], 1
    %2987 = vsyncpa %s2986, 1

// kernel: transformer_forward.21
$region0: #{transformer_forward.21}
  #allocation0 [shape = 'u32[]', space=smem, size = 0x4, offset = 0x4, fixed_abs, tag = 'smem constant byte address 0x4 - core index']
  #allocation1 [shape = 'u32[144,128]{1,0:T(1,128)}', space=vmem, size = 0x12000, scoped, tag = 'internal scratch']
  %s0 = inlined_call_operand.vmem [shape: bf16[512,256], index: 0, kind: input, shape index: {}]
  %s1 = inlined_call_operand.vmem [shape: bf16[256,128], index: 1, kind: input, shape index: {}]
  %s2 = inlined_call_operand.vmem [shape: f32[1,128], index: 2, kind: input, shape index: {}]
  %s3 = inlined_call_operand.vmem [shape: f32[512,128], index: 3, kind: output, shape index: {}]
  %s4 = sld [smem:[#allocation0]]
  $region45: #{transformer_forward.21} parent=0
    _
  %s6 = ssub.s32 1, %s4
  %s7 = scalar_select 0, %s6, %s4
  loop: start=0, step=1, limit=4
  $region2: #{transformer_forward.21} parent=0 // loop_pre_header
    _
  $region3: #{transformer_forward.21} parent=0 // loop_header
    %s9 = sphi 0, %s13
    %p10 = scmp.ge.s32.totalorder %s9, 4
    %s19 = sphi 0, %s21
    %s22 = sphi 0, %s19
    %s23 = sphi 0, %s22
    %s39 = sphi 0, %s23
    %s43 = sphi 0, %s43
    %s45 = sphi 0, %s43
    %s46 = sphi 0, %s45
    %s60 = sphi 0, %s46
    %s64 = sphi 0, %s64
    %s66 = sphi 0, %s64
    %s67 = sphi 0, %s66
    %s81 = sphi 0, %s67
    %s87 = sphi 0, %s89
    %s90 = sphi 0, %s87
    %s91 = sphi 0, %s90
    %s107 = sphi 0, %s91
  $region4: #{transformer_forward.21} parent=0 // loop_header_branch
    %12 = sbr.rel (%p10) target = $region8
  $region5: #{transformer_forward.21} parent=0 // loop_body
    %s14 = ssub.s32 %s9, 1
    %s15 = ssub.s32 %s9, 2
    %s16 = sadd.s32 %s9, 1
    %s17 = ssub.s32 %s9, %s16
    %p18 = scmp.eq.s32.totalorder %s17, 0
    %s20 = sadd.s32 %s19, 1
    %s21 = scalar_select %p18, %s19, %s20
    %p24 = pneg %p18
    %p25 = scmp.eq.s32.totalorder %s9, 1
    %p26 = por %p24, %p25
    %p27 = scmp.ne.s32.totalorder %s19, %s22
    %p28 = scmp.eq.s32.totalorder %s9, 0
    %p29 = por %p27, %p28
    %p30 = scmp.ne.s32.totalorder %s19, %s22
    %p31 = scmp.eq.s32.totalorder %s14, 1
    %p32 = por %p30, %p31
    %p33 = scmp.ne.s32.totalorder %s22, %s23
    %p34 = scmp.eq.s32.totalorder %s14, 0
    %p35 = por %p33, %p34
    %p36 = scmp.ne.s32.totalorder %s22, %s23
    %p37 = scmp.eq.s32.totalorder %s15, 1
    %p38 = por %p36, %p37
    %p40 = scmp.ne.s32.totalorder %s23, %s39
    %p41 = scmp.eq.s32.totalorder %s15, 0
    %p42 = por %p40, %p41
    %s44 = sadd.s32 %s43, 1
    %p47 = scmp.eq.s32.totalorder %s9, 1
    %p48 = scmp.ne.s32.totalorder %s43, %s45
    %p49 = scmp.eq.s32.totalorder %s9, 0
    %p50 = por %p48, %p49
    %p51 = scmp.ne.s32.totalorder %s43, %s45
    %p52 = scmp.eq.s32.totalorder %s14, 1
    %p53 = por %p51, %p52
    %p54 = scmp.ne.s32.totalorder %s45, %s46
    %p55 = scmp.eq.s32.totalorder %s14, 0
    %p56 = por %p54, %p55
    %p57 = scmp.ne.s32.totalorder %s45, %s46
    %p58 = scmp.eq.s32.totalorder %s15, 1
    %p59 = por %p57, %p58
    %p61 = scmp.ne.s32.totalorder %s46, %s60
    %p62 = scmp.eq.s32.totalorder %s15, 0
    %p63 = por %p61, %p62
    %s65 = sadd.s32 %s64, 1
    %p68 = scmp.eq.s32.totalorder %s9, 1
    %p69 = scmp.ne.s32.totalorder %s64, %s66
    %p70 = scmp.eq.s32.totalorder %s9, 0
    %p71 = por %p69, %p70
    %p72 = scmp.ne.s32.totalorder %s64, %s66
    %p73 = scmp.eq.s32.totalorder %s14, 1
    %p74 = por %p72, %p73
    %p75 = scmp.ne.s32.totalorder %s66, %s67
    %p76 = scmp.eq.s32.totalorder %s14, 0
    %p77 = por %p75, %p76
    %p78 = scmp.ne.s32.totalorder %s66, %s67
    %p79 = scmp.eq.s32.totalorder %s15, 1
    %p80 = por %p78, %p79
    %p82 = scmp.ne.s32.totalorder %s67, %s81
    %p83 = scmp.eq.s32.totalorder %s15, 0
    %p84 = por %p82, %p83
    %s85 = ssub.s32 %s9, %s16
    %p86 = scmp.eq.s32.totalorder %s85, 0
    %s88 = sadd.s32 %s87, 1
    %s89 = scalar_select %p86, %s87, %s88
    %p92 = pneg %p86
    %p93 = scmp.eq.s32.totalorder %s9, 1
    %p94 = por %p92, %p93
    %p95 = scmp.ne.s32.totalorder %s87, %s90
    %p96 = scmp.eq.s32.totalorder %s9, 0
    %p97 = por %p95, %p96
    %p98 = scmp.ne.s32.totalorder %s87, %s90
    %p99 = scmp.eq.s32.totalorder %s14, 1
    %p100 = por %p98, %p99
    %p101 = scmp.ne.s32.totalorder %s90, %s91
    %p102 = scmp.eq.s32.totalorder %s14, 0
    %p103 = por %p101, %p102
    %p104 = scmp.ne.s32.totalorder %s90, %s91
    %p105 = scmp.eq.s32.totalorder %s15, 1
    %p106 = por %p104, %p105
    %p108 = scmp.ne.s32.totalorder %s91, %s107
    %p109 = scmp.eq.s32.totalorder %s15, 0
    %p110 = por %p108, %p109
    %p111 = scmp.le.s32.totalorder 1, %s9
    %p112 = scmp.lt.s32.totalorder %s9, 3
    %p113 = pnand %p111, %p112
    %p114 = pneg %p113
    // Predicated region
    $region9: #{transformer_forward.21} parent=5 // pred_check
      _
    $region10: #{transformer_forward.21} parent=5 // pred_check_branch
      %116 = sbr.rel (%p113) target = $region12
    $region11: #{transformer_forward.21} parent=5 // pred_region
      %s117 = ssub.s32 %s9, 1
      // Predicated region
      $region13: #{transformer_forward.21} parent=11 // pred_check
        %p118 = pneg %p56
      $region14: #{transformer_forward.21} parent=11 // pred_check_branch
        %120 = sbr.rel (%p118) target = $region16
      $region15: #{transformer_forward.21} parent=11 // pred_region
        _
      $region16: #{transformer_forward.21} parent=11 // pred_fallthru
        _
      // Predicated region
      $region17: #{transformer_forward.21} parent=11 // pred_check
        %p121 = pneg %p77
      $region18: #{transformer_forward.21} parent=11 // pred_check_branch
        %123 = sbr.rel (%p121) target = $region20
      $region19: #{transformer_forward.21} parent=11 // pred_region
        _
      $region20: #{transformer_forward.21} parent=11 // pred_fallthru
        _
    $region12: #{transformer_forward.21} parent=5 // pred_fallthru
      _
    %p124 = scmp.lt.s32.totalorder %s9, 2
    // Predicated region
    $region21: #{transformer_forward.21} parent=5 // pred_check
      %p125 = pneg %p124
    $region22: #{transformer_forward.21} parent=5 // pred_check_branch
      %127 = sbr.rel (%p125) target = $region24
    $region23: #{transformer_forward.21} parent=5 // pred_region
      // Predicated region
      $region25: #{transformer_forward.21} parent=23 // pred_check
        %p128 = pneg %p29
      $region26: #{transformer_forward.21} parent=23 // pred_check_branch
        %130 = sbr.rel (%p128) target = $region28
      $region27: #{transformer_forward.21} parent=23 // pred_region
        %s131 = smul.u32 32, %s9
        %p132 = scmp.lt.s32.totalorder %s131, 63
        %s133 = scalar_select %p132, %s131, 63
        %s134 = smul.addr %s133, 2
        %s135 = smul.addr %s134, 4
        %s136 = scalar_lea.vmem %s0, %s135
        %s137 = smul.u32 32, %s9
      $region28: #{transformer_forward.21} parent=23 // pred_fallthru
        _
    $region24: #{transformer_forward.21} parent=5 // pred_fallthru
      _
    %p138 = scmp.le.s32.totalorder 1, %s9
    %p139 = scmp.lt.s32.totalorder %s9, 3
    %p140 = pnand %p138, %p139
    %p141 = pneg %p140
    // Predicated region
    $region29: #{transformer_forward.21} parent=5 // pred_check
      _
    $region30: #{transformer_forward.21} parent=5 // pred_check_branch
      %143 = sbr.rel (%p140) target = $region32
    $region31: #{transformer_forward.21} parent=5 // pred_region
      %s144 = ssub.s32 %s9, 1
      %s145 = smul.u32 32, %s14
      %p146 = scmp.lt.s32.totalorder %s145, 63
      %s147 = scalar_select %p146, %s145, 63
      %s148 = smul.addr %s147, 2
      %s149 = smul.addr %s148, 4
      %s150 = scalar_lea.vmem %s0, %s149
      %p151 = pneg %p35
      %p152 = pneg %p32
      %p153 = pneg %p56
      %p154 = pneg %p53
      %p155 = pneg %p77
      %p156 = pneg %p74
      %p157 = pneg %p103
      %p158 = pneg %p100
      %s159 = smul.u32 32, %s14
      %p160 = scmp.lt.s32.totalorder %s159, 63
      %s161 = scalar_select %p160, %s159, 63
      %s162 = smul.addr %s161, 8
      %s163 = scalar_lea.vmem %s3, %s162
      %s164 = smul.u32 32, %s14
      %p165 = scmp.lt.s32.totalorder %s164, 63
      %s166 = scalar_select %p165, %s164, 63
      %s167 = smul.addr %s166, 2
      %s168 = smul.addr %s167, 4
      %s169 = scalar_lea.vmem %s0, %s168
      %s170 = smul.u32 32, %s14
      %s171 = smul.u32 32, %s14
      %p172 = scmp.lt.s32.totalorder %s171, 63
      %s173 = scalar_select %p172, %s171, 63
      %s174 = smul.addr %s173, 8
      %s175 = scalar_lea.vmem %s3, %s174
      %s176 = smul.u32 32, %s14
      %v178 = vld [vmem:[%s169] sm:$0xff]
      %v179 = vld [vmem:[%s169 + $0x8] sm:$0xff]
      %v180 = vld [vmem:[%s169 + $0x10] sm:$0xff]
      %v181 = vld [vmem:[%s169 + $0x18] sm:$0xff]
      %v182 = vld [vmem:[%s169 + $0x20] sm:$0xff]
      %v183 = vld [vmem:[%s169 + $0x28] sm:$0xff]
      %v184 = vld [vmem:[%s169 + $0x30] sm:$0xff]
      %v185 = vld [vmem:[%s169 + $0x38] sm:$0xff]
      %v186 = vld [vmem:[%s169 + $0x40] sm:$0xff]
      %v187 = vld [vmem:[%s169 + $0x48] sm:$0xff]
      %v188 = vld [vmem:[%s169 + $0x50] sm:$0xff]
      %v189 = vld [vmem:[%s169 + $0x58] sm:$0xff]
      %v190 = vld [vmem:[%s169 + $0x60] sm:$0xff]
      %v191 = vld [vmem:[%s169 + $0x68] sm:$0xff]
      %v192 = vld [vmem:[%s169 + $0x70] sm:$0xff]
      %v193 = vld [vmem:[%s169 + $0x78] sm:$0xff]
      %v194 = vld [vmem:[%s169 + $0x80] sm:$0xff]
      %v195 = vld [vmem:[%s169 + $0x88] sm:$0xff]
      %v196 = vld [vmem:[%s169 + $0x90] sm:$0xff]
      %v197 = vld [vmem:[%s169 + $0x98] sm:$0xff]
      %v198 = vld [vmem:[%s169 + $0xa0] sm:$0xff]
      %v199 = vld [vmem:[%s169 + $0xa8] sm:$0xff]
      %v200 = vld [vmem:[%s169 + $0xb0] sm:$0xff]
      %v201 = vld [vmem:[%s169 + $0xb8] sm:$0xff]
      %v202 = vld [vmem:[%s169 + $0xc0] sm:$0xff]
      %v203 = vld [vmem:[%s169 + $0xc8] sm:$0xff]
      %v204 = vld [vmem:[%s169 + $0xd0] sm:$0xff]
      %v205 = vld [vmem:[%s169 + $0xd8] sm:$0xff]
      %v206 = vld [vmem:[%s169 + $0xe0] sm:$0xff]
      %v207 = vld [vmem:[%s169 + $0xe8] sm:$0xff]
      %v208 = vld [vmem:[%s169 + $0xf0] sm:$0xff]
      %v209 = vld [vmem:[%s169 + $0xf8] sm:$0xff]
      %v210 = vld [vmem:[%s1] sm:$0xf]
      %v211 = vld [vmem:[%s1 + $0x4] sm:$0xf]
      %v212 = vld [vmem:[%s1 + $0x8] sm:$0xf]
      %v213 = vld [vmem:[%s1 + $0xc] sm:$0xf]
      %v214 = vld [vmem:[%s1 + $0x10] sm:$0xf]
      %v215 = vld [vmem:[%s1 + $0x14] sm:$0xf]
      %v216 = vld [vmem:[%s1 + $0x18] sm:$0xf]
      %v217 = vld [vmem:[%s1 + $0x1c] sm:$0xf]
      %v218 = vld [vmem:[%s1 + $0x20] sm:$0xf]
      %v219 = vld [vmem:[%s1 + $0x24] sm:$0xf]
      %v220 = vld [vmem:[%s1 + $0x28] sm:$0xf]
      %v221 = vld [vmem:[%s1 + $0x2c] sm:$0xf]
      %v222 = vld [vmem:[%s1 + $0x30] sm:$0xf]
      %v223 = vld [vmem:[%s1 + $0x34] sm:$0xf]
      %v224 = vld [vmem:[%s1 + $0x38] sm:$0xf]
      %v225 = vld [vmem:[%s1 + $0x3c] sm:$0xf]
      %v226 = vld [vmem:[%s1 + $0x40] sm:$0xf]
      %v227 = vld [vmem:[%s1 + $0x44] sm:$0xf]
      %v228 = vld [vmem:[%s1 + $0x48] sm:$0xf]
      %v229 = vld [vmem:[%s1 + $0x4c] sm:$0xf]
      %v230 = vld [vmem:[%s1 + $0x50] sm:$0xf]
      %v231 = vld [vmem:[%s1 + $0x54] sm:$0xf]
      %v232 = vld [vmem:[%s1 + $0x58] sm:$0xf]
      %v233 = vld [vmem:[%s1 + $0x5c] sm:$0xf]
      %v234 = vld [vmem:[%s1 + $0x60] sm:$0xf]
      %v235 = vld [vmem:[%s1 + $0x64] sm:$0xf]
      %v236 = vld [vmem:[%s1 + $0x68] sm:$0xf]
      %v237 = vld [vmem:[%s1 + $0x6c] sm:$0xf]
      %v238 = vld [vmem:[%s1 + $0x70] sm:$0xf]
      %v239 = vld [vmem:[%s1 + $0x74] sm:$0xf]
      %v240 = vld [vmem:[%s1 + $0x78] sm:$0xf]
      %v241 = vld [vmem:[%s1 + $0x7c] sm:$0xf]
      %v242 = vld [vmem:[%s2] sm:$0x1]
      %v244 = vlaneseq
      %v245 = vshrl.u32 %v244, 7
      %v246 = vsub.s32 0, %v245
      %v247 = vrot.slane %v242, %v246
      %v281 = vunpack.c.l.b16 %v178
      %v282 = vunpack.c.h.b16 %v178
      %v283 = vunpack.c.l.b16 %v179
      %v284 = vunpack.c.h.b16 %v179
      %v285 = vunpack.c.l.b16 %v180
      %v286 = vunpack.c.h.b16 %v180
      %v287 = vunpack.c.l.b16 %v181
      %v288 = vunpack.c.h.b16 %v181
      %v289 = vunpack.c.l.b16 %v182
      %v290 = vunpack.c.h.b16 %v182
      %v291 = vunpack.c.l.b16 %v183
      %v292 = vunpack.c.h.b16 %v183
      %v293 = vunpack.c.l.b16 %v184
      %v294 = vunpack.c.h.b16 %v184
      %v295 = vunpack.c.l.b16 %v185
      %v296 = vunpack.c.h.b16 %v185
      %v297 = vunpack.c.l.b16 %v186
      %v298 = vunpack.c.h.b16 %v186
      %v299 = vunpack.c.l.b16 %v187
      %v300 = vunpack.c.h.b16 %v187
      %v301 = vunpack.c.l.b16 %v188
      %v302 = vunpack.c.h.b16 %v188
      %v303 = vunpack.c.l.b16 %v189
      %v304 = vunpack.c.h.b16 %v189
      %v305 = vunpack.c.l.b16 %v190
      %v306 = vunpack.c.h.b16 %v190
      %v307 = vunpack.c.l.b16 %v191
      %v308 = vunpack.c.h.b16 %v191
      %v309 = vunpack.c.l.b16 %v192
      %v310 = vunpack.c.h.b16 %v192
      %v311 = vunpack.c.l.b16 %v193
      %v312 = vunpack.c.h.b16 %v193
      %v313 = vunpack.c.l.b16 %v194
      %v314 = vunpack.c.h.b16 %v194
      %v315 = vunpack.c.l.b16 %v195
      %v316 = vunpack.c.h.b16 %v195
      %v317 = vunpack.c.l.b16 %v196
      %v318 = vunpack.c.h.b16 %v196
      %v319 = vunpack.c.l.b16 %v197
      %v320 = vunpack.c.h.b16 %v197
      %v321 = vunpack.c.l.b16 %v198
      %v322 = vunpack.c.h.b16 %v198
      %v323 = vunpack.c.l.b16 %v199
      %v324 = vunpack.c.h.b16 %v199
      %v325 = vunpack.c.l.b16 %v200
      %v326 = vunpack.c.h.b16 %v200
      %v327 = vunpack.c.l.b16 %v201
      %v328 = vunpack.c.h.b16 %v201
      %v329 = vunpack.c.l.b16 %v202
      %v330 = vunpack.c.h.b16 %v202
      %v331 = vunpack.c.l.b16 %v203
      %v332 = vunpack.c.h.b16 %v203
      %v333 = vunpack.c.l.b16 %v204
      %v334 = vunpack.c.h.b16 %v204
      %v335 = vunpack.c.l.b16 %v205
      %v336 = vunpack.c.h.b16 %v205
      %v337 = vunpack.c.l.b16 %v206
      %v338 = vunpack.c.h.b16 %v206
      %v339 = vunpack.c.l.b16 %v207
      %v340 = vunpack.c.h.b16 %v207
      %v341 = vunpack.c.l.b16 %v208
      %v342 = vunpack.c.h.b16 %v208
      %v343 = vunpack.c.l.b16 %v209
      %v344 = vunpack.c.h.b16 %v209
      %v345 = vpack.c.b16 %v283, %v281
      %v346 = vpack.c.b16 %v284, %v282
      %v347 = vpack.c.b16 %v287, %v285
      %v348 = vpack.c.b16 %v288, %v286
      %v349 = vpack.c.b16 %v291, %v289
      %v350 = vpack.c.b16 %v292, %v290
      %v351 = vpack.c.b16 %v295, %v293
      %v352 = vpack.c.b16 %v296, %v294
      %v353 = vpack.c.b16 %v299, %v297
      %v354 = vpack.c.b16 %v300, %v298
      %v355 = vpack.c.b16 %v303, %v301
      %v356 = vpack.c.b16 %v304, %v302
      %v357 = vpack.c.b16 %v307, %v305
      %v358 = vpack.c.b16 %v308, %v306
      %v359 = vpack.c.b16 %v311, %v309
      %v360 = vpack.c.b16 %v312, %v310
      %v361 = vpack.c.b16 %v315, %v313
      %v362 = vpack.c.b16 %v316, %v314
      %v363 = vpack.c.b16 %v319, %v317
      %v364 = vpack.c.b16 %v320, %v318
      %v365 = vpack.c.b16 %v323, %v321
      %v366 = vpack.c.b16 %v324, %v322
      %v367 = vpack.c.b16 %v327, %v325
      %v368 = vpack.c.b16 %v328, %v326
      %v369 = vpack.c.b16 %v331, %v329
      %v370 = vpack.c.b16 %v332, %v330
      %v371 = vpack.c.b16 %v335, %v333
      %v372 = vpack.c.b16 %v336, %v334
      %v373 = vpack.c.b16 %v339, %v337
      %v374 = vpack.c.b16 %v340, %v338
      %v375 = vpack.c.b16 %v343, %v341
      %v376 = vpack.c.b16 %v344, %v342
      %v441 = vunpack.c.l.b16 %v210
      %v442 = vunpack.c.l.b16 %v211
      %v443 = vunpack.c.l.b16 %v212
      %v444 = vunpack.c.l.b16 %v213
      %v445 = vunpack.c.l.b16 %v214
      %v446 = vunpack.c.l.b16 %v215
      %v447 = vunpack.c.l.b16 %v216
      %v448 = vunpack.c.l.b16 %v217
      %v449 = vunpack.c.l.b16 %v218
      %v450 = vunpack.c.l.b16 %v219
      %v451 = vunpack.c.l.b16 %v220
      %v452 = vunpack.c.l.b16 %v221
      %v453 = vunpack.c.l.b16 %v222
      %v454 = vunpack.c.l.b16 %v223
      %v455 = vunpack.c.l.b16 %v224
      %v456 = vunpack.c.l.b16 %v225
      %v457 = vunpack.c.l.b16 %v226
      %v458 = vunpack.c.l.b16 %v227
      %v459 = vunpack.c.l.b16 %v228
      %v460 = vunpack.c.l.b16 %v229
      %v461 = vunpack.c.l.b16 %v230
      %v462 = vunpack.c.l.b16 %v231
      %v463 = vunpack.c.l.b16 %v232
      %v464 = vunpack.c.l.b16 %v233
      %v465 = vunpack.c.l.b16 %v234
      %v466 = vunpack.c.l.b16 %v235
      %v467 = vunpack.c.l.b16 %v236
      %v468 = vunpack.c.l.b16 %v237
      %v469 = vunpack.c.l.b16 %v238
      %v470 = vunpack.c.l.b16 %v239
      %v471 = vunpack.c.l.b16 %v240
      %v472 = vunpack.c.l.b16 %v241
      %v473 = vpack.c.b16 %v442, %v441
      %v474 = vpack.c.b16 %v444, %v443
      %v475 = vpack.c.b16 %v446, %v445
      %v476 = vpack.c.b16 %v448, %v447
      %v477 = vpack.c.b16 %v450, %v449
      %v478 = vpack.c.b16 %v452, %v451
      %v479 = vpack.c.b16 %v454, %v453
      %v480 = vpack.c.b16 %v456, %v455
      %v481 = vpack.c.b16 %v458, %v457
      %v482 = vpack.c.b16 %v460, %v459
      %v483 = vpack.c.b16 %v462, %v461
      %v484 = vpack.c.b16 %v464, %v463
      %v485 = vpack.c.b16 %v466, %v465
      %v486 = vpack.c.b16 %v468, %v467
      %v487 = vpack.c.b16 %v470, %v469
      %v488 = vpack.c.b16 %v472, %v471
      %505 = vmatprep.subr.bf16.mxu0 0
      %506 = vmatpush1.bf16.msra.mxu0 %v480
      %507 = vmatprep.subr.bf16.mxu0 0
      %508 = vmatpush1.bf16.msra.mxu0 %v479
      %509 = vmatprep.subr.bf16.mxu0 0
      %510 = vmatpush1.bf16.msra.mxu0 %v478
      %511 = vmatprep.subr.bf16.mxu0 0
      %512 = vmatpush1.bf16.msra.mxu0 %v477
      %513 = vmatprep.subr.bf16.mxu0 0
      %514 = vmatpush1.bf16.msra.mxu0 %v476
      %515 = vmatprep.subr.bf16.mxu0 0
      %516 = vmatpush1.bf16.msra.mxu0 %v475
      %517 = vmatprep.subr.bf16.mxu0 0
      %518 = vmatpush1.bf16.msra.mxu0 %v474
      %519 = vmatprep.subr.bf16.mxu0 0
      %520 = vmatpush1.bf16.msra.mxu0 %v473
      %521 = vmatprep.subr.bf16.mxu0 0
      %522 = vmatpush2.bf16.msra.mxu0 %v488
      %523 = vmatprep.subr.bf16.mxu0 0
      %524 = vmatpush2.bf16.msra.mxu0 %v487
      %525 = vmatprep.subr.bf16.mxu0 0
      %526 = vmatpush2.bf16.msra.mxu0 %v486
      %527 = vmatprep.subr.bf16.mxu0 0
      %528 = vmatpush2.bf16.msra.mxu0 %v485
      %529 = vmatprep.subr.bf16.mxu0 0
      %530 = vmatpush2.bf16.msra.mxu0 %v484
      %531 = vmatprep.subr.bf16.mxu0 0
      %532 = vmatpush2.bf16.msra.mxu0 %v483
      %533 = vmatprep.subr.bf16.mxu0 0
      %534 = vmatpush2.bf16.msra.mxu0 %v482
      %535 = vmatprep.subr.bf16.mxu0 0
      %536 = vmatpush2.bf16.msra.mxu0 %v481
      %537 = vmatprep.mubr.bf16.mxu0 %v346
      %538 = vmatmul.mubr.bf16.gmra.mxu0 %v345
      %v539 = vpop.f32.mrf.mxu0
      %v540 = vadd.f32 %v247, %v539
      %v541 = vpop.f32.mrf.mxu0
      %v542 = vpop.f32.mrf.mxu0
      %v543 = vadd.f32 %v247, %v542
      %v544 = vpop.f32.mrf.mxu0
      %545 = vmatprep.mubr.bf16.mxu0 %v348
      %546 = vmatmul.mubr.bf16.gmra.mxu0 %v347
      %v547 = vpop.f32.mrf.mxu0
      %v548 = vadd.f32 %v247, %v547
      %v549 = vpop.f32.mrf.mxu0
      %v550 = vpop.f32.mrf.mxu0
      %v551 = vadd.f32 %v247, %v550
      %v552 = vpop.f32.mrf.mxu0
      %553 = vmatprep.mubr.bf16.mxu0 %v350
      %554 = vmatmul.mubr.bf16.gmra.mxu0 %v349
      %v555 = vpop.f32.mrf.mxu0
      %v556 = vadd.f32 %v247, %v555
      %v557 = vpop.f32.mrf.mxu0
      %v558 = vpop.f32.mrf.mxu0
      %v559 = vadd.f32 %v247, %v558
      %v560 = vpop.f32.mrf.mxu0
      %561 = vmatprep.mubr.bf16.mxu0 %v352
      %562 = vmatmul.mubr.bf16.gmra.mxu0 %v351
      %v563 = vpop.f32.mrf.mxu0
      %v564 = vadd.f32 %v247, %v563
      %v565 = vpop.f32.mrf.mxu0
      %v566 = vpop.f32.mrf.mxu0
      %v567 = vadd.f32 %v247, %v566
      %v568 = vpop.f32.mrf.mxu0
      %569 = vmatprep.mubr.bf16.mxu0 %v354
      %570 = vmatmul.mubr.bf16.gmra.mxu0 %v353
      %v571 = vpop.f32.mrf.mxu0
      %v572 = vadd.f32 %v247, %v571
      %v573 = vpop.f32.mrf.mxu0
      %v574 = vpop.f32.mrf.mxu0
      %v575 = vadd.f32 %v247, %v574
      %v576 = vpop.f32.mrf.mxu0
      %577 = vmatprep.mubr.bf16.mxu0 %v356
      %578 = vmatmul.mubr.bf16.gmra.mxu0 %v355
      %v579 = vpop.f32.mrf.mxu0
      %v580 = vadd.f32 %v247, %v579
      %v581 = vpop.f32.mrf.mxu0
      %v582 = vpop.f32.mrf.mxu0
      %v583 = vadd.f32 %v247, %v582
      %v584 = vpop.f32.mrf.mxu0
      %585 = vmatprep.mubr.bf16.mxu0 %v358
      %586 = vmatmul.mubr.bf16.gmra.mxu0 %v357
      %v587 = vpop.f32.mrf.mxu0
      %v588 = vadd.f32 %v247, %v587
      %v589 = vpop.f32.mrf.mxu0
      %v590 = vpop.f32.mrf.mxu0
      %v591 = vadd.f32 %v247, %v590
      %v592 = vpop.f32.mrf.mxu0
      %593 = vmatprep.mubr.bf16.mxu0 %v360
      %594 = vmatmul.mubr.bf16.gmra.mxu0 %v359
      %v595 = vpop.f32.mrf.mxu0
      %v596 = vadd.f32 %v247, %v595
      %v597 = vpop.f32.mrf.mxu0
      %v598 = vpop.f32.mrf.mxu0
      %v599 = vadd.f32 %v247, %v598
      %v600 = vpop.f32.mrf.mxu0
      %601 = vmatprep.mubr.bf16.mxu0 %v362
      %602 = vmatmul.mubr.bf16.gmra.mxu0 %v361
      %v603 = vpop.f32.mrf.mxu0
      %v604 = vadd.f32 %v247, %v603
      %v605 = vpop.f32.mrf.mxu0
      %v606 = vpop.f32.mrf.mxu0
      %v607 = vadd.f32 %v247, %v606
      %v608 = vpop.f32.mrf.mxu0
      %609 = vmatprep.mubr.bf16.mxu0 %v364
      %610 = vmatmul.mubr.bf16.gmra.mxu0 %v363
      %v611 = vpop.f32.mrf.mxu0
      %v612 = vadd.f32 %v247, %v611
      %v613 = vpop.f32.mrf.mxu0
      %v614 = vpop.f32.mrf.mxu0
      %v615 = vadd.f32 %v247, %v614
      %v616 = vpop.f32.mrf.mxu0
      %617 = vmatprep.mubr.bf16.mxu0 %v366
      %618 = vmatmul.mubr.bf16.gmra.mxu0 %v365
      %v619 = vpop.f32.mrf.mxu0
      %v620 = vadd.f32 %v247, %v619
      %v621 = vpop.f32.mrf.mxu0
      %v622 = vpop.f32.mrf.mxu0
      %v623 = vadd.f32 %v247, %v622
      %v624 = vpop.f32.mrf.mxu0
      %625 = vmatprep.mubr.bf16.mxu0 %v368
      %626 = vmatmul.mubr.bf16.gmra.mxu0 %v367
      %v627 = vpop.f32.mrf.mxu0
      %v628 = vadd.f32 %v247, %v627
      %v629 = vpop.f32.mrf.mxu0
      %v630 = vpop.f32.mrf.mxu0
      %v631 = vadd.f32 %v247, %v630
      %v632 = vpop.f32.mrf.mxu0
      %633 = vmatprep.mubr.bf16.mxu0 %v370
      %634 = vmatmul.mubr.bf16.gmra.mxu0 %v369
      %v635 = vpop.f32.mrf.mxu0
      %v636 = vadd.f32 %v247, %v635
      %v637 = vpop.f32.mrf.mxu0
      %v638 = vpop.f32.mrf.mxu0
      %v639 = vadd.f32 %v247, %v638
      %v640 = vpop.f32.mrf.mxu0
      %641 = vmatprep.mubr.bf16.mxu0 %v372
      %642 = vmatmul.mubr.bf16.gmra.mxu0 %v371
      %v643 = vpop.f32.mrf.mxu0
      %v644 = vadd.f32 %v247, %v643
      %v645 = vpop.f32.mrf.mxu0
      %v646 = vpop.f32.mrf.mxu0
      %v647 = vadd.f32 %v247, %v646
      %v648 = vpop.f32.mrf.mxu0
      %649 = vmatprep.mubr.bf16.mxu0 %v374
      %650 = vmatmul.mubr.bf16.gmra.mxu0 %v373
      %v651 = vpop.f32.mrf.mxu0
      %v652 = vadd.f32 %v247, %v651
      %v653 = vpop.f32.mrf.mxu0
      %v654 = vpop.f32.mrf.mxu0
      %v655 = vadd.f32 %v247, %v654
      %v656 = vpop.f32.mrf.mxu0
      %657 = vmatprep.mubr.bf16.mxu0 %v376
      %658 = vmatmul.mubr.bf16.gmra.mxu0 %v375
      %v659 = vpop.f32.mrf.mxu0
      %v660 = vadd.f32 %v247, %v659
      %v661 = vpop.f32.mrf.mxu0
      %v662 = vpop.f32.mrf.mxu0
      %v663 = vadd.f32 %v247, %v662
      %v664 = vpop.f32.mrf.mxu0
      %665 = vdwg.mxu0
      %666 = vst [vmem:[%s175] sm:$0xff] %v540
      %667 = vst [vmem:[%s175 + $0x8] sm:$0xff] %v543
      %668 = vst [vmem:[%s175 + $0x10] sm:$0xff] %v548
      %669 = vst [vmem:[%s175 + $0x18] sm:$0xff] %v551
      %670 = vst [vmem:[%s175 + $0x20] sm:$0xff] %v556
      %671 = vst [vmem:[%s175 + $0x28] sm:$0xff] %v559
      %672 = vst [vmem:[%s175 + $0x30] sm:$0xff] %v564
      %673 = vst [vmem:[%s175 + $0x38] sm:$0xff] %v567
      %674 = vst [vmem:[%s175 + $0x40] sm:$0xff] %v572
      %675 = vst [vmem:[%s175 + $0x48] sm:$0xff] %v575
      %676 = vst [vmem:[%s175 + $0x50] sm:$0xff] %v580
      %677 = vst [vmem:[%s175 + $0x58] sm:$0xff] %v583
      %678 = vst [vmem:[%s175 + $0x60] sm:$0xff] %v588
      %679 = vst [vmem:[%s175 + $0x68] sm:$0xff] %v591
      %680 = vst [vmem:[%s175 + $0x70] sm:$0xff] %v596
      %681 = vst [vmem:[%s175 + $0x78] sm:$0xff] %v599
      %682 = vst [vmem:[%s175 + $0x80] sm:$0xff] %v604
      %683 = vst [vmem:[%s175 + $0x88] sm:$0xff] %v607
      %684 = vst [vmem:[%s175 + $0x90] sm:$0xff] %v612
      %685 = vst [vmem:[%s175 + $0x98] sm:$0xff] %v615
      %686 = vst [vmem:[%s175 + $0xa0] sm:$0xff] %v620
      %687 = vst [vmem:[%s175 + $0xa8] sm:$0xff] %v623
      %688 = vst [vmem:[%s175 + $0xb0] sm:$0xff] %v628
      %689 = vst [vmem:[%s175 + $0xb8] sm:$0xff] %v631
      %690 = vst [vmem:[%s175 + $0xc0] sm:$0xff] %v636
      %691 = vst [vmem:[%s175 + $0xc8] sm:$0xff] %v639
      %692 = vst [vmem:[%s175 + $0xd0] sm:$0xff] %v644
      %693 = vst [vmem:[%s175 + $0xd8] sm:$0xff] %v647
      %694 = vst [vmem:[%s175 + $0xe0] sm:$0xff] %v652
      %695 = vst [vmem:[%s175 + $0xe8] sm:$0xff] %v655
      %696 = vst [vmem:[%s175 + $0xf0] sm:$0xff] %v660
      %697 = vst [vmem:[%s175 + $0xf8] sm:$0xff] %v663
      %s698 = smul.u32 32, %s14
      %p699 = scmp.lt.s32.totalorder %s698, 63
      %s700 = scalar_select %p699, %s698, 63
      %s701 = smul.addr %s700, 8
      %s702 = scalar_lea.vmem %s3, %s701
      // Predicated region
      $region33: #{transformer_forward.21} parent=31 // pred_check
        %p703 = pneg %p100
      $region34: #{transformer_forward.21} parent=31 // pred_check_branch
        %705 = sbr.rel (%p703) target = $region36
      $region35: #{transformer_forward.21} parent=31 // pred_region
        %s706 = smul.u32 32, %s14
      $region36: #{transformer_forward.21} parent=31 // pred_fallthru
        _
    $region32: #{transformer_forward.21} parent=5 // pred_fallthru
      _
    %p707 = scmp.le.s32.totalorder 2, %s9
    // Predicated region
    $region37: #{transformer_forward.21} parent=5 // pred_check
      %p708 = pneg %p707
    $region38: #{transformer_forward.21} parent=5 // pred_check_branch
      %710 = sbr.rel (%p708) target = $region40
    $region39: #{transformer_forward.21} parent=5 // pred_region
      %s711 = ssub.s32 %s9, 2
      // Predicated region
      $region41: #{transformer_forward.21} parent=39 // pred_check
        %p712 = pneg %p106
      $region42: #{transformer_forward.21} parent=39 // pred_check_branch
        %714 = sbr.rel (%p712) target = $region44
      $region43: #{transformer_forward.21} parent=39 // pred_region
        %s715 = smul.u32 32, %s15
        %p716 = scmp.lt.s32.totalorder %s715, 63
        %s717 = scalar_select %p716, %s715, 63
        %s718 = smul.addr %s717, 8
        %s719 = scalar_lea.vmem %s3, %s718
      $region44: #{transformer_forward.21} parent=39 // pred_fallthru
        _
    $region40: #{transformer_forward.21} parent=5 // pred_fallthru
      _
  $region6: #{transformer_forward.21} parent=0 // loop_footer
    %s13 = sadd.s32 1, %s9
  $region7: #{transformer_forward.21} parent=0 // loop_footer_branch
    %8 = sbr.rel target = $region3
  $region8: #{transformer_forward.21} parent=0 // loop_exit
    _

</llo_original>
